<compile_context>
chip_gen: v5e
topology: v5e:2x2
jax: 0.10.0
libtpu: 0.0.40
codegen_flags: <defaults>
</compile_context>

<pallas_src>
import numpy as np
import jax
import jax.numpy as jnp
from jax.experimental import pallas as pl
from jax.experimental.pallas import tpu as pltpu


# ------------------------------ fused kernel --------------------------------
def _pdcnn_kernel(x_ref, w1_ref, b1_ref, w2_ref, b2_ref, w3_ref, b3_ref,
                  wd1_ref, bd1_ref, wd2_ref, bd2_ref, wd3_ref, bd3_ref,
                  wo_ref, bo_ref, o_ref, pooled_ref, acc_ref):
    k = pl.program_id(0)
    nk = pl.num_programs(0)
    B = x_ref.shape[0]
    LP = wd1_ref.shape[0]            # pool positions per dense1 chunk (13)

    # -------- step 0: conv chain + maxpool + flatten, all kept in VMEM -------
    @pl.when(k == 0)
    def _conv_chain():
        acc_ref[...] = jnp.zeros_like(acc_ref)

        # stride-2 downsample as an exact 0/1 matmul (sel[w, l] = 1 iff w == 2l)
        rows = jax.lax.broadcasted_iota(jnp.int32, (104, 52), 0)
        cols = jax.lax.broadcasted_iota(jnp.int32, (104, 52), 1)
        sel = (rows == 2 * cols).astype(jnp.float32)

        w1 = w1_ref[...]; b1 = b1_ref[...]
        w2 = w2_ref[...]; b2 = b2_ref[...]
        w3 = w3_ref[...]; b3 = b3_ref[...]

        for b in range(B):                                    # static unroll
            xb = x_ref[b]                                     # (1, 112)
            # conv1 (C_in=1): VPU outer-product broadcast over the 3 taps
            h1 = (w1[:, 0:1] * xb[:, 0:110]
                  + w1[:, 1:2] * xb[:, 1:111]
                  + w1[:, 2:3] * xb[:, 2:112] + b1)           # (32, 110)
            # conv2: im2col along sublanes, one MXU dot with K = 3*32
            c2 = jnp.concatenate([h1[:, t:t + 108] for t in range(3)], axis=0)
            h2 = jnp.dot(w2, c2, preferred_element_type=jnp.float32) + b2   # (64, 108)
            # conv3: K = 3*64
            c3 = jnp.concatenate([h2[:, t:t + 106] for t in range(3)], axis=0)
            h3 = jnp.dot(w3, c3, preferred_element_type=jnp.float32) + b3   # (128, 106)
            # maxpool kernel=3 stride=2 -> (128, 52)
            m = jnp.maximum(jnp.maximum(h3[:, 0:104], h3[:, 1:105]), h3[:, 2:106])
            pb = jnp.dot(m, sel, preferred_element_type=jnp.float32)        # (128, 52)
            # flatten: scratch row (b*52 + l) holds the 128 channels at pool pos l
            pooled_ref[pl.ds(b * 52, 52), :] = pb.T                         # (52, 128)

    # -------- dense1 partial sum for this weight chunk ------------------------
    # chunk k covers pool positions [k*LP, (k+1)*LP)
    acc = acc_ref[...]
    for l in range(LP):                                       # static unroll
        lg = k * LP + l
        a = pooled_ref[pl.ds(lg, B, stride=52), :]            # (B, 128)
        acc = acc + jnp.dot(a, wd1_ref[l], preferred_element_type=jnp.float32)
    acc_ref[...] = acc

    # -------- finalize: dense1 bias + dense2 + dense3 + output ----------------
    @pl.when(k == nk - 1)
    def _mlp_tail():
        h = acc_ref[...] + bd1_ref[...]                                        # (B, 512)
        h = jnp.dot(h, wd2_ref[...], preferred_element_type=jnp.float32) + bd2_ref[...]
        h = jnp.dot(h, wd3_ref[...], preferred_element_type=jnp.float32) + bd3_ref[...]
        o_ref[...] = jnp.dot(h, wo_ref[...], preferred_element_type=jnp.float32) + bo_ref[...]


# --------------------------------- forward -----------------------------------
def pdcnn_forward(params, x):
    B, C_in, L = x.shape
    assert C_in == 1 and L == 112
    NK = 4                       # dense1 weight streamed in 4 chunks of 13 positions
    LP = 52 // NK
    assert 52 % NK == 0

    return pl.pallas_call(
        _pdcnn_kernel,
        out_shape=jax.ShapeDtypeStruct((B, 2), jnp.float32),
        grid=(NK,),
        in_specs=[
            pl.BlockSpec((B, 1, 112), lambda k: (0, 0, 0)),       # x (resident)
            pl.BlockSpec((32, 3), lambda k: (0, 0)),              # w1
            pl.BlockSpec((32, 1), lambda k: (0, 0)),              # b1
            pl.BlockSpec((64, 96), lambda k: (0, 0)),             # w2
            pl.BlockSpec((64, 1), lambda k: (0, 0)),              # b2
            pl.BlockSpec((128, 192), lambda k: (0, 0)),           # w3
            pl.BlockSpec((128, 1), lambda k: (0, 0)),             # b3
            pl.BlockSpec((LP, 128, 512), lambda k: (k, 0, 0)),    # wd1 (streamed)
            pl.BlockSpec((1, 512), lambda k: (0, 0)),             # bd1
            pl.BlockSpec((512, 256), lambda k: (0, 0)),           # wd2 (resident)
            pl.BlockSpec((1, 256), lambda k: (0, 0)),             # bd2
            pl.BlockSpec((256, 128), lambda k: (0, 0)),           # wd3 (resident)
            pl.BlockSpec((1, 128), lambda k: (0, 0)),             # bd3
            pl.BlockSpec((128, 2), lambda k: (0, 0)),             # wo  (resident)
            pl.BlockSpec((1, 2), lambda k: (0, 0)),               # bo
        ],
        out_specs=pl.BlockSpec((B, 2), lambda k: (0, 0)),
        scratch_shapes=[
            pltpu.VMEM((52 * B, 128), jnp.float32),   # pooled/flattened activation
            pltpu.VMEM((B, 512), jnp.float32),        # dense1 accumulator
        ],
        compiler_params=pltpu.CompilerParams(
            dimension_semantics=("arbitrary",)),
    )(x, params["w1"], params["b1"], params["w2"], params["b2"],
      params["w3"], params["b3"], params["wd1"], params["bd1"],
      params["wd2"], params["bd2"], params["wd3"], params["bd3"],
      params["wo"], params["bo"])


# -------------------------------- param init ---------------------------------
def init_params(key):
    ks = jax.random.split(key, 14)

    def u(k, shape, fan_in):
        bound = 1.0 / np.sqrt(fan_in)
        return jax.random.uniform(k, shape, jnp.float32, -bound, bound)

    p = {}
    # conv weights: (C_out, K*C_in) with [o, k*C_in + c] = torch_w[o, c, k]
    p["w1"] = u(ks[0], (32, 3), 1 * 3)
    p["b1"] = u(ks[1], (32, 1), 1 * 3)
    p["w2"] = u(ks[2], (64, 3 * 32), 32 * 3)
    p["b2"] = u(ks[3], (64, 1), 32 * 3)
    p["w3"] = u(ks[4], (128, 3 * 64), 64 * 3)
    p["b3"] = u(ks[5], (128, 1), 64 * 3)
    # dense1 weight: (52, 128, 512) with [l, c, n] = torch_w.T[c*52 + l, n]
    p["wd1"] = u(ks[6], (52, 128, 512), 6656)
    p["bd1"] = u(ks[7], (1, 512), 6656)
    p["wd2"] = u(ks[8], (512, 256), 512)
    p["bd2"] = u(ks[9], (1, 256), 512)
    p["wd3"] = u(ks[10], (256, 128), 256)
    p["bd3"] = u(ks[11], (1, 128), 256)
    p["wo"] = u(ks[12], (128, 2), 128)
    p["bo"] = u(ks[13], (1, 2), 128)
    return p


# ----------------------------- pure-JAX reference ----------------------------
def pdcnn_ref(params, x):
    def conv_ref(h, wf, b, cin):
        C_out = wf.shape[0]
        w_oik = wf.reshape(C_out, 3, cin).transpose(0, 2, 1)      # (O, I, K)
        y = jax.lax.conv_general_dilated(
            h, w_oik, (1,), "VALID", dimension_numbers=("NCH", "OIH", "NCH"))
        return y + b.reshape(1, -1, 1)

    def pool_ref(h, k=3, s=2):
        L = h.shape[-1]
        Lo = (L - k) // s + 1
        cols = s * jnp.arange(Lo)[:, None] + jnp.arange(k)[None, :]
        return jnp.max(h[..., cols], axis=-1)

    h = conv_ref(x, params["w1"], params["b1"], 1)
    h = conv_ref(h, params["w2"], params["b2"], 32)
    h = conv_ref(h, params["w3"], params["b3"], 64)
    h = pool_ref(h)
    h = h.reshape(h.shape[0], -1)                                 # channel-major flatten
    wd1_flat = params["wd1"].transpose(1, 0, 2).reshape(6656, 512)
    h = h @ wd1_flat + params["bd1"]
    h = h @ params["wd2"] + params["bd2"]
    h = h @ params["wd3"] + params["bd3"]
    h = h @ params["wo"] + params["bo"]
    return h


if __name__ == "__main__":
    key = jax.random.PRNGKey(0)
    pkey, xkey = jax.random.split(key)
    params = init_params(pkey)
    x = jax.random.normal(xkey, (8, 1, 112), jnp.float32)   # (B, C=1, L=112)

    out = jax.jit(pdcnn_forward)(params, x)
    out = jax.block_until_ready(out)
    assert out.shape == (8, 2)

    ref = pdcnn_ref(params, x)
    np.testing.assert_allclose(np.asarray(out), np.asarray(ref),
                               rtol=2e-3, atol=2e-3)
    print("KERNEL_OK")
</pallas_src>

<mosaic_0001>
module attributes {stable_mosaic.version = 11 : i64} {
  func.func @_pdcnn_kernel(%arg0: i32, %arg1: memref<8x1x112xf32, #tpu.memory_space<vmem>>, %arg2: memref<32x3xf32, #tpu.memory_space<vmem>>, %arg3: memref<32x1xf32, #tpu.memory_space<vmem>>, %arg4: memref<64x96xf32, #tpu.memory_space<vmem>>, %arg5: memref<64x1xf32, #tpu.memory_space<vmem>>, %arg6: memref<128x192xf32, #tpu.memory_space<vmem>>, %arg7: memref<128x1xf32, #tpu.memory_space<vmem>>, %arg8: memref<13x128x512xf32, #tpu.memory_space<vmem>>, %arg9: memref<1x512xf32, #tpu.memory_space<vmem>>, %arg10: memref<512x256xf32, #tpu.memory_space<vmem>>, %arg11: memref<1x256xf32, #tpu.memory_space<vmem>>, %arg12: memref<256x128xf32, #tpu.memory_space<vmem>>, %arg13: memref<1x128xf32, #tpu.memory_space<vmem>>, %arg14: memref<128x2xf32, #tpu.memory_space<vmem>>, %arg15: memref<1x2xf32, #tpu.memory_space<vmem>>, %arg16: memref<8x2xf32, #tpu.memory_space<vmem>>, %arg17: memref<416x128xf32, #tpu.memory_space<vmem>>, %arg18: memref<8x512xf32, #tpu.memory_space<vmem>>) attributes {dimension_semantics = [#tpu.dimension_semantics<arbitrary>], iteration_bounds = array<i64: 4>, scalar_prefetch = 0 : i64, scratch_operands = 2 : i64, tpu.core_type = #tpu.core_type<tc>, window_params = [{pipeline_mode = #tpu.pipeline_mode<synchronous>, transform_indices = @transform_0, window_bounds = array<i64: 8, 1, 112>}, {pipeline_mode = #tpu.pipeline_mode<synchronous>, transform_indices = @transform_1, window_bounds = array<i64: 32, 3>}, {pipeline_mode = #tpu.pipeline_mode<synchronous>, transform_indices = @transform_2, window_bounds = array<i64: 32, 1>}, {pipeline_mode = #tpu.pipeline_mode<synchronous>, transform_indices = @transform_3, window_bounds = array<i64: 64, 96>}, {pipeline_mode = #tpu.pipeline_mode<synchronous>, transform_indices = @transform_4, window_bounds = array<i64: 64, 1>}, {pipeline_mode = #tpu.pipeline_mode<synchronous>, transform_indices = @transform_5, window_bounds = array<i64: 128, 192>}, {pipeline_mode = #tpu.pipeline_mode<synchronous>, transform_indices = @transform_6, window_bounds = array<i64: 128, 1>}, {transform_indices = @transform_7, window_bounds = array<i64: 13, 128, 512>}, {pipeline_mode = #tpu.pipeline_mode<synchronous>, transform_indices = @transform_8, window_bounds = array<i64: 1, 512>}, {pipeline_mode = #tpu.pipeline_mode<synchronous>, transform_indices = @transform_9, window_bounds = array<i64: 512, 256>}, {pipeline_mode = #tpu.pipeline_mode<synchronous>, transform_indices = @transform_10, window_bounds = array<i64: 1, 256>}, {pipeline_mode = #tpu.pipeline_mode<synchronous>, transform_indices = @transform_11, window_bounds = array<i64: 256, 128>}, {pipeline_mode = #tpu.pipeline_mode<synchronous>, transform_indices = @transform_12, window_bounds = array<i64: 1, 128>}, {pipeline_mode = #tpu.pipeline_mode<synchronous>, transform_indices = @transform_13, window_bounds = array<i64: 128, 2>}, {pipeline_mode = #tpu.pipeline_mode<synchronous>, transform_indices = @transform_14, window_bounds = array<i64: 1, 2>}, {pipeline_mode = #tpu.pipeline_mode<synchronous>, transform_indices = @transform_15, window_bounds = array<i64: 8, 2>}]} {
    %c0_i32 = arith.constant 0 : i32
    %0 = arith.cmpi eq, %arg0, %c0_i32 : i32
    %1 = arith.extui %0 : i1 to i32
    %c0_i32_0 = arith.constant 0 : i32
    %2 = arith.cmpi ne, %1, %c0_i32_0 : i32
    scf.if %2 {
      %cst_71 = arith.constant 0.000000e+00 : f32
      %112 = vector.broadcast %cst_71 : f32 to vector<8x512xf32>
      %c0_72 = arith.constant 0 : index
      %c0_73 = arith.constant 0 : index
      %113 = vector.load %arg18[%c0_72, %c0_73] : memref<8x512xf32, #tpu.memory_space<vmem>>, vector<8x512xf32>
      tpu.vector_store %arg18[%c0_72, %c0_73], %112 {strides = array<i32>} : memref<8x512xf32, #tpu.memory_space<vmem>>, vector<8x512xf32>,
      %114 = tpu.iota {dimensions = array<i32: 0>} : vector<104x52xi32>
      %115 = tpu.iota {dimensions = array<i32: 1>} : vector<104x52xi32>
      %c2_i32_74 = arith.constant 2 : i32
      %116 = vector.broadcast %c2_i32_74 : i32 to vector<104x52xi32>
      %117 = arith.muli %116, %115 : vector<104x52xi32>
      %118 = arith.cmpi eq, %114, %117 : vector<104x52xi32>
      %119 = arith.extui %118 : vector<104x52xi1> to vector<104x52xi32>
      %120 = arith.sitofp %119 : vector<104x52xi32> to vector<104x52xf32>
      %c0_75 = arith.constant 0 : index
      %c0_76 = arith.constant 0 : index
      %121 = vector.load %arg2[%c0_75, %c0_76] : memref<32x3xf32, #tpu.memory_space<vmem>>, vector<32x3xf32>
      %c0_77 = arith.constant 0 : index
      %c0_78 = arith.constant 0 : index
      %122 = vector.load %arg3[%c0_77, %c0_78] : memref<32x1xf32, #tpu.memory_space<vmem>>, vector<32x1xf32>
      %c0_79 = arith.constant 0 : index
      %c0_80 = arith.constant 0 : index
      %123 = vector.load %arg4[%c0_79, %c0_80] : memref<64x96xf32, #tpu.memory_space<vmem>>, vector<64x96xf32>
      %c0_81 = arith.constant 0 : index
      %c0_82 = arith.constant 0 : index
      %124 = vector.load %arg5[%c0_81, %c0_82] : memref<64x1xf32, #tpu.memory_space<vmem>>, vector<64x1xf32>
      %c0_83 = arith.constant 0 : index
      %c0_84 = arith.constant 0 : index
      %125 = vector.load %arg6[%c0_83, %c0_84] : memref<128x192xf32, #tpu.memory_space<vmem>>, vector<128x192xf32>
      %c0_85 = arith.constant 0 : index
      %c0_86 = arith.constant 0 : index
      %126 = vector.load %arg7[%c0_85, %c0_86] : memref<128x1xf32, #tpu.memory_space<vmem>>, vector<128x1xf32>
      %c0_87 = arith.constant 0 : index
      %c0_88 = arith.constant 0 : index
      %c0_89 = arith.constant 0 : index
      %127 = vector.load %arg1[%c0_87, %c0_88, %c0_89] : memref<8x1x112xf32, #tpu.memory_space<vmem>>, vector<1x1x112xf32>
      %128 = vector.shape_cast %127 : vector<1x1x112xf32> to vector<1x112xf32>
      %129 = vector.extract_strided_slice %121 {offsets = [0, 0], sizes = [32, 1], strides = [1, 1]} : vector<32x3xf32> to vector<32x1xf32>
      %130 = vector.extract_strided_slice %128 {offsets = [0, 0], sizes = [1, 110], strides = [1, 1]} : vector<1x112xf32> to vector<1x110xf32>
      %131 = vector.broadcast %129 : vector<32x1xf32> to vector<32x110xf32>
      %132 = vector.broadcast %130 : vector<1x110xf32> to vector<32x110xf32>
      %133 = arith.mulf %131, %132 : vector<32x110xf32>
      %134 = vector.extract_strided_slice %121 {offsets = [0, 1], sizes = [32, 1], strides = [1, 1]} : vector<32x3xf32> to vector<32x1xf32>
      %135 = vector.extract_strided_slice %128 {offsets = [0, 1], sizes = [1, 110], strides = [1, 1]} : vector<1x112xf32> to vector<1x110xf32>
      %136 = vector.broadcast %134 : vector<32x1xf32> to vector<32x110xf32>
      %137 = vector.broadcast %135 : vector<1x110xf32> to vector<32x110xf32>
      %138 = arith.mulf %136, %137 : vector<32x110xf32>
      %139 = arith.addf %133, %138 : vector<32x110xf32>
      %140 = vector.extract_strided_slice %121 {offsets = [0, 2], sizes = [32, 1], strides = [1, 1]} : vector<32x3xf32> to vector<32x1xf32>
      %141 = vector.extract_strided_slice %128 {offsets = [0, 2], sizes = [1, 110], strides = [1, 1]} : vector<1x112xf32> to vector<1x110xf32>
      %142 = vector.broadcast %140 : vector<32x1xf32> to vector<32x110xf32>
      %143 = vector.broadcast %141 : vector<1x110xf32> to vector<32x110xf32>
      %144 = arith.mulf %142, %143 : vector<32x110xf32>
      %145 = arith.addf %139, %144 : vector<32x110xf32>
      %146 = vector.broadcast %122 : vector<32x1xf32> to vector<32x110xf32>
      %147 = arith.addf %145, %146 : vector<32x110xf32>
      %148 = vector.extract_strided_slice %147 {offsets = [0, 0], sizes = [32, 108], strides = [1, 1]} : vector<32x110xf32> to vector<32x108xf32>
      %149 = vector.extract_strided_slice %147 {offsets = [0, 1], sizes = [32, 108], strides = [1, 1]} : vector<32x110xf32> to vector<32x108xf32>
      %150 = vector.extract_strided_slice %147 {offsets = [0, 2], sizes = [32, 108], strides = [1, 1]} : vector<32x110xf32> to vector<32x108xf32>
      %151 = tpu.concatenate %148, %149, %150 in 0 : vector<32x108xf32>, vector<32x108xf32>, vector<32x108xf32> -> vector<96x108xf32>
      %cst_90 = arith.constant dense<0.000000e+00> : vector<64x108xf32>
      %152 = tpu.matmul %123, %151, %cst_90 {dimension_numbers = #tpu.dot_dimension_numbers<[1], [0], [0], [1], [0, 0, 1, 1], [], []>} : vector<64x96xf32>, vector<96x108xf32>, vector<64x108xf32> -> vector<64x108xf32>
      %153 = vector.broadcast %124 : vector<64x1xf32> to vector<64x108xf32>
      %154 = arith.addf %152, %153 : vector<64x108xf32>
      %155 = vector.extract_strided_slice %154 {offsets = [0, 0], sizes = [64, 106], strides = [1, 1]} : vector<64x108xf32> to vector<64x106xf32>
      %156 = vector.extract_strided_slice %154 {offsets = [0, 1], sizes = [64, 106], strides = [1, 1]} : vector<64x108xf32> to vector<64x106xf32>
      %157 = vector.extract_strided_slice %154 {offsets = [0, 2], sizes = [64, 106], strides = [1, 1]} : vector<64x108xf32> to vector<64x106xf32>
      %158 = tpu.concatenate %155, %156, %157 in 0 : vector<64x106xf32>, vector<64x106xf32>, vector<64x106xf32> -> vector<192x106xf32>
      %cst_91 = arith.constant dense<0.000000e+00> : vector<128x106xf32>
      %159 = tpu.matmul %125, %158, %cst_91 {dimension_numbers = #tpu.dot_dimension_numbers<[1], [0], [0], [1], [0, 0, 1, 1], [], []>} : vector<128x192xf32>, vector<192x106xf32>, vector<128x106xf32> -> vector<128x106xf32>
      %160 = vector.broadcast %126 : vector<128x1xf32> to vector<128x106xf32>
      %161 = arith.addf %159, %160 : vector<128x106xf32>
      %162 = vector.extract_strided_slice %161 {offsets = [0, 0], sizes = [128, 104], strides = [1, 1]} : vector<128x106xf32> to vector<128x104xf32>
      %163 = vector.extract_strided_slice %161 {offsets = [0, 1], sizes = [128, 104], strides = [1, 1]} : vector<128x106xf32> to vector<128x104xf32>
      %164 = arith.maximumf %162, %163 : vector<128x104xf32>
      %165 = vector.extract_strided_slice %161 {offsets = [0, 2], sizes = [128, 104], strides = [1, 1]} : vector<128x106xf32> to vector<128x104xf32>
      %166 = arith.maximumf %164, %165 : vector<128x104xf32>
      %cst_92 = arith.constant dense<0.000000e+00> : vector<128x52xf32>
      %167 = tpu.matmul %166, %120, %cst_92 {dimension_numbers = #tpu.dot_dimension_numbers<[1], [0], [0], [1], [0, 0, 1, 1], [], []>} : vector<128x104xf32>, vector<104x52xf32>, vector<128x52xf32> -> vector<128x52xf32>
      %168 = tpu.transpose %167, [1, 0] : vector<128x52xf32> -> vector<52x128xf32>
      %c0_93 = arith.constant 0 : index
      %c0_94 = arith.constant 0 : index
      %169 = vector.load %arg17[%c0_93, %c0_94] : memref<416x128xf32, #tpu.memory_space<vmem>>, vector<52x128xf32>
      tpu.vector_store %arg17[%c0_93, %c0_94], %168 {strides = array<i32>} : memref<416x128xf32, #tpu.memory_space<vmem>>, vector<52x128xf32>,
      %c1_95 = arith.constant 1 : index
      %c0_96 = arith.constant 0 : index
      %c0_97 = arith.constant 0 : index
      %170 = vector.load %arg1[%c1_95, %c0_96, %c0_97] : memref<8x1x112xf32, #tpu.memory_space<vmem>>, vector<1x1x112xf32>
      %171 = vector.shape_cast %170 : vector<1x1x112xf32> to vector<1x112xf32>
      %172 = vector.extract_strided_slice %121 {offsets = [0, 0], sizes = [32, 1], strides = [1, 1]} : vector<32x3xf32> to vector<32x1xf32>
      %173 = vector.extract_strided_slice %171 {offsets = [0, 0], sizes = [1, 110], strides = [1, 1]} : vector<1x112xf32> to vector<1x110xf32>
      %174 = vector.broadcast %172 : vector<32x1xf32> to vector<32x110xf32>
      %175 = vector.broadcast %173 : vector<1x110xf32> to vector<32x110xf32>
      %176 = arith.mulf %174, %175 : vector<32x110xf32>
      %177 = vector.extract_strided_slice %121 {offsets = [0, 1], sizes = [32, 1], strides = [1, 1]} : vector<32x3xf32> to vector<32x1xf32>
      %178 = vector.extract_strided_slice %171 {offsets = [0, 1], sizes = [1, 110], strides = [1, 1]} : vector<1x112xf32> to vector<1x110xf32>
      %179 = vector.broadcast %177 : vector<32x1xf32> to vector<32x110xf32>
      %180 = vector.broadcast %178 : vector<1x110xf32> to vector<32x110xf32>
      %181 = arith.mulf %179, %180 : vector<32x110xf32>
      %182 = arith.addf %176, %181 : vector<32x110xf32>
      %183 = vector.extract_strided_slice %121 {offsets = [0, 2], sizes = [32, 1], strides = [1, 1]} : vector<32x3xf32> to vector<32x1xf32>
      %184 = vector.extract_strided_slice %171 {offsets = [0, 2], sizes = [1, 110], strides = [1, 1]} : vector<1x112xf32> to vector<1x110xf32>
      %185 = vector.broadcast %183 : vector<32x1xf32> to vector<32x110xf32>
      %186 = vector.broadcast %184 : vector<1x110xf32> to vector<32x110xf32>
      %187 = arith.mulf %185, %186 : vector<32x110xf32>
      %188 = arith.addf %182, %187 : vector<32x110xf32>
      %189 = vector.broadcast %122 : vector<32x1xf32> to vector<32x110xf32>
      %190 = arith.addf %188, %189 : vector<32x110xf32>
      %191 = vector.extract_strided_slice %190 {offsets = [0, 0], sizes = [32, 108], strides = [1, 1]} : vector<32x110xf32> to vector<32x108xf32>
      %192 = vector.extract_strided_slice %190 {offsets = [0, 1], sizes = [32, 108], strides = [1, 1]} : vector<32x110xf32> to vector<32x108xf32>
      %193 = vector.extract_strided_slice %190 {offsets = [0, 2], sizes = [32, 108], strides = [1, 1]} : vector<32x110xf32> to vector<32x108xf32>
      %194 = tpu.concatenate %191, %192, %193 in 0 : vector<32x108xf32>, vector<32x108xf32>, vector<32x108xf32> -> vector<96x108xf32>
      %cst_98 = arith.constant dense<0.000000e+00> : vector<64x108xf32>
      %195 = tpu.matmul %123, %194, %cst_98 {dimension_numbers = #tpu.dot_dimension_numbers<[1], [0], [0], [1], [0, 0, 1, 1], [], []>} : vector<64x96xf32>, vector<96x108xf32>, vector<64x108xf32> -> vector<64x108xf32>
      %196 = vector.broadcast %124 : vector<64x1xf32> to vector<64x108xf32>
      %197 = arith.addf %195, %196 : vector<64x108xf32>
      %198 = vector.extract_strided_slice %197 {offsets = [0, 0], sizes = [64, 106], strides = [1, 1]} : vector<64x108xf32> to vector<64x106xf32>
      %199 = vector.extract_strided_slice %197 {offsets = [0, 1], sizes = [64, 106], strides = [1, 1]} : vector<64x108xf32> to vector<64x106xf32>
      %200 = vector.extract_strided_slice %197 {offsets = [0, 2], sizes = [64, 106], strides = [1, 1]} : vector<64x108xf32> to vector<64x106xf32>
      %201 = tpu.concatenate %198, %199, %200 in 0 : vector<64x106xf32>, vector<64x106xf32>, vector<64x106xf32> -> vector<192x106xf32>
      %cst_99 = arith.constant dense<0.000000e+00> : vector<128x106xf32>
      %202 = tpu.matmul %125, %201, %cst_99 {dimension_numbers = #tpu.dot_dimension_numbers<[1], [0], [0], [1], [0, 0, 1, 1], [], []>} : vector<128x192xf32>, vector<192x106xf32>, vector<128x106xf32> -> vector<128x106xf32>
      %203 = vector.broadcast %126 : vector<128x1xf32> to vector<128x106xf32>
      %204 = arith.addf %202, %203 : vector<128x106xf32>
      %205 = vector.extract_strided_slice %204 {offsets = [0, 0], sizes = [128, 104], strides = [1, 1]} : vector<128x106xf32> to vector<128x104xf32>
      %206 = vector.extract_strided_slice %204 {offsets = [0, 1], sizes = [128, 104], strides = [1, 1]} : vector<128x106xf32> to vector<128x104xf32>
      %207 = arith.maximumf %205, %206 : vector<128x104xf32>
      %208 = vector.extract_strided_slice %204 {offsets = [0, 2], sizes = [128, 104], strides = [1, 1]} : vector<128x106xf32> to vector<128x104xf32>
      %209 = arith.maximumf %207, %208 : vector<128x104xf32>
      %cst_100 = arith.constant dense<0.000000e+00> : vector<128x52xf32>
      %210 = tpu.matmul %209, %120, %cst_100 {dimension_numbers = #tpu.dot_dimension_numbers<[1], [0], [0], [1], [0, 0, 1, 1], [], []>} : vector<128x104xf32>, vector<104x52xf32>, vector<128x52xf32> -> vector<128x52xf32>
      %211 = tpu.transpose %210, [1, 0] : vector<128x52xf32> -> vector<52x128xf32>
      %c52 = arith.constant 52 : index
      %c0_101 = arith.constant 0 : index
      %212 = vector.load %arg17[%c52, %c0_101] : memref<416x128xf32, #tpu.memory_space<vmem>>, vector<52x128xf32>
      tpu.vector_store %arg17[%c52, %c0_101], %211 {strides = array<i32>} : memref<416x128xf32, #tpu.memory_space<vmem>>, vector<52x128xf32>,
      %c2_102 = arith.constant 2 : index
      %c0_103 = arith.constant 0 : index
      %c0_104 = arith.constant 0 : index
      %213 = vector.load %arg1[%c2_102, %c0_103, %c0_104] : memref<8x1x112xf32, #tpu.memory_space<vmem>>, vector<1x1x112xf32>
      %214 = vector.shape_cast %213 : vector<1x1x112xf32> to vector<1x112xf32>
      %215 = vector.extract_strided_slice %121 {offsets = [0, 0], sizes = [32, 1], strides = [1, 1]} : vector<32x3xf32> to vector<32x1xf32>
      %216 = vector.extract_strided_slice %214 {offsets = [0, 0], sizes = [1, 110], strides = [1, 1]} : vector<1x112xf32> to vector<1x110xf32>
      %217 = vector.broadcast %215 : vector<32x1xf32> to vector<32x110xf32>
      %218 = vector.broadcast %216 : vector<1x110xf32> to vector<32x110xf32>
      %219 = arith.mulf %217, %218 : vector<32x110xf32>
      %220 = vector.extract_strided_slice %121 {offsets = [0, 1], sizes = [32, 1], strides = [1, 1]} : vector<32x3xf32> to vector<32x1xf32>
      %221 = vector.extract_strided_slice %214 {offsets = [0, 1], sizes = [1, 110], strides = [1, 1]} : vector<1x112xf32> to vector<1x110xf32>
      %222 = vector.broadcast %220 : vector<32x1xf32> to vector<32x110xf32>
      %223 = vector.broadcast %221 : vector<1x110xf32> to vector<32x110xf32>
      %224 = arith.mulf %222, %223 : vector<32x110xf32>
      %225 = arith.addf %219, %224 : vector<32x110xf32>
      %226 = vector.extract_strided_slice %121 {offsets = [0, 2], sizes = [32, 1], strides = [1, 1]} : vector<32x3xf32> to vector<32x1xf32>
      %227 = vector.extract_strided_slice %214 {offsets = [0, 2], sizes = [1, 110], strides = [1, 1]} : vector<1x112xf32> to vector<1x110xf32>
      %228 = vector.broadcast %226 : vector<32x1xf32> to vector<32x110xf32>
      %229 = vector.broadcast %227 : vector<1x110xf32> to vector<32x110xf32>
      %230 = arith.mulf %228, %229 : vector<32x110xf32>
      %231 = arith.addf %225, %230 : vector<32x110xf32>
      %232 = vector.broadcast %122 : vector<32x1xf32> to vector<32x110xf32>
      %233 = arith.addf %231, %232 : vector<32x110xf32>
      %234 = vector.extract_strided_slice %233 {offsets = [0, 0], sizes = [32, 108], strides = [1, 1]} : vector<32x110xf32> to vector<32x108xf32>
      %235 = vector.extract_strided_slice %233 {offsets = [0, 1], sizes = [32, 108], strides = [1, 1]} : vector<32x110xf32> to vector<32x108xf32>
      %236 = vector.extract_strided_slice %233 {offsets = [0, 2], sizes = [32, 108], strides = [1, 1]} : vector<32x110xf32> to vector<32x108xf32>
      %237 = tpu.concatenate %234, %235, %236 in 0 : vector<32x108xf32>, vector<32x108xf32>, vector<32x108xf32> -> vector<96x108xf32>
      %cst_105 = arith.constant dense<0.000000e+00> : vector<64x108xf32>
      %238 = tpu.matmul %123, %237, %cst_105 {dimension_numbers = #tpu.dot_dimension_numbers<[1], [0], [0], [1], [0, 0, 1, 1], [], []>} : vector<64x96xf32>, vector<96x108xf32>, vector<64x108xf32> -> vector<64x108xf32>
      %239 = vector.broadcast %124 : vector<64x1xf32> to vector<64x108xf32>
      %240 = arith.addf %238, %239 : vector<64x108xf32>
      %241 = vector.extract_strided_slice %240 {offsets = [0, 0], sizes = [64, 106], strides = [1, 1]} : vector<64x108xf32> to vector<64x106xf32>
      %242 = vector.extract_strided_slice %240 {offsets = [0, 1], sizes = [64, 106], strides = [1, 1]} : vector<64x108xf32> to vector<64x106xf32>
      %243 = vector.extract_strided_slice %240 {offsets = [0, 2], sizes = [64, 106], strides = [1, 1]} : vector<64x108xf32> to vector<64x106xf32>
      %244 = tpu.concatenate %241, %242, %243 in 0 : vector<64x106xf32>, vector<64x106xf32>, vector<64x106xf32> -> vector<192x106xf32>
      %cst_106 = arith.constant dense<0.000000e+00> : vector<128x106xf32>
      %245 = tpu.matmul %125, %244, %cst_106 {dimension_numbers = #tpu.dot_dimension_numbers<[1], [0], [0], [1], [0, 0, 1, 1], [], []>} : vector<128x192xf32>, vector<192x106xf32>, vector<128x106xf32> -> vector<128x106xf32>
      %246 = vector.broadcast %126 : vector<128x1xf32> to vector<128x106xf32>
      %247 = arith.addf %245, %246 : vector<128x106xf32>
      %248 = vector.extract_strided_slice %247 {offsets = [0, 0], sizes = [128, 104], strides = [1, 1]} : vector<128x106xf32> to vector<128x104xf32>
      %249 = vector.extract_strided_slice %247 {offsets = [0, 1], sizes = [128, 104], strides = [1, 1]} : vector<128x106xf32> to vector<128x104xf32>
      %250 = arith.maximumf %248, %249 : vector<128x104xf32>
      %251 = vector.extract_strided_slice %247 {offsets = [0, 2], sizes = [128, 104], strides = [1, 1]} : vector<128x106xf32> to vector<128x104xf32>
      %252 = arith.maximumf %250, %251 : vector<128x104xf32>
      %cst_107 = arith.constant dense<0.000000e+00> : vector<128x52xf32>
      %253 = tpu.matmul %252, %120, %cst_107 {dimension_numbers = #tpu.dot_dimension_numbers<[1], [0], [0], [1], [0, 0, 1, 1], [], []>} : vector<128x104xf32>, vector<104x52xf32>, vector<128x52xf32> -> vector<128x52xf32>
      %254 = tpu.transpose %253, [1, 0] : vector<128x52xf32> -> vector<52x128xf32>
      %c104 = arith.constant 104 : index
      %c0_108 = arith.constant 0 : index
      %255 = vector.load %arg17[%c104, %c0_108] : memref<416x128xf32, #tpu.memory_space<vmem>>, vector<52x128xf32>
      tpu.vector_store %arg17[%c104, %c0_108], %254 {strides = array<i32>} : memref<416x128xf32, #tpu.memory_space<vmem>>, vector<52x128xf32>,
      %c3_109 = arith.constant 3 : index
      %c0_110 = arith.constant 0 : index
      %c0_111 = arith.constant 0 : index
      %256 = vector.load %arg1[%c3_109, %c0_110, %c0_111] : memref<8x1x112xf32, #tpu.memory_space<vmem>>, vector<1x1x112xf32>
      %257 = vector.shape_cast %256 : vector<1x1x112xf32> to vector<1x112xf32>
      %258 = vector.extract_strided_slice %121 {offsets = [0, 0], sizes = [32, 1], strides = [1, 1]} : vector<32x3xf32> to vector<32x1xf32>
      %259 = vector.extract_strided_slice %257 {offsets = [0, 0], sizes = [1, 110], strides = [1, 1]} : vector<1x112xf32> to vector<1x110xf32>
      %260 = vector.broadcast %258 : vector<32x1xf32> to vector<32x110xf32>
      %261 = vector.broadcast %259 : vector<1x110xf32> to vector<32x110xf32>
      %262 = arith.mulf %260, %261 : vector<32x110xf32>
      %263 = vector.extract_strided_slice %121 {offsets = [0, 1], sizes = [32, 1], strides = [1, 1]} : vector<32x3xf32> to vector<32x1xf32>
      %264 = vector.extract_strided_slice %257 {offsets = [0, 1], sizes = [1, 110], strides = [1, 1]} : vector<1x112xf32> to vector<1x110xf32>
      %265 = vector.broadcast %263 : vector<32x1xf32> to vector<32x110xf32>
      %266 = vector.broadcast %264 : vector<1x110xf32> to vector<32x110xf32>
      %267 = arith.mulf %265, %266 : vector<32x110xf32>
      %268 = arith.addf %262, %267 : vector<32x110xf32>
      %269 = vector.extract_strided_slice %121 {offsets = [0, 2], sizes = [32, 1], strides = [1, 1]} : vector<32x3xf32> to vector<32x1xf32>
      %270 = vector.extract_strided_slice %257 {offsets = [0, 2], sizes = [1, 110], strides = [1, 1]} : vector<1x112xf32> to vector<1x110xf32>
      %271 = vector.broadcast %269 : vector<32x1xf32> to vector<32x110xf32>
      %272 = vector.broadcast %270 : vector<1x110xf32> to vector<32x110xf32>
      %273 = arith.mulf %271, %272 : vector<32x110xf32>
      %274 = arith.addf %268, %273 : vector<32x110xf32>
      %275 = vector.broadcast %122 : vector<32x1xf32> to vector<32x110xf32>
      %276 = arith.addf %274, %275 : vector<32x110xf32>
      %277 = vector.extract_strided_slice %276 {offsets = [0, 0], sizes = [32, 108], strides = [1, 1]} : vector<32x110xf32> to vector<32x108xf32>
      %278 = vector.extract_strided_slice %276 {offsets = [0, 1], sizes = [32, 108], strides = [1, 1]} : vector<32x110xf32> to vector<32x108xf32>
      %279 = vector.extract_strided_slice %276 {offsets = [0, 2], sizes = [32, 108], strides = [1, 1]} : vector<32x110xf32> to vector<32x108xf32>
      %280 = tpu.concatenate %277, %278, %279 in 0 : vector<32x108xf32>, vector<32x108xf32>, vector<32x108xf32> -> vector<96x108xf32>
      %cst_112 = arith.constant dense<0.000000e+00> : vector<64x108xf32>
      %281 = tpu.matmul %123, %280, %cst_112 {dimension_numbers = #tpu.dot_dimension_numbers<[1], [0], [0], [1], [0, 0, 1, 1], [], []>} : vector<64x96xf32>, vector<96x108xf32>, vector<64x108xf32> -> vector<64x108xf32>
      %282 = vector.broadcast %124 : vector<64x1xf32> to vector<64x108xf32>
      %283 = arith.addf %281, %282 : vector<64x108xf32>
      %284 = vector.extract_strided_slice %283 {offsets = [0, 0], sizes = [64, 106], strides = [1, 1]} : vector<64x108xf32> to vector<64x106xf32>
      %285 = vector.extract_strided_slice %283 {offsets = [0, 1], sizes = [64, 106], strides = [1, 1]} : vector<64x108xf32> to vector<64x106xf32>
      %286 = vector.extract_strided_slice %283 {offsets = [0, 2], sizes = [64, 106], strides = [1, 1]} : vector<64x108xf32> to vector<64x106xf32>
      %287 = tpu.concatenate %284, %285, %286 in 0 : vector<64x106xf32>, vector<64x106xf32>, vector<64x106xf32> -> vector<192x106xf32>
      %cst_113 = arith.constant dense<0.000000e+00> : vector<128x106xf32>
      %288 = tpu.matmul %125, %287, %cst_113 {dimension_numbers = #tpu.dot_dimension_numbers<[1], [0], [0], [1], [0, 0, 1, 1], [], []>} : vector<128x192xf32>, vector<192x106xf32>, vector<128x106xf32> -> vector<128x106xf32>
      %289 = vector.broadcast %126 : vector<128x1xf32> to vector<128x106xf32>
      %290 = arith.addf %288, %289 : vector<128x106xf32>
      %291 = vector.extract_strided_slice %290 {offsets = [0, 0], sizes = [128, 104], strides = [1, 1]} : vector<128x106xf32> to vector<128x104xf32>
      %292 = vector.extract_strided_slice %290 {offsets = [0, 1], sizes = [128, 104], strides = [1, 1]} : vector<128x106xf32> to vector<128x104xf32>
      %293 = arith.maximumf %291, %292 : vector<128x104xf32>
      %294 = vector.extract_strided_slice %290 {offsets = [0, 2], sizes = [128, 104], strides = [1, 1]} : vector<128x106xf32> to vector<128x104xf32>
      %295 = arith.maximumf %293, %294 : vector<128x104xf32>
      %cst_114 = arith.constant dense<0.000000e+00> : vector<128x52xf32>
      %296 = tpu.matmul %295, %120, %cst_114 {dimension_numbers = #tpu.dot_dimension_numbers<[1], [0], [0], [1], [0, 0, 1, 1], [], []>} : vector<128x104xf32>, vector<104x52xf32>, vector<128x52xf32> -> vector<128x52xf32>
      %297 = tpu.transpose %296, [1, 0] : vector<128x52xf32> -> vector<52x128xf32>
      %c156 = arith.constant 156 : index
      %c0_115 = arith.constant 0 : index
      %298 = vector.load %arg17[%c156, %c0_115] : memref<416x128xf32, #tpu.memory_space<vmem>>, vector<52x128xf32>
      tpu.vector_store %arg17[%c156, %c0_115], %297 {strides = array<i32>} : memref<416x128xf32, #tpu.memory_space<vmem>>, vector<52x128xf32>,
      %c4_116 = arith.constant 4 : index
      %c0_117 = arith.constant 0 : index
      %c0_118 = arith.constant 0 : index
      %299 = vector.load %arg1[%c4_116, %c0_117, %c0_118] : memref<8x1x112xf32, #tpu.memory_space<vmem>>, vector<1x1x112xf32>
      %300 = vector.shape_cast %299 : vector<1x1x112xf32> to vector<1x112xf32>
      %301 = vector.extract_strided_slice %121 {offsets = [0, 0], sizes = [32, 1], strides = [1, 1]} : vector<32x3xf32> to vector<32x1xf32>
      %302 = vector.extract_strided_slice %300 {offsets = [0, 0], sizes = [1, 110], strides = [1, 1]} : vector<1x112xf32> to vector<1x110xf32>
      %303 = vector.broadcast %301 : vector<32x1xf32> to vector<32x110xf32>
      %304 = vector.broadcast %302 : vector<1x110xf32> to vector<32x110xf32>
      %305 = arith.mulf %303, %304 : vector<32x110xf32>
      %306 = vector.extract_strided_slice %121 {offsets = [0, 1], sizes = [32, 1], strides = [1, 1]} : vector<32x3xf32> to vector<32x1xf32>
      %307 = vector.extract_strided_slice %300 {offsets = [0, 1], sizes = [1, 110], strides = [1, 1]} : vector<1x112xf32> to vector<1x110xf32>
      %308 = vector.broadcast %306 : vector<32x1xf32> to vector<32x110xf32>
      %309 = vector.broadcast %307 : vector<1x110xf32> to vector<32x110xf32>
      %310 = arith.mulf %308, %309 : vector<32x110xf32>
      %311 = arith.addf %305, %310 : vector<32x110xf32>
      %312 = vector.extract_strided_slice %121 {offsets = [0, 2], sizes = [32, 1], strides = [1, 1]} : vector<32x3xf32> to vector<32x1xf32>
      %313 = vector.extract_strided_slice %300 {offsets = [0, 2], sizes = [1, 110], strides = [1, 1]} : vector<1x112xf32> to vector<1x110xf32>
      %314 = vector.broadcast %312 : vector<32x1xf32> to vector<32x110xf32>
      %315 = vector.broadcast %313 : vector<1x110xf32> to vector<32x110xf32>
      %316 = arith.mulf %314, %315 : vector<32x110xf32>
      %317 = arith.addf %311, %316 : vector<32x110xf32>
      %318 = vector.broadcast %122 : vector<32x1xf32> to vector<32x110xf32>
      %319 = arith.addf %317, %318 : vector<32x110xf32>
      %320 = vector.extract_strided_slice %319 {offsets = [0, 0], sizes = [32, 108], strides = [1, 1]} : vector<32x110xf32> to vector<32x108xf32>
      %321 = vector.extract_strided_slice %319 {offsets = [0, 1], sizes = [32, 108], strides = [1, 1]} : vector<32x110xf32> to vector<32x108xf32>
      %322 = vector.extract_strided_slice %319 {offsets = [0, 2], sizes = [32, 108], strides = [1, 1]} : vector<32x110xf32> to vector<32x108xf32>
      %323 = tpu.concatenate %320, %321, %322 in 0 : vector<32x108xf32>, vector<32x108xf32>, vector<32x108xf32> -> vector<96x108xf32>
      %cst_119 = arith.constant dense<0.000000e+00> : vector<64x108xf32>
      %324 = tpu.matmul %123, %323, %cst_119 {dimension_numbers = #tpu.dot_dimension_numbers<[1], [0], [0], [1], [0, 0, 1, 1], [], []>} : vector<64x96xf32>, vector<96x108xf32>, vector<64x108xf32> -> vector<64x108xf32>
      %325 = vector.broadcast %124 : vector<64x1xf32> to vector<64x108xf32>
      %326 = arith.addf %324, %325 : vector<64x108xf32>
      %327 = vector.extract_strided_slice %326 {offsets = [0, 0], sizes = [64, 106], strides = [1, 1]} : vector<64x108xf32> to vector<64x106xf32>
      %328 = vector.extract_strided_slice %326 {offsets = [0, 1], sizes = [64, 106], strides = [1, 1]} : vector<64x108xf32> to vector<64x106xf32>
      %329 = vector.extract_strided_slice %326 {offsets = [0, 2], sizes = [64, 106], strides = [1, 1]} : vector<64x108xf32> to vector<64x106xf32>
      %330 = tpu.concatenate %327, %328, %329 in 0 : vector<64x106xf32>, vector<64x106xf32>, vector<64x106xf32> -> vector<192x106xf32>
      %cst_120 = arith.constant dense<0.000000e+00> : vector<128x106xf32>
      %331 = tpu.matmul %125, %330, %cst_120 {dimension_numbers = #tpu.dot_dimension_numbers<[1], [0], [0], [1], [0, 0, 1, 1], [], []>} : vector<128x192xf32>, vector<192x106xf32>, vector<128x106xf32> -> vector<128x106xf32>
      %332 = vector.broadcast %126 : vector<128x1xf32> to vector<128x106xf32>
      %333 = arith.addf %331, %332 : vector<128x106xf32>
      %334 = vector.extract_strided_slice %333 {offsets = [0, 0], sizes = [128, 104], strides = [1, 1]} : vector<128x106xf32> to vector<128x104xf32>
      %335 = vector.extract_strided_slice %333 {offsets = [0, 1], sizes = [128, 104], strides = [1, 1]} : vector<128x106xf32> to vector<128x104xf32>
      %336 = arith.maximumf %334, %335 : vector<128x104xf32>
      %337 = vector.extract_strided_slice %333 {offsets = [0, 2], sizes = [128, 104], strides = [1, 1]} : vector<128x106xf32> to vector<128x104xf32>
      %338 = arith.maximumf %336, %337 : vector<128x104xf32>
      %cst_121 = arith.constant dense<0.000000e+00> : vector<128x52xf32>
      %339 = tpu.matmul %338, %120, %cst_121 {dimension_numbers = #tpu.dot_dimension_numbers<[1], [0], [0], [1], [0, 0, 1, 1], [], []>} : vector<128x104xf32>, vector<104x52xf32>, vector<128x52xf32> -> vector<128x52xf32>
      %340 = tpu.transpose %339, [1, 0] : vector<128x52xf32> -> vector<52x128xf32>
      %c208 = arith.constant 208 : index
      %c0_122 = arith.constant 0 : index
      %341 = vector.load %arg17[%c208, %c0_122] : memref<416x128xf32, #tpu.memory_space<vmem>>, vector<52x128xf32>
      tpu.vector_store %arg17[%c208, %c0_122], %340 {strides = array<i32>} : memref<416x128xf32, #tpu.memory_space<vmem>>, vector<52x128xf32>,
      %c5_123 = arith.constant 5 : index
      %c0_124 = arith.constant 0 : index
      %c0_125 = arith.constant 0 : index
      %342 = vector.load %arg1[%c5_123, %c0_124, %c0_125] : memref<8x1x112xf32, #tpu.memory_space<vmem>>, vector<1x1x112xf32>
      %343 = vector.shape_cast %342 : vector<1x1x112xf32> to vector<1x112xf32>
      %344 = vector.extract_strided_slice %121 {offsets = [0, 0], sizes = [32, 1], strides = [1, 1]} : vector<32x3xf32> to vector<32x1xf32>
      %345 = vector.extract_strided_slice %343 {offsets = [0, 0], sizes = [1, 110], strides = [1, 1]} : vector<1x112xf32> to vector<1x110xf32>
      %346 = vector.broadcast %344 : vector<32x1xf32> to vector<32x110xf32>
      %347 = vector.broadcast %345 : vector<1x110xf32> to vector<32x110xf32>
      %348 = arith.mulf %346, %347 : vector<32x110xf32>
      %349 = vector.extract_strided_slice %121 {offsets = [0, 1], sizes = [32, 1], strides = [1, 1]} : vector<32x3xf32> to vector<32x1xf32>
      %350 = vector.extract_strided_slice %343 {offsets = [0, 1], sizes = [1, 110], strides = [1, 1]} : vector<1x112xf32> to vector<1x110xf32>
      %351 = vector.broadcast %349 : vector<32x1xf32> to vector<32x110xf32>
      %352 = vector.broadcast %350 : vector<1x110xf32> to vector<32x110xf32>
      %353 = arith.mulf %351, %352 : vector<32x110xf32>
      %354 = arith.addf %348, %353 : vector<32x110xf32>
      %355 = vector.extract_strided_slice %121 {offsets = [0, 2], sizes = [32, 1], strides = [1, 1]} : vector<32x3xf32> to vector<32x1xf32>
      %356 = vector.extract_strided_slice %343 {offsets = [0, 2], sizes = [1, 110], strides = [1, 1]} : vector<1x112xf32> to vector<1x110xf32>
      %357 = vector.broadcast %355 : vector<32x1xf32> to vector<32x110xf32>
      %358 = vector.broadcast %356 : vector<1x110xf32> to vector<32x110xf32>
      %359 = arith.mulf %357, %358 : vector<32x110xf32>
      %360 = arith.addf %354, %359 : vector<32x110xf32>
      %361 = vector.broadcast %122 : vector<32x1xf32> to vector<32x110xf32>
      %362 = arith.addf %360, %361 : vector<32x110xf32>
      %363 = vector.extract_strided_slice %362 {offsets = [0, 0], sizes = [32, 108], strides = [1, 1]} : vector<32x110xf32> to vector<32x108xf32>
      %364 = vector.extract_strided_slice %362 {offsets = [0, 1], sizes = [32, 108], strides = [1, 1]} : vector<32x110xf32> to vector<32x108xf32>
      %365 = vector.extract_strided_slice %362 {offsets = [0, 2], sizes = [32, 108], strides = [1, 1]} : vector<32x110xf32> to vector<32x108xf32>
      %366 = tpu.concatenate %363, %364, %365 in 0 : vector<32x108xf32>, vector<32x108xf32>, vector<32x108xf32> -> vector<96x108xf32>
      %cst_126 = arith.constant dense<0.000000e+00> : vector<64x108xf32>
      %367 = tpu.matmul %123, %366, %cst_126 {dimension_numbers = #tpu.dot_dimension_numbers<[1], [0], [0], [1], [0, 0, 1, 1], [], []>} : vector<64x96xf32>, vector<96x108xf32>, vector<64x108xf32> -> vector<64x108xf32>
      %368 = vector.broadcast %124 : vector<64x1xf32> to vector<64x108xf32>
      %369 = arith.addf %367, %368 : vector<64x108xf32>
      %370 = vector.extract_strided_slice %369 {offsets = [0, 0], sizes = [64, 106], strides = [1, 1]} : vector<64x108xf32> to vector<64x106xf32>
      %371 = vector.extract_strided_slice %369 {offsets = [0, 1], sizes = [64, 106], strides = [1, 1]} : vector<64x108xf32> to vector<64x106xf32>
      %372 = vector.extract_strided_slice %369 {offsets = [0, 2], sizes = [64, 106], strides = [1, 1]} : vector<64x108xf32> to vector<64x106xf32>
      %373 = tpu.concatenate %370, %371, %372 in 0 : vector<64x106xf32>, vector<64x106xf32>, vector<64x106xf32> -> vector<192x106xf32>
      %cst_127 = arith.constant dense<0.000000e+00> : vector<128x106xf32>
      %374 = tpu.matmul %125, %373, %cst_127 {dimension_numbers = #tpu.dot_dimension_numbers<[1], [0], [0], [1], [0, 0, 1, 1], [], []>} : vector<128x192xf32>, vector<192x106xf32>, vector<128x106xf32> -> vector<128x106xf32>
      %375 = vector.broadcast %126 : vector<128x1xf32> to vector<128x106xf32>
      %376 = arith.addf %374, %375 : vector<128x106xf32>
      %377 = vector.extract_strided_slice %376 {offsets = [0, 0], sizes = [128, 104], strides = [1, 1]} : vector<128x106xf32> to vector<128x104xf32>
      %378 = vector.extract_strided_slice %376 {offsets = [0, 1], sizes = [128, 104], strides = [1, 1]} : vector<128x106xf32> to vector<128x104xf32>
      %379 = arith.maximumf %377, %378 : vector<128x104xf32>
      %380 = vector.extract_strided_slice %376 {offsets = [0, 2], sizes = [128, 104], strides = [1, 1]} : vector<128x106xf32> to vector<128x104xf32>
      %381 = arith.maximumf %379, %380 : vector<128x104xf32>
      %cst_128 = arith.constant dense<0.000000e+00> : vector<128x52xf32>
      %382 = tpu.matmul %381, %120, %cst_128 {dimension_numbers = #tpu.dot_dimension_numbers<[1], [0], [0], [1], [0, 0, 1, 1], [], []>} : vector<128x104xf32>, vector<104x52xf32>, vector<128x52xf32> -> vector<128x52xf32>
      %383 = tpu.transpose %382, [1, 0] : vector<128x52xf32> -> vector<52x128xf32>
      %c260 = arith.constant 260 : index
      %c0_129 = arith.constant 0 : index
      %384 = vector.load %arg17[%c260, %c0_129] : memref<416x128xf32, #tpu.memory_space<vmem>>, vector<52x128xf32>
      tpu.vector_store %arg17[%c260, %c0_129], %383 {strides = array<i32>} : memref<416x128xf32, #tpu.memory_space<vmem>>, vector<52x128xf32>,
      %c6_130 = arith.constant 6 : index
      %c0_131 = arith.constant 0 : index
      %c0_132 = arith.constant 0 : index
      %385 = vector.load %arg1[%c6_130, %c0_131, %c0_132] : memref<8x1x112xf32, #tpu.memory_space<vmem>>, vector<1x1x112xf32>
      %386 = vector.shape_cast %385 : vector<1x1x112xf32> to vector<1x112xf32>
      %387 = vector.extract_strided_slice %121 {offsets = [0, 0], sizes = [32, 1], strides = [1, 1]} : vector<32x3xf32> to vector<32x1xf32>
      %388 = vector.extract_strided_slice %386 {offsets = [0, 0], sizes = [1, 110], strides = [1, 1]} : vector<1x112xf32> to vector<1x110xf32>
      %389 = vector.broadcast %387 : vector<32x1xf32> to vector<32x110xf32>
      %390 = vector.broadcast %388 : vector<1x110xf32> to vector<32x110xf32>
      %391 = arith.mulf %389, %390 : vector<32x110xf32>
      %392 = vector.extract_strided_slice %121 {offsets = [0, 1], sizes = [32, 1], strides = [1, 1]} : vector<32x3xf32> to vector<32x1xf32>
      %393 = vector.extract_strided_slice %386 {offsets = [0, 1], sizes = [1, 110], strides = [1, 1]} : vector<1x112xf32> to vector<1x110xf32>
      %394 = vector.broadcast %392 : vector<32x1xf32> to vector<32x110xf32>
      %395 = vector.broadcast %393 : vector<1x110xf32> to vector<32x110xf32>
      %396 = arith.mulf %394, %395 : vector<32x110xf32>
      %397 = arith.addf %391, %396 : vector<32x110xf32>
      %398 = vector.extract_strided_slice %121 {offsets = [0, 2], sizes = [32, 1], strides = [1, 1]} : vector<32x3xf32> to vector<32x1xf32>
      %399 = vector.extract_strided_slice %386 {offsets = [0, 2], sizes = [1, 110], strides = [1, 1]} : vector<1x112xf32> to vector<1x110xf32>
      %400 = vector.broadcast %398 : vector<32x1xf32> to vector<32x110xf32>
      %401 = vector.broadcast %399 : vector<1x110xf32> to vector<32x110xf32>
      %402 = arith.mulf %400, %401 : vector<32x110xf32>
      %403 = arith.addf %397, %402 : vector<32x110xf32>
      %404 = vector.broadcast %122 : vector<32x1xf32> to vector<32x110xf32>
      %405 = arith.addf %403, %404 : vector<32x110xf32>
      %406 = vector.extract_strided_slice %405 {offsets = [0, 0], sizes = [32, 108], strides = [1, 1]} : vector<32x110xf32> to vector<32x108xf32>
      %407 = vector.extract_strided_slice %405 {offsets = [0, 1], sizes = [32, 108], strides = [1, 1]} : vector<32x110xf32> to vector<32x108xf32>
      %408 = vector.extract_strided_slice %405 {offsets = [0, 2], sizes = [32, 108], strides = [1, 1]} : vector<32x110xf32> to vector<32x108xf32>
      %409 = tpu.concatenate %406, %407, %408 in 0 : vector<32x108xf32>, vector<32x108xf32>, vector<32x108xf32> -> vector<96x108xf32>
      %cst_133 = arith.constant dense<0.000000e+00> : vector<64x108xf32>
      %410 = tpu.matmul %123, %409, %cst_133 {dimension_numbers = #tpu.dot_dimension_numbers<[1], [0], [0], [1], [0, 0, 1, 1], [], []>} : vector<64x96xf32>, vector<96x108xf32>, vector<64x108xf32> -> vector<64x108xf32>
      %411 = vector.broadcast %124 : vector<64x1xf32> to vector<64x108xf32>
      %412 = arith.addf %410, %411 : vector<64x108xf32>
      %413 = vector.extract_strided_slice %412 {offsets = [0, 0], sizes = [64, 106], strides = [1, 1]} : vector<64x108xf32> to vector<64x106xf32>
      %414 = vector.extract_strided_slice %412 {offsets = [0, 1], sizes = [64, 106], strides = [1, 1]} : vector<64x108xf32> to vector<64x106xf32>
      %415 = vector.extract_strided_slice %412 {offsets = [0, 2], sizes = [64, 106], strides = [1, 1]} : vector<64x108xf32> to vector<64x106xf32>
      %416 = tpu.concatenate %413, %414, %415 in 0 : vector<64x106xf32>, vector<64x106xf32>, vector<64x106xf32> -> vector<192x106xf32>
      %cst_134 = arith.constant dense<0.000000e+00> : vector<128x106xf32>
      %417 = tpu.matmul %125, %416, %cst_134 {dimension_numbers = #tpu.dot_dimension_numbers<[1], [0], [0], [1], [0, 0, 1, 1], [], []>} : vector<128x192xf32>, vector<192x106xf32>, vector<128x106xf32> -> vector<128x106xf32>
      %418 = vector.broadcast %126 : vector<128x1xf32> to vector<128x106xf32>
      %419 = arith.addf %417, %418 : vector<128x106xf32>
      %420 = vector.extract_strided_slice %419 {offsets = [0, 0], sizes = [128, 104], strides = [1, 1]} : vector<128x106xf32> to vector<128x104xf32>
      %421 = vector.extract_strided_slice %419 {offsets = [0, 1], sizes = [128, 104], strides = [1, 1]} : vector<128x106xf32> to vector<128x104xf32>
      %422 = arith.maximumf %420, %421 : vector<128x104xf32>
      %423 = vector.extract_strided_slice %419 {offsets = [0, 2], sizes = [128, 104], strides = [1, 1]} : vector<128x106xf32> to vector<128x104xf32>
      %424 = arith.maximumf %422, %423 : vector<128x104xf32>
      %cst_135 = arith.constant dense<0.000000e+00> : vector<128x52xf32>
      %425 = tpu.matmul %424, %120, %cst_135 {dimension_numbers = #tpu.dot_dimension_numbers<[1], [0], [0], [1], [0, 0, 1, 1], [], []>} : vector<128x104xf32>, vector<104x52xf32>, vector<128x52xf32> -> vector<128x52xf32>
      %426 = tpu.transpose %425, [1, 0] : vector<128x52xf32> -> vector<52x128xf32>
      %c312 = arith.constant 312 : index
      %c0_136 = arith.constant 0 : index
      %427 = vector.load %arg17[%c312, %c0_136] : memref<416x128xf32, #tpu.memory_space<vmem>>, vector<52x128xf32>
      tpu.vector_store %arg17[%c312, %c0_136], %426 {strides = array<i32>} : memref<416x128xf32, #tpu.memory_space<vmem>>, vector<52x128xf32>,
      %c7_137 = arith.constant 7 : index
      %c0_138 = arith.constant 0 : index
      %c0_139 = arith.constant 0 : index
      %428 = vector.load %arg1[%c7_137, %c0_138, %c0_139] : memref<8x1x112xf32, #tpu.memory_space<vmem>>, vector<1x1x112xf32>
      %429 = vector.shape_cast %428 : vector<1x1x112xf32> to vector<1x112xf32>
      %430 = vector.extract_strided_slice %121 {offsets = [0, 0], sizes = [32, 1], strides = [1, 1]} : vector<32x3xf32> to vector<32x1xf32>
      %431 = vector.extract_strided_slice %429 {offsets = [0, 0], sizes = [1, 110], strides = [1, 1]} : vector<1x112xf32> to vector<1x110xf32>
      %432 = vector.broadcast %430 : vector<32x1xf32> to vector<32x110xf32>
      %433 = vector.broadcast %431 : vector<1x110xf32> to vector<32x110xf32>
      %434 = arith.mulf %432, %433 : vector<32x110xf32>
      %435 = vector.extract_strided_slice %121 {offsets = [0, 1], sizes = [32, 1], strides = [1, 1]} : vector<32x3xf32> to vector<32x1xf32>
      %436 = vector.extract_strided_slice %429 {offsets = [0, 1], sizes = [1, 110], strides = [1, 1]} : vector<1x112xf32> to vector<1x110xf32>
      %437 = vector.broadcast %435 : vector<32x1xf32> to vector<32x110xf32>
      %438 = vector.broadcast %436 : vector<1x110xf32> to vector<32x110xf32>
      %439 = arith.mulf %437, %438 : vector<32x110xf32>
      %440 = arith.addf %434, %439 : vector<32x110xf32>
      %441 = vector.extract_strided_slice %121 {offsets = [0, 2], sizes = [32, 1], strides = [1, 1]} : vector<32x3xf32> to vector<32x1xf32>
      %442 = vector.extract_strided_slice %429 {offsets = [0, 2], sizes = [1, 110], strides = [1, 1]} : vector<1x112xf32> to vector<1x110xf32>
      %443 = vector.broadcast %441 : vector<32x1xf32> to vector<32x110xf32>
      %444 = vector.broadcast %442 : vector<1x110xf32> to vector<32x110xf32>
      %445 = arith.mulf %443, %444 : vector<32x110xf32>
      %446 = arith.addf %440, %445 : vector<32x110xf32>
      %447 = vector.broadcast %122 : vector<32x1xf32> to vector<32x110xf32>
      %448 = arith.addf %446, %447 : vector<32x110xf32>
      %449 = vector.extract_strided_slice %448 {offsets = [0, 0], sizes = [32, 108], strides = [1, 1]} : vector<32x110xf32> to vector<32x108xf32>
      %450 = vector.extract_strided_slice %448 {offsets = [0, 1], sizes = [32, 108], strides = [1, 1]} : vector<32x110xf32> to vector<32x108xf32>
      %451 = vector.extract_strided_slice %448 {offsets = [0, 2], sizes = [32, 108], strides = [1, 1]} : vector<32x110xf32> to vector<32x108xf32>
      %452 = tpu.concatenate %449, %450, %451 in 0 : vector<32x108xf32>, vector<32x108xf32>, vector<32x108xf32> -> vector<96x108xf32>
      %cst_140 = arith.constant dense<0.000000e+00> : vector<64x108xf32>
      %453 = tpu.matmul %123, %452, %cst_140 {dimension_numbers = #tpu.dot_dimension_numbers<[1], [0], [0], [1], [0, 0, 1, 1], [], []>} : vector<64x96xf32>, vector<96x108xf32>, vector<64x108xf32> -> vector<64x108xf32>
      %454 = vector.broadcast %124 : vector<64x1xf32> to vector<64x108xf32>
      %455 = arith.addf %453, %454 : vector<64x108xf32>
      %456 = vector.extract_strided_slice %455 {offsets = [0, 0], sizes = [64, 106], strides = [1, 1]} : vector<64x108xf32> to vector<64x106xf32>
      %457 = vector.extract_strided_slice %455 {offsets = [0, 1], sizes = [64, 106], strides = [1, 1]} : vector<64x108xf32> to vector<64x106xf32>
      %458 = vector.extract_strided_slice %455 {offsets = [0, 2], sizes = [64, 106], strides = [1, 1]} : vector<64x108xf32> to vector<64x106xf32>
      %459 = tpu.concatenate %456, %457, %458 in 0 : vector<64x106xf32>, vector<64x106xf32>, vector<64x106xf32> -> vector<192x106xf32>
      %cst_141 = arith.constant dense<0.000000e+00> : vector<128x106xf32>
      %460 = tpu.matmul %125, %459, %cst_141 {dimension_numbers = #tpu.dot_dimension_numbers<[1], [0], [0], [1], [0, 0, 1, 1], [], []>} : vector<128x192xf32>, vector<192x106xf32>, vector<128x106xf32> -> vector<128x106xf32>
      %461 = vector.broadcast %126 : vector<128x1xf32> to vector<128x106xf32>
      %462 = arith.addf %460, %461 : vector<128x106xf32>
      %463 = vector.extract_strided_slice %462 {offsets = [0, 0], sizes = [128, 104], strides = [1, 1]} : vector<128x106xf32> to vector<128x104xf32>
      %464 = vector.extract_strided_slice %462 {offsets = [0, 1], sizes = [128, 104], strides = [1, 1]} : vector<128x106xf32> to vector<128x104xf32>
      %465 = arith.maximumf %463, %464 : vector<128x104xf32>
      %466 = vector.extract_strided_slice %462 {offsets = [0, 2], sizes = [128, 104], strides = [1, 1]} : vector<128x106xf32> to vector<128x104xf32>
      %467 = arith.maximumf %465, %466 : vector<128x104xf32>
      %cst_142 = arith.constant dense<0.000000e+00> : vector<128x52xf32>
      %468 = tpu.matmul %467, %120, %cst_142 {dimension_numbers = #tpu.dot_dimension_numbers<[1], [0], [0], [1], [0, 0, 1, 1], [], []>} : vector<128x104xf32>, vector<104x52xf32>, vector<128x52xf32> -> vector<128x52xf32>
      %469 = tpu.transpose %468, [1, 0] : vector<128x52xf32> -> vector<52x128xf32>
      %c364 = arith.constant 364 : index
      %c0_143 = arith.constant 0 : index
      %470 = vector.load %arg17[%c364, %c0_143] : memref<416x128xf32, #tpu.memory_space<vmem>>, vector<52x128xf32>
      tpu.vector_store %arg17[%c364, %c0_143], %469 {strides = array<i32>} : memref<416x128xf32, #tpu.memory_space<vmem>>, vector<52x128xf32>,
    } else {
    }
    %c0 = arith.constant 0 : index
    %c0_1 = arith.constant 0 : index
    %3 = vector.load %arg18[%c0, %c0_1] : memref<8x512xf32, #tpu.memory_space<vmem>>, vector<8x512xf32>
    %c13_i32 = arith.constant 13 : i32
    %4 = arith.muli %arg0, %c13_i32 : i32
    %c0_i32_2 = arith.constant 0 : i32
    %5 = arith.addi %4, %c0_i32_2 : i32
    %6 = arith.index_cast %5 : i32 to index
    %c0_3 = arith.constant 0 : index
    %7 = tpu.strided_load %arg17[%6, %c0_3] {strides = array<i32: 52, 1>} : memref<416x128xf32, #tpu.memory_space<vmem>>, vector<8x128xf32>
    %c0_4 = arith.constant 0 : index
    %c0_5 = arith.constant 0 : index
    %c0_6 = arith.constant 0 : index
    %8 = vector.load %arg8[%c0_4, %c0_5, %c0_6] : memref<13x128x512xf32, #tpu.memory_space<vmem>>, vector<1x128x512xf32>
    %9 = vector.shape_cast %8 : vector<1x128x512xf32> to vector<128x512xf32>
    %cst = arith.constant dense<0.000000e+00> : vector<8x512xf32>
    %10 = tpu.matmul %7, %9, %cst {dimension_numbers = #tpu.dot_dimension_numbers<[1], [0], [0], [1], [0, 0, 1, 1], [], []>} : vector<8x128xf32>, vector<128x512xf32>, vector<8x512xf32> -> vector<8x512xf32>
    %11 = arith.addf %3, %10 : vector<8x512xf32>
    %c13_i32_7 = arith.constant 13 : i32
    %12 = arith.muli %arg0, %c13_i32_7 : i32
    %c1_i32 = arith.constant 1 : i32
    %13 = arith.addi %12, %c1_i32 : i32
    %14 = arith.index_cast %13 : i32 to index
    %c0_8 = arith.constant 0 : index
    %15 = tpu.strided_load %arg17[%14, %c0_8] {strides = array<i32: 52, 1>} : memref<416x128xf32, #tpu.memory_space<vmem>>, vector<8x128xf32>
    %c1 = arith.constant 1 : index
    %c0_9 = arith.constant 0 : index
    %c0_10 = arith.constant 0 : index
    %16 = vector.load %arg8[%c1, %c0_9, %c0_10] : memref<13x128x512xf32, #tpu.memory_space<vmem>>, vector<1x128x512xf32>
    %17 = vector.shape_cast %16 : vector<1x128x512xf32> to vector<128x512xf32>
    %cst_11 = arith.constant dense<0.000000e+00> : vector<8x512xf32>
    %18 = tpu.matmul %15, %17, %cst_11 {dimension_numbers = #tpu.dot_dimension_numbers<[1], [0], [0], [1], [0, 0, 1, 1], [], []>} : vector<8x128xf32>, vector<128x512xf32>, vector<8x512xf32> -> vector<8x512xf32>
    %19 = arith.addf %11, %18 : vector<8x512xf32>
    %c13_i32_12 = arith.constant 13 : i32
    %20 = arith.muli %arg0, %c13_i32_12 : i32
    %c2_i32 = arith.constant 2 : i32
    %21 = arith.addi %20, %c2_i32 : i32
    %22 = arith.index_cast %21 : i32 to index
    %c0_13 = arith.constant 0 : index
    %23 = tpu.strided_load %arg17[%22, %c0_13] {strides = array<i32: 52, 1>} : memref<416x128xf32, #tpu.memory_space<vmem>>, vector<8x128xf32>
    %c2 = arith.constant 2 : index
    %c0_14 = arith.constant 0 : index
    %c0_15 = arith.constant 0 : index
    %24 = vector.load %arg8[%c2, %c0_14, %c0_15] : memref<13x128x512xf32, #tpu.memory_space<vmem>>, vector<1x128x512xf32>
    %25 = vector.shape_cast %24 : vector<1x128x512xf32> to vector<128x512xf32>
    %cst_16 = arith.constant dense<0.000000e+00> : vector<8x512xf32>
    %26 = tpu.matmul %23, %25, %cst_16 {dimension_numbers = #tpu.dot_dimension_numbers<[1], [0], [0], [1], [0, 0, 1, 1], [], []>} : vector<8x128xf32>, vector<128x512xf32>, vector<8x512xf32> -> vector<8x512xf32>
    %27 = arith.addf %19, %26 : vector<8x512xf32>
    %c13_i32_17 = arith.constant 13 : i32
    %28 = arith.muli %arg0, %c13_i32_17 : i32
    %c3_i32 = arith.constant 3 : i32
    %29 = arith.addi %28, %c3_i32 : i32
    %30 = arith.index_cast %29 : i32 to index
    %c0_18 = arith.constant 0 : index
    %31 = tpu.strided_load %arg17[%30, %c0_18] {strides = array<i32: 52, 1>} : memref<416x128xf32, #tpu.memory_space<vmem>>, vector<8x128xf32>
    %c3 = arith.constant 3 : index
    %c0_19 = arith.constant 0 : index
    %c0_20 = arith.constant 0 : index
    %32 = vector.load %arg8[%c3, %c0_19, %c0_20] : memref<13x128x512xf32, #tpu.memory_space<vmem>>, vector<1x128x512xf32>
    %33 = vector.shape_cast %32 : vector<1x128x512xf32> to vector<128x512xf32>
    %cst_21 = arith.constant dense<0.000000e+00> : vector<8x512xf32>
    %34 = tpu.matmul %31, %33, %cst_21 {dimension_numbers = #tpu.dot_dimension_numbers<[1], [0], [0], [1], [0, 0, 1, 1], [], []>} : vector<8x128xf32>, vector<128x512xf32>, vector<8x512xf32> -> vector<8x512xf32>
    %35 = arith.addf %27, %34 : vector<8x512xf32>
    %c13_i32_22 = arith.constant 13 : i32
    %36 = arith.muli %arg0, %c13_i32_22 : i32
    %c4_i32 = arith.constant 4 : i32
    %37 = arith.addi %36, %c4_i32 : i32
    %38 = arith.index_cast %37 : i32 to index
    %c0_23 = arith.constant 0 : index
    %39 = tpu.strided_load %arg17[%38, %c0_23] {strides = array<i32: 52, 1>} : memref<416x128xf32, #tpu.memory_space<vmem>>, vector<8x128xf32>
    %c4 = arith.constant 4 : index
    %c0_24 = arith.constant 0 : index
    %c0_25 = arith.constant 0 : index
    %40 = vector.load %arg8[%c4, %c0_24, %c0_25] : memref<13x128x512xf32, #tpu.memory_space<vmem>>, vector<1x128x512xf32>
    %41 = vector.shape_cast %40 : vector<1x128x512xf32> to vector<128x512xf32>
    %cst_26 = arith.constant dense<0.000000e+00> : vector<8x512xf32>
    %42 = tpu.matmul %39, %41, %cst_26 {dimension_numbers = #tpu.dot_dimension_numbers<[1], [0], [0], [1], [0, 0, 1, 1], [], []>} : vector<8x128xf32>, vector<128x512xf32>, vector<8x512xf32> -> vector<8x512xf32>
    %43 = arith.addf %35, %42 : vector<8x512xf32>
    %c13_i32_27 = arith.constant 13 : i32
    %44 = arith.muli %arg0, %c13_i32_27 : i32
    %c5_i32 = arith.constant 5 : i32
    %45 = arith.addi %44, %c5_i32 : i32
    %46 = arith.index_cast %45 : i32 to index
    %c0_28 = arith.constant 0 : index
    %47 = tpu.strided_load %arg17[%46, %c0_28] {strides = array<i32: 52, 1>} : memref<416x128xf32, #tpu.memory_space<vmem>>, vector<8x128xf32>
    %c5 = arith.constant 5 : index
    %c0_29 = arith.constant 0 : index
    %c0_30 = arith.constant 0 : index
    %48 = vector.load %arg8[%c5, %c0_29, %c0_30] : memref<13x128x512xf32, #tpu.memory_space<vmem>>, vector<1x128x512xf32>
    %49 = vector.shape_cast %48 : vector<1x128x512xf32> to vector<128x512xf32>
    %cst_31 = arith.constant dense<0.000000e+00> : vector<8x512xf32>
    %50 = tpu.matmul %47, %49, %cst_31 {dimension_numbers = #tpu.dot_dimension_numbers<[1], [0], [0], [1], [0, 0, 1, 1], [], []>} : vector<8x128xf32>, vector<128x512xf32>, vector<8x512xf32> -> vector<8x512xf32>
    %51 = arith.addf %43, %50 : vector<8x512xf32>
    %c13_i32_32 = arith.constant 13 : i32
    %52 = arith.muli %arg0, %c13_i32_32 : i32
    %c6_i32 = arith.constant 6 : i32
    %53 = arith.addi %52, %c6_i32 : i32
    %54 = arith.index_cast %53 : i32 to index
    %c0_33 = arith.constant 0 : index
    %55 = tpu.strided_load %arg17[%54, %c0_33] {strides = array<i32: 52, 1>} : memref<416x128xf32, #tpu.memory_space<vmem>>, vector<8x128xf32>
    %c6 = arith.constant 6 : index
    %c0_34 = arith.constant 0 : index
    %c0_35 = arith.constant 0 : index
    %56 = vector.load %arg8[%c6, %c0_34, %c0_35] : memref<13x128x512xf32, #tpu.memory_space<vmem>>, vector<1x128x512xf32>
    %57 = vector.shape_cast %56 : vector<1x128x512xf32> to vector<128x512xf32>
    %cst_36 = arith.constant dense<0.000000e+00> : vector<8x512xf32>
    %58 = tpu.matmul %55, %57, %cst_36 {dimension_numbers = #tpu.dot_dimension_numbers<[1], [0], [0], [1], [0, 0, 1, 1], [], []>} : vector<8x128xf32>, vector<128x512xf32>, vector<8x512xf32> -> vector<8x512xf32>
    %59 = arith.addf %51, %58 : vector<8x512xf32>
    %c13_i32_37 = arith.constant 13 : i32
    %60 = arith.muli %arg0, %c13_i32_37 : i32
    %c7_i32 = arith.constant 7 : i32
    %61 = arith.addi %60, %c7_i32 : i32
    %62 = arith.index_cast %61 : i32 to index
    %c0_38 = arith.constant 0 : index
    %63 = tpu.strided_load %arg17[%62, %c0_38] {strides = array<i32: 52, 1>} : memref<416x128xf32, #tpu.memory_space<vmem>>, vector<8x128xf32>
    %c7 = arith.constant 7 : index
    %c0_39 = arith.constant 0 : index
    %c0_40 = arith.constant 0 : index
    %64 = vector.load %arg8[%c7, %c0_39, %c0_40] : memref<13x128x512xf32, #tpu.memory_space<vmem>>, vector<1x128x512xf32>
    %65 = vector.shape_cast %64 : vector<1x128x512xf32> to vector<128x512xf32>
    %cst_41 = arith.constant dense<0.000000e+00> : vector<8x512xf32>
    %66 = tpu.matmul %63, %65, %cst_41 {dimension_numbers = #tpu.dot_dimension_numbers<[1], [0], [0], [1], [0, 0, 1, 1], [], []>} : vector<8x128xf32>, vector<128x512xf32>, vector<8x512xf32> -> vector<8x512xf32>
    %67 = arith.addf %59, %66 : vector<8x512xf32>
    %c13_i32_42 = arith.constant 13 : i32
    %68 = arith.muli %arg0, %c13_i32_42 : i32
    %c8_i32 = arith.constant 8 : i32
    %69 = arith.addi %68, %c8_i32 : i32
    %70 = arith.index_cast %69 : i32 to index
    %c0_43 = arith.constant 0 : index
    %71 = tpu.strided_load %arg17[%70, %c0_43] {strides = array<i32: 52, 1>} : memref<416x128xf32, #tpu.memory_space<vmem>>, vector<8x128xf32>
    %c8 = arith.constant 8 : index
    %c0_44 = arith.constant 0 : index
    %c0_45 = arith.constant 0 : index
    %72 = vector.load %arg8[%c8, %c0_44, %c0_45] : memref<13x128x512xf32, #tpu.memory_space<vmem>>, vector<1x128x512xf32>
    %73 = vector.shape_cast %72 : vector<1x128x512xf32> to vector<128x512xf32>
    %cst_46 = arith.constant dense<0.000000e+00> : vector<8x512xf32>
    %74 = tpu.matmul %71, %73, %cst_46 {dimension_numbers = #tpu.dot_dimension_numbers<[1], [0], [0], [1], [0, 0, 1, 1], [], []>} : vector<8x128xf32>, vector<128x512xf32>, vector<8x512xf32> -> vector<8x512xf32>
    %75 = arith.addf %67, %74 : vector<8x512xf32>
    %c13_i32_47 = arith.constant 13 : i32
    %76 = arith.muli %arg0, %c13_i32_47 : i32
    %c9_i32 = arith.constant 9 : i32
    %77 = arith.addi %76, %c9_i32 : i32
    %78 = arith.index_cast %77 : i32 to index
    %c0_48 = arith.constant 0 : index
    %79 = tpu.strided_load %arg17[%78, %c0_48] {strides = array<i32: 52, 1>} : memref<416x128xf32, #tpu.memory_space<vmem>>, vector<8x128xf32>
    %c9 = arith.constant 9 : index
    %c0_49 = arith.constant 0 : index
    %c0_50 = arith.constant 0 : index
    %80 = vector.load %arg8[%c9, %c0_49, %c0_50] : memref<13x128x512xf32, #tpu.memory_space<vmem>>, vector<1x128x512xf32>
    %81 = vector.shape_cast %80 : vector<1x128x512xf32> to vector<128x512xf32>
    %cst_51 = arith.constant dense<0.000000e+00> : vector<8x512xf32>
    %82 = tpu.matmul %79, %81, %cst_51 {dimension_numbers = #tpu.dot_dimension_numbers<[1], [0], [0], [1], [0, 0, 1, 1], [], []>} : vector<8x128xf32>, vector<128x512xf32>, vector<8x512xf32> -> vector<8x512xf32>
    %83 = arith.addf %75, %82 : vector<8x512xf32>
    %c13_i32_52 = arith.constant 13 : i32
    %84 = arith.muli %arg0, %c13_i32_52 : i32
    %c10_i32 = arith.constant 10 : i32
    %85 = arith.addi %84, %c10_i32 : i32
    %86 = arith.index_cast %85 : i32 to index
    %c0_53 = arith.constant 0 : index
    %87 = tpu.strided_load %arg17[%86, %c0_53] {strides = array<i32: 52, 1>} : memref<416x128xf32, #tpu.memory_space<vmem>>, vector<8x128xf32>
    %c10 = arith.constant 10 : index
    %c0_54 = arith.constant 0 : index
    %c0_55 = arith.constant 0 : index
    %88 = vector.load %arg8[%c10, %c0_54, %c0_55] : memref<13x128x512xf32, #tpu.memory_space<vmem>>, vector<1x128x512xf32>
    %89 = vector.shape_cast %88 : vector<1x128x512xf32> to vector<128x512xf32>
    %cst_56 = arith.constant dense<0.000000e+00> : vector<8x512xf32>
    %90 = tpu.matmul %87, %89, %cst_56 {dimension_numbers = #tpu.dot_dimension_numbers<[1], [0], [0], [1], [0, 0, 1, 1], [], []>} : vector<8x128xf32>, vector<128x512xf32>, vector<8x512xf32> -> vector<8x512xf32>
    %91 = arith.addf %83, %90 : vector<8x512xf32>
    %c13_i32_57 = arith.constant 13 : i32
    %92 = arith.muli %arg0, %c13_i32_57 : i32
    %c11_i32 = arith.constant 11 : i32
    %93 = arith.addi %92, %c11_i32 : i32
    %94 = arith.index_cast %93 : i32 to index
    %c0_58 = arith.constant 0 : index
    %95 = tpu.strided_load %arg17[%94, %c0_58] {strides = array<i32: 52, 1>} : memref<416x128xf32, #tpu.memory_space<vmem>>, vector<8x128xf32>
    %c11 = arith.constant 11 : index
    %c0_59 = arith.constant 0 : index
    %c0_60 = arith.constant 0 : index
    %96 = vector.load %arg8[%c11, %c0_59, %c0_60] : memref<13x128x512xf32, #tpu.memory_space<vmem>>, vector<1x128x512xf32>
    %97 = vector.shape_cast %96 : vector<1x128x512xf32> to vector<128x512xf32>
    %cst_61 = arith.constant dense<0.000000e+00> : vector<8x512xf32>
    %98 = tpu.matmul %95, %97, %cst_61 {dimension_numbers = #tpu.dot_dimension_numbers<[1], [0], [0], [1], [0, 0, 1, 1], [], []>} : vector<8x128xf32>, vector<128x512xf32>, vector<8x512xf32> -> vector<8x512xf32>
    %99 = arith.addf %91, %98 : vector<8x512xf32>
    %c13_i32_62 = arith.constant 13 : i32
    %100 = arith.muli %arg0, %c13_i32_62 : i32
    %c12_i32 = arith.constant 12 : i32
    %101 = arith.addi %100, %c12_i32 : i32
    %102 = arith.index_cast %101 : i32 to index
    %c0_63 = arith.constant 0 : index
    %103 = tpu.strided_load %arg17[%102, %c0_63] {strides = array<i32: 52, 1>} : memref<416x128xf32, #tpu.memory_space<vmem>>, vector<8x128xf32>
    %c12 = arith.constant 12 : index
    %c0_64 = arith.constant 0 : index
    %c0_65 = arith.constant 0 : index
    %104 = vector.load %arg8[%c12, %c0_64, %c0_65] : memref<13x128x512xf32, #tpu.memory_space<vmem>>, vector<1x128x512xf32>
    %105 = vector.shape_cast %104 : vector<1x128x512xf32> to vector<128x512xf32>
    %cst_66 = arith.constant dense<0.000000e+00> : vector<8x512xf32>
    %106 = tpu.matmul %103, %105, %cst_66 {dimension_numbers = #tpu.dot_dimension_numbers<[1], [0], [0], [1], [0, 0, 1, 1], [], []>} : vector<8x128xf32>, vector<128x512xf32>, vector<8x512xf32> -> vector<8x512xf32>
    %107 = arith.addf %99, %106 : vector<8x512xf32>
    %c0_67 = arith.constant 0 : index
    %c0_68 = arith.constant 0 : index
    %108 = vector.load %arg18[%c0_67, %c0_68] : memref<8x512xf32, #tpu.memory_space<vmem>>, vector<8x512xf32>
    tpu.vector_store %arg18[%c0_67, %c0_68], %107 {strides = array<i32>} : memref<8x512xf32, #tpu.memory_space<vmem>>, vector<8x512xf32>,
    %c3_i32_69 = arith.constant 3 : i32
    %109 = arith.cmpi eq, %arg0, %c3_i32_69 : i32
    %110 = arith.extui %109 : i1 to i32
    %c0_i32_70 = arith.constant 0 : i32
    %111 = arith.cmpi ne, %110, %c0_i32_70 : i32
    scf.if %111 {
      %c0_71 = arith.constant 0 : index
      %c0_72 = arith.constant 0 : index
      %112 = vector.load %arg18[%c0_71, %c0_72] : memref<8x512xf32, #tpu.memory_space<vmem>>, vector<8x512xf32>
      %c0_73 = arith.constant 0 : index
      %c0_74 = arith.constant 0 : index
      %113 = vector.load %arg9[%c0_73, %c0_74] : memref<1x512xf32, #tpu.memory_space<vmem>>, vector<1x512xf32>
      %114 = vector.broadcast %113 : vector<1x512xf32> to vector<8x512xf32>
      %115 = arith.addf %112, %114 : vector<8x512xf32>
      %c0_75 = arith.constant 0 : index
      %c0_76 = arith.constant 0 : index
      %116 = vector.load %arg10[%c0_75, %c0_76] : memref<512x256xf32, #tpu.memory_space<vmem>>, vector<512x256xf32>
      %cst_77 = arith.constant dense<0.000000e+00> : vector<8x256xf32>
      %117 = tpu.matmul %115, %116, %cst_77 {dimension_numbers = #tpu.dot_dimension_numbers<[1], [0], [0], [1], [0, 0, 1, 1], [], []>} : vector<8x512xf32>, vector<512x256xf32>, vector<8x256xf32> -> vector<8x256xf32>
      %c0_78 = arith.constant 0 : index
      %c0_79 = arith.constant 0 : index
      %118 = vector.load %arg11[%c0_78, %c0_79] : memref<1x256xf32, #tpu.memory_space<vmem>>, vector<1x256xf32>
      %119 = vector.broadcast %118 : vector<1x256xf32> to vector<8x256xf32>
      %120 = arith.addf %117, %119 : vector<8x256xf32>
      %c0_80 = arith.constant 0 : index
      %c0_81 = arith.constant 0 : index
      %121 = vector.load %arg12[%c0_80, %c0_81] : memref<256x128xf32, #tpu.memory_space<vmem>>, vector<256x128xf32>
      %cst_82 = arith.constant dense<0.000000e+00> : vector<8x128xf32>
      %122 = tpu.matmul %120, %121, %cst_82 {dimension_numbers = #tpu.dot_dimension_numbers<[1], [0], [0], [1], [0, 0, 1, 1], [], []>} : vector<8x256xf32>, vector<256x128xf32>, vector<8x128xf32> -> vector<8x128xf32>
      %c0_83 = arith.constant 0 : index
      %c0_84 = arith.constant 0 : index
      %123 = vector.load %arg13[%c0_83, %c0_84] : memref<1x128xf32, #tpu.memory_space<vmem>>, vector<1x128xf32>
      %124 = vector.broadcast %123 : vector<1x128xf32> to vector<8x128xf32>
      %125 = arith.addf %122, %124 : vector<8x128xf32>
      %c0_85 = arith.constant 0 : index
      %c0_86 = arith.constant 0 : index
      %126 = vector.load %arg14[%c0_85, %c0_86] : memref<128x2xf32, #tpu.memory_space<vmem>>, vector<128x2xf32>
      %cst_87 = arith.constant dense<0.000000e+00> : vector<8x2xf32>
      %127 = tpu.matmul %125, %126, %cst_87 {dimension_numbers = #tpu.dot_dimension_numbers<[1], [0], [0], [1], [0, 0, 1, 1], [], []>} : vector<8x128xf32>, vector<128x2xf32>, vector<8x2xf32> -> vector<8x2xf32>
      %c0_88 = arith.constant 0 : index
      %c0_89 = arith.constant 0 : index
      %128 = vector.load %arg15[%c0_88, %c0_89] : memref<1x2xf32, #tpu.memory_space<vmem>>, vector<1x2xf32>
      %129 = vector.broadcast %128 : vector<1x2xf32> to vector<8x2xf32>
      %130 = arith.addf %127, %129 : vector<8x2xf32>
      %c0_90 = arith.constant 0 : index
      %c0_91 = arith.constant 0 : index
      %131 = vector.load %arg16[%c0_90, %c0_91] : memref<8x2xf32, #tpu.memory_space<vmem>>, vector<8x2xf32>
      tpu.vector_store %arg16[%c0_90, %c0_91], %130 {strides = array<i32>} : memref<8x2xf32, #tpu.memory_space<vmem>>, vector<8x2xf32>,
    } else {
    }
    return
  }
  func.func @transform_0(%arg0: i32) -> (i32, i32, i32) {
    %c0_i32 = arith.constant 0 : i32
    %c0_i32_0 = arith.constant 0 : i32
    %c0_i32_1 = arith.constant 0 : i32
    %c0_i32_2 = arith.constant 0 : i32
    return %c0_i32, %c0_i32_0, %c0_i32_1 : i32, i32, i32
  }
  func.func @transform_1(%arg0: i32) -> (i32, i32) {
    %c0_i32 = arith.constant 0 : i32
    %c0_i32_0 = arith.constant 0 : i32
    %c0_i32_1 = arith.constant 0 : i32
    return %c0_i32, %c0_i32_0 : i32, i32
  }
  func.func @transform_2(%arg0: i32) -> (i32, i32) {
    %c0_i32 = arith.constant 0 : i32
    %c0_i32_0 = arith.constant 0 : i32
    %c0_i32_1 = arith.constant 0 : i32
    return %c0_i32, %c0_i32_0 : i32, i32
  }
  func.func @transform_3(%arg0: i32) -> (i32, i32) {
    %c0_i32 = arith.constant 0 : i32
    %c0_i32_0 = arith.constant 0 : i32
    %c0_i32_1 = arith.constant 0 : i32
    return %c0_i32, %c0_i32_0 : i32, i32
  }
  func.func @transform_4(%arg0: i32) -> (i32, i32) {
    %c0_i32 = arith.constant 0 : i32
    %c0_i32_0 = arith.constant 0 : i32
    %c0_i32_1 = arith.constant 0 : i32
    return %c0_i32, %c0_i32_0 : i32, i32
  }
  func.func @transform_5(%arg0: i32) -> (i32, i32) {
    %c0_i32 = arith.constant 0 : i32
    %c0_i32_0 = arith.constant 0 : i32
    %c0_i32_1 = arith.constant 0 : i32
    return %c0_i32, %c0_i32_0 : i32, i32
  }
  func.func @transform_6(%arg0: i32) -> (i32, i32) {
    %c0_i32 = arith.constant 0 : i32
    %c0_i32_0 = arith.constant 0 : i32
    %c0_i32_1 = arith.constant 0 : i32
    return %c0_i32, %c0_i32_0 : i32, i32
  }
  func.func @transform_7(%arg0: i32) -> (i32, i32, i32) {
    %c0_i32 = arith.constant 0 : i32
    %c0_i32_0 = arith.constant 0 : i32
    %c0_i32_1 = arith.constant 0 : i32
    return %arg0, %c0_i32, %c0_i32_0 : i32, i32, i32
  }
  func.func @transform_8(%arg0: i32) -> (i32, i32) {
    %c0_i32 = arith.constant 0 : i32
    %c0_i32_0 = arith.constant 0 : i32
    %c0_i32_1 = arith.constant 0 : i32
    return %c0_i32, %c0_i32_0 : i32, i32
  }
  func.func @transform_9(%arg0: i32) -> (i32, i32) {
    %c0_i32 = arith.constant 0 : i32
    %c0_i32_0 = arith.constant 0 : i32
    %c0_i32_1 = arith.constant 0 : i32
    return %c0_i32, %c0_i32_0 : i32, i32
  }
  func.func @transform_10(%arg0: i32) -> (i32, i32) {
    %c0_i32 = arith.constant 0 : i32
    %c0_i32_0 = arith.constant 0 : i32
    %c0_i32_1 = arith.constant 0 : i32
    return %c0_i32, %c0_i32_0 : i32, i32
  }
  func.func @transform_11(%arg0: i32) -> (i32, i32) {
    %c0_i32 = arith.constant 0 : i32
    %c0_i32_0 = arith.constant 0 : i32
    %c0_i32_1 = arith.constant 0 : i32
    return %c0_i32, %c0_i32_0 : i32, i32
  }
  func.func @transform_12(%arg0: i32) -> (i32, i32) {
    %c0_i32 = arith.constant 0 : i32
    %c0_i32_0 = arith.constant 0 : i32
    %c0_i32_1 = arith.constant 0 : i32
    return %c0_i32, %c0_i32_0 : i32, i32
  }
  func.func @transform_13(%arg0: i32) -> (i32, i32) {
    %c0_i32 = arith.constant 0 : i32
    %c0_i32_0 = arith.constant 0 : i32
    %c0_i32_1 = arith.constant 0 : i32
    return %c0_i32, %c0_i32_0 : i32, i32
  }
  func.func @transform_14(%arg0: i32) -> (i32, i32) {
    %c0_i32 = arith.constant 0 : i32
    %c0_i32_0 = arith.constant 0 : i32
    %c0_i32_1 = arith.constant 0 : i32
    return %c0_i32, %c0_i32_0 : i32, i32
  }
  func.func @transform_15(%arg0: i32) -> (i32, i32) {
    %c0_i32 = arith.constant 0 : i32
    %c0_i32_0 = arith.constant 0 : i32
    %c0_i32_1 = arith.constant 0 : i32
    return %c0_i32, %c0_i32_0 : i32, i32
  }
}

</mosaic_0001>

<llo_original>
// kernel: pdcnn_forward.1
$region0: #{pdcnn_forward.1}
  #allocation0 [shape = 'u32[]', space=smem, size = 0x4, offset = 0x4, fixed_abs, tag = 'smem constant byte address 0x4 - core index']
  #allocation1 [shape = 'u32[72,128]{1,0:T(1,128)}', space=vmem, size = 0x9000, scoped, tag = 'internal scratch']
  #allocation2 [shape = 'f32[416,128]{1,0:T(8,128)}', space=vmem, size = 0x34000, scoped, tag = 'scratch operand']
  #allocation3 [shape = 'f32[8,512]{1,0:T(8,128)}', space=vmem, size = 0x4000, scoped, tag = 'scratch operand']
  %s0 = inlined_call_operand.hbm [shape: f32[8,1,112], index: 0, kind: input, shape index: {}]
  %s1 = inlined_call_operand.vmem [shape: f32[32,3], index: 1, kind: input, shape index: {}]
  %s2 = inlined_call_operand.vmem [shape: f32[32,1], index: 2, kind: input, shape index: {}]
  %s3 = inlined_call_operand.hbm [shape: f32[64,96], index: 3, kind: input, shape index: {}]
  %s4 = inlined_call_operand.vmem [shape: f32[64,1], index: 4, kind: input, shape index: {}]
  %s5 = inlined_call_operand.vmem [shape: f32[128,192], index: 5, kind: input, shape index: {}]
  %s6 = inlined_call_operand.vmem [shape: f32[128,1], index: 6, kind: input, shape index: {}]
  %s7 = inlined_call_operand.hbm [shape: f32[52,128,512], index: 7, kind: input, shape index: {}]
  %s8 = inlined_call_operand.hbm [shape: f32[1,512], index: 8, kind: input, shape index: {}]
  %s9 = inlined_call_operand.hbm [shape: f32[512,256], index: 9, kind: input, shape index: {}]
  %s10 = inlined_call_operand.hbm [shape: f32[1,256], index: 10, kind: input, shape index: {}]
  %s11 = inlined_call_operand.hbm [shape: f32[256,128], index: 11, kind: input, shape index: {}]
  %s12 = inlined_call_operand.hbm [shape: f32[1,128], index: 12, kind: input, shape index: {}]
  %s13 = inlined_call_operand.vmem [shape: f32[128,2], index: 13, kind: input, shape index: {}]
  %s14 = inlined_call_operand.hbm [shape: f32[1,2], index: 14, kind: input, shape index: {}]
  %s15 = inlined_call_operand.vmem [shape: f32[8,2], index: 15, kind: output, shape index: {}]
  %s16 = sld [smem:[#allocation0]]
  $region137: #{pdcnn_forward.1} parent=0
    _
  %s18 = ssub.s32 1, %s16
  %s19 = scalar_select 0, %s18, %s16
  $region1: #{pdcnn_forward.1} parent=0
    #allocation4 [shape = 'u8[4096]{0}', space=vmem, size = 0x1000, scoped, tag = 'input window, operand 0, single buffered']
    #allocation5 [shape = 's32[2]{0}', space=sflag, size = 0x8, scoped, tag = 'scoped memory for pdcnn_forward.1']
    #allocation6 [shape = 'u8[32768]{0}', space=vmem, size = 0x8000, scoped, tag = 'input window, operand 3, single buffered']
    #allocation7 [shape = 's32[1]{0}', space=sflag, size = 0x4, scoped, tag = 'scoped memory for pdcnn_forward.1']
    #allocation8 [shape = 'u8[6815744]{0}', space=vmem, size = 0x680000, scoped, tag = 'input window, operand 7']
    #allocation9 [shape = 'u8[2048]{0}', space=vmem, size = 0x800, scoped, tag = 'input window, operand 8, single buffered']
    #allocation10 [shape = 'u8[524288]{0}', space=vmem, size = 0x80000, scoped, tag = 'input window, operand 9, single buffered']
    #allocation11 [shape = 's32[1]{0}', space=sflag, size = 0x4, scoped, tag = 'scoped memory for pdcnn_forward.1']
    #allocation12 [shape = 'u8[1024]{0}', space=vmem, size = 0x400, scoped, tag = 'input window, operand 10, single buffered']
    #allocation13 [shape = 'u8[131072]{0}', space=vmem, size = 0x20000, scoped, tag = 'input window, operand 11, single buffered']
    #allocation14 [shape = 's32[1]{0}', space=sflag, size = 0x4, scoped, tag = 'scoped memory for pdcnn_forward.1']
    #allocation15 [shape = 'u8[512]{0}', space=vmem, size = 0x400, scoped, tag = 'input window, operand 12, single buffered']
    #allocation16 [shape = 'u8[512]{0}', space=vmem, size = 0x400, scoped, tag = 'input window, operand 14, single buffered']
    #allocation17 [shape = 's32[1]{0}', space=sflag, size = 0x4, scoped, tag = 'scoped memory for pdcnn_forward.1']
    %20 = vsyncpa [#allocation5], 0
    %21 = vsyncpa [#allocation7], 0
    %22 = vsyncpa [#allocation11], 0
    %23 = vsyncpa [#allocation14], 0
    %24 = vsyncpa [#allocation17], 0
    loop: start=0, step=1, limit=6
    $region2: #{pdcnn_forward.1} parent=1 // loop_pre_header
      _
    $region3: #{pdcnn_forward.1} parent=1 // loop_header
      %s26 = sphi 0, %s30
      %p27 = scmp.ge.s32.totalorder %s26, 6
      %s34 = sphi 0, %s34
      %s36 = sphi 0, %s34
      %s37 = sphi 0, %s36
      %s51 = sphi 0, %s37
      %s55 = sphi 0, %s55
      %s57 = sphi 0, %s55
      %s58 = sphi 0, %s57
      %s72 = sphi 0, %s58
      %s76 = sphi 0, %s76
      %s78 = sphi 0, %s76
      %s79 = sphi 0, %s78
      %s93 = sphi 0, %s79
      %s97 = sphi 0, %s97
      %s99 = sphi 0, %s97
      %s100 = sphi 0, %s99
      %s114 = sphi 0, %s100
      %s118 = sphi 0, %s118
      %s120 = sphi 0, %s118
      %s121 = sphi 0, %s120
      %s135 = sphi 0, %s121
      %s139 = sphi 0, %s139
      %s141 = sphi 0, %s139
      %s142 = sphi 0, %s141
      %s156 = sphi 0, %s142
      %s160 = sphi 0, %s160
      %s162 = sphi 0, %s160
      %s163 = sphi 0, %s162
      %s177 = sphi 0, %s163
      %s183 = sphi 0, %s185
      %s186 = sphi 0, %s183
      %s187 = sphi 0, %s186
      %s203 = sphi 0, %s187
      %s207 = sphi 0, %s207
      %s209 = sphi 0, %s207
      %s210 = sphi 0, %s209
      %s224 = sphi 0, %s210
      %s228 = sphi 0, %s228
      %s230 = sphi 0, %s228
      %s231 = sphi 0, %s230
      %s245 = sphi 0, %s231
      %s249 = sphi 0, %s249
      %s251 = sphi 0, %s249
      %s252 = sphi 0, %s251
      %s266 = sphi 0, %s252
      %s270 = sphi 0, %s270
      %s272 = sphi 0, %s270
      %s273 = sphi 0, %s272
      %s287 = sphi 0, %s273
      %s291 = sphi 0, %s291
      %s293 = sphi 0, %s291
      %s294 = sphi 0, %s293
      %s308 = sphi 0, %s294
      %s312 = sphi 0, %s312
      %s314 = sphi 0, %s312
      %s315 = sphi 0, %s314
      %s329 = sphi 0, %s315
      %s333 = sphi 0, %s333
      %s335 = sphi 0, %s333
      %s336 = sphi 0, %s335
      %s350 = sphi 0, %s336
      %s354 = sphi 0, %s354
      %s356 = sphi 0, %s354
      %s357 = sphi 0, %s356
      %s371 = sphi 0, %s357
    $region4: #{pdcnn_forward.1} parent=1 // loop_header_branch
      %29 = sbr.rel (%p27) target = $region8
    $region5: #{pdcnn_forward.1} parent=1 // loop_body
      %s31 = ssub.s32 %s26, 1
      %s32 = ssub.s32 %s26, 2
      %s33 = sadd.s32 %s26, 1
      %s35 = sadd.s32 %s34, 1
      %p38 = scmp.eq.s32.totalorder %s26, 3
      %p39 = scmp.ne.s32.totalorder %s34, %s36
      %p40 = scmp.eq.s32.totalorder %s26, 0
      %p41 = por %p39, %p40
      %p42 = scmp.ne.s32.totalorder %s34, %s36
      %p43 = scmp.eq.s32.totalorder %s31, 3
      %p44 = por %p42, %p43
      %p45 = scmp.ne.s32.totalorder %s36, %s37
      %p46 = scmp.eq.s32.totalorder %s31, 0
      %p47 = por %p45, %p46
      %p48 = scmp.ne.s32.totalorder %s36, %s37
      %p49 = scmp.eq.s32.totalorder %s32, 3
      %p50 = por %p48, %p49
      %p52 = scmp.ne.s32.totalorder %s37, %s51
      %p53 = scmp.eq.s32.totalorder %s32, 0
      %p54 = por %p52, %p53
      %s56 = sadd.s32 %s55, 1
      %p59 = scmp.eq.s32.totalorder %s26, 3
      %p60 = scmp.ne.s32.totalorder %s55, %s57
      %p61 = scmp.eq.s32.totalorder %s26, 0
      %p62 = por %p60, %p61
      %p63 = scmp.ne.s32.totalorder %s55, %s57
      %p64 = scmp.eq.s32.totalorder %s31, 3
      %p65 = por %p63, %p64
      %p66 = scmp.ne.s32.totalorder %s57, %s58
      %p67 = scmp.eq.s32.totalorder %s31, 0
      %p68 = por %p66, %p67
      %p69 = scmp.ne.s32.totalorder %s57, %s58
      %p70 = scmp.eq.s32.totalorder %s32, 3
      %p71 = por %p69, %p70
      %p73 = scmp.ne.s32.totalorder %s58, %s72
      %p74 = scmp.eq.s32.totalorder %s32, 0
      %p75 = por %p73, %p74
      %s77 = sadd.s32 %s76, 1
      %p80 = scmp.eq.s32.totalorder %s26, 3
      %p81 = scmp.ne.s32.totalorder %s76, %s78
      %p82 = scmp.eq.s32.totalorder %s26, 0
      %p83 = por %p81, %p82
      %p84 = scmp.ne.s32.totalorder %s76, %s78
      %p85 = scmp.eq.s32.totalorder %s31, 3
      %p86 = por %p84, %p85
      %p87 = scmp.ne.s32.totalorder %s78, %s79
      %p88 = scmp.eq.s32.totalorder %s31, 0
      %p89 = por %p87, %p88
      %p90 = scmp.ne.s32.totalorder %s78, %s79
      %p91 = scmp.eq.s32.totalorder %s32, 3
      %p92 = por %p90, %p91
      %p94 = scmp.ne.s32.totalorder %s79, %s93
      %p95 = scmp.eq.s32.totalorder %s32, 0
      %p96 = por %p94, %p95
      %s98 = sadd.s32 %s97, 1
      %p101 = scmp.eq.s32.totalorder %s26, 3
      %p102 = scmp.ne.s32.totalorder %s97, %s99
      %p103 = scmp.eq.s32.totalorder %s26, 0
      %p104 = por %p102, %p103
      %p105 = scmp.ne.s32.totalorder %s97, %s99
      %p106 = scmp.eq.s32.totalorder %s31, 3
      %p107 = por %p105, %p106
      %p108 = scmp.ne.s32.totalorder %s99, %s100
      %p109 = scmp.eq.s32.totalorder %s31, 0
      %p110 = por %p108, %p109
      %p111 = scmp.ne.s32.totalorder %s99, %s100
      %p112 = scmp.eq.s32.totalorder %s32, 3
      %p113 = por %p111, %p112
      %p115 = scmp.ne.s32.totalorder %s100, %s114
      %p116 = scmp.eq.s32.totalorder %s32, 0
      %p117 = por %p115, %p116
      %s119 = sadd.s32 %s118, 1
      %p122 = scmp.eq.s32.totalorder %s26, 3
      %p123 = scmp.ne.s32.totalorder %s118, %s120
      %p124 = scmp.eq.s32.totalorder %s26, 0
      %p125 = por %p123, %p124
      %p126 = scmp.ne.s32.totalorder %s118, %s120
      %p127 = scmp.eq.s32.totalorder %s31, 3
      %p128 = por %p126, %p127
      %p129 = scmp.ne.s32.totalorder %s120, %s121
      %p130 = scmp.eq.s32.totalorder %s31, 0
      %p131 = por %p129, %p130
      %p132 = scmp.ne.s32.totalorder %s120, %s121
      %p133 = scmp.eq.s32.totalorder %s32, 3
      %p134 = por %p132, %p133
      %p136 = scmp.ne.s32.totalorder %s121, %s135
      %p137 = scmp.eq.s32.totalorder %s32, 0
      %p138 = por %p136, %p137
      %s140 = sadd.s32 %s139, 1
      %p143 = scmp.eq.s32.totalorder %s26, 3
      %p144 = scmp.ne.s32.totalorder %s139, %s141
      %p145 = scmp.eq.s32.totalorder %s26, 0
      %p146 = por %p144, %p145
      %p147 = scmp.ne.s32.totalorder %s139, %s141
      %p148 = scmp.eq.s32.totalorder %s31, 3
      %p149 = por %p147, %p148
      %p150 = scmp.ne.s32.totalorder %s141, %s142
      %p151 = scmp.eq.s32.totalorder %s31, 0
      %p152 = por %p150, %p151
      %p153 = scmp.ne.s32.totalorder %s141, %s142
      %p154 = scmp.eq.s32.totalorder %s32, 3
      %p155 = por %p153, %p154
      %p157 = scmp.ne.s32.totalorder %s142, %s156
      %p158 = scmp.eq.s32.totalorder %s32, 0
      %p159 = por %p157, %p158
      %s161 = sadd.s32 %s160, 1
      %p164 = scmp.eq.s32.totalorder %s26, 3
      %p165 = scmp.ne.s32.totalorder %s160, %s162
      %p166 = scmp.eq.s32.totalorder %s26, 0
      %p167 = por %p165, %p166
      %p168 = scmp.ne.s32.totalorder %s160, %s162
      %p169 = scmp.eq.s32.totalorder %s31, 3
      %p170 = por %p168, %p169
      %p171 = scmp.ne.s32.totalorder %s162, %s163
      %p172 = scmp.eq.s32.totalorder %s31, 0
      %p173 = por %p171, %p172
      %p174 = scmp.ne.s32.totalorder %s162, %s163
      %p175 = scmp.eq.s32.totalorder %s32, 3
      %p176 = por %p174, %p175
      %p178 = scmp.ne.s32.totalorder %s163, %s177
      %p179 = scmp.eq.s32.totalorder %s32, 0
      %p180 = por %p178, %p179
      %s181 = ssub.s32 %s26, %s33
      %p182 = scmp.eq.s32.totalorder %s181, 0
      %s184 = sadd.s32 %s183, 1
      %s185 = scalar_select %p182, %s183, %s184
      %p188 = pneg %p182
      %p189 = scmp.eq.s32.totalorder %s26, 3
      %p190 = por %p188, %p189
      %p191 = scmp.ne.s32.totalorder %s183, %s186
      %p192 = scmp.eq.s32.totalorder %s26, 0
      %p193 = por %p191, %p192
      %p194 = scmp.ne.s32.totalorder %s183, %s186
      %p195 = scmp.eq.s32.totalorder %s31, 3
      %p196 = por %p194, %p195
      %p197 = scmp.ne.s32.totalorder %s186, %s187
      %p198 = scmp.eq.s32.totalorder %s31, 0
      %p199 = por %p197, %p198
      %p200 = scmp.ne.s32.totalorder %s186, %s187
      %p201 = scmp.eq.s32.totalorder %s32, 3
      %p202 = por %p200, %p201
      %p204 = scmp.ne.s32.totalorder %s187, %s203
      %p205 = scmp.eq.s32.totalorder %s32, 0
      %p206 = por %p204, %p205
      %s208 = sadd.s32 %s207, 1
      %p211 = scmp.eq.s32.totalorder %s26, 3
      %p212 = scmp.ne.s32.totalorder %s207, %s209
      %p213 = scmp.eq.s32.totalorder %s26, 0
      %p214 = por %p212, %p213
      %p215 = scmp.ne.s32.totalorder %s207, %s209
      %p216 = scmp.eq.s32.totalorder %s31, 3
      %p217 = por %p215, %p216
      %p218 = scmp.ne.s32.totalorder %s209, %s210
      %p219 = scmp.eq.s32.totalorder %s31, 0
      %p220 = por %p218, %p219
      %p221 = scmp.ne.s32.totalorder %s209, %s210
      %p222 = scmp.eq.s32.totalorder %s32, 3
      %p223 = por %p221, %p222
      %p225 = scmp.ne.s32.totalorder %s210, %s224
      %p226 = scmp.eq.s32.totalorder %s32, 0
      %p227 = por %p225, %p226
      %s229 = sadd.s32 %s228, 1
      %p232 = scmp.eq.s32.totalorder %s26, 3
      %p233 = scmp.ne.s32.totalorder %s228, %s230
      %p234 = scmp.eq.s32.totalorder %s26, 0
      %p235 = por %p233, %p234
      %p236 = scmp.ne.s32.totalorder %s228, %s230
      %p237 = scmp.eq.s32.totalorder %s31, 3
      %p238 = por %p236, %p237
      %p239 = scmp.ne.s32.totalorder %s230, %s231
      %p240 = scmp.eq.s32.totalorder %s31, 0
      %p241 = por %p239, %p240
      %p242 = scmp.ne.s32.totalorder %s230, %s231
      %p243 = scmp.eq.s32.totalorder %s32, 3
      %p244 = por %p242, %p243
      %p246 = scmp.ne.s32.totalorder %s231, %s245
      %p247 = scmp.eq.s32.totalorder %s32, 0
      %p248 = por %p246, %p247
      %s250 = sadd.s32 %s249, 1
      %p253 = scmp.eq.s32.totalorder %s26, 3
      %p254 = scmp.ne.s32.totalorder %s249, %s251
      %p255 = scmp.eq.s32.totalorder %s26, 0
      %p256 = por %p254, %p255
      %p257 = scmp.ne.s32.totalorder %s249, %s251
      %p258 = scmp.eq.s32.totalorder %s31, 3
      %p259 = por %p257, %p258
      %p260 = scmp.ne.s32.totalorder %s251, %s252
      %p261 = scmp.eq.s32.totalorder %s31, 0
      %p262 = por %p260, %p261
      %p263 = scmp.ne.s32.totalorder %s251, %s252
      %p264 = scmp.eq.s32.totalorder %s32, 3
      %p265 = por %p263, %p264
      %p267 = scmp.ne.s32.totalorder %s252, %s266
      %p268 = scmp.eq.s32.totalorder %s32, 0
      %p269 = por %p267, %p268
      %s271 = sadd.s32 %s270, 1
      %p274 = scmp.eq.s32.totalorder %s26, 3
      %p275 = scmp.ne.s32.totalorder %s270, %s272
      %p276 = scmp.eq.s32.totalorder %s26, 0
      %p277 = por %p275, %p276
      %p278 = scmp.ne.s32.totalorder %s270, %s272
      %p279 = scmp.eq.s32.totalorder %s31, 3
      %p280 = por %p278, %p279
      %p281 = scmp.ne.s32.totalorder %s272, %s273
      %p282 = scmp.eq.s32.totalorder %s31, 0
      %p283 = por %p281, %p282
      %p284 = scmp.ne.s32.totalorder %s272, %s273
      %p285 = scmp.eq.s32.totalorder %s32, 3
      %p286 = por %p284, %p285
      %p288 = scmp.ne.s32.totalorder %s273, %s287
      %p289 = scmp.eq.s32.totalorder %s32, 0
      %p290 = por %p288, %p289
      %s292 = sadd.s32 %s291, 1
      %p295 = scmp.eq.s32.totalorder %s26, 3
      %p296 = scmp.ne.s32.totalorder %s291, %s293
      %p297 = scmp.eq.s32.totalorder %s26, 0
      %p298 = por %p296, %p297
      %p299 = scmp.ne.s32.totalorder %s291, %s293
      %p300 = scmp.eq.s32.totalorder %s31, 3
      %p301 = por %p299, %p300
      %p302 = scmp.ne.s32.totalorder %s293, %s294
      %p303 = scmp.eq.s32.totalorder %s31, 0
      %p304 = por %p302, %p303
      %p305 = scmp.ne.s32.totalorder %s293, %s294
      %p306 = scmp.eq.s32.totalorder %s32, 3
      %p307 = por %p305, %p306
      %p309 = scmp.ne.s32.totalorder %s294, %s308
      %p310 = scmp.eq.s32.totalorder %s32, 0
      %p311 = por %p309, %p310
      %s313 = sadd.s32 %s312, 1
      %p316 = scmp.eq.s32.totalorder %s26, 3
      %p317 = scmp.ne.s32.totalorder %s312, %s314
      %p318 = scmp.eq.s32.totalorder %s26, 0
      %p319 = por %p317, %p318
      %p320 = scmp.ne.s32.totalorder %s312, %s314
      %p321 = scmp.eq.s32.totalorder %s31, 3
      %p322 = por %p320, %p321
      %p323 = scmp.ne.s32.totalorder %s314, %s315
      %p324 = scmp.eq.s32.totalorder %s31, 0
      %p325 = por %p323, %p324
      %p326 = scmp.ne.s32.totalorder %s314, %s315
      %p327 = scmp.eq.s32.totalorder %s32, 3
      %p328 = por %p326, %p327
      %p330 = scmp.ne.s32.totalorder %s315, %s329
      %p331 = scmp.eq.s32.totalorder %s32, 0
      %p332 = por %p330, %p331
      %s334 = sadd.s32 %s333, 1
      %p337 = scmp.eq.s32.totalorder %s26, 3
      %p338 = scmp.ne.s32.totalorder %s333, %s335
      %p339 = scmp.eq.s32.totalorder %s26, 0
      %p340 = por %p338, %p339
      %p341 = scmp.ne.s32.totalorder %s333, %s335
      %p342 = scmp.eq.s32.totalorder %s31, 3
      %p343 = por %p341, %p342
      %p344 = scmp.ne.s32.totalorder %s335, %s336
      %p345 = scmp.eq.s32.totalorder %s31, 0
      %p346 = por %p344, %p345
      %p347 = scmp.ne.s32.totalorder %s335, %s336
      %p348 = scmp.eq.s32.totalorder %s32, 3
      %p349 = por %p347, %p348
      %p351 = scmp.ne.s32.totalorder %s336, %s350
      %p352 = scmp.eq.s32.totalorder %s32, 0
      %p353 = por %p351, %p352
      %s355 = sadd.s32 %s354, 1
      %p358 = scmp.eq.s32.totalorder %s26, 3
      %p359 = scmp.ne.s32.totalorder %s354, %s356
      %p360 = scmp.eq.s32.totalorder %s26, 0
      %p361 = por %p359, %p360
      %p362 = scmp.ne.s32.totalorder %s354, %s356
      %p363 = scmp.eq.s32.totalorder %s31, 3
      %p364 = por %p362, %p363
      %p365 = scmp.ne.s32.totalorder %s356, %s357
      %p366 = scmp.eq.s32.totalorder %s31, 0
      %p367 = por %p365, %p366
      %p368 = scmp.ne.s32.totalorder %s356, %s357
      %p369 = scmp.eq.s32.totalorder %s32, 3
      %p370 = por %p368, %p369
      %p372 = scmp.ne.s32.totalorder %s357, %s371
      %p373 = scmp.eq.s32.totalorder %s32, 0
      %p374 = por %p372, %p373
      %p375 = scmp.le.s32.totalorder 1, %s26
      %p376 = scmp.lt.s32.totalorder %s26, 5
      %p377 = pnand %p375, %p376
      %p378 = pneg %p377
      // Predicated region
      $region9: #{pdcnn_forward.1} parent=5 // pred_check
        _
      $region10: #{pdcnn_forward.1} parent=5 // pred_check_branch
        %380 = sbr.rel (%p377) target = $region12
      $region11: #{pdcnn_forward.1} parent=5 // pred_region
        %s381 = ssub.s32 %s26, 1
        // Predicated region
        $region13: #{pdcnn_forward.1} parent=11 // pred_check
          %p382 = pneg %p47
        $region14: #{pdcnn_forward.1} parent=11 // pred_check_branch
          %384 = sbr.rel (%p382) target = $region16
        $region15: #{pdcnn_forward.1} parent=11 // pred_region
          %386 = vsyncadd [#allocation5], 0
          %s387 = sshll.u32 %s0, 4
          %s388 = int_to_ptr.hbm [resolvable:$true] %s387
          %s389 = sshll.u32 [#allocation4], 4
          %s390 = int_to_ptr.vmem [resolvable:$true] %s389
          %395 = dma.hbm_to_vmem [thread:$0]  %s388, 128, %s390, [#allocation5], 16, 16, 1
        $region16: #{pdcnn_forward.1} parent=11 // pred_fallthru
          _
        // Predicated region
        $region17: #{pdcnn_forward.1} parent=11 // pred_check
          %p396 = pneg %p68
        $region18: #{pdcnn_forward.1} parent=11 // pred_check_branch
          %398 = sbr.rel (%p396) target = $region20
        $region19: #{pdcnn_forward.1} parent=11 // pred_region
          _
        $region20: #{pdcnn_forward.1} parent=11 // pred_fallthru
          _
        // Predicated region
        $region21: #{pdcnn_forward.1} parent=11 // pred_check
          %p399 = pneg %p89
        $region22: #{pdcnn_forward.1} parent=11 // pred_check_branch
          %401 = sbr.rel (%p399) target = $region24
        $region23: #{pdcnn_forward.1} parent=11 // pred_region
          _
        $region24: #{pdcnn_forward.1} parent=11 // pred_fallthru
          _
        // Predicated region
        $region25: #{pdcnn_forward.1} parent=11 // pred_check
          %p402 = pneg %p110
        $region26: #{pdcnn_forward.1} parent=11 // pred_check_branch
          %404 = sbr.rel (%p402) target = $region28
        $region27: #{pdcnn_forward.1} parent=11 // pred_region
          %406 = vsyncadd [#allocation7], 0
          %s407 = sshll.u32 %s3, 4
          %s408 = int_to_ptr.hbm [resolvable:$true] %s407
          %s409 = sshll.u32 [#allocation6], 4
          %s410 = int_to_ptr.vmem [resolvable:$true] %s409
          %415 = dma.hbm_to_vmem [thread:$0]  %s408, 1024, %s410, [#allocation7], 128, 128, 8
        $region28: #{pdcnn_forward.1} parent=11 // pred_fallthru
          _
        // Predicated region
        $region29: #{pdcnn_forward.1} parent=11 // pred_check
          %p416 = pneg %p131
        $region30: #{pdcnn_forward.1} parent=11 // pred_check_branch
          %418 = sbr.rel (%p416) target = $region32
        $region31: #{pdcnn_forward.1} parent=11 // pred_region
          _
        $region32: #{pdcnn_forward.1} parent=11 // pred_fallthru
          _
        // Predicated region
        $region33: #{pdcnn_forward.1} parent=11 // pred_check
          %p419 = pneg %p152
        $region34: #{pdcnn_forward.1} parent=11 // pred_check_branch
          %421 = sbr.rel (%p419) target = $region36
        $region35: #{pdcnn_forward.1} parent=11 // pred_region
          _
        $region36: #{pdcnn_forward.1} parent=11 // pred_fallthru
          _
        // Predicated region
        $region37: #{pdcnn_forward.1} parent=11 // pred_check
          %p422 = pneg %p173
        $region38: #{pdcnn_forward.1} parent=11 // pred_check_branch
          %424 = sbr.rel (%p422) target = $region40
        $region39: #{pdcnn_forward.1} parent=11 // pred_region
          _
        $region40: #{pdcnn_forward.1} parent=11 // pred_fallthru
          _
        // Predicated region
        $region41: #{pdcnn_forward.1} parent=11 // pred_check
          %p425 = pneg %p220
        $region42: #{pdcnn_forward.1} parent=11 // pred_check_branch
          %427 = sbr.rel (%p425) target = $region44
        $region43: #{pdcnn_forward.1} parent=11 // pred_region
          %429 = vsyncadd [#allocation7], 0
          %s431 = sshll.u32 %s8, 4
          %s432 = int_to_ptr.hbm [resolvable:$true] %s431
          %s433 = sshll.u32 [#allocation9], 4
          %s434 = int_to_ptr.vmem [resolvable:$true] %s433
          %436 = dma.hbm_to_vmem [thread:$0]  %s432, 64, %s434, [#allocation7]
        $region44: #{pdcnn_forward.1} parent=11 // pred_fallthru
          _
        // Predicated region
        $region45: #{pdcnn_forward.1} parent=11 // pred_check
          %p437 = pneg %p241
        $region46: #{pdcnn_forward.1} parent=11 // pred_check_branch
          %439 = sbr.rel (%p437) target = $region48
        $region47: #{pdcnn_forward.1} parent=11 // pred_region
          %441 = vsyncadd [#allocation11], 0
          %s442 = sshll.u32 %s9, 4
          %s443 = int_to_ptr.hbm [resolvable:$true] %s442
          %s444 = sshll.u32 [#allocation10], 4
          %s445 = int_to_ptr.vmem [resolvable:$true] %s444
          %450 = dma.hbm_to_vmem [thread:$0]  %s443, 16384, %s445, [#allocation11], 256, 256, 16
        $region48: #{pdcnn_forward.1} parent=11 // pred_fallthru
          _
        // Predicated region
        $region49: #{pdcnn_forward.1} parent=11 // pred_check
          %p451 = pneg %p262
        $region50: #{pdcnn_forward.1} parent=11 // pred_check_branch
          %453 = sbr.rel (%p451) target = $region52
        $region51: #{pdcnn_forward.1} parent=11 // pred_region
          %455 = vsyncadd [#allocation11], 0
          %s457 = sshll.u32 %s10, 4
          %s458 = int_to_ptr.hbm [resolvable:$true] %s457
          %s459 = sshll.u32 [#allocation12], 4
          %s460 = int_to_ptr.vmem [resolvable:$true] %s459
          %462 = dma.hbm_to_vmem [thread:$0]  %s458, 32, %s460, [#allocation11]
        $region52: #{pdcnn_forward.1} parent=11 // pred_fallthru
          _
        // Predicated region
        $region53: #{pdcnn_forward.1} parent=11 // pred_check
          %p463 = pneg %p283
        $region54: #{pdcnn_forward.1} parent=11 // pred_check_branch
          %465 = sbr.rel (%p463) target = $region56
        $region55: #{pdcnn_forward.1} parent=11 // pred_region
          %467 = vsyncadd [#allocation14], 0
          %s468 = sshll.u32 %s11, 4
          %s469 = int_to_ptr.hbm [resolvable:$true] %s468
          %s470 = sshll.u32 [#allocation13], 4
          %s471 = int_to_ptr.vmem [resolvable:$true] %s470
          %476 = dma.hbm_to_vmem [thread:$0]  %s469, 4096, %s471, [#allocation14], 128, 128, 8
        $region56: #{pdcnn_forward.1} parent=11 // pred_fallthru
          _
        // Predicated region
        $region57: #{pdcnn_forward.1} parent=11 // pred_check
          %p477 = pneg %p304
        $region58: #{pdcnn_forward.1} parent=11 // pred_check_branch
          %479 = sbr.rel (%p477) target = $region60
        $region59: #{pdcnn_forward.1} parent=11 // pred_region
          %481 = vsyncadd [#allocation14], 0
          %s483 = sshll.u32 %s12, 4
          %s484 = int_to_ptr.hbm [resolvable:$true] %s483
          %s485 = sshll.u32 [#allocation15], 4
          %s486 = int_to_ptr.vmem [resolvable:$true] %s485
          %488 = dma.hbm_to_vmem [thread:$0]  %s484, 16, %s486, [#allocation14]
        $region60: #{pdcnn_forward.1} parent=11 // pred_fallthru
          _
        // Predicated region
        $region61: #{pdcnn_forward.1} parent=11 // pred_check
          %p489 = pneg %p325
        $region62: #{pdcnn_forward.1} parent=11 // pred_check_branch
          %491 = sbr.rel (%p489) target = $region64
        $region63: #{pdcnn_forward.1} parent=11 // pred_region
          _
        $region64: #{pdcnn_forward.1} parent=11 // pred_fallthru
          _
        // Predicated region
        $region65: #{pdcnn_forward.1} parent=11 // pred_check
          %p492 = pneg %p346
        $region66: #{pdcnn_forward.1} parent=11 // pred_check_branch
          %494 = sbr.rel (%p492) target = $region68
        $region67: #{pdcnn_forward.1} parent=11 // pred_region
          %496 = vsyncadd [#allocation17], 0
          %s498 = sshll.u32 %s14, 4
          %s499 = int_to_ptr.hbm [resolvable:$true] %s498
          %s500 = sshll.u32 [#allocation16], 4
          %s501 = int_to_ptr.vmem [resolvable:$true] %s500
          %503 = dma.hbm_to_vmem [thread:$0]  %s499, 16, %s501, [#allocation17]
        $region68: #{pdcnn_forward.1} parent=11 // pred_fallthru
          _
      $region12: #{pdcnn_forward.1} parent=5 // pred_fallthru
        _
      %p504 = scmp.lt.s32.totalorder %s26, 4
      // Predicated region
      $region69: #{pdcnn_forward.1} parent=5 // pred_check
        %p505 = pneg %p504
      $region70: #{pdcnn_forward.1} parent=5 // pred_check_branch
        %507 = sbr.rel (%p505) target = $region72
      $region71: #{pdcnn_forward.1} parent=5 // pred_region
        // Predicated region
        $region73: #{pdcnn_forward.1} parent=71 // pred_check
          %p508 = pneg %p193
        $region74: #{pdcnn_forward.1} parent=71 // pred_check_branch
          %510 = sbr.rel (%p508) target = $region76
        $region75: #{pdcnn_forward.1} parent=71 // pred_region
          %s511 = sand.u32 %s26, 1
          %s512 = scalar_lea.sflag [#allocation5], %s511
          %s513 = sand.u32 %s183, 1
          %s514 = smul.addr %s513, 6656
          %s515 = scalar_lea.vmem [#allocation8], %s514
          %s516 = smul.u32 13, %s26
          %518 = vsyncadd %s512, 0
          %s519 = smul.addr %s516, 64
          %s520 = smul.addr %s519, 8
          %s521 = scalar_lea.hbm %s7, %s520
          %s522 = sshll.u32 %s521, 4
          %s523 = int_to_ptr.hbm [resolvable:$true] %s522
          %s524 = sshll.u32 %s515, 4
          %s525 = int_to_ptr.vmem [resolvable:$true] %s524
          %530 = dma.hbm_to_vmem [thread:$0]  %s523, 106496, %s525, %s512, 512, 512, 32
        $region76: #{pdcnn_forward.1} parent=71 // pred_fallthru
          _
      $region72: #{pdcnn_forward.1} parent=5 // pred_fallthru
        _
      %p531 = scmp.le.s32.totalorder 1, %s26
      %p532 = scmp.lt.s32.totalorder %s26, 5
      %p533 = pnand %p531, %p532
      %p534 = pneg %p533
      // Predicated region
      $region77: #{pdcnn_forward.1} parent=5 // pred_check
        _
      $region78: #{pdcnn_forward.1} parent=5 // pred_check_branch
        %536 = sbr.rel (%p533) target = $region80
      $region79: #{pdcnn_forward.1} parent=5 // pred_region
        %s537 = ssub.s32 %s26, 1
        // Predicated region
        $region81: #{pdcnn_forward.1} parent=79 // pred_check
          %p538 = pneg %p47
        $region82: #{pdcnn_forward.1} parent=79 // pred_check_branch
          %540 = sbr.rel (%p538) target = $region84
        $region83: #{pdcnn_forward.1} parent=79 // pred_region
          %542 = dma.done [#allocation5], 128
        $region84: #{pdcnn_forward.1} parent=79 // pred_fallthru
          _
        // Predicated region
        $region85: #{pdcnn_forward.1} parent=79 // pred_check
          %p543 = pneg %p110
        $region86: #{pdcnn_forward.1} parent=79 // pred_check_branch
          %545 = sbr.rel (%p543) target = $region88
        $region87: #{pdcnn_forward.1} parent=79 // pred_region
          %547 = dma.done [#allocation7], 1024
        $region88: #{pdcnn_forward.1} parent=79 // pred_fallthru
          _
        %s548 = sand.u32 %s31, 1
        %s549 = scalar_lea.sflag [#allocation5], %s548
        %s550 = sand.u32 %s186, 1
        %s551 = smul.addr %s550, 6656
        %s552 = scalar_lea.vmem [#allocation8], %s551
        // Predicated region
        $region89: #{pdcnn_forward.1} parent=79 // pred_check
          %p553 = pneg %p199
        $region90: #{pdcnn_forward.1} parent=79 // pred_check_branch
          %555 = sbr.rel (%p553) target = $region92
        $region91: #{pdcnn_forward.1} parent=79 // pred_region
          %557 = dma.done %s549, 106496
        $region92: #{pdcnn_forward.1} parent=79 // pred_fallthru
          _
        // Predicated region
        $region93: #{pdcnn_forward.1} parent=79 // pred_check
          %p558 = pneg %p220
        $region94: #{pdcnn_forward.1} parent=79 // pred_check_branch
          %560 = sbr.rel (%p558) target = $region96
        $region95: #{pdcnn_forward.1} parent=79 // pred_region
          %562 = dma.done [#allocation7], 64
        $region96: #{pdcnn_forward.1} parent=79 // pred_fallthru
          _
        // Predicated region
        $region97: #{pdcnn_forward.1} parent=79 // pred_check
          %p563 = pneg %p241
        $region98: #{pdcnn_forward.1} parent=79 // pred_check_branch
          %565 = sbr.rel (%p563) target = $region100
        $region99: #{pdcnn_forward.1} parent=79 // pred_region
          %567 = dma.done [#allocation11], 16384
        $region100: #{pdcnn_forward.1} parent=79 // pred_fallthru
          _
        // Predicated region
        $region101: #{pdcnn_forward.1} parent=79 // pred_check
          %p568 = pneg %p262
        $region102: #{pdcnn_forward.1} parent=79 // pred_check_branch
          %570 = sbr.rel (%p568) target = $region104
        $region103: #{pdcnn_forward.1} parent=79 // pred_region
          %572 = dma.done [#allocation11], 32
        $region104: #{pdcnn_forward.1} parent=79 // pred_fallthru
          _
        // Predicated region
        $region105: #{pdcnn_forward.1} parent=79 // pred_check
          %p573 = pneg %p283
        $region106: #{pdcnn_forward.1} parent=79 // pred_check_branch
          %575 = sbr.rel (%p573) target = $region108
        $region107: #{pdcnn_forward.1} parent=79 // pred_region
          %577 = dma.done [#allocation14], 4096
        $region108: #{pdcnn_forward.1} parent=79 // pred_fallthru
          _
        // Predicated region
        $region109: #{pdcnn_forward.1} parent=79 // pred_check
          %p578 = pneg %p304
        $region110: #{pdcnn_forward.1} parent=79 // pred_check_branch
          %580 = sbr.rel (%p578) target = $region112
        $region111: #{pdcnn_forward.1} parent=79 // pred_region
          %582 = dma.done [#allocation14], 16
        $region112: #{pdcnn_forward.1} parent=79 // pred_fallthru
          _
        // Predicated region
        $region113: #{pdcnn_forward.1} parent=79 // pred_check
          %p583 = pneg %p346
        $region114: #{pdcnn_forward.1} parent=79 // pred_check_branch
          %585 = sbr.rel (%p583) target = $region116
        $region115: #{pdcnn_forward.1} parent=79 // pred_region
          %587 = dma.done [#allocation17], 16
        $region116: #{pdcnn_forward.1} parent=79 // pred_fallthru
          _
        %p588 = pneg %p47
        %p589 = pneg %p44
        %p590 = pneg %p68
        %p591 = pneg %p65
        %p592 = pneg %p89
        %p593 = pneg %p86
        %p594 = pneg %p110
        %p595 = pneg %p107
        %p596 = pneg %p131
        %p597 = pneg %p128
        %p598 = pneg %p152
        %p599 = pneg %p149
        %p600 = pneg %p173
        %p601 = pneg %p170
        %s602 = sand.u32 %s31, 1
        %s603 = scalar_lea.sflag [#allocation5], %s602
        %s604 = sand.u32 %s186, 1
        %s605 = smul.addr %s604, 6656
        %s606 = scalar_lea.vmem [#allocation8], %s605
        %p607 = pneg %p199
        %p608 = pneg %p196
        %p609 = pneg %p220
        %p610 = pneg %p217
        %p611 = pneg %p241
        %p612 = pneg %p238
        %p613 = pneg %p262
        %p614 = pneg %p259
        %p615 = pneg %p283
        %p616 = pneg %p280
        %p617 = pneg %p304
        %p618 = pneg %p301
        %p619 = pneg %p325
        %p620 = pneg %p322
        %p621 = pneg %p346
        %p622 = pneg %p343
        %p623 = pneg %p367
        %p624 = pneg %p364
        %s625 = smul.u32 13, %s31
        %p626 = scmp.eq.s32.totalorder %s31, 0
        // Predicated region
        $region117: #{pdcnn_forward.1} parent=79 // pred_check
          %p627 = pneg %p626
        $region118: #{pdcnn_forward.1} parent=79 // pred_check_branch
          %629 = sbr.rel (%p627) target = $region120
        $region119: #{pdcnn_forward.1} parent=79 // pred_region
          %630 = vst [vmem:[#allocation3] sm:$0xff] 0.0
          %631 = vst [vmem:[#allocation3 + $0x8] sm:$0xff] 0.0
          %632 = vst [vmem:[#allocation3 + $0x10] sm:$0xff] 0.0
          %633 = vst [vmem:[#allocation3 + $0x18] sm:$0xff] 0.0
          %v634 = vlaneseq
          %v635 = vshrl.u32 %v634, 7
          %v636 = vadd.s32 %v635, 8
          %v637 = vadd.s32 %v635, 16
          %v638 = vadd.s32 %v635, 24
          %v639 = vadd.s32 %v635, 32
          %v640 = vadd.s32 %v635, 40
          %v641 = vadd.s32 %v635, 48
          %v642 = vadd.s32 %v635, 56
          %v643 = vadd.s32 %v635, 64
          %v644 = vadd.s32 %v635, 72
          %v645 = vadd.s32 %v635, 80
          %v646 = vadd.s32 %v635, 88
          %v647 = vadd.s32 %v635, 96
          %v648 = vlaneseq
          %v649 = vand.u32 %v648, 127
          %v650 = vmul.u32 %v649, 2
          %vm651 = vcmp.eq.s32.totalorder %v635, %v650
          %vm652 = vcmp.eq.s32.totalorder %v636, %v650
          %vm653 = vcmp.eq.s32.totalorder %v637, %v650
          %vm654 = vcmp.eq.s32.totalorder %v638, %v650
          %vm655 = vcmp.eq.s32.totalorder %v639, %v650
          %vm656 = vcmp.eq.s32.totalorder %v640, %v650
          %vm657 = vcmp.eq.s32.totalorder %v641, %v650
          %vm658 = vcmp.eq.s32.totalorder %v642, %v650
          %vm659 = vcmp.eq.s32.totalorder %v643, %v650
          %vm660 = vcmp.eq.s32.totalorder %v644, %v650
          %vm661 = vcmp.eq.s32.totalorder %v645, %v650
          %vm662 = vcmp.eq.s32.totalorder %v646, %v650
          %vm663 = vcmp.eq.s32.totalorder %v647, %v650
          %v664 = vsel %vm651, 1, 0
          %v665 = vsel %vm652, 1, 0
          %v666 = vsel %vm653, 1, 0
          %v667 = vsel %vm654, 1, 0
          %v668 = vsel %vm655, 1, 0
          %v669 = vsel %vm656, 1, 0
          %v670 = vsel %vm657, 1, 0
          %v671 = vsel %vm658, 1, 0
          %v672 = vsel %vm659, 1, 0
          %v673 = vsel %vm660, 1, 0
          %v674 = vsel %vm661, 1, 0
          %v675 = vsel %vm662, 1, 0
          %v676 = vsel %vm663, 1, 0
          %v677 = vcvt.s32.f32 %v664
          %v678 = vcvt.s32.f32 %v665
          %v679 = vcvt.s32.f32 %v666
          %v680 = vcvt.s32.f32 %v667
          %v681 = vcvt.s32.f32 %v668
          %v682 = vcvt.s32.f32 %v669
          %v683 = vcvt.s32.f32 %v670
          %v684 = vcvt.s32.f32 %v671
          %v685 = vcvt.s32.f32 %v672
          %v686 = vcvt.s32.f32 %v673
          %v687 = vcvt.s32.f32 %v674
          %v688 = vcvt.s32.f32 %v675
          %v689 = vcvt.s32.f32 %v676
          %v690 = vld [vmem:[%s1] sm:$0xff]
          %v691 = vld [vmem:[%s1 + $0x8] sm:$0xff]
          %v692 = vld [vmem:[%s1 + $0x10] sm:$0xff]
          %v693 = vld [vmem:[%s1 + $0x18] sm:$0xff]
          %v694 = vld [vmem:[%s2] sm:$0xff]
          %v695 = vld [vmem:[%s2 + $0x8] sm:$0xff]
          %v696 = vld [vmem:[%s2 + $0x10] sm:$0xff]
          %v697 = vld [vmem:[%s2 + $0x18] sm:$0xff]
          %v698 = vld [vmem:[#allocation6] sm:$0xff]
          %v699 = vld [vmem:[#allocation6 + $0x8] sm:$0xff]
          %v700 = vld [vmem:[#allocation6 + $0x10] sm:$0xff]
          %v701 = vld [vmem:[#allocation6 + $0x18] sm:$0xff]
          %v702 = vld [vmem:[#allocation6 + $0x20] sm:$0xff]
          %v703 = vld [vmem:[#allocation6 + $0x28] sm:$0xff]
          %v704 = vld [vmem:[#allocation6 + $0x30] sm:$0xff]
          %v705 = vld [vmem:[#allocation6 + $0x38] sm:$0xff]
          %v706 = vld [vmem:[%s4] sm:$0xff]
          %v707 = vld [vmem:[%s4 + $0x8] sm:$0xff]
          %v708 = vld [vmem:[%s4 + $0x10] sm:$0xff]
          %v709 = vld [vmem:[%s4 + $0x18] sm:$0xff]
          %v710 = vld [vmem:[%s4 + $0x20] sm:$0xff]
          %v711 = vld [vmem:[%s4 + $0x28] sm:$0xff]
          %v712 = vld [vmem:[%s4 + $0x30] sm:$0xff]
          %v713 = vld [vmem:[%s4 + $0x38] sm:$0xff]
          %v714 = vld [vmem:[%s5] sm:$0xff]
          %v715 = vld [vmem:[%s5 + $0x8] sm:$0xff]
          %v716 = vld [vmem:[%s5 + $0x10] sm:$0xff]
          %v717 = vld [vmem:[%s5 + $0x18] sm:$0xff]
          %v718 = vld [vmem:[%s5 + $0x20] sm:$0xff]
          %v719 = vld [vmem:[%s5 + $0x28] sm:$0xff]
          %v720 = vld [vmem:[%s5 + $0x30] sm:$0xff]
          %v721 = vld [vmem:[%s5 + $0x38] sm:$0xff]
          %v722 = vld [vmem:[%s5 + $0x40] sm:$0xff]
          %v723 = vld [vmem:[%s5 + $0x48] sm:$0xff]
          %v724 = vld [vmem:[%s5 + $0x50] sm:$0xff]
          %v725 = vld [vmem:[%s5 + $0x58] sm:$0xff]
          %v726 = vld [vmem:[%s5 + $0x60] sm:$0xff]
          %v727 = vld [vmem:[%s5 + $0x68] sm:$0xff]
          %v728 = vld [vmem:[%s5 + $0x70] sm:$0xff]
          %v729 = vld [vmem:[%s5 + $0x78] sm:$0xff]
          %v730 = vld [vmem:[%s5 + $0x80] sm:$0xff]
          %v731 = vld [vmem:[%s5 + $0x88] sm:$0xff]
          %v732 = vld [vmem:[%s5 + $0x90] sm:$0xff]
          %v733 = vld [vmem:[%s5 + $0x98] sm:$0xff]
          %v734 = vld [vmem:[%s5 + $0xa0] sm:$0xff]
          %v735 = vld [vmem:[%s5 + $0xa8] sm:$0xff]
          %v736 = vld [vmem:[%s5 + $0xb0] sm:$0xff]
          %v737 = vld [vmem:[%s5 + $0xb8] sm:$0xff]
          %v738 = vld [vmem:[%s5 + $0xc0] sm:$0xff]
          %v739 = vld [vmem:[%s5 + $0xc8] sm:$0xff]
          %v740 = vld [vmem:[%s5 + $0xd0] sm:$0xff]
          %v741 = vld [vmem:[%s5 + $0xd8] sm:$0xff]
          %v742 = vld [vmem:[%s5 + $0xe0] sm:$0xff]
          %v743 = vld [vmem:[%s5 + $0xe8] sm:$0xff]
          %v744 = vld [vmem:[%s5 + $0xf0] sm:$0xff]
          %v745 = vld [vmem:[%s5 + $0xf8] sm:$0xff]
          %v746 = vld [vmem:[%s6] sm:$0xff]
          %v747 = vld [vmem:[%s6 + $0x8] sm:$0xff]
          %v748 = vld [vmem:[%s6 + $0x10] sm:$0xff]
          %v749 = vld [vmem:[%s6 + $0x18] sm:$0xff]
          %v750 = vld [vmem:[%s6 + $0x20] sm:$0xff]
          %v751 = vld [vmem:[%s6 + $0x28] sm:$0xff]
          %v752 = vld [vmem:[%s6 + $0x30] sm:$0xff]
          %v753 = vld [vmem:[%s6 + $0x38] sm:$0xff]
          %v754 = vld [vmem:[%s6 + $0x40] sm:$0xff]
          %v755 = vld [vmem:[%s6 + $0x48] sm:$0xff]
          %v756 = vld [vmem:[%s6 + $0x50] sm:$0xff]
          %v757 = vld [vmem:[%s6 + $0x58] sm:$0xff]
          %v758 = vld [vmem:[%s6 + $0x60] sm:$0xff]
          %v759 = vld [vmem:[%s6 + $0x68] sm:$0xff]
          %v760 = vld [vmem:[%s6 + $0x70] sm:$0xff]
          %v761 = vld [vmem:[%s6 + $0x78] sm:$0xff]
          %v762 = vld [vmem:[#allocation4] sm:$0x1]
          %764 = vset.pattern.permute.xlu0 0
          %765 = vperm.xlu0 %764, %v690
          %v766 = vpop.permute.xlu0 %765
          %769 = vset.pattern.permute.xlu0 0
          %770 = vperm.xlu0 %769, %v691
          %v771 = vpop.permute.xlu0 %770
          %774 = vset.pattern.permute.xlu0 0
          %775 = vperm.xlu0 %774, %v692
          %v776 = vpop.permute.xlu0 %775
          %779 = vset.pattern.permute.xlu0 0
          %780 = vperm.xlu0 %779, %v693
          %v781 = vpop.permute.xlu0 %780
          %v784 = vperm.slane %v762, 0
          %v786 = vmul.f32 %v766, %v784
          %v787 = vmul.f32 %v771, %v784
          %v788 = vmul.f32 %v776, %v784
          %v789 = vmul.f32 %v781, %v784
          %790 = vset.pattern.permute.xlu0 1
          %791 = vperm.xlu0 %790, %v690
          %v792 = vpop.permute.xlu0 %791
          %794 = vset.pattern.permute.xlu0 1
          %795 = vperm.xlu0 %794, %v691
          %v796 = vpop.permute.xlu0 %795
          %798 = vset.pattern.permute.xlu0 1
          %799 = vperm.xlu0 %798, %v692
          %v800 = vpop.permute.xlu0 %799
          %802 = vset.pattern.permute.xlu0 1
          %803 = vperm.xlu0 %802, %v693
          %v804 = vpop.permute.xlu0 %803
          %v806 = vmul.f32 %v792, %v784
          %v807 = vmul.f32 %v796, %v784
          %v808 = vmul.f32 %v800, %v784
          %v809 = vmul.f32 %v804, %v784
          %814 = vrot.lane.b32.xlu0 %v806, 127
          %v815 = vpop.permute.xlu0 %814
          %816 = vrot.lane.b32.xlu0 %v807, 127
          %v817 = vpop.permute.xlu0 %816
          %818 = vrot.lane.b32.xlu0 %v808, 127
          %v819 = vpop.permute.xlu0 %818
          %820 = vrot.lane.b32.xlu0 %v809, 127
          %v821 = vpop.permute.xlu0 %820
          %v826 = vadd.f32 %v786, %v815
          %v827 = vadd.f32 %v787, %v817
          %v828 = vadd.f32 %v788, %v819
          %v829 = vadd.f32 %v789, %v821
          %830 = vset.pattern.permute.xlu0 2
          %831 = vperm.xlu0 %830, %v690
          %v832 = vpop.permute.xlu0 %831
          %834 = vset.pattern.permute.xlu0 2
          %835 = vperm.xlu0 %834, %v691
          %v836 = vpop.permute.xlu0 %835
          %838 = vset.pattern.permute.xlu0 2
          %839 = vperm.xlu0 %838, %v692
          %v840 = vpop.permute.xlu0 %839
          %842 = vset.pattern.permute.xlu0 2
          %843 = vperm.xlu0 %842, %v693
          %v844 = vpop.permute.xlu0 %843
          %v846 = vmul.f32 %v832, %v784
          %v847 = vmul.f32 %v836, %v784
          %v848 = vmul.f32 %v840, %v784
          %v849 = vmul.f32 %v844, %v784
          %854 = vrot.lane.b32.xlu0 %v846, 126
          %v855 = vpop.permute.xlu0 %854
          %856 = vrot.lane.b32.xlu0 %v847, 126
          %v857 = vpop.permute.xlu0 %856
          %858 = vrot.lane.b32.xlu0 %v848, 126
          %v859 = vpop.permute.xlu0 %858
          %860 = vrot.lane.b32.xlu0 %v849, 126
          %v861 = vpop.permute.xlu0 %860
          %v866 = vadd.f32 %v826, %v855
          %v867 = vadd.f32 %v827, %v857
          %v868 = vadd.f32 %v828, %v859
          %v869 = vadd.f32 %v829, %v861
          %871 = vset.pattern.permute.xlu0 0
          %872 = vperm.xlu0 %871, %v694
          %v873 = vpop.permute.xlu0 %872
          %876 = vset.pattern.permute.xlu0 0
          %877 = vperm.xlu0 %876, %v695
          %v878 = vpop.permute.xlu0 %877
          %881 = vset.pattern.permute.xlu0 0
          %882 = vperm.xlu0 %881, %v696
          %v883 = vpop.permute.xlu0 %882
          %886 = vset.pattern.permute.xlu0 0
          %887 = vperm.xlu0 %886, %v697
          %v888 = vpop.permute.xlu0 %887
          %v890 = vadd.f32 %v866, %v873
          %v891 = vadd.f32 %v867, %v878
          %v892 = vadd.f32 %v868, %v883
          %v893 = vadd.f32 %v869, %v888
          %898 = vrot.lane.b32.xlu0 %v890, 127
          %v899 = vpop.permute.xlu0 %898
          %900 = vrot.lane.b32.xlu0 %v891, 127
          %v901 = vpop.permute.xlu0 %900
          %902 = vrot.lane.b32.xlu0 %v892, 127
          %v903 = vpop.permute.xlu0 %902
          %904 = vrot.lane.b32.xlu0 %v893, 127
          %v905 = vpop.permute.xlu0 %904
          %910 = vrot.lane.b32.xlu0 %v890, 126
          %v911 = vpop.permute.xlu0 %910
          %912 = vrot.lane.b32.xlu0 %v891, 126
          %v913 = vpop.permute.xlu0 %912
          %914 = vrot.lane.b32.xlu0 %v892, 126
          %v915 = vpop.permute.xlu0 %914
          %916 = vrot.lane.b32.xlu0 %v893, 126
          %v917 = vpop.permute.xlu0 %916
          %923 = vset.pattern.permute.xlu0 0
          %924 = vperm.xlu0 %923, %v706
          %v925 = vpop.permute.xlu0 %924
          %928 = vset.pattern.permute.xlu0 0
          %929 = vperm.xlu0 %928, %v707
          %v930 = vpop.permute.xlu0 %929
          %933 = vset.pattern.permute.xlu0 0
          %934 = vperm.xlu0 %933, %v708
          %v935 = vpop.permute.xlu0 %934
          %938 = vset.pattern.permute.xlu0 0
          %939 = vperm.xlu0 %938, %v709
          %v940 = vpop.permute.xlu0 %939
          %943 = vset.pattern.permute.xlu0 0
          %944 = vperm.xlu0 %943, %v710
          %v945 = vpop.permute.xlu0 %944
          %948 = vset.pattern.permute.xlu0 0
          %949 = vperm.xlu0 %948, %v711
          %v950 = vpop.permute.xlu0 %949
          %953 = vset.pattern.permute.xlu0 0
          %954 = vperm.xlu0 %953, %v712
          %v955 = vpop.permute.xlu0 %954
          %958 = vset.pattern.permute.xlu0 0
          %959 = vperm.xlu0 %958, %v713
          %v960 = vpop.permute.xlu0 %959
          %vm962 = vcmask 785408
          %v964 = vsel %vm962, %v698, 0
          %v967 = vsel %vm962, %v699, 0
          %v970 = vsel %vm962, %v700, 0
          %v973 = vsel %vm962, %v701, 0
          %v976 = vsel %vm962, %v702, 0
          %v979 = vsel %vm962, %v703, 0
          %v982 = vsel %vm962, %v704, 0
          %v985 = vsel %vm962, %v705, 0
          %987 = vmatpush.msra.mxu0 0.0
          %988 = vmatpush.msra.mxu0 0.0
          %989 = vmatpush.msra.mxu0 0.0
          %990 = vmatpush.msra.mxu0 0.0
          %991 = vmatpush.msra.mxu0 %v917
          %992 = vmatpush.msra.mxu0 %v915
          %993 = vmatpush.msra.mxu0 %v913
          %994 = vmatpush.msra.mxu0 %v911
          %995 = vmatpush.msra.mxu0 %v905
          %996 = vmatpush.msra.mxu0 %v903
          %997 = vmatpush.msra.mxu0 %v901
          %998 = vmatpush.msra.mxu0 %v899
          %999 = vmatpush.msra.mxu0 %v893
          %1000 = vmatpush.msra.mxu0 %v892
          %1001 = vmatpush.msra.mxu0 %v891
          %1002 = vmatpush.msra.mxu0 %v890
          %1003 = vmatmul.f32.gmra.mxu0 %v964
          %v1004 = vpop.f32.mrf.mxu0
          %v1005 = vadd.f32 %v925, %v1004
          %1006 = vmatmul.f32.gmra.mxu0 %v967
          %v1007 = vpop.f32.mrf.mxu0
          %v1008 = vadd.f32 %v930, %v1007
          %1009 = vmatmul.f32.gmra.mxu0 %v970
          %v1010 = vpop.f32.mrf.mxu0
          %v1011 = vadd.f32 %v935, %v1010
          %1012 = vmatmul.f32.gmra.mxu0 %v973
          %v1013 = vpop.f32.mrf.mxu0
          %v1014 = vadd.f32 %v940, %v1013
          %1015 = vmatmul.f32.gmra.mxu0 %v976
          %v1016 = vpop.f32.mrf.mxu0
          %v1017 = vadd.f32 %v945, %v1016
          %1018 = vmatmul.f32.gmra.mxu0 %v979
          %v1019 = vpop.f32.mrf.mxu0
          %v1020 = vadd.f32 %v950, %v1019
          %1021 = vmatmul.f32.gmra.mxu0 %v982
          %v1022 = vpop.f32.mrf.mxu0
          %v1023 = vadd.f32 %v955, %v1022
          %1024 = vmatmul.f32.gmra.mxu0 %v985
          %v1025 = vpop.f32.mrf.mxu0
          %v1026 = vadd.f32 %v960, %v1025
          %1027 = vdwg.mxu0
          %1036 = vrot.lane.b32.xlu0 %v1005, 127
          %v1037 = vpop.permute.xlu0 %1036
          %1038 = vrot.lane.b32.xlu0 %v1008, 127
          %v1039 = vpop.permute.xlu0 %1038
          %1040 = vrot.lane.b32.xlu0 %v1011, 127
          %v1041 = vpop.permute.xlu0 %1040
          %1042 = vrot.lane.b32.xlu0 %v1014, 127
          %v1043 = vpop.permute.xlu0 %1042
          %1044 = vrot.lane.b32.xlu0 %v1017, 127
          %v1045 = vpop.permute.xlu0 %1044
          %1046 = vrot.lane.b32.xlu0 %v1020, 127
          %v1047 = vpop.permute.xlu0 %1046
          %1048 = vrot.lane.b32.xlu0 %v1023, 127
          %v1049 = vpop.permute.xlu0 %1048
          %1050 = vrot.lane.b32.xlu0 %v1026, 127
          %v1051 = vpop.permute.xlu0 %1050
          %1060 = vrot.lane.b32.xlu0 %v1005, 126
          %v1061 = vpop.permute.xlu0 %1060
          %1062 = vrot.lane.b32.xlu0 %v1008, 126
          %v1063 = vpop.permute.xlu0 %1062
          %1064 = vrot.lane.b32.xlu0 %v1011, 126
          %v1065 = vpop.permute.xlu0 %1064
          %1066 = vrot.lane.b32.xlu0 %v1014, 126
          %v1067 = vpop.permute.xlu0 %1066
          %1068 = vrot.lane.b32.xlu0 %v1017, 126
          %v1069 = vpop.permute.xlu0 %1068
          %1070 = vrot.lane.b32.xlu0 %v1020, 126
          %v1071 = vpop.permute.xlu0 %1070
          %1072 = vrot.lane.b32.xlu0 %v1023, 126
          %v1073 = vpop.permute.xlu0 %1072
          %1074 = vrot.lane.b32.xlu0 %v1026, 126
          %v1075 = vpop.permute.xlu0 %1074
          %1085 = vset.pattern.permute.xlu0 0
          %1086 = vperm.xlu0 %1085, %v746
          %v1087 = vpop.permute.xlu0 %1086
          %1090 = vset.pattern.permute.xlu0 0
          %1091 = vperm.xlu0 %1090, %v747
          %v1092 = vpop.permute.xlu0 %1091
          %1095 = vset.pattern.permute.xlu0 0
          %1096 = vperm.xlu0 %1095, %v748
          %v1097 = vpop.permute.xlu0 %1096
          %1100 = vset.pattern.permute.xlu0 0
          %1101 = vperm.xlu0 %1100, %v749
          %v1102 = vpop.permute.xlu0 %1101
          %1105 = vset.pattern.permute.xlu0 0
          %1106 = vperm.xlu0 %1105, %v750
          %v1107 = vpop.permute.xlu0 %1106
          %1110 = vset.pattern.permute.xlu0 0
          %1111 = vperm.xlu0 %1110, %v751
          %v1112 = vpop.permute.xlu0 %1111
          %1115 = vset.pattern.permute.xlu0 0
          %1116 = vperm.xlu0 %1115, %v752
          %v1117 = vpop.permute.xlu0 %1116
          %1120 = vset.pattern.permute.xlu0 0
          %1121 = vperm.xlu0 %1120, %v753
          %v1122 = vpop.permute.xlu0 %1121
          %1125 = vset.pattern.permute.xlu0 0
          %1126 = vperm.xlu0 %1125, %v754
          %v1127 = vpop.permute.xlu0 %1126
          %1130 = vset.pattern.permute.xlu0 0
          %1131 = vperm.xlu0 %1130, %v755
          %v1132 = vpop.permute.xlu0 %1131
          %1135 = vset.pattern.permute.xlu0 0
          %1136 = vperm.xlu0 %1135, %v756
          %v1137 = vpop.permute.xlu0 %1136
          %1140 = vset.pattern.permute.xlu0 0
          %1141 = vperm.xlu0 %1140, %v757
          %v1142 = vpop.permute.xlu0 %1141
          %1145 = vset.pattern.permute.xlu0 0
          %1146 = vperm.xlu0 %1145, %v758
          %v1147 = vpop.permute.xlu0 %1146
          %1150 = vset.pattern.permute.xlu0 0
          %1151 = vperm.xlu0 %1150, %v759
          %v1152 = vpop.permute.xlu0 %1151
          %1155 = vset.pattern.permute.xlu0 0
          %1156 = vperm.xlu0 %1155, %v760
          %v1157 = vpop.permute.xlu0 %1156
          %1160 = vset.pattern.permute.xlu0 0
          %1161 = vperm.xlu0 %1160, %v761
          %v1162 = vpop.permute.xlu0 %1161
          %vm1164 = vcmask 523264
          %v1166 = vsel %vm1164, %v715, 0
          %v1169 = vsel %vm1164, %v717, 0
          %v1172 = vsel %vm1164, %v719, 0
          %v1175 = vsel %vm1164, %v721, 0
          %v1178 = vsel %vm1164, %v723, 0
          %v1181 = vsel %vm1164, %v725, 0
          %v1184 = vsel %vm1164, %v727, 0
          %v1187 = vsel %vm1164, %v729, 0
          %v1190 = vsel %vm1164, %v731, 0
          %v1193 = vsel %vm1164, %v733, 0
          %v1196 = vsel %vm1164, %v735, 0
          %v1199 = vsel %vm1164, %v737, 0
          %v1202 = vsel %vm1164, %v739, 0
          %v1205 = vsel %vm1164, %v741, 0
          %v1208 = vsel %vm1164, %v743, 0
          %v1211 = vsel %vm1164, %v745, 0
          %1213 = vmatpush.msra.mxu0 %v1051
          %1214 = vmatpush.msra.mxu0 %v1049
          %1215 = vmatpush.msra.mxu0 %v1047
          %1216 = vmatpush.msra.mxu0 %v1045
          %1217 = vmatpush.msra.mxu0 %v1043
          %1218 = vmatpush.msra.mxu0 %v1041
          %1219 = vmatpush.msra.mxu0 %v1039
          %1220 = vmatpush.msra.mxu0 %v1037
          %1221 = vmatpush.msra.mxu0 %v1026
          %1222 = vmatpush.msra.mxu0 %v1023
          %1223 = vmatpush.msra.mxu0 %v1020
          %1224 = vmatpush.msra.mxu0 %v1017
          %1225 = vmatpush.msra.mxu0 %v1014
          %1226 = vmatpush.msra.mxu0 %v1011
          %1227 = vmatpush.msra.mxu0 %v1008
          %1228 = vmatpush.msra.mxu0 %v1005
          %1229 = vmatmul.f32.gmra.mxu0 %v714
          %v1230 = vpop.f32.mrf.mxu0
          %v1231 = vadd.f32 %v1087, %v1230
          %1232 = vmatmul.f32.gmra.mxu0 %v716
          %v1233 = vpop.f32.mrf.mxu0
          %v1234 = vadd.f32 %v1092, %v1233
          %1235 = vmatmul.f32.gmra.mxu0 %v718
          %v1236 = vpop.f32.mrf.mxu0
          %v1237 = vadd.f32 %v1097, %v1236
          %1238 = vmatmul.f32.gmra.mxu0 %v720
          %v1239 = vpop.f32.mrf.mxu0
          %v1240 = vadd.f32 %v1102, %v1239
          %1241 = vmatmul.f32.gmra.mxu0 %v722
          %v1242 = vpop.f32.mrf.mxu0
          %v1243 = vadd.f32 %v1107, %v1242
          %1244 = vmatmul.f32.gmra.mxu0 %v724
          %v1245 = vpop.f32.mrf.mxu0
          %v1246 = vadd.f32 %v1112, %v1245
          %1247 = vmatmul.f32.gmra.mxu0 %v726
          %v1248 = vpop.f32.mrf.mxu0
          %v1249 = vadd.f32 %v1117, %v1248
          %1250 = vmatmul.f32.gmra.mxu0 %v728
          %v1251 = vpop.f32.mrf.mxu0
          %v1252 = vadd.f32 %v1122, %v1251
          %1253 = vmatmul.f32.gmra.mxu0 %v730
          %v1254 = vpop.f32.mrf.mxu0
          %v1255 = vadd.f32 %v1127, %v1254
          %1256 = vmatmul.f32.gmra.mxu0 %v732
          %v1257 = vpop.f32.mrf.mxu0
          %v1258 = vadd.f32 %v1132, %v1257
          %1259 = vmatmul.f32.gmra.mxu0 %v734
          %v1260 = vpop.f32.mrf.mxu0
          %v1261 = vadd.f32 %v1137, %v1260
          %1262 = vmatmul.f32.gmra.mxu0 %v736
          %v1263 = vpop.f32.mrf.mxu0
          %v1264 = vadd.f32 %v1142, %v1263
          %1265 = vmatmul.f32.gmra.mxu0 %v738
          %v1266 = vpop.f32.mrf.mxu0
          %v1267 = vadd.f32 %v1147, %v1266
          %1268 = vmatmul.f32.gmra.mxu0 %v740
          %v1269 = vpop.f32.mrf.mxu0
          %v1270 = vadd.f32 %v1152, %v1269
          %1271 = vmatmul.f32.gmra.mxu0 %v742
          %v1272 = vpop.f32.mrf.mxu0
          %v1273 = vadd.f32 %v1157, %v1272
          %1274 = vmatmul.f32.gmra.mxu0 %v744
          %v1275 = vpop.f32.mrf.mxu0
          %v1276 = vadd.f32 %v1162, %v1275
          %1277 = vdwg.mxu0
          %1278 = vmatpush.msra.mxu0 0.0
          %1279 = vmatpush.msra.mxu0 0.0
          %1280 = vmatpush.msra.mxu0 0.0
          %1281 = vmatpush.msra.mxu0 0.0
          %1282 = vmatpush.msra.mxu0 0.0
          %1283 = vmatpush.msra.mxu0 0.0
          %1284 = vmatpush.msra.mxu0 0.0
          %1285 = vmatpush.msra.mxu0 0.0
          %1286 = vmatpush.msra.mxu0 %v1075
          %1287 = vmatpush.msra.mxu0 %v1073
          %1288 = vmatpush.msra.mxu0 %v1071
          %1289 = vmatpush.msra.mxu0 %v1069
          %1290 = vmatpush.msra.mxu0 %v1067
          %1291 = vmatpush.msra.mxu0 %v1065
          %1292 = vmatpush.msra.mxu0 %v1063
          %1293 = vmatpush.msra.mxu0 %v1061
          %1294 = vmatmul.f32.gmra.mxu0 %v1166
          %v1295 = vpop.f32.mrf.mxu0
          %v1296 = vadd.f32 %v1231, %v1295
          %1297 = vmatmul.f32.gmra.mxu0 %v1169
          %v1298 = vpop.f32.mrf.mxu0
          %v1299 = vadd.f32 %v1234, %v1298
          %1300 = vmatmul.f32.gmra.mxu0 %v1172
          %v1301 = vpop.f32.mrf.mxu0
          %v1302 = vadd.f32 %v1237, %v1301
          %1303 = vmatmul.f32.gmra.mxu0 %v1175
          %v1304 = vpop.f32.mrf.mxu0
          %v1305 = vadd.f32 %v1240, %v1304
          %1306 = vmatmul.f32.gmra.mxu0 %v1178
          %v1307 = vpop.f32.mrf.mxu0
          %v1308 = vadd.f32 %v1243, %v1307
          %1309 = vmatmul.f32.gmra.mxu0 %v1181
          %v1310 = vpop.f32.mrf.mxu0
          %v1311 = vadd.f32 %v1246, %v1310
          %1312 = vmatmul.f32.gmra.mxu0 %v1184
          %v1313 = vpop.f32.mrf.mxu0
          %v1314 = vadd.f32 %v1249, %v1313
          %1315 = vmatmul.f32.gmra.mxu0 %v1187
          %v1316 = vpop.f32.mrf.mxu0
          %v1317 = vadd.f32 %v1252, %v1316
          %1318 = vmatmul.f32.gmra.mxu0 %v1190
          %v1319 = vpop.f32.mrf.mxu0
          %v1320 = vadd.f32 %v1255, %v1319
          %1321 = vmatmul.f32.gmra.mxu0 %v1193
          %v1322 = vpop.f32.mrf.mxu0
          %v1323 = vadd.f32 %v1258, %v1322
          %1324 = vmatmul.f32.gmra.mxu0 %v1196
          %v1325 = vpop.f32.mrf.mxu0
          %v1326 = vadd.f32 %v1261, %v1325
          %1327 = vmatmul.f32.gmra.mxu0 %v1199
          %v1328 = vpop.f32.mrf.mxu0
          %v1329 = vadd.f32 %v1264, %v1328
          %1330 = vmatmul.f32.gmra.mxu0 %v1202
          %v1331 = vpop.f32.mrf.mxu0
          %v1332 = vadd.f32 %v1267, %v1331
          %1333 = vmatmul.f32.gmra.mxu0 %v1205
          %v1334 = vpop.f32.mrf.mxu0
          %v1335 = vadd.f32 %v1270, %v1334
          %1336 = vmatmul.f32.gmra.mxu0 %v1208
          %v1337 = vpop.f32.mrf.mxu0
          %v1338 = vadd.f32 %v1273, %v1337
          %1339 = vmatmul.f32.gmra.mxu0 %v1211
          %v1340 = vpop.f32.mrf.mxu0
          %v1341 = vadd.f32 %v1276, %v1340
          %1342 = vdwg.mxu0
          %1359 = vrot.lane.b32.xlu0 %v1296, 127
          %v1360 = vpop.permute.xlu0 %1359
          %1361 = vrot.lane.b32.xlu0 %v1299, 127
          %v1362 = vpop.permute.xlu0 %1361
          %1363 = vrot.lane.b32.xlu0 %v1302, 127
          %v1364 = vpop.permute.xlu0 %1363
          %1365 = vrot.lane.b32.xlu0 %v1305, 127
          %v1366 = vpop.permute.xlu0 %1365
          %1367 = vrot.lane.b32.xlu0 %v1308, 127
          %v1368 = vpop.permute.xlu0 %1367
          %1369 = vrot.lane.b32.xlu0 %v1311, 127
          %v1370 = vpop.permute.xlu0 %1369
          %1371 = vrot.lane.b32.xlu0 %v1314, 127
          %v1372 = vpop.permute.xlu0 %1371
          %1373 = vrot.lane.b32.xlu0 %v1317, 127
          %v1374 = vpop.permute.xlu0 %1373
          %1375 = vrot.lane.b32.xlu0 %v1320, 127
          %v1376 = vpop.permute.xlu0 %1375
          %1377 = vrot.lane.b32.xlu0 %v1323, 127
          %v1378 = vpop.permute.xlu0 %1377
          %1379 = vrot.lane.b32.xlu0 %v1326, 127
          %v1380 = vpop.permute.xlu0 %1379
          %1381 = vrot.lane.b32.xlu0 %v1329, 127
          %v1382 = vpop.permute.xlu0 %1381
          %1383 = vrot.lane.b32.xlu0 %v1332, 127
          %v1384 = vpop.permute.xlu0 %1383
          %1385 = vrot.lane.b32.xlu0 %v1335, 127
          %v1386 = vpop.permute.xlu0 %1385
          %1387 = vrot.lane.b32.xlu0 %v1338, 127
          %v1388 = vpop.permute.xlu0 %1387
          %1389 = vrot.lane.b32.xlu0 %v1341, 127
          %v1390 = vpop.permute.xlu0 %1389
          %v1407 = vmax.f32 %v1296, %v1360
          %v1408 = vmax.f32 %v1299, %v1362
          %v1409 = vmax.f32 %v1302, %v1364
          %v1410 = vmax.f32 %v1305, %v1366
          %v1411 = vmax.f32 %v1308, %v1368
          %v1412 = vmax.f32 %v1311, %v1370
          %v1413 = vmax.f32 %v1314, %v1372
          %v1414 = vmax.f32 %v1317, %v1374
          %v1415 = vmax.f32 %v1320, %v1376
          %v1416 = vmax.f32 %v1323, %v1378
          %v1417 = vmax.f32 %v1326, %v1380
          %v1418 = vmax.f32 %v1329, %v1382
          %v1419 = vmax.f32 %v1332, %v1384
          %v1420 = vmax.f32 %v1335, %v1386
          %v1421 = vmax.f32 %v1338, %v1388
          %v1422 = vmax.f32 %v1341, %v1390
          %1423 = vrot.lane.b32.xlu0 %v1296, 126
          %v1424 = vpop.permute.xlu0 %1423
          %1425 = vrot.lane.b32.xlu0 %v1299, 126
          %v1426 = vpop.permute.xlu0 %1425
          %1427 = vrot.lane.b32.xlu0 %v1302, 126
          %v1428 = vpop.permute.xlu0 %1427
          %1429 = vrot.lane.b32.xlu0 %v1305, 126
          %v1430 = vpop.permute.xlu0 %1429
          %1431 = vrot.lane.b32.xlu0 %v1308, 126
          %v1432 = vpop.permute.xlu0 %1431
          %1433 = vrot.lane.b32.xlu0 %v1311, 126
          %v1434 = vpop.permute.xlu0 %1433
          %1435 = vrot.lane.b32.xlu0 %v1314, 126
          %v1436 = vpop.permute.xlu0 %1435
          %1437 = vrot.lane.b32.xlu0 %v1317, 126
          %v1438 = vpop.permute.xlu0 %1437
          %1439 = vrot.lane.b32.xlu0 %v1320, 126
          %v1440 = vpop.permute.xlu0 %1439
          %1441 = vrot.lane.b32.xlu0 %v1323, 126
          %v1442 = vpop.permute.xlu0 %1441
          %1443 = vrot.lane.b32.xlu0 %v1326, 126
          %v1444 = vpop.permute.xlu0 %1443
          %1445 = vrot.lane.b32.xlu0 %v1329, 126
          %v1446 = vpop.permute.xlu0 %1445
          %1447 = vrot.lane.b32.xlu0 %v1332, 126
          %v1448 = vpop.permute.xlu0 %1447
          %1449 = vrot.lane.b32.xlu0 %v1335, 126
          %v1450 = vpop.permute.xlu0 %1449
          %1451 = vrot.lane.b32.xlu0 %v1338, 126
          %v1452 = vpop.permute.xlu0 %1451
          %1453 = vrot.lane.b32.xlu0 %v1341, 126
          %v1454 = vpop.permute.xlu0 %1453
          %v1471 = vmax.f32 %v1407, %v1424
          %v1472 = vmax.f32 %v1408, %v1426
          %v1473 = vmax.f32 %v1409, %v1428
          %v1474 = vmax.f32 %v1410, %v1430
          %v1475 = vmax.f32 %v1411, %v1432
          %v1476 = vmax.f32 %v1412, %v1434
          %v1477 = vmax.f32 %v1413, %v1436
          %v1478 = vmax.f32 %v1414, %v1438
          %v1479 = vmax.f32 %v1415, %v1440
          %v1480 = vmax.f32 %v1416, %v1442
          %v1481 = vmax.f32 %v1417, %v1444
          %v1482 = vmax.f32 %v1418, %v1446
          %v1483 = vmax.f32 %v1419, %v1448
          %v1484 = vmax.f32 %v1420, %v1450
          %v1485 = vmax.f32 %v1421, %v1452
          %v1486 = vmax.f32 %v1422, %v1454
          %vm1487 = vcmask 850944
          %v1489 = vsel %vm1487, %v1471, 0
          %v1492 = vsel %vm1487, %v1472, 0
          %v1495 = vsel %vm1487, %v1473, 0
          %v1498 = vsel %vm1487, %v1474, 0
          %v1501 = vsel %vm1487, %v1475, 0
          %v1504 = vsel %vm1487, %v1476, 0
          %v1507 = vsel %vm1487, %v1477, 0
          %v1510 = vsel %vm1487, %v1478, 0
          %v1513 = vsel %vm1487, %v1479, 0
          %v1516 = vsel %vm1487, %v1480, 0
          %v1519 = vsel %vm1487, %v1481, 0
          %v1522 = vsel %vm1487, %v1482, 0
          %v1525 = vsel %vm1487, %v1483, 0
          %v1528 = vsel %vm1487, %v1484, 0
          %v1531 = vsel %vm1487, %v1485, 0
          %v1534 = vsel %vm1487, %v1486, 0
          %1536 = vmatpush.msra.mxu0 0.0
          %1537 = vmatpush.msra.mxu0 0.0
          %1538 = vmatpush.msra.mxu0 0.0
          %1539 = vmatpush.msra.mxu0 %v689
          %1540 = vmatpush.msra.mxu0 %v688
          %1541 = vmatpush.msra.mxu0 %v687
          %1542 = vmatpush.msra.mxu0 %v686
          %1543 = vmatpush.msra.mxu0 %v685
          %1544 = vmatpush.msra.mxu0 %v684
          %1545 = vmatpush.msra.mxu0 %v683
          %1546 = vmatpush.msra.mxu0 %v682
          %1547 = vmatpush.msra.mxu0 %v681
          %1548 = vmatpush.msra.mxu0 %v680
          %1549 = vmatpush.msra.mxu0 %v679
          %1550 = vmatpush.msra.mxu0 %v678
          %1551 = vmatpush.msra.mxu0 %v677
          %1552 = vmatmul.f32.gmra.mxu0 %v1489
          %v1553 = vpop.f32.mrf.mxu0
          %v1554 = vadd.f32 0.0, %v1553
          %1555 = vmatmul.f32.gmra.mxu0 %v1492
          %v1556 = vpop.f32.mrf.mxu0
          %v1557 = vadd.f32 0.0, %v1556
          %1558 = vmatmul.f32.gmra.mxu0 %v1495
          %v1559 = vpop.f32.mrf.mxu0
          %v1560 = vadd.f32 0.0, %v1559
          %1561 = vmatmul.f32.gmra.mxu0 %v1498
          %v1562 = vpop.f32.mrf.mxu0
          %v1563 = vadd.f32 0.0, %v1562
          %1564 = vmatmul.f32.gmra.mxu0 %v1501
          %v1565 = vpop.f32.mrf.mxu0
          %v1566 = vadd.f32 0.0, %v1565
          %1567 = vmatmul.f32.gmra.mxu0 %v1504
          %v1568 = vpop.f32.mrf.mxu0
          %v1569 = vadd.f32 0.0, %v1568
          %1570 = vmatmul.f32.gmra.mxu0 %v1507
          %v1571 = vpop.f32.mrf.mxu0
          %v1572 = vadd.f32 0.0, %v1571
          %1573 = vmatmul.f32.gmra.mxu0 %v1510
          %v1574 = vpop.f32.mrf.mxu0
          %v1575 = vadd.f32 0.0, %v1574
          %1576 = vmatmul.f32.gmra.mxu0 %v1513
          %v1577 = vpop.f32.mrf.mxu0
          %v1578 = vadd.f32 0.0, %v1577
          %1579 = vmatmul.f32.gmra.mxu0 %v1516
          %v1580 = vpop.f32.mrf.mxu0
          %v1581 = vadd.f32 0.0, %v1580
          %1582 = vmatmul.f32.gmra.mxu0 %v1519
          %v1583 = vpop.f32.mrf.mxu0
          %v1584 = vadd.f32 0.0, %v1583
          %1585 = vmatmul.f32.gmra.mxu0 %v1522
          %v1586 = vpop.f32.mrf.mxu0
          %v1587 = vadd.f32 0.0, %v1586
          %1588 = vmatmul.f32.gmra.mxu0 %v1525
          %v1589 = vpop.f32.mrf.mxu0
          %v1590 = vadd.f32 0.0, %v1589
          %1591 = vmatmul.f32.gmra.mxu0 %v1528
          %v1592 = vpop.f32.mrf.mxu0
          %v1593 = vadd.f32 0.0, %v1592
          %1594 = vmatmul.f32.gmra.mxu0 %v1531
          %v1595 = vpop.f32.mrf.mxu0
          %v1596 = vadd.f32 0.0, %v1595
          %1597 = vmatmul.f32.gmra.mxu0 %v1534
          %v1598 = vpop.f32.mrf.mxu0
          %v1599 = vadd.f32 0.0, %v1598
          %1600 = vdwg.mxu0
          %1601 = vxpose.xlu0.b32.start [1/16] %v1554, 128
          %1602 = vxpose.xlu0.b32.cont [2/16] %v1557, 128
          %1603 = vxpose.xlu0.b32.cont [3/16] %v1560, 128
          %1604 = vxpose.xlu0.b32.cont [4/16] %v1563, 128
          %1605 = vxpose.xlu0.b32.cont [5/16] %v1566, 128
          %1606 = vxpose.xlu0.b32.cont [6/16] %v1569, 128
          %1607 = vxpose.xlu0.b32.cont [7/16] %v1572, 128
          %1608 = vxpose.xlu0.b32.cont [8/16] %v1575, 128
          %1609 = vxpose.xlu0.b32.cont [9/16] %v1578, 128
          %1610 = vxpose.xlu0.b32.cont [10/16] %v1581, 128
          %1611 = vxpose.xlu0.b32.cont [11/16] %v1584, 128
          %1612 = vxpose.xlu0.b32.cont [12/16] %v1587, 128
          %1613 = vxpose.xlu0.b32.cont [13/16] %v1590, 128
          %1614 = vxpose.xlu0.b32.cont [14/16] %v1593, 128
          %1615 = vxpose.xlu0.b32.cont [15/16] %v1596, 128
          %1616 = vxpose.xlu0.b32.end [16/16] %v1599, 128
          %v1617 = vpop.trf.xlu0
          %v1618 = vpop.trf.xlu0
          %v1619 = vpop.trf.xlu0
          %v1620 = vpop.trf.xlu0
          %v1621 = vpop.trf.xlu0
          %v1622 = vpop.trf.xlu0
          %v1623 = vpop.trf.xlu0
          %v1624 = vpop.trf.xlu0
          %v1625 = vpop.trf.xlu0
          %v1626 = vpop.trf.xlu0
          %v1627 = vpop.trf.xlu0
          %v1628 = vpop.trf.xlu0
          %v1629 = vpop.trf.xlu0
          %v1630 = vpop.trf.xlu0
          %v1631 = vpop.trf.xlu0
          %v1632 = vpop.trf.xlu0
          %1633 = vst [vmem:[#allocation2] sm:$0xff] %v1617
          %1634 = vst [vmem:[#allocation2 + $0x8] sm:$0xff] %v1618
          %1635 = vst [vmem:[#allocation2 + $0x10] sm:$0xff] %v1619
          %1636 = vst [vmem:[#allocation2 + $0x18] sm:$0xff] %v1620
          %1637 = vst [vmem:[#allocation2 + $0x20] sm:$0xff] %v1621
          %1638 = vst [vmem:[#allocation2 + $0x28] sm:$0xff] %v1622
          %1639 = vst [vmem:[#allocation2 + $0x30] sm:$0xf] %v1623
          %s1640 = scalar_lea.vmem [#allocation4], 1
          %v1641 = vld [vmem:[%s1640] sm:$0x1]
          %v1643 = vperm.slane %v1641, 0
          %v1645 = vmul.f32 %v766, %v1643
          %v1646 = vmul.f32 %v771, %v1643
          %v1647 = vmul.f32 %v776, %v1643
          %v1648 = vmul.f32 %v781, %v1643
          %v1649 = vmul.f32 %v792, %v1643
          %v1650 = vmul.f32 %v796, %v1643
          %v1651 = vmul.f32 %v800, %v1643
          %v1652 = vmul.f32 %v804, %v1643
          %1657 = vrot.lane.b32.xlu0 %v1649, 127
          %v1658 = vpop.permute.xlu0 %1657
          %1659 = vrot.lane.b32.xlu0 %v1650, 127
          %v1660 = vpop.permute.xlu0 %1659
          %1661 = vrot.lane.b32.xlu0 %v1651, 127
          %v1662 = vpop.permute.xlu0 %1661
          %1663 = vrot.lane.b32.xlu0 %v1652, 127
          %v1664 = vpop.permute.xlu0 %1663
          %v1669 = vadd.f32 %v1645, %v1658
          %v1670 = vadd.f32 %v1646, %v1660
          %v1671 = vadd.f32 %v1647, %v1662
          %v1672 = vadd.f32 %v1648, %v1664
          %v1673 = vmul.f32 %v832, %v1643
          %v1674 = vmul.f32 %v836, %v1643
          %v1675 = vmul.f32 %v840, %v1643
          %v1676 = vmul.f32 %v844, %v1643
          %1681 = vrot.lane.b32.xlu0 %v1673, 126
          %v1682 = vpop.permute.xlu0 %1681
          %1683 = vrot.lane.b32.xlu0 %v1674, 126
          %v1684 = vpop.permute.xlu0 %1683
          %1685 = vrot.lane.b32.xlu0 %v1675, 126
          %v1686 = vpop.permute.xlu0 %1685
          %1687 = vrot.lane.b32.xlu0 %v1676, 126
          %v1688 = vpop.permute.xlu0 %1687
          %v1693 = vadd.f32 %v1669, %v1682
          %v1694 = vadd.f32 %v1670, %v1684
          %v1695 = vadd.f32 %v1671, %v1686
          %v1696 = vadd.f32 %v1672, %v1688
          %v1697 = vadd.f32 %v1693, %v873
          %v1698 = vadd.f32 %v1694, %v878
          %v1699 = vadd.f32 %v1695, %v883
          %v1700 = vadd.f32 %v1696, %v888
          %1705 = vrot.lane.b32.xlu0 %v1697, 127
          %v1706 = vpop.permute.xlu0 %1705
          %1707 = vrot.lane.b32.xlu0 %v1698, 127
          %v1708 = vpop.permute.xlu0 %1707
          %1709 = vrot.lane.b32.xlu0 %v1699, 127
          %v1710 = vpop.permute.xlu0 %1709
          %1711 = vrot.lane.b32.xlu0 %v1700, 127
          %v1712 = vpop.permute.xlu0 %1711
          %1717 = vrot.lane.b32.xlu0 %v1697, 126
          %v1718 = vpop.permute.xlu0 %1717
          %1719 = vrot.lane.b32.xlu0 %v1698, 126
          %v1720 = vpop.permute.xlu0 %1719
          %1721 = vrot.lane.b32.xlu0 %v1699, 126
          %v1722 = vpop.permute.xlu0 %1721
          %1723 = vrot.lane.b32.xlu0 %v1700, 126
          %v1724 = vpop.permute.xlu0 %1723
          %1729 = vmatpush.msra.mxu0 0.0
          %1730 = vmatpush.msra.mxu0 0.0
          %1731 = vmatpush.msra.mxu0 0.0
          %1732 = vmatpush.msra.mxu0 0.0
          %1733 = vmatpush.msra.mxu0 %v1724
          %1734 = vmatpush.msra.mxu0 %v1722
          %1735 = vmatpush.msra.mxu0 %v1720
          %1736 = vmatpush.msra.mxu0 %v1718
          %1737 = vmatpush.msra.mxu0 %v1712
          %1738 = vmatpush.msra.mxu0 %v1710
          %1739 = vmatpush.msra.mxu0 %v1708
          %1740 = vmatpush.msra.mxu0 %v1706
          %1741 = vmatpush.msra.mxu0 %v1700
          %1742 = vmatpush.msra.mxu0 %v1699
          %1743 = vmatpush.msra.mxu0 %v1698
          %1744 = vmatpush.msra.mxu0 %v1697
          %1745 = vmatmul.f32.gmra.mxu0 %v964
          %v1746 = vpop.f32.mrf.mxu0
          %v1747 = vadd.f32 %v925, %v1746
          %1748 = vmatmul.f32.gmra.mxu0 %v967
          %v1749 = vpop.f32.mrf.mxu0
          %v1750 = vadd.f32 %v930, %v1749
          %1751 = vmatmul.f32.gmra.mxu0 %v970
          %v1752 = vpop.f32.mrf.mxu0
          %v1753 = vadd.f32 %v935, %v1752
          %1754 = vmatmul.f32.gmra.mxu0 %v973
          %v1755 = vpop.f32.mrf.mxu0
          %v1756 = vadd.f32 %v940, %v1755
          %1757 = vmatmul.f32.gmra.mxu0 %v976
          %v1758 = vpop.f32.mrf.mxu0
          %v1759 = vadd.f32 %v945, %v1758
          %1760 = vmatmul.f32.gmra.mxu0 %v979
          %v1761 = vpop.f32.mrf.mxu0
          %v1762 = vadd.f32 %v950, %v1761
          %1763 = vmatmul.f32.gmra.mxu0 %v982
          %v1764 = vpop.f32.mrf.mxu0
          %v1765 = vadd.f32 %v955, %v1764
          %1766 = vmatmul.f32.gmra.mxu0 %v985
          %v1767 = vpop.f32.mrf.mxu0
          %v1768 = vadd.f32 %v960, %v1767
          %1769 = vdwg.mxu0
          %1778 = vrot.lane.b32.xlu0 %v1747, 127
          %v1779 = vpop.permute.xlu0 %1778
          %1780 = vrot.lane.b32.xlu0 %v1750, 127
          %v1781 = vpop.permute.xlu0 %1780
          %1782 = vrot.lane.b32.xlu0 %v1753, 127
          %v1783 = vpop.permute.xlu0 %1782
          %1784 = vrot.lane.b32.xlu0 %v1756, 127
          %v1785 = vpop.permute.xlu0 %1784
          %1786 = vrot.lane.b32.xlu0 %v1759, 127
          %v1787 = vpop.permute.xlu0 %1786
          %1788 = vrot.lane.b32.xlu0 %v1762, 127
          %v1789 = vpop.permute.xlu0 %1788
          %1790 = vrot.lane.b32.xlu0 %v1765, 127
          %v1791 = vpop.permute.xlu0 %1790
          %1792 = vrot.lane.b32.xlu0 %v1768, 127
          %v1793 = vpop.permute.xlu0 %1792
          %1802 = vrot.lane.b32.xlu0 %v1747, 126
          %v1803 = vpop.permute.xlu0 %1802
          %1804 = vrot.lane.b32.xlu0 %v1750, 126
          %v1805 = vpop.permute.xlu0 %1804
          %1806 = vrot.lane.b32.xlu0 %v1753, 126
          %v1807 = vpop.permute.xlu0 %1806
          %1808 = vrot.lane.b32.xlu0 %v1756, 126
          %v1809 = vpop.permute.xlu0 %1808
          %1810 = vrot.lane.b32.xlu0 %v1759, 126
          %v1811 = vpop.permute.xlu0 %1810
          %1812 = vrot.lane.b32.xlu0 %v1762, 126
          %v1813 = vpop.permute.xlu0 %1812
          %1814 = vrot.lane.b32.xlu0 %v1765, 126
          %v1815 = vpop.permute.xlu0 %1814
          %1816 = vrot.lane.b32.xlu0 %v1768, 126
          %v1817 = vpop.permute.xlu0 %1816
          %1826 = vmatpush.msra.mxu0 %v1793
          %1827 = vmatpush.msra.mxu0 %v1791
          %1828 = vmatpush.msra.mxu0 %v1789
          %1829 = vmatpush.msra.mxu0 %v1787
          %1830 = vmatpush.msra.mxu0 %v1785
          %1831 = vmatpush.msra.mxu0 %v1783
          %1832 = vmatpush.msra.mxu0 %v1781
          %1833 = vmatpush.msra.mxu0 %v1779
          %1834 = vmatpush.msra.mxu0 %v1768
          %1835 = vmatpush.msra.mxu0 %v1765
          %1836 = vmatpush.msra.mxu0 %v1762
          %1837 = vmatpush.msra.mxu0 %v1759
          %1838 = vmatpush.msra.mxu0 %v1756
          %1839 = vmatpush.msra.mxu0 %v1753
          %1840 = vmatpush.msra.mxu0 %v1750
          %1841 = vmatpush.msra.mxu0 %v1747
          %1842 = vmatmul.f32.gmra.mxu0 %v714
          %v1843 = vpop.f32.mrf.mxu0
          %v1844 = vadd.f32 %v1087, %v1843
          %1845 = vmatmul.f32.gmra.mxu0 %v716
          %v1846 = vpop.f32.mrf.mxu0
          %v1847 = vadd.f32 %v1092, %v1846
          %1848 = vmatmul.f32.gmra.mxu0 %v718
          %v1849 = vpop.f32.mrf.mxu0
          %v1850 = vadd.f32 %v1097, %v1849
          %1851 = vmatmul.f32.gmra.mxu0 %v720
          %v1852 = vpop.f32.mrf.mxu0
          %v1853 = vadd.f32 %v1102, %v1852
          %1854 = vmatmul.f32.gmra.mxu0 %v722
          %v1855 = vpop.f32.mrf.mxu0
          %v1856 = vadd.f32 %v1107, %v1855
          %1857 = vmatmul.f32.gmra.mxu0 %v724
          %v1858 = vpop.f32.mrf.mxu0
          %v1859 = vadd.f32 %v1112, %v1858
          %1860 = vmatmul.f32.gmra.mxu0 %v726
          %v1861 = vpop.f32.mrf.mxu0
          %v1862 = vadd.f32 %v1117, %v1861
          %1863 = vmatmul.f32.gmra.mxu0 %v728
          %v1864 = vpop.f32.mrf.mxu0
          %v1865 = vadd.f32 %v1122, %v1864
          %1866 = vmatmul.f32.gmra.mxu0 %v730
          %v1867 = vpop.f32.mrf.mxu0
          %v1868 = vadd.f32 %v1127, %v1867
          %1869 = vmatmul.f32.gmra.mxu0 %v732
          %v1870 = vpop.f32.mrf.mxu0
          %v1871 = vadd.f32 %v1132, %v1870
          %1872 = vmatmul.f32.gmra.mxu0 %v734
          %v1873 = vpop.f32.mrf.mxu0
          %v1874 = vadd.f32 %v1137, %v1873
          %1875 = vmatmul.f32.gmra.mxu0 %v736
          %v1876 = vpop.f32.mrf.mxu0
          %v1877 = vadd.f32 %v1142, %v1876
          %1878 = vmatmul.f32.gmra.mxu0 %v738
          %v1879 = vpop.f32.mrf.mxu0
          %v1880 = vadd.f32 %v1147, %v1879
          %1881 = vmatmul.f32.gmra.mxu0 %v740
          %v1882 = vpop.f32.mrf.mxu0
          %v1883 = vadd.f32 %v1152, %v1882
          %1884 = vmatmul.f32.gmra.mxu0 %v742
          %v1885 = vpop.f32.mrf.mxu0
          %v1886 = vadd.f32 %v1157, %v1885
          %1887 = vmatmul.f32.gmra.mxu0 %v744
          %v1888 = vpop.f32.mrf.mxu0
          %v1889 = vadd.f32 %v1162, %v1888
          %1890 = vdwg.mxu0
          %1891 = vmatpush.msra.mxu0 0.0
          %1892 = vmatpush.msra.mxu0 0.0
          %1893 = vmatpush.msra.mxu0 0.0
          %1894 = vmatpush.msra.mxu0 0.0
          %1895 = vmatpush.msra.mxu0 0.0
          %1896 = vmatpush.msra.mxu0 0.0
          %1897 = vmatpush.msra.mxu0 0.0
          %1898 = vmatpush.msra.mxu0 0.0
          %1899 = vmatpush.msra.mxu0 %v1817
          %1900 = vmatpush.msra.mxu0 %v1815
          %1901 = vmatpush.msra.mxu0 %v1813
          %1902 = vmatpush.msra.mxu0 %v1811
          %1903 = vmatpush.msra.mxu0 %v1809
          %1904 = vmatpush.msra.mxu0 %v1807
          %1905 = vmatpush.msra.mxu0 %v1805
          %1906 = vmatpush.msra.mxu0 %v1803
          %1907 = vmatmul.f32.gmra.mxu0 %v1166
          %v1908 = vpop.f32.mrf.mxu0
          %v1909 = vadd.f32 %v1844, %v1908
          %1910 = vmatmul.f32.gmra.mxu0 %v1169
          %v1911 = vpop.f32.mrf.mxu0
          %v1912 = vadd.f32 %v1847, %v1911
          %1913 = vmatmul.f32.gmra.mxu0 %v1172
          %v1914 = vpop.f32.mrf.mxu0
          %v1915 = vadd.f32 %v1850, %v1914
          %1916 = vmatmul.f32.gmra.mxu0 %v1175
          %v1917 = vpop.f32.mrf.mxu0
          %v1918 = vadd.f32 %v1853, %v1917
          %1919 = vmatmul.f32.gmra.mxu0 %v1178
          %v1920 = vpop.f32.mrf.mxu0
          %v1921 = vadd.f32 %v1856, %v1920
          %1922 = vmatmul.f32.gmra.mxu0 %v1181
          %v1923 = vpop.f32.mrf.mxu0
          %v1924 = vadd.f32 %v1859, %v1923
          %1925 = vmatmul.f32.gmra.mxu0 %v1184
          %v1926 = vpop.f32.mrf.mxu0
          %v1927 = vadd.f32 %v1862, %v1926
          %1928 = vmatmul.f32.gmra.mxu0 %v1187
          %v1929 = vpop.f32.mrf.mxu0
          %v1930 = vadd.f32 %v1865, %v1929
          %1931 = vmatmul.f32.gmra.mxu0 %v1190
          %v1932 = vpop.f32.mrf.mxu0
          %v1933 = vadd.f32 %v1868, %v1932
          %1934 = vmatmul.f32.gmra.mxu0 %v1193
          %v1935 = vpop.f32.mrf.mxu0
          %v1936 = vadd.f32 %v1871, %v1935
          %1937 = vmatmul.f32.gmra.mxu0 %v1196
          %v1938 = vpop.f32.mrf.mxu0
          %v1939 = vadd.f32 %v1874, %v1938
          %1940 = vmatmul.f32.gmra.mxu0 %v1199
          %v1941 = vpop.f32.mrf.mxu0
          %v1942 = vadd.f32 %v1877, %v1941
          %1943 = vmatmul.f32.gmra.mxu0 %v1202
          %v1944 = vpop.f32.mrf.mxu0
          %v1945 = vadd.f32 %v1880, %v1944
          %1946 = vmatmul.f32.gmra.mxu0 %v1205
          %v1947 = vpop.f32.mrf.mxu0
          %v1948 = vadd.f32 %v1883, %v1947
          %1949 = vmatmul.f32.gmra.mxu0 %v1208
          %v1950 = vpop.f32.mrf.mxu0
          %v1951 = vadd.f32 %v1886, %v1950
          %1952 = vmatmul.f32.gmra.mxu0 %v1211
          %v1953 = vpop.f32.mrf.mxu0
          %v1954 = vadd.f32 %v1889, %v1953
          %1955 = vdwg.mxu0
          %1972 = vrot.lane.b32.xlu0 %v1909, 127
          %v1973 = vpop.permute.xlu0 %1972
          %1974 = vrot.lane.b32.xlu0 %v1912, 127
          %v1975 = vpop.permute.xlu0 %1974
          %1976 = vrot.lane.b32.xlu0 %v1915, 127
          %v1977 = vpop.permute.xlu0 %1976
          %1978 = vrot.lane.b32.xlu0 %v1918, 127
          %v1979 = vpop.permute.xlu0 %1978
          %1980 = vrot.lane.b32.xlu0 %v1921, 127
          %v1981 = vpop.permute.xlu0 %1980
          %1982 = vrot.lane.b32.xlu0 %v1924, 127
          %v1983 = vpop.permute.xlu0 %1982
          %1984 = vrot.lane.b32.xlu0 %v1927, 127
          %v1985 = vpop.permute.xlu0 %1984
          %1986 = vrot.lane.b32.xlu0 %v1930, 127
          %v1987 = vpop.permute.xlu0 %1986
          %1988 = vrot.lane.b32.xlu0 %v1933, 127
          %v1989 = vpop.permute.xlu0 %1988
          %1990 = vrot.lane.b32.xlu0 %v1936, 127
          %v1991 = vpop.permute.xlu0 %1990
          %1992 = vrot.lane.b32.xlu0 %v1939, 127
          %v1993 = vpop.permute.xlu0 %1992
          %1994 = vrot.lane.b32.xlu0 %v1942, 127
          %v1995 = vpop.permute.xlu0 %1994
          %1996 = vrot.lane.b32.xlu0 %v1945, 127
          %v1997 = vpop.permute.xlu0 %1996
          %1998 = vrot.lane.b32.xlu0 %v1948, 127
          %v1999 = vpop.permute.xlu0 %1998
          %2000 = vrot.lane.b32.xlu0 %v1951, 127
          %v2001 = vpop.permute.xlu0 %2000
          %2002 = vrot.lane.b32.xlu0 %v1954, 127
          %v2003 = vpop.permute.xlu0 %2002
          %v2020 = vmax.f32 %v1909, %v1973
          %v2021 = vmax.f32 %v1912, %v1975
          %v2022 = vmax.f32 %v1915, %v1977
          %v2023 = vmax.f32 %v1918, %v1979
          %v2024 = vmax.f32 %v1921, %v1981
          %v2025 = vmax.f32 %v1924, %v1983
          %v2026 = vmax.f32 %v1927, %v1985
          %v2027 = vmax.f32 %v1930, %v1987
          %v2028 = vmax.f32 %v1933, %v1989
          %v2029 = vmax.f32 %v1936, %v1991
          %v2030 = vmax.f32 %v1939, %v1993
          %v2031 = vmax.f32 %v1942, %v1995
          %v2032 = vmax.f32 %v1945, %v1997
          %v2033 = vmax.f32 %v1948, %v1999
          %v2034 = vmax.f32 %v1951, %v2001
          %v2035 = vmax.f32 %v1954, %v2003
          %2036 = vrot.lane.b32.xlu0 %v1909, 126
          %v2037 = vpop.permute.xlu0 %2036
          %2038 = vrot.lane.b32.xlu0 %v1912, 126
          %v2039 = vpop.permute.xlu0 %2038
          %2040 = vrot.lane.b32.xlu0 %v1915, 126
          %v2041 = vpop.permute.xlu0 %2040
          %2042 = vrot.lane.b32.xlu0 %v1918, 126
          %v2043 = vpop.permute.xlu0 %2042
          %2044 = vrot.lane.b32.xlu0 %v1921, 126
          %v2045 = vpop.permute.xlu0 %2044
          %2046 = vrot.lane.b32.xlu0 %v1924, 126
          %v2047 = vpop.permute.xlu0 %2046
          %2048 = vrot.lane.b32.xlu0 %v1927, 126
          %v2049 = vpop.permute.xlu0 %2048
          %2050 = vrot.lane.b32.xlu0 %v1930, 126
          %v2051 = vpop.permute.xlu0 %2050
          %2052 = vrot.lane.b32.xlu0 %v1933, 126
          %v2053 = vpop.permute.xlu0 %2052
          %2054 = vrot.lane.b32.xlu0 %v1936, 126
          %v2055 = vpop.permute.xlu0 %2054
          %2056 = vrot.lane.b32.xlu0 %v1939, 126
          %v2057 = vpop.permute.xlu0 %2056
          %2058 = vrot.lane.b32.xlu0 %v1942, 126
          %v2059 = vpop.permute.xlu0 %2058
          %2060 = vrot.lane.b32.xlu0 %v1945, 126
          %v2061 = vpop.permute.xlu0 %2060
          %2062 = vrot.lane.b32.xlu0 %v1948, 126
          %v2063 = vpop.permute.xlu0 %2062
          %2064 = vrot.lane.b32.xlu0 %v1951, 126
          %v2065 = vpop.permute.xlu0 %2064
          %2066 = vrot.lane.b32.xlu0 %v1954, 126
          %v2067 = vpop.permute.xlu0 %2066
          %v2084 = vmax.f32 %v2020, %v2037
          %v2085 = vmax.f32 %v2021, %v2039
          %v2086 = vmax.f32 %v2022, %v2041
          %v2087 = vmax.f32 %v2023, %v2043
          %v2088 = vmax.f32 %v2024, %v2045
          %v2089 = vmax.f32 %v2025, %v2047
          %v2090 = vmax.f32 %v2026, %v2049
          %v2091 = vmax.f32 %v2027, %v2051
          %v2092 = vmax.f32 %v2028, %v2053
          %v2093 = vmax.f32 %v2029, %v2055
          %v2094 = vmax.f32 %v2030, %v2057
          %v2095 = vmax.f32 %v2031, %v2059
          %v2096 = vmax.f32 %v2032, %v2061
          %v2097 = vmax.f32 %v2033, %v2063
          %v2098 = vmax.f32 %v2034, %v2065
          %v2099 = vmax.f32 %v2035, %v2067
          %v2101 = vsel %vm1487, %v2084, 0
          %v2104 = vsel %vm1487, %v2085, 0
          %v2107 = vsel %vm1487, %v2086, 0
          %v2110 = vsel %vm1487, %v2087, 0
          %v2113 = vsel %vm1487, %v2088, 0
          %v2116 = vsel %vm1487, %v2089, 0
          %v2119 = vsel %vm1487, %v2090, 0
          %v2122 = vsel %vm1487, %v2091, 0
          %v2125 = vsel %vm1487, %v2092, 0
          %v2128 = vsel %vm1487, %v2093, 0
          %v2131 = vsel %vm1487, %v2094, 0
          %v2134 = vsel %vm1487, %v2095, 0
          %v2137 = vsel %vm1487, %v2096, 0
          %v2140 = vsel %vm1487, %v2097, 0
          %v2143 = vsel %vm1487, %v2098, 0
          %v2146 = vsel %vm1487, %v2099, 0
          %2148 = vmatpush.msra.mxu0 0.0
          %2149 = vmatpush.msra.mxu0 0.0
          %2150 = vmatpush.msra.mxu0 0.0
          %2151 = vmatpush.msra.mxu0 %v689
          %2152 = vmatpush.msra.mxu0 %v688
          %2153 = vmatpush.msra.mxu0 %v687
          %2154 = vmatpush.msra.mxu0 %v686
          %2155 = vmatpush.msra.mxu0 %v685
          %2156 = vmatpush.msra.mxu0 %v684
          %2157 = vmatpush.msra.mxu0 %v683
          %2158 = vmatpush.msra.mxu0 %v682
          %2159 = vmatpush.msra.mxu0 %v681
          %2160 = vmatpush.msra.mxu0 %v680
          %2161 = vmatpush.msra.mxu0 %v679
          %2162 = vmatpush.msra.mxu0 %v678
          %2163 = vmatpush.msra.mxu0 %v677
          %2164 = vmatmul.f32.gmra.mxu0 %v2101
          %v2165 = vpop.f32.mrf.mxu0
          %v2166 = vadd.f32 0.0, %v2165
          %2167 = vmatmul.f32.gmra.mxu0 %v2104
          %v2168 = vpop.f32.mrf.mxu0
          %v2169 = vadd.f32 0.0, %v2168
          %2170 = vmatmul.f32.gmra.mxu0 %v2107
          %v2171 = vpop.f32.mrf.mxu0
          %v2172 = vadd.f32 0.0, %v2171
          %2173 = vmatmul.f32.gmra.mxu0 %v2110
          %v2174 = vpop.f32.mrf.mxu0
          %v2175 = vadd.f32 0.0, %v2174
          %2176 = vmatmul.f32.gmra.mxu0 %v2113
          %v2177 = vpop.f32.mrf.mxu0
          %v2178 = vadd.f32 0.0, %v2177
          %2179 = vmatmul.f32.gmra.mxu0 %v2116
          %v2180 = vpop.f32.mrf.mxu0
          %v2181 = vadd.f32 0.0, %v2180
          %2182 = vmatmul.f32.gmra.mxu0 %v2119
          %v2183 = vpop.f32.mrf.mxu0
          %v2184 = vadd.f32 0.0, %v2183
          %2185 = vmatmul.f32.gmra.mxu0 %v2122
          %v2186 = vpop.f32.mrf.mxu0
          %v2187 = vadd.f32 0.0, %v2186
          %2188 = vmatmul.f32.gmra.mxu0 %v2125
          %v2189 = vpop.f32.mrf.mxu0
          %v2190 = vadd.f32 0.0, %v2189
          %2191 = vmatmul.f32.gmra.mxu0 %v2128
          %v2192 = vpop.f32.mrf.mxu0
          %v2193 = vadd.f32 0.0, %v2192
          %2194 = vmatmul.f32.gmra.mxu0 %v2131
          %v2195 = vpop.f32.mrf.mxu0
          %v2196 = vadd.f32 0.0, %v2195
          %2197 = vmatmul.f32.gmra.mxu0 %v2134
          %v2198 = vpop.f32.mrf.mxu0
          %v2199 = vadd.f32 0.0, %v2198
          %2200 = vmatmul.f32.gmra.mxu0 %v2137
          %v2201 = vpop.f32.mrf.mxu0
          %v2202 = vadd.f32 0.0, %v2201
          %2203 = vmatmul.f32.gmra.mxu0 %v2140
          %v2204 = vpop.f32.mrf.mxu0
          %v2205 = vadd.f32 0.0, %v2204
          %2206 = vmatmul.f32.gmra.mxu0 %v2143
          %v2207 = vpop.f32.mrf.mxu0
          %v2208 = vadd.f32 0.0, %v2207
          %2209 = vmatmul.f32.gmra.mxu0 %v2146
          %v2210 = vpop.f32.mrf.mxu0
          %v2211 = vadd.f32 0.0, %v2210
          %2212 = vdwg.mxu0
          %2213 = vxpose.xlu0.b32.start [1/16] %v2166, 128
          %2214 = vxpose.xlu0.b32.cont [2/16] %v2169, 128
          %2215 = vxpose.xlu0.b32.cont [3/16] %v2172, 128
          %2216 = vxpose.xlu0.b32.cont [4/16] %v2175, 128
          %2217 = vxpose.xlu0.b32.cont [5/16] %v2178, 128
          %2218 = vxpose.xlu0.b32.cont [6/16] %v2181, 128
          %2219 = vxpose.xlu0.b32.cont [7/16] %v2184, 128
          %2220 = vxpose.xlu0.b32.cont [8/16] %v2187, 128
          %2221 = vxpose.xlu0.b32.cont [9/16] %v2190, 128
          %2222 = vxpose.xlu0.b32.cont [10/16] %v2193, 128
          %2223 = vxpose.xlu0.b32.cont [11/16] %v2196, 128
          %2224 = vxpose.xlu0.b32.cont [12/16] %v2199, 128
          %2225 = vxpose.xlu0.b32.cont [13/16] %v2202, 128
          %2226 = vxpose.xlu0.b32.cont [14/16] %v2205, 128
          %2227 = vxpose.xlu0.b32.cont [15/16] %v2208, 128
          %2228 = vxpose.xlu0.b32.end [16/16] %v2211, 128
          %v2229 = vpop.trf.xlu0
          %v2230 = vpop.trf.xlu0
          %v2231 = vpop.trf.xlu0
          %v2232 = vpop.trf.xlu0
          %v2233 = vpop.trf.xlu0
          %v2234 = vpop.trf.xlu0
          %v2235 = vpop.trf.xlu0
          %v2236 = vpop.trf.xlu0
          %v2237 = vpop.trf.xlu0
          %v2238 = vpop.trf.xlu0
          %v2239 = vpop.trf.xlu0
          %v2240 = vpop.trf.xlu0
          %v2241 = vpop.trf.xlu0
          %v2242 = vpop.trf.xlu0
          %v2243 = vpop.trf.xlu0
          %v2244 = vpop.trf.xlu0
          %2245 = vst [vmem:[#allocation2 + $0x34] sm:$0xff] %v2229
          %2246 = vst [vmem:[#allocation2 + $0x3c] sm:$0xff] %v2230
          %2247 = vst [vmem:[#allocation2 + $0x44] sm:$0xff] %v2231
          %2248 = vst [vmem:[#allocation2 + $0x4c] sm:$0xff] %v2232
          %2249 = vst [vmem:[#allocation2 + $0x54] sm:$0xff] %v2233
          %2250 = vst [vmem:[#allocation2 + $0x5c] sm:$0xff] %v2234
          %2251 = vst [vmem:[#allocation2 + $0x64] sm:$0xf] %v2235
          %s2252 = scalar_lea.vmem [#allocation4], 2
          %v2253 = vld [vmem:[%s2252] sm:$0x1]
          %v2255 = vperm.slane %v2253, 0
          %v2257 = vmul.f32 %v766, %v2255
          %v2258 = vmul.f32 %v771, %v2255
          %v2259 = vmul.f32 %v776, %v2255
          %v2260 = vmul.f32 %v781, %v2255
          %v2261 = vmul.f32 %v792, %v2255
          %v2262 = vmul.f32 %v796, %v2255
          %v2263 = vmul.f32 %v800, %v2255
          %v2264 = vmul.f32 %v804, %v2255
          %2269 = vrot.lane.b32.xlu0 %v2261, 127
          %v2270 = vpop.permute.xlu0 %2269
          %2271 = vrot.lane.b32.xlu0 %v2262, 127
          %v2272 = vpop.permute.xlu0 %2271
          %2273 = vrot.lane.b32.xlu0 %v2263, 127
          %v2274 = vpop.permute.xlu0 %2273
          %2275 = vrot.lane.b32.xlu0 %v2264, 127
          %v2276 = vpop.permute.xlu0 %2275
          %v2281 = vadd.f32 %v2257, %v2270
          %v2282 = vadd.f32 %v2258, %v2272
          %v2283 = vadd.f32 %v2259, %v2274
          %v2284 = vadd.f32 %v2260, %v2276
          %v2285 = vmul.f32 %v832, %v2255
          %v2286 = vmul.f32 %v836, %v2255
          %v2287 = vmul.f32 %v840, %v2255
          %v2288 = vmul.f32 %v844, %v2255
          %2293 = vrot.lane.b32.xlu0 %v2285, 126
          %v2294 = vpop.permute.xlu0 %2293
          %2295 = vrot.lane.b32.xlu0 %v2286, 126
          %v2296 = vpop.permute.xlu0 %2295
          %2297 = vrot.lane.b32.xlu0 %v2287, 126
          %v2298 = vpop.permute.xlu0 %2297
          %2299 = vrot.lane.b32.xlu0 %v2288, 126
          %v2300 = vpop.permute.xlu0 %2299
          %v2305 = vadd.f32 %v2281, %v2294
          %v2306 = vadd.f32 %v2282, %v2296
          %v2307 = vadd.f32 %v2283, %v2298
          %v2308 = vadd.f32 %v2284, %v2300
          %v2309 = vadd.f32 %v2305, %v873
          %v2310 = vadd.f32 %v2306, %v878
          %v2311 = vadd.f32 %v2307, %v883
          %v2312 = vadd.f32 %v2308, %v888
          %2317 = vrot.lane.b32.xlu0 %v2309, 127
          %v2318 = vpop.permute.xlu0 %2317
          %2319 = vrot.lane.b32.xlu0 %v2310, 127
          %v2320 = vpop.permute.xlu0 %2319
          %2321 = vrot.lane.b32.xlu0 %v2311, 127
          %v2322 = vpop.permute.xlu0 %2321
          %2323 = vrot.lane.b32.xlu0 %v2312, 127
          %v2324 = vpop.permute.xlu0 %2323
          %2329 = vrot.lane.b32.xlu0 %v2309, 126
          %v2330 = vpop.permute.xlu0 %2329
          %2331 = vrot.lane.b32.xlu0 %v2310, 126
          %v2332 = vpop.permute.xlu0 %2331
          %2333 = vrot.lane.b32.xlu0 %v2311, 126
          %v2334 = vpop.permute.xlu0 %2333
          %2335 = vrot.lane.b32.xlu0 %v2312, 126
          %v2336 = vpop.permute.xlu0 %2335
          %2341 = vmatpush.msra.mxu0 0.0
          %2342 = vmatpush.msra.mxu0 0.0
          %2343 = vmatpush.msra.mxu0 0.0
          %2344 = vmatpush.msra.mxu0 0.0
          %2345 = vmatpush.msra.mxu0 %v2336
          %2346 = vmatpush.msra.mxu0 %v2334
          %2347 = vmatpush.msra.mxu0 %v2332
          %2348 = vmatpush.msra.mxu0 %v2330
          %2349 = vmatpush.msra.mxu0 %v2324
          %2350 = vmatpush.msra.mxu0 %v2322
          %2351 = vmatpush.msra.mxu0 %v2320
          %2352 = vmatpush.msra.mxu0 %v2318
          %2353 = vmatpush.msra.mxu0 %v2312
          %2354 = vmatpush.msra.mxu0 %v2311
          %2355 = vmatpush.msra.mxu0 %v2310
          %2356 = vmatpush.msra.mxu0 %v2309
          %2357 = vmatmul.f32.gmra.mxu0 %v964
          %v2358 = vpop.f32.mrf.mxu0
          %v2359 = vadd.f32 %v925, %v2358
          %2360 = vmatmul.f32.gmra.mxu0 %v967
          %v2361 = vpop.f32.mrf.mxu0
          %v2362 = vadd.f32 %v930, %v2361
          %2363 = vmatmul.f32.gmra.mxu0 %v970
          %v2364 = vpop.f32.mrf.mxu0
          %v2365 = vadd.f32 %v935, %v2364
          %2366 = vmatmul.f32.gmra.mxu0 %v973
          %v2367 = vpop.f32.mrf.mxu0
          %v2368 = vadd.f32 %v940, %v2367
          %2369 = vmatmul.f32.gmra.mxu0 %v976
          %v2370 = vpop.f32.mrf.mxu0
          %v2371 = vadd.f32 %v945, %v2370
          %2372 = vmatmul.f32.gmra.mxu0 %v979
          %v2373 = vpop.f32.mrf.mxu0
          %v2374 = vadd.f32 %v950, %v2373
          %2375 = vmatmul.f32.gmra.mxu0 %v982
          %v2376 = vpop.f32.mrf.mxu0
          %v2377 = vadd.f32 %v955, %v2376
          %2378 = vmatmul.f32.gmra.mxu0 %v985
          %v2379 = vpop.f32.mrf.mxu0
          %v2380 = vadd.f32 %v960, %v2379
          %2381 = vdwg.mxu0
          %2390 = vrot.lane.b32.xlu0 %v2359, 127
          %v2391 = vpop.permute.xlu0 %2390
          %2392 = vrot.lane.b32.xlu0 %v2362, 127
          %v2393 = vpop.permute.xlu0 %2392
          %2394 = vrot.lane.b32.xlu0 %v2365, 127
          %v2395 = vpop.permute.xlu0 %2394
          %2396 = vrot.lane.b32.xlu0 %v2368, 127
          %v2397 = vpop.permute.xlu0 %2396
          %2398 = vrot.lane.b32.xlu0 %v2371, 127
          %v2399 = vpop.permute.xlu0 %2398
          %2400 = vrot.lane.b32.xlu0 %v2374, 127
          %v2401 = vpop.permute.xlu0 %2400
          %2402 = vrot.lane.b32.xlu0 %v2377, 127
          %v2403 = vpop.permute.xlu0 %2402
          %2404 = vrot.lane.b32.xlu0 %v2380, 127
          %v2405 = vpop.permute.xlu0 %2404
          %2414 = vrot.lane.b32.xlu0 %v2359, 126
          %v2415 = vpop.permute.xlu0 %2414
          %2416 = vrot.lane.b32.xlu0 %v2362, 126
          %v2417 = vpop.permute.xlu0 %2416
          %2418 = vrot.lane.b32.xlu0 %v2365, 126
          %v2419 = vpop.permute.xlu0 %2418
          %2420 = vrot.lane.b32.xlu0 %v2368, 126
          %v2421 = vpop.permute.xlu0 %2420
          %2422 = vrot.lane.b32.xlu0 %v2371, 126
          %v2423 = vpop.permute.xlu0 %2422
          %2424 = vrot.lane.b32.xlu0 %v2374, 126
          %v2425 = vpop.permute.xlu0 %2424
          %2426 = vrot.lane.b32.xlu0 %v2377, 126
          %v2427 = vpop.permute.xlu0 %2426
          %2428 = vrot.lane.b32.xlu0 %v2380, 126
          %v2429 = vpop.permute.xlu0 %2428
          %2438 = vmatpush.msra.mxu0 %v2405
          %2439 = vmatpush.msra.mxu0 %v2403
          %2440 = vmatpush.msra.mxu0 %v2401
          %2441 = vmatpush.msra.mxu0 %v2399
          %2442 = vmatpush.msra.mxu0 %v2397
          %2443 = vmatpush.msra.mxu0 %v2395
          %2444 = vmatpush.msra.mxu0 %v2393
          %2445 = vmatpush.msra.mxu0 %v2391
          %2446 = vmatpush.msra.mxu0 %v2380
          %2447 = vmatpush.msra.mxu0 %v2377
          %2448 = vmatpush.msra.mxu0 %v2374
          %2449 = vmatpush.msra.mxu0 %v2371
          %2450 = vmatpush.msra.mxu0 %v2368
          %2451 = vmatpush.msra.mxu0 %v2365
          %2452 = vmatpush.msra.mxu0 %v2362
          %2453 = vmatpush.msra.mxu0 %v2359
          %2454 = vmatmul.f32.gmra.mxu0 %v714
          %v2455 = vpop.f32.mrf.mxu0
          %v2456 = vadd.f32 %v1087, %v2455
          %2457 = vmatmul.f32.gmra.mxu0 %v716
          %v2458 = vpop.f32.mrf.mxu0
          %v2459 = vadd.f32 %v1092, %v2458
          %2460 = vmatmul.f32.gmra.mxu0 %v718
          %v2461 = vpop.f32.mrf.mxu0
          %v2462 = vadd.f32 %v1097, %v2461
          %2463 = vmatmul.f32.gmra.mxu0 %v720
          %v2464 = vpop.f32.mrf.mxu0
          %v2465 = vadd.f32 %v1102, %v2464
          %2466 = vmatmul.f32.gmra.mxu0 %v722
          %v2467 = vpop.f32.mrf.mxu0
          %v2468 = vadd.f32 %v1107, %v2467
          %2469 = vmatmul.f32.gmra.mxu0 %v724
          %v2470 = vpop.f32.mrf.mxu0
          %v2471 = vadd.f32 %v1112, %v2470
          %2472 = vmatmul.f32.gmra.mxu0 %v726
          %v2473 = vpop.f32.mrf.mxu0
          %v2474 = vadd.f32 %v1117, %v2473
          %2475 = vmatmul.f32.gmra.mxu0 %v728
          %v2476 = vpop.f32.mrf.mxu0
          %v2477 = vadd.f32 %v1122, %v2476
          %2478 = vmatmul.f32.gmra.mxu0 %v730
          %v2479 = vpop.f32.mrf.mxu0
          %v2480 = vadd.f32 %v1127, %v2479
          %2481 = vmatmul.f32.gmra.mxu0 %v732
          %v2482 = vpop.f32.mrf.mxu0
          %v2483 = vadd.f32 %v1132, %v2482
          %2484 = vmatmul.f32.gmra.mxu0 %v734
          %v2485 = vpop.f32.mrf.mxu0
          %v2486 = vadd.f32 %v1137, %v2485
          %2487 = vmatmul.f32.gmra.mxu0 %v736
          %v2488 = vpop.f32.mrf.mxu0
          %v2489 = vadd.f32 %v1142, %v2488
          %2490 = vmatmul.f32.gmra.mxu0 %v738
          %v2491 = vpop.f32.mrf.mxu0
          %v2492 = vadd.f32 %v1147, %v2491
          %2493 = vmatmul.f32.gmra.mxu0 %v740
          %v2494 = vpop.f32.mrf.mxu0
          %v2495 = vadd.f32 %v1152, %v2494
          %2496 = vmatmul.f32.gmra.mxu0 %v742
          %v2497 = vpop.f32.mrf.mxu0
          %v2498 = vadd.f32 %v1157, %v2497
          %2499 = vmatmul.f32.gmra.mxu0 %v744
          %v2500 = vpop.f32.mrf.mxu0
          %v2501 = vadd.f32 %v1162, %v2500
          %2502 = vdwg.mxu0
          %2503 = vmatpush.msra.mxu0 0.0
          %2504 = vmatpush.msra.mxu0 0.0
          %2505 = vmatpush.msra.mxu0 0.0
          %2506 = vmatpush.msra.mxu0 0.0
          %2507 = vmatpush.msra.mxu0 0.0
          %2508 = vmatpush.msra.mxu0 0.0
          %2509 = vmatpush.msra.mxu0 0.0
          %2510 = vmatpush.msra.mxu0 0.0
          %2511 = vmatpush.msra.mxu0 %v2429
          %2512 = vmatpush.msra.mxu0 %v2427
          %2513 = vmatpush.msra.mxu0 %v2425
          %2514 = vmatpush.msra.mxu0 %v2423
          %2515 = vmatpush.msra.mxu0 %v2421
          %2516 = vmatpush.msra.mxu0 %v2419
          %2517 = vmatpush.msra.mxu0 %v2417
          %2518 = vmatpush.msra.mxu0 %v2415
          %2519 = vmatmul.f32.gmra.mxu0 %v1166
          %v2520 = vpop.f32.mrf.mxu0
          %v2521 = vadd.f32 %v2456, %v2520
          %2522 = vmatmul.f32.gmra.mxu0 %v1169
          %v2523 = vpop.f32.mrf.mxu0
          %v2524 = vadd.f32 %v2459, %v2523
          %2525 = vmatmul.f32.gmra.mxu0 %v1172
          %v2526 = vpop.f32.mrf.mxu0
          %v2527 = vadd.f32 %v2462, %v2526
          %2528 = vmatmul.f32.gmra.mxu0 %v1175
          %v2529 = vpop.f32.mrf.mxu0
          %v2530 = vadd.f32 %v2465, %v2529
          %2531 = vmatmul.f32.gmra.mxu0 %v1178
          %v2532 = vpop.f32.mrf.mxu0
          %v2533 = vadd.f32 %v2468, %v2532
          %2534 = vmatmul.f32.gmra.mxu0 %v1181
          %v2535 = vpop.f32.mrf.mxu0
          %v2536 = vadd.f32 %v2471, %v2535
          %2537 = vmatmul.f32.gmra.mxu0 %v1184
          %v2538 = vpop.f32.mrf.mxu0
          %v2539 = vadd.f32 %v2474, %v2538
          %2540 = vmatmul.f32.gmra.mxu0 %v1187
          %v2541 = vpop.f32.mrf.mxu0
          %v2542 = vadd.f32 %v2477, %v2541
          %2543 = vmatmul.f32.gmra.mxu0 %v1190
          %v2544 = vpop.f32.mrf.mxu0
          %v2545 = vadd.f32 %v2480, %v2544
          %2546 = vmatmul.f32.gmra.mxu0 %v1193
          %v2547 = vpop.f32.mrf.mxu0
          %v2548 = vadd.f32 %v2483, %v2547
          %2549 = vmatmul.f32.gmra.mxu0 %v1196
          %v2550 = vpop.f32.mrf.mxu0
          %v2551 = vadd.f32 %v2486, %v2550
          %2552 = vmatmul.f32.gmra.mxu0 %v1199
          %v2553 = vpop.f32.mrf.mxu0
          %v2554 = vadd.f32 %v2489, %v2553
          %2555 = vmatmul.f32.gmra.mxu0 %v1202
          %v2556 = vpop.f32.mrf.mxu0
          %v2557 = vadd.f32 %v2492, %v2556
          %2558 = vmatmul.f32.gmra.mxu0 %v1205
          %v2559 = vpop.f32.mrf.mxu0
          %v2560 = vadd.f32 %v2495, %v2559
          %2561 = vmatmul.f32.gmra.mxu0 %v1208
          %v2562 = vpop.f32.mrf.mxu0
          %v2563 = vadd.f32 %v2498, %v2562
          %2564 = vmatmul.f32.gmra.mxu0 %v1211
          %v2565 = vpop.f32.mrf.mxu0
          %v2566 = vadd.f32 %v2501, %v2565
          %2567 = vdwg.mxu0
          %2584 = vrot.lane.b32.xlu0 %v2521, 127
          %v2585 = vpop.permute.xlu0 %2584
          %2586 = vrot.lane.b32.xlu0 %v2524, 127
          %v2587 = vpop.permute.xlu0 %2586
          %2588 = vrot.lane.b32.xlu0 %v2527, 127
          %v2589 = vpop.permute.xlu0 %2588
          %2590 = vrot.lane.b32.xlu0 %v2530, 127
          %v2591 = vpop.permute.xlu0 %2590
          %2592 = vrot.lane.b32.xlu0 %v2533, 127
          %v2593 = vpop.permute.xlu0 %2592
          %2594 = vrot.lane.b32.xlu0 %v2536, 127
          %v2595 = vpop.permute.xlu0 %2594
          %2596 = vrot.lane.b32.xlu0 %v2539, 127
          %v2597 = vpop.permute.xlu0 %2596
          %2598 = vrot.lane.b32.xlu0 %v2542, 127
          %v2599 = vpop.permute.xlu0 %2598
          %2600 = vrot.lane.b32.xlu0 %v2545, 127
          %v2601 = vpop.permute.xlu0 %2600
          %2602 = vrot.lane.b32.xlu0 %v2548, 127
          %v2603 = vpop.permute.xlu0 %2602
          %2604 = vrot.lane.b32.xlu0 %v2551, 127
          %v2605 = vpop.permute.xlu0 %2604
          %2606 = vrot.lane.b32.xlu0 %v2554, 127
          %v2607 = vpop.permute.xlu0 %2606
          %2608 = vrot.lane.b32.xlu0 %v2557, 127
          %v2609 = vpop.permute.xlu0 %2608
          %2610 = vrot.lane.b32.xlu0 %v2560, 127
          %v2611 = vpop.permute.xlu0 %2610
          %2612 = vrot.lane.b32.xlu0 %v2563, 127
          %v2613 = vpop.permute.xlu0 %2612
          %2614 = vrot.lane.b32.xlu0 %v2566, 127
          %v2615 = vpop.permute.xlu0 %2614
          %v2632 = vmax.f32 %v2521, %v2585
          %v2633 = vmax.f32 %v2524, %v2587
          %v2634 = vmax.f32 %v2527, %v2589
          %v2635 = vmax.f32 %v2530, %v2591
          %v2636 = vmax.f32 %v2533, %v2593
          %v2637 = vmax.f32 %v2536, %v2595
          %v2638 = vmax.f32 %v2539, %v2597
          %v2639 = vmax.f32 %v2542, %v2599
          %v2640 = vmax.f32 %v2545, %v2601
          %v2641 = vmax.f32 %v2548, %v2603
          %v2642 = vmax.f32 %v2551, %v2605
          %v2643 = vmax.f32 %v2554, %v2607
          %v2644 = vmax.f32 %v2557, %v2609
          %v2645 = vmax.f32 %v2560, %v2611
          %v2646 = vmax.f32 %v2563, %v2613
          %v2647 = vmax.f32 %v2566, %v2615
          %2648 = vrot.lane.b32.xlu0 %v2521, 126
          %v2649 = vpop.permute.xlu0 %2648
          %2650 = vrot.lane.b32.xlu0 %v2524, 126
          %v2651 = vpop.permute.xlu0 %2650
          %2652 = vrot.lane.b32.xlu0 %v2527, 126
          %v2653 = vpop.permute.xlu0 %2652
          %2654 = vrot.lane.b32.xlu0 %v2530, 126
          %v2655 = vpop.permute.xlu0 %2654
          %2656 = vrot.lane.b32.xlu0 %v2533, 126
          %v2657 = vpop.permute.xlu0 %2656
          %2658 = vrot.lane.b32.xlu0 %v2536, 126
          %v2659 = vpop.permute.xlu0 %2658
          %2660 = vrot.lane.b32.xlu0 %v2539, 126
          %v2661 = vpop.permute.xlu0 %2660
          %2662 = vrot.lane.b32.xlu0 %v2542, 126
          %v2663 = vpop.permute.xlu0 %2662
          %2664 = vrot.lane.b32.xlu0 %v2545, 126
          %v2665 = vpop.permute.xlu0 %2664
          %2666 = vrot.lane.b32.xlu0 %v2548, 126
          %v2667 = vpop.permute.xlu0 %2666
          %2668 = vrot.lane.b32.xlu0 %v2551, 126
          %v2669 = vpop.permute.xlu0 %2668
          %2670 = vrot.lane.b32.xlu0 %v2554, 126
          %v2671 = vpop.permute.xlu0 %2670
          %2672 = vrot.lane.b32.xlu0 %v2557, 126
          %v2673 = vpop.permute.xlu0 %2672
          %2674 = vrot.lane.b32.xlu0 %v2560, 126
          %v2675 = vpop.permute.xlu0 %2674
          %2676 = vrot.lane.b32.xlu0 %v2563, 126
          %v2677 = vpop.permute.xlu0 %2676
          %2678 = vrot.lane.b32.xlu0 %v2566, 126
          %v2679 = vpop.permute.xlu0 %2678
          %v2696 = vmax.f32 %v2632, %v2649
          %v2697 = vmax.f32 %v2633, %v2651
          %v2698 = vmax.f32 %v2634, %v2653
          %v2699 = vmax.f32 %v2635, %v2655
          %v2700 = vmax.f32 %v2636, %v2657
          %v2701 = vmax.f32 %v2637, %v2659
          %v2702 = vmax.f32 %v2638, %v2661
          %v2703 = vmax.f32 %v2639, %v2663
          %v2704 = vmax.f32 %v2640, %v2665
          %v2705 = vmax.f32 %v2641, %v2667
          %v2706 = vmax.f32 %v2642, %v2669
          %v2707 = vmax.f32 %v2643, %v2671
          %v2708 = vmax.f32 %v2644, %v2673
          %v2709 = vmax.f32 %v2645, %v2675
          %v2710 = vmax.f32 %v2646, %v2677
          %v2711 = vmax.f32 %v2647, %v2679
          %v2713 = vsel %vm1487, %v2696, 0
          %v2716 = vsel %vm1487, %v2697, 0
          %v2719 = vsel %vm1487, %v2698, 0
          %v2722 = vsel %vm1487, %v2699, 0
          %v2725 = vsel %vm1487, %v2700, 0
          %v2728 = vsel %vm1487, %v2701, 0
          %v2731 = vsel %vm1487, %v2702, 0
          %v2734 = vsel %vm1487, %v2703, 0
          %v2737 = vsel %vm1487, %v2704, 0
          %v2740 = vsel %vm1487, %v2705, 0
          %v2743 = vsel %vm1487, %v2706, 0
          %v2746 = vsel %vm1487, %v2707, 0
          %v2749 = vsel %vm1487, %v2708, 0
          %v2752 = vsel %vm1487, %v2709, 0
          %v2755 = vsel %vm1487, %v2710, 0
          %v2758 = vsel %vm1487, %v2711, 0
          %2760 = vmatpush.msra.mxu0 0.0
          %2761 = vmatpush.msra.mxu0 0.0
          %2762 = vmatpush.msra.mxu0 0.0
          %2763 = vmatpush.msra.mxu0 %v689
          %2764 = vmatpush.msra.mxu0 %v688
          %2765 = vmatpush.msra.mxu0 %v687
          %2766 = vmatpush.msra.mxu0 %v686
          %2767 = vmatpush.msra.mxu0 %v685
          %2768 = vmatpush.msra.mxu0 %v684
          %2769 = vmatpush.msra.mxu0 %v683
          %2770 = vmatpush.msra.mxu0 %v682
          %2771 = vmatpush.msra.mxu0 %v681
          %2772 = vmatpush.msra.mxu0 %v680
          %2773 = vmatpush.msra.mxu0 %v679
          %2774 = vmatpush.msra.mxu0 %v678
          %2775 = vmatpush.msra.mxu0 %v677
          %2776 = vmatmul.f32.gmra.mxu0 %v2713
          %v2777 = vpop.f32.mrf.mxu0
          %v2778 = vadd.f32 0.0, %v2777
          %2779 = vmatmul.f32.gmra.mxu0 %v2716
          %v2780 = vpop.f32.mrf.mxu0
          %v2781 = vadd.f32 0.0, %v2780
          %2782 = vmatmul.f32.gmra.mxu0 %v2719
          %v2783 = vpop.f32.mrf.mxu0
          %v2784 = vadd.f32 0.0, %v2783
          %2785 = vmatmul.f32.gmra.mxu0 %v2722
          %v2786 = vpop.f32.mrf.mxu0
          %v2787 = vadd.f32 0.0, %v2786
          %2788 = vmatmul.f32.gmra.mxu0 %v2725
          %v2789 = vpop.f32.mrf.mxu0
          %v2790 = vadd.f32 0.0, %v2789
          %2791 = vmatmul.f32.gmra.mxu0 %v2728
          %v2792 = vpop.f32.mrf.mxu0
          %v2793 = vadd.f32 0.0, %v2792
          %2794 = vmatmul.f32.gmra.mxu0 %v2731
          %v2795 = vpop.f32.mrf.mxu0
          %v2796 = vadd.f32 0.0, %v2795
          %2797 = vmatmul.f32.gmra.mxu0 %v2734
          %v2798 = vpop.f32.mrf.mxu0
          %v2799 = vadd.f32 0.0, %v2798
          %2800 = vmatmul.f32.gmra.mxu0 %v2737
          %v2801 = vpop.f32.mrf.mxu0
          %v2802 = vadd.f32 0.0, %v2801
          %2803 = vmatmul.f32.gmra.mxu0 %v2740
          %v2804 = vpop.f32.mrf.mxu0
          %v2805 = vadd.f32 0.0, %v2804
          %2806 = vmatmul.f32.gmra.mxu0 %v2743
          %v2807 = vpop.f32.mrf.mxu0
          %v2808 = vadd.f32 0.0, %v2807
          %2809 = vmatmul.f32.gmra.mxu0 %v2746
          %v2810 = vpop.f32.mrf.mxu0
          %v2811 = vadd.f32 0.0, %v2810
          %2812 = vmatmul.f32.gmra.mxu0 %v2749
          %v2813 = vpop.f32.mrf.mxu0
          %v2814 = vadd.f32 0.0, %v2813
          %2815 = vmatmul.f32.gmra.mxu0 %v2752
          %v2816 = vpop.f32.mrf.mxu0
          %v2817 = vadd.f32 0.0, %v2816
          %2818 = vmatmul.f32.gmra.mxu0 %v2755
          %v2819 = vpop.f32.mrf.mxu0
          %v2820 = vadd.f32 0.0, %v2819
          %2821 = vmatmul.f32.gmra.mxu0 %v2758
          %v2822 = vpop.f32.mrf.mxu0
          %v2823 = vadd.f32 0.0, %v2822
          %2824 = vdwg.mxu0
          %2825 = vxpose.xlu0.b32.start [1/16] %v2778, 128
          %2826 = vxpose.xlu0.b32.cont [2/16] %v2781, 128
          %2827 = vxpose.xlu0.b32.cont [3/16] %v2784, 128
          %2828 = vxpose.xlu0.b32.cont [4/16] %v2787, 128
          %2829 = vxpose.xlu0.b32.cont [5/16] %v2790, 128
          %2830 = vxpose.xlu0.b32.cont [6/16] %v2793, 128
          %2831 = vxpose.xlu0.b32.cont [7/16] %v2796, 128
          %2832 = vxpose.xlu0.b32.cont [8/16] %v2799, 128
          %2833 = vxpose.xlu0.b32.cont [9/16] %v2802, 128
          %2834 = vxpose.xlu0.b32.cont [10/16] %v2805, 128
          %2835 = vxpose.xlu0.b32.cont [11/16] %v2808, 128
          %2836 = vxpose.xlu0.b32.cont [12/16] %v2811, 128
          %2837 = vxpose.xlu0.b32.cont [13/16] %v2814, 128
          %2838 = vxpose.xlu0.b32.cont [14/16] %v2817, 128
          %2839 = vxpose.xlu0.b32.cont [15/16] %v2820, 128
          %2840 = vxpose.xlu0.b32.end [16/16] %v2823, 128
          %v2841 = vpop.trf.xlu0
          %v2842 = vpop.trf.xlu0
          %v2843 = vpop.trf.xlu0
          %v2844 = vpop.trf.xlu0
          %v2845 = vpop.trf.xlu0
          %v2846 = vpop.trf.xlu0
          %v2847 = vpop.trf.xlu0
          %v2848 = vpop.trf.xlu0
          %v2849 = vpop.trf.xlu0
          %v2850 = vpop.trf.xlu0
          %v2851 = vpop.trf.xlu0
          %v2852 = vpop.trf.xlu0
          %v2853 = vpop.trf.xlu0
          %v2854 = vpop.trf.xlu0
          %v2855 = vpop.trf.xlu0
          %v2856 = vpop.trf.xlu0
          %2857 = vst [vmem:[#allocation2 + $0x68] sm:$0xff] %v2841
          %2858 = vst [vmem:[#allocation2 + $0x70] sm:$0xff] %v2842
          %2859 = vst [vmem:[#allocation2 + $0x78] sm:$0xff] %v2843
          %2860 = vst [vmem:[#allocation2 + $0x80] sm:$0xff] %v2844
          %2861 = vst [vmem:[#allocation2 + $0x88] sm:$0xff] %v2845
          %2862 = vst [vmem:[#allocation2 + $0x90] sm:$0xff] %v2846
          %2863 = vst [vmem:[#allocation2 + $0x98] sm:$0xf] %v2847
          %s2864 = scalar_lea.vmem [#allocation4], 3
          %v2865 = vld [vmem:[%s2864] sm:$0x1]
          %v2867 = vperm.slane %v2865, 0
          %v2869 = vmul.f32 %v766, %v2867
          %v2870 = vmul.f32 %v771, %v2867
          %v2871 = vmul.f32 %v776, %v2867
          %v2872 = vmul.f32 %v781, %v2867
          %v2873 = vmul.f32 %v792, %v2867
          %v2874 = vmul.f32 %v796, %v2867
          %v2875 = vmul.f32 %v800, %v2867
          %v2876 = vmul.f32 %v804, %v2867
          %2881 = vrot.lane.b32.xlu0 %v2873, 127
          %v2882 = vpop.permute.xlu0 %2881
          %2883 = vrot.lane.b32.xlu0 %v2874, 127
          %v2884 = vpop.permute.xlu0 %2883
          %2885 = vrot.lane.b32.xlu0 %v2875, 127
          %v2886 = vpop.permute.xlu0 %2885
          %2887 = vrot.lane.b32.xlu0 %v2876, 127
          %v2888 = vpop.permute.xlu0 %2887
          %v2893 = vadd.f32 %v2869, %v2882
          %v2894 = vadd.f32 %v2870, %v2884
          %v2895 = vadd.f32 %v2871, %v2886
          %v2896 = vadd.f32 %v2872, %v2888
          %v2897 = vmul.f32 %v832, %v2867
          %v2898 = vmul.f32 %v836, %v2867
          %v2899 = vmul.f32 %v840, %v2867
          %v2900 = vmul.f32 %v844, %v2867
          %2905 = vrot.lane.b32.xlu0 %v2897, 126
          %v2906 = vpop.permute.xlu0 %2905
          %2907 = vrot.lane.b32.xlu0 %v2898, 126
          %v2908 = vpop.permute.xlu0 %2907
          %2909 = vrot.lane.b32.xlu0 %v2899, 126
          %v2910 = vpop.permute.xlu0 %2909
          %2911 = vrot.lane.b32.xlu0 %v2900, 126
          %v2912 = vpop.permute.xlu0 %2911
          %v2917 = vadd.f32 %v2893, %v2906
          %v2918 = vadd.f32 %v2894, %v2908
          %v2919 = vadd.f32 %v2895, %v2910
          %v2920 = vadd.f32 %v2896, %v2912
          %v2921 = vadd.f32 %v2917, %v873
          %v2922 = vadd.f32 %v2918, %v878
          %v2923 = vadd.f32 %v2919, %v883
          %v2924 = vadd.f32 %v2920, %v888
          %2929 = vrot.lane.b32.xlu0 %v2921, 127
          %v2930 = vpop.permute.xlu0 %2929
          %2931 = vrot.lane.b32.xlu0 %v2922, 127
          %v2932 = vpop.permute.xlu0 %2931
          %2933 = vrot.lane.b32.xlu0 %v2923, 127
          %v2934 = vpop.permute.xlu0 %2933
          %2935 = vrot.lane.b32.xlu0 %v2924, 127
          %v2936 = vpop.permute.xlu0 %2935
          %2941 = vrot.lane.b32.xlu0 %v2921, 126
          %v2942 = vpop.permute.xlu0 %2941
          %2943 = vrot.lane.b32.xlu0 %v2922, 126
          %v2944 = vpop.permute.xlu0 %2943
          %2945 = vrot.lane.b32.xlu0 %v2923, 126
          %v2946 = vpop.permute.xlu0 %2945
          %2947 = vrot.lane.b32.xlu0 %v2924, 126
          %v2948 = vpop.permute.xlu0 %2947
          %2953 = vmatpush.msra.mxu0 0.0
          %2954 = vmatpush.msra.mxu0 0.0
          %2955 = vmatpush.msra.mxu0 0.0
          %2956 = vmatpush.msra.mxu0 0.0
          %2957 = vmatpush.msra.mxu0 %v2948
          %2958 = vmatpush.msra.mxu0 %v2946
          %2959 = vmatpush.msra.mxu0 %v2944
          %2960 = vmatpush.msra.mxu0 %v2942
          %2961 = vmatpush.msra.mxu0 %v2936
          %2962 = vmatpush.msra.mxu0 %v2934
          %2963 = vmatpush.msra.mxu0 %v2932
          %2964 = vmatpush.msra.mxu0 %v2930
          %2965 = vmatpush.msra.mxu0 %v2924
          %2966 = vmatpush.msra.mxu0 %v2923
          %2967 = vmatpush.msra.mxu0 %v2922
          %2968 = vmatpush.msra.mxu0 %v2921
          %2969 = vmatmul.f32.gmra.mxu0 %v964
          %v2970 = vpop.f32.mrf.mxu0
          %v2971 = vadd.f32 %v925, %v2970
          %2972 = vmatmul.f32.gmra.mxu0 %v967
          %v2973 = vpop.f32.mrf.mxu0
          %v2974 = vadd.f32 %v930, %v2973
          %2975 = vmatmul.f32.gmra.mxu0 %v970
          %v2976 = vpop.f32.mrf.mxu0
          %v2977 = vadd.f32 %v935, %v2976
          %2978 = vmatmul.f32.gmra.mxu0 %v973
          %v2979 = vpop.f32.mrf.mxu0
          %v2980 = vadd.f32 %v940, %v2979
          %2981 = vmatmul.f32.gmra.mxu0 %v976
          %v2982 = vpop.f32.mrf.mxu0
          %v2983 = vadd.f32 %v945, %v2982
          %2984 = vmatmul.f32.gmra.mxu0 %v979
          %v2985 = vpop.f32.mrf.mxu0
          %v2986 = vadd.f32 %v950, %v2985
          %2987 = vmatmul.f32.gmra.mxu0 %v982
          %v2988 = vpop.f32.mrf.mxu0
          %v2989 = vadd.f32 %v955, %v2988
          %2990 = vmatmul.f32.gmra.mxu0 %v985
          %v2991 = vpop.f32.mrf.mxu0
          %v2992 = vadd.f32 %v960, %v2991
          %2993 = vdwg.mxu0
          %3002 = vrot.lane.b32.xlu0 %v2971, 127
          %v3003 = vpop.permute.xlu0 %3002
          %3004 = vrot.lane.b32.xlu0 %v2974, 127
          %v3005 = vpop.permute.xlu0 %3004
          %3006 = vrot.lane.b32.xlu0 %v2977, 127
          %v3007 = vpop.permute.xlu0 %3006
          %3008 = vrot.lane.b32.xlu0 %v2980, 127
          %v3009 = vpop.permute.xlu0 %3008
          %3010 = vrot.lane.b32.xlu0 %v2983, 127
          %v3011 = vpop.permute.xlu0 %3010
          %3012 = vrot.lane.b32.xlu0 %v2986, 127
          %v3013 = vpop.permute.xlu0 %3012
          %3014 = vrot.lane.b32.xlu0 %v2989, 127
          %v3015 = vpop.permute.xlu0 %3014
          %3016 = vrot.lane.b32.xlu0 %v2992, 127
          %v3017 = vpop.permute.xlu0 %3016
          %3026 = vrot.lane.b32.xlu0 %v2971, 126
          %v3027 = vpop.permute.xlu0 %3026
          %3028 = vrot.lane.b32.xlu0 %v2974, 126
          %v3029 = vpop.permute.xlu0 %3028
          %3030 = vrot.lane.b32.xlu0 %v2977, 126
          %v3031 = vpop.permute.xlu0 %3030
          %3032 = vrot.lane.b32.xlu0 %v2980, 126
          %v3033 = vpop.permute.xlu0 %3032
          %3034 = vrot.lane.b32.xlu0 %v2983, 126
          %v3035 = vpop.permute.xlu0 %3034
          %3036 = vrot.lane.b32.xlu0 %v2986, 126
          %v3037 = vpop.permute.xlu0 %3036
          %3038 = vrot.lane.b32.xlu0 %v2989, 126
          %v3039 = vpop.permute.xlu0 %3038
          %3040 = vrot.lane.b32.xlu0 %v2992, 126
          %v3041 = vpop.permute.xlu0 %3040
          %3050 = vmatpush.msra.mxu0 %v3017
          %3051 = vmatpush.msra.mxu0 %v3015
          %3052 = vmatpush.msra.mxu0 %v3013
          %3053 = vmatpush.msra.mxu0 %v3011
          %3054 = vmatpush.msra.mxu0 %v3009
          %3055 = vmatpush.msra.mxu0 %v3007
          %3056 = vmatpush.msra.mxu0 %v3005
          %3057 = vmatpush.msra.mxu0 %v3003
          %3058 = vmatpush.msra.mxu0 %v2992
          %3059 = vmatpush.msra.mxu0 %v2989
          %3060 = vmatpush.msra.mxu0 %v2986
          %3061 = vmatpush.msra.mxu0 %v2983
          %3062 = vmatpush.msra.mxu0 %v2980
          %3063 = vmatpush.msra.mxu0 %v2977
          %3064 = vmatpush.msra.mxu0 %v2974
          %3065 = vmatpush.msra.mxu0 %v2971
          %3066 = vmatmul.f32.gmra.mxu0 %v714
          %v3067 = vpop.f32.mrf.mxu0
          %v3068 = vadd.f32 %v1087, %v3067
          %3069 = vmatmul.f32.gmra.mxu0 %v716
          %v3070 = vpop.f32.mrf.mxu0
          %v3071 = vadd.f32 %v1092, %v3070
          %3072 = vmatmul.f32.gmra.mxu0 %v718
          %v3073 = vpop.f32.mrf.mxu0
          %v3074 = vadd.f32 %v1097, %v3073
          %3075 = vmatmul.f32.gmra.mxu0 %v720
          %v3076 = vpop.f32.mrf.mxu0
          %v3077 = vadd.f32 %v1102, %v3076
          %3078 = vmatmul.f32.gmra.mxu0 %v722
          %v3079 = vpop.f32.mrf.mxu0
          %v3080 = vadd.f32 %v1107, %v3079
          %3081 = vmatmul.f32.gmra.mxu0 %v724
          %v3082 = vpop.f32.mrf.mxu0
          %v3083 = vadd.f32 %v1112, %v3082
          %3084 = vmatmul.f32.gmra.mxu0 %v726
          %v3085 = vpop.f32.mrf.mxu0
          %v3086 = vadd.f32 %v1117, %v3085
          %3087 = vmatmul.f32.gmra.mxu0 %v728
          %v3088 = vpop.f32.mrf.mxu0
          %v3089 = vadd.f32 %v1122, %v3088
          %3090 = vmatmul.f32.gmra.mxu0 %v730
          %v3091 = vpop.f32.mrf.mxu0
          %v3092 = vadd.f32 %v1127, %v3091
          %3093 = vmatmul.f32.gmra.mxu0 %v732
          %v3094 = vpop.f32.mrf.mxu0
          %v3095 = vadd.f32 %v1132, %v3094
          %3096 = vmatmul.f32.gmra.mxu0 %v734
          %v3097 = vpop.f32.mrf.mxu0
          %v3098 = vadd.f32 %v1137, %v3097
          %3099 = vmatmul.f32.gmra.mxu0 %v736
          %v3100 = vpop.f32.mrf.mxu0
          %v3101 = vadd.f32 %v1142, %v3100
          %3102 = vmatmul.f32.gmra.mxu0 %v738
          %v3103 = vpop.f32.mrf.mxu0
          %v3104 = vadd.f32 %v1147, %v3103
          %3105 = vmatmul.f32.gmra.mxu0 %v740
          %v3106 = vpop.f32.mrf.mxu0
          %v3107 = vadd.f32 %v1152, %v3106
          %3108 = vmatmul.f32.gmra.mxu0 %v742
          %v3109 = vpop.f32.mrf.mxu0
          %v3110 = vadd.f32 %v1157, %v3109
          %3111 = vmatmul.f32.gmra.mxu0 %v744
          %v3112 = vpop.f32.mrf.mxu0
          %v3113 = vadd.f32 %v1162, %v3112
          %3114 = vdwg.mxu0
          %3115 = vmatpush.msra.mxu0 0.0
          %3116 = vmatpush.msra.mxu0 0.0
          %3117 = vmatpush.msra.mxu0 0.0
          %3118 = vmatpush.msra.mxu0 0.0
          %3119 = vmatpush.msra.mxu0 0.0
          %3120 = vmatpush.msra.mxu0 0.0
          %3121 = vmatpush.msra.mxu0 0.0
          %3122 = vmatpush.msra.mxu0 0.0
          %3123 = vmatpush.msra.mxu0 %v3041
          %3124 = vmatpush.msra.mxu0 %v3039
          %3125 = vmatpush.msra.mxu0 %v3037
          %3126 = vmatpush.msra.mxu0 %v3035
          %3127 = vmatpush.msra.mxu0 %v3033
          %3128 = vmatpush.msra.mxu0 %v3031
          %3129 = vmatpush.msra.mxu0 %v3029
          %3130 = vmatpush.msra.mxu0 %v3027
          %3131 = vmatmul.f32.gmra.mxu0 %v1166
          %v3132 = vpop.f32.mrf.mxu0
          %v3133 = vadd.f32 %v3068, %v3132
          %3134 = vmatmul.f32.gmra.mxu0 %v1169
          %v3135 = vpop.f32.mrf.mxu0
          %v3136 = vadd.f32 %v3071, %v3135
          %3137 = vmatmul.f32.gmra.mxu0 %v1172
          %v3138 = vpop.f32.mrf.mxu0
          %v3139 = vadd.f32 %v3074, %v3138
          %3140 = vmatmul.f32.gmra.mxu0 %v1175
          %v3141 = vpop.f32.mrf.mxu0
          %v3142 = vadd.f32 %v3077, %v3141
          %3143 = vmatmul.f32.gmra.mxu0 %v1178
          %v3144 = vpop.f32.mrf.mxu0
          %v3145 = vadd.f32 %v3080, %v3144
          %3146 = vmatmul.f32.gmra.mxu0 %v1181
          %v3147 = vpop.f32.mrf.mxu0
          %v3148 = vadd.f32 %v3083, %v3147
          %3149 = vmatmul.f32.gmra.mxu0 %v1184
          %v3150 = vpop.f32.mrf.mxu0
          %v3151 = vadd.f32 %v3086, %v3150
          %3152 = vmatmul.f32.gmra.mxu0 %v1187
          %v3153 = vpop.f32.mrf.mxu0
          %v3154 = vadd.f32 %v3089, %v3153
          %3155 = vmatmul.f32.gmra.mxu0 %v1190
          %v3156 = vpop.f32.mrf.mxu0
          %v3157 = vadd.f32 %v3092, %v3156
          %3158 = vmatmul.f32.gmra.mxu0 %v1193
          %v3159 = vpop.f32.mrf.mxu0
          %v3160 = vadd.f32 %v3095, %v3159
          %3161 = vmatmul.f32.gmra.mxu0 %v1196
          %v3162 = vpop.f32.mrf.mxu0
          %v3163 = vadd.f32 %v3098, %v3162
          %3164 = vmatmul.f32.gmra.mxu0 %v1199
          %v3165 = vpop.f32.mrf.mxu0
          %v3166 = vadd.f32 %v3101, %v3165
          %3167 = vmatmul.f32.gmra.mxu0 %v1202
          %v3168 = vpop.f32.mrf.mxu0
          %v3169 = vadd.f32 %v3104, %v3168
          %3170 = vmatmul.f32.gmra.mxu0 %v1205
          %v3171 = vpop.f32.mrf.mxu0
          %v3172 = vadd.f32 %v3107, %v3171
          %3173 = vmatmul.f32.gmra.mxu0 %v1208
          %v3174 = vpop.f32.mrf.mxu0
          %v3175 = vadd.f32 %v3110, %v3174
          %3176 = vmatmul.f32.gmra.mxu0 %v1211
          %v3177 = vpop.f32.mrf.mxu0
          %v3178 = vadd.f32 %v3113, %v3177
          %3179 = vdwg.mxu0
          %3196 = vrot.lane.b32.xlu0 %v3133, 127
          %v3197 = vpop.permute.xlu0 %3196
          %3198 = vrot.lane.b32.xlu0 %v3136, 127
          %v3199 = vpop.permute.xlu0 %3198
          %3200 = vrot.lane.b32.xlu0 %v3139, 127
          %v3201 = vpop.permute.xlu0 %3200
          %3202 = vrot.lane.b32.xlu0 %v3142, 127
          %v3203 = vpop.permute.xlu0 %3202
          %3204 = vrot.lane.b32.xlu0 %v3145, 127
          %v3205 = vpop.permute.xlu0 %3204
          %3206 = vrot.lane.b32.xlu0 %v3148, 127
          %v3207 = vpop.permute.xlu0 %3206
          %3208 = vrot.lane.b32.xlu0 %v3151, 127
          %v3209 = vpop.permute.xlu0 %3208
          %3210 = vrot.lane.b32.xlu0 %v3154, 127
          %v3211 = vpop.permute.xlu0 %3210
          %3212 = vrot.lane.b32.xlu0 %v3157, 127
          %v3213 = vpop.permute.xlu0 %3212
          %3214 = vrot.lane.b32.xlu0 %v3160, 127
          %v3215 = vpop.permute.xlu0 %3214
          %3216 = vrot.lane.b32.xlu0 %v3163, 127
          %v3217 = vpop.permute.xlu0 %3216
          %3218 = vrot.lane.b32.xlu0 %v3166, 127
          %v3219 = vpop.permute.xlu0 %3218
          %3220 = vrot.lane.b32.xlu0 %v3169, 127
          %v3221 = vpop.permute.xlu0 %3220
          %3222 = vrot.lane.b32.xlu0 %v3172, 127
          %v3223 = vpop.permute.xlu0 %3222
          %3224 = vrot.lane.b32.xlu0 %v3175, 127
          %v3225 = vpop.permute.xlu0 %3224
          %3226 = vrot.lane.b32.xlu0 %v3178, 127
          %v3227 = vpop.permute.xlu0 %3226
          %v3244 = vmax.f32 %v3133, %v3197
          %v3245 = vmax.f32 %v3136, %v3199
          %v3246 = vmax.f32 %v3139, %v3201
          %v3247 = vmax.f32 %v3142, %v3203
          %v3248 = vmax.f32 %v3145, %v3205
          %v3249 = vmax.f32 %v3148, %v3207
          %v3250 = vmax.f32 %v3151, %v3209
          %v3251 = vmax.f32 %v3154, %v3211
          %v3252 = vmax.f32 %v3157, %v3213
          %v3253 = vmax.f32 %v3160, %v3215
          %v3254 = vmax.f32 %v3163, %v3217
          %v3255 = vmax.f32 %v3166, %v3219
          %v3256 = vmax.f32 %v3169, %v3221
          %v3257 = vmax.f32 %v3172, %v3223
          %v3258 = vmax.f32 %v3175, %v3225
          %v3259 = vmax.f32 %v3178, %v3227
          %3260 = vrot.lane.b32.xlu0 %v3133, 126
          %v3261 = vpop.permute.xlu0 %3260
          %3262 = vrot.lane.b32.xlu0 %v3136, 126
          %v3263 = vpop.permute.xlu0 %3262
          %3264 = vrot.lane.b32.xlu0 %v3139, 126
          %v3265 = vpop.permute.xlu0 %3264
          %3266 = vrot.lane.b32.xlu0 %v3142, 126
          %v3267 = vpop.permute.xlu0 %3266
          %3268 = vrot.lane.b32.xlu0 %v3145, 126
          %v3269 = vpop.permute.xlu0 %3268
          %3270 = vrot.lane.b32.xlu0 %v3148, 126
          %v3271 = vpop.permute.xlu0 %3270
          %3272 = vrot.lane.b32.xlu0 %v3151, 126
          %v3273 = vpop.permute.xlu0 %3272
          %3274 = vrot.lane.b32.xlu0 %v3154, 126
          %v3275 = vpop.permute.xlu0 %3274
          %3276 = vrot.lane.b32.xlu0 %v3157, 126
          %v3277 = vpop.permute.xlu0 %3276
          %3278 = vrot.lane.b32.xlu0 %v3160, 126
          %v3279 = vpop.permute.xlu0 %3278
          %3280 = vrot.lane.b32.xlu0 %v3163, 126
          %v3281 = vpop.permute.xlu0 %3280
          %3282 = vrot.lane.b32.xlu0 %v3166, 126
          %v3283 = vpop.permute.xlu0 %3282
          %3284 = vrot.lane.b32.xlu0 %v3169, 126
          %v3285 = vpop.permute.xlu0 %3284
          %3286 = vrot.lane.b32.xlu0 %v3172, 126
          %v3287 = vpop.permute.xlu0 %3286
          %3288 = vrot.lane.b32.xlu0 %v3175, 126
          %v3289 = vpop.permute.xlu0 %3288
          %3290 = vrot.lane.b32.xlu0 %v3178, 126
          %v3291 = vpop.permute.xlu0 %3290
          %v3308 = vmax.f32 %v3244, %v3261
          %v3309 = vmax.f32 %v3245, %v3263
          %v3310 = vmax.f32 %v3246, %v3265
          %v3311 = vmax.f32 %v3247, %v3267
          %v3312 = vmax.f32 %v3248, %v3269
          %v3313 = vmax.f32 %v3249, %v3271
          %v3314 = vmax.f32 %v3250, %v3273
          %v3315 = vmax.f32 %v3251, %v3275
          %v3316 = vmax.f32 %v3252, %v3277
          %v3317 = vmax.f32 %v3253, %v3279
          %v3318 = vmax.f32 %v3254, %v3281
          %v3319 = vmax.f32 %v3255, %v3283
          %v3320 = vmax.f32 %v3256, %v3285
          %v3321 = vmax.f32 %v3257, %v3287
          %v3322 = vmax.f32 %v3258, %v3289
          %v3323 = vmax.f32 %v3259, %v3291
          %v3325 = vsel %vm1487, %v3308, 0
          %v3328 = vsel %vm1487, %v3309, 0
          %v3331 = vsel %vm1487, %v3310, 0
          %v3334 = vsel %vm1487, %v3311, 0
          %v3337 = vsel %vm1487, %v3312, 0
          %v3340 = vsel %vm1487, %v3313, 0
          %v3343 = vsel %vm1487, %v3314, 0
          %v3346 = vsel %vm1487, %v3315, 0
          %v3349 = vsel %vm1487, %v3316, 0
          %v3352 = vsel %vm1487, %v3317, 0
          %v3355 = vsel %vm1487, %v3318, 0
          %v3358 = vsel %vm1487, %v3319, 0
          %v3361 = vsel %vm1487, %v3320, 0
          %v3364 = vsel %vm1487, %v3321, 0
          %v3367 = vsel %vm1487, %v3322, 0
          %v3370 = vsel %vm1487, %v3323, 0
          %3372 = vmatpush.msra.mxu0 0.0
          %3373 = vmatpush.msra.mxu0 0.0
          %3374 = vmatpush.msra.mxu0 0.0
          %3375 = vmatpush.msra.mxu0 %v689
          %3376 = vmatpush.msra.mxu0 %v688
          %3377 = vmatpush.msra.mxu0 %v687
          %3378 = vmatpush.msra.mxu0 %v686
          %3379 = vmatpush.msra.mxu0 %v685
          %3380 = vmatpush.msra.mxu0 %v684
          %3381 = vmatpush.msra.mxu0 %v683
          %3382 = vmatpush.msra.mxu0 %v682
          %3383 = vmatpush.msra.mxu0 %v681
          %3384 = vmatpush.msra.mxu0 %v680
          %3385 = vmatpush.msra.mxu0 %v679
          %3386 = vmatpush.msra.mxu0 %v678
          %3387 = vmatpush.msra.mxu0 %v677
          %3388 = vmatmul.f32.gmra.mxu0 %v3325
          %v3389 = vpop.f32.mrf.mxu0
          %v3390 = vadd.f32 0.0, %v3389
          %3391 = vmatmul.f32.gmra.mxu0 %v3328
          %v3392 = vpop.f32.mrf.mxu0
          %v3393 = vadd.f32 0.0, %v3392
          %3394 = vmatmul.f32.gmra.mxu0 %v3331
          %v3395 = vpop.f32.mrf.mxu0
          %v3396 = vadd.f32 0.0, %v3395
          %3397 = vmatmul.f32.gmra.mxu0 %v3334
          %v3398 = vpop.f32.mrf.mxu0
          %v3399 = vadd.f32 0.0, %v3398
          %3400 = vmatmul.f32.gmra.mxu0 %v3337
          %v3401 = vpop.f32.mrf.mxu0
          %v3402 = vadd.f32 0.0, %v3401
          %3403 = vmatmul.f32.gmra.mxu0 %v3340
          %v3404 = vpop.f32.mrf.mxu0
          %v3405 = vadd.f32 0.0, %v3404
          %3406 = vmatmul.f32.gmra.mxu0 %v3343
          %v3407 = vpop.f32.mrf.mxu0
          %v3408 = vadd.f32 0.0, %v3407
          %3409 = vmatmul.f32.gmra.mxu0 %v3346
          %v3410 = vpop.f32.mrf.mxu0
          %v3411 = vadd.f32 0.0, %v3410
          %3412 = vmatmul.f32.gmra.mxu0 %v3349
          %v3413 = vpop.f32.mrf.mxu0
          %v3414 = vadd.f32 0.0, %v3413
          %3415 = vmatmul.f32.gmra.mxu0 %v3352
          %v3416 = vpop.f32.mrf.mxu0
          %v3417 = vadd.f32 0.0, %v3416
          %3418 = vmatmul.f32.gmra.mxu0 %v3355
          %v3419 = vpop.f32.mrf.mxu0
          %v3420 = vadd.f32 0.0, %v3419
          %3421 = vmatmul.f32.gmra.mxu0 %v3358
          %v3422 = vpop.f32.mrf.mxu0
          %v3423 = vadd.f32 0.0, %v3422
          %3424 = vmatmul.f32.gmra.mxu0 %v3361
          %v3425 = vpop.f32.mrf.mxu0
          %v3426 = vadd.f32 0.0, %v3425
          %3427 = vmatmul.f32.gmra.mxu0 %v3364
          %v3428 = vpop.f32.mrf.mxu0
          %v3429 = vadd.f32 0.0, %v3428
          %3430 = vmatmul.f32.gmra.mxu0 %v3367
          %v3431 = vpop.f32.mrf.mxu0
          %v3432 = vadd.f32 0.0, %v3431
          %3433 = vmatmul.f32.gmra.mxu0 %v3370
          %v3434 = vpop.f32.mrf.mxu0
          %v3435 = vadd.f32 0.0, %v3434
          %3436 = vdwg.mxu0
          %3437 = vxpose.xlu0.b32.start [1/16] %v3390, 128
          %3438 = vxpose.xlu0.b32.cont [2/16] %v3393, 128
          %3439 = vxpose.xlu0.b32.cont [3/16] %v3396, 128
          %3440 = vxpose.xlu0.b32.cont [4/16] %v3399, 128
          %3441 = vxpose.xlu0.b32.cont [5/16] %v3402, 128
          %3442 = vxpose.xlu0.b32.cont [6/16] %v3405, 128
          %3443 = vxpose.xlu0.b32.cont [7/16] %v3408, 128
          %3444 = vxpose.xlu0.b32.cont [8/16] %v3411, 128
          %3445 = vxpose.xlu0.b32.cont [9/16] %v3414, 128
          %3446 = vxpose.xlu0.b32.cont [10/16] %v3417, 128
          %3447 = vxpose.xlu0.b32.cont [11/16] %v3420, 128
          %3448 = vxpose.xlu0.b32.cont [12/16] %v3423, 128
          %3449 = vxpose.xlu0.b32.cont [13/16] %v3426, 128
          %3450 = vxpose.xlu0.b32.cont [14/16] %v3429, 128
          %3451 = vxpose.xlu0.b32.cont [15/16] %v3432, 128
          %3452 = vxpose.xlu0.b32.end [16/16] %v3435, 128
          %v3453 = vpop.trf.xlu0
          %v3454 = vpop.trf.xlu0
          %v3455 = vpop.trf.xlu0
          %v3456 = vpop.trf.xlu0
          %v3457 = vpop.trf.xlu0
          %v3458 = vpop.trf.xlu0
          %v3459 = vpop.trf.xlu0
          %v3460 = vpop.trf.xlu0
          %v3461 = vpop.trf.xlu0
          %v3462 = vpop.trf.xlu0
          %v3463 = vpop.trf.xlu0
          %v3464 = vpop.trf.xlu0
          %v3465 = vpop.trf.xlu0
          %v3466 = vpop.trf.xlu0
          %v3467 = vpop.trf.xlu0
          %v3468 = vpop.trf.xlu0
          %3469 = vst [vmem:[#allocation2 + $0x9c] sm:$0xff] %v3453
          %3470 = vst [vmem:[#allocation2 + $0xa4] sm:$0xff] %v3454
          %3471 = vst [vmem:[#allocation2 + $0xac] sm:$0xff] %v3455
          %3472 = vst [vmem:[#allocation2 + $0xb4] sm:$0xff] %v3456
          %3473 = vst [vmem:[#allocation2 + $0xbc] sm:$0xff] %v3457
          %3474 = vst [vmem:[#allocation2 + $0xc4] sm:$0xff] %v3458
          %3475 = vst [vmem:[#allocation2 + $0xcc] sm:$0xf] %v3459
          %s3476 = scalar_lea.vmem [#allocation4], 4
          %v3477 = vld [vmem:[%s3476] sm:$0x1]
          %v3479 = vperm.slane %v3477, 0
          %v3481 = vmul.f32 %v766, %v3479
          %v3482 = vmul.f32 %v771, %v3479
          %v3483 = vmul.f32 %v776, %v3479
          %v3484 = vmul.f32 %v781, %v3479
          %v3485 = vmul.f32 %v792, %v3479
          %v3486 = vmul.f32 %v796, %v3479
          %v3487 = vmul.f32 %v800, %v3479
          %v3488 = vmul.f32 %v804, %v3479
          %3493 = vrot.lane.b32.xlu0 %v3485, 127
          %v3494 = vpop.permute.xlu0 %3493
          %3495 = vrot.lane.b32.xlu0 %v3486, 127
          %v3496 = vpop.permute.xlu0 %3495
          %3497 = vrot.lane.b32.xlu0 %v3487, 127
          %v3498 = vpop.permute.xlu0 %3497
          %3499 = vrot.lane.b32.xlu0 %v3488, 127
          %v3500 = vpop.permute.xlu0 %3499
          %v3505 = vadd.f32 %v3481, %v3494
          %v3506 = vadd.f32 %v3482, %v3496
          %v3507 = vadd.f32 %v3483, %v3498
          %v3508 = vadd.f32 %v3484, %v3500
          %v3509 = vmul.f32 %v832, %v3479
          %v3510 = vmul.f32 %v836, %v3479
          %v3511 = vmul.f32 %v840, %v3479
          %v3512 = vmul.f32 %v844, %v3479
          %3517 = vrot.lane.b32.xlu0 %v3509, 126
          %v3518 = vpop.permute.xlu0 %3517
          %3519 = vrot.lane.b32.xlu0 %v3510, 126
          %v3520 = vpop.permute.xlu0 %3519
          %3521 = vrot.lane.b32.xlu0 %v3511, 126
          %v3522 = vpop.permute.xlu0 %3521
          %3523 = vrot.lane.b32.xlu0 %v3512, 126
          %v3524 = vpop.permute.xlu0 %3523
          %v3529 = vadd.f32 %v3505, %v3518
          %v3530 = vadd.f32 %v3506, %v3520
          %v3531 = vadd.f32 %v3507, %v3522
          %v3532 = vadd.f32 %v3508, %v3524
          %v3533 = vadd.f32 %v3529, %v873
          %v3534 = vadd.f32 %v3530, %v878
          %v3535 = vadd.f32 %v3531, %v883
          %v3536 = vadd.f32 %v3532, %v888
          %3541 = vrot.lane.b32.xlu0 %v3533, 127
          %v3542 = vpop.permute.xlu0 %3541
          %3543 = vrot.lane.b32.xlu0 %v3534, 127
          %v3544 = vpop.permute.xlu0 %3543
          %3545 = vrot.lane.b32.xlu0 %v3535, 127
          %v3546 = vpop.permute.xlu0 %3545
          %3547 = vrot.lane.b32.xlu0 %v3536, 127
          %v3548 = vpop.permute.xlu0 %3547
          %3553 = vrot.lane.b32.xlu0 %v3533, 126
          %v3554 = vpop.permute.xlu0 %3553
          %3555 = vrot.lane.b32.xlu0 %v3534, 126
          %v3556 = vpop.permute.xlu0 %3555
          %3557 = vrot.lane.b32.xlu0 %v3535, 126
          %v3558 = vpop.permute.xlu0 %3557
          %3559 = vrot.lane.b32.xlu0 %v3536, 126
          %v3560 = vpop.permute.xlu0 %3559
          %3565 = vmatpush.msra.mxu0 0.0
          %3566 = vmatpush.msra.mxu0 0.0
          %3567 = vmatpush.msra.mxu0 0.0
          %3568 = vmatpush.msra.mxu0 0.0
          %3569 = vmatpush.msra.mxu0 %v3560
          %3570 = vmatpush.msra.mxu0 %v3558
          %3571 = vmatpush.msra.mxu0 %v3556
          %3572 = vmatpush.msra.mxu0 %v3554
          %3573 = vmatpush.msra.mxu0 %v3548
          %3574 = vmatpush.msra.mxu0 %v3546
          %3575 = vmatpush.msra.mxu0 %v3544
          %3576 = vmatpush.msra.mxu0 %v3542
          %3577 = vmatpush.msra.mxu0 %v3536
          %3578 = vmatpush.msra.mxu0 %v3535
          %3579 = vmatpush.msra.mxu0 %v3534
          %3580 = vmatpush.msra.mxu0 %v3533
          %3581 = vmatmul.f32.gmra.mxu0 %v964
          %v3582 = vpop.f32.mrf.mxu0
          %v3583 = vadd.f32 %v925, %v3582
          %3584 = vmatmul.f32.gmra.mxu0 %v967
          %v3585 = vpop.f32.mrf.mxu0
          %v3586 = vadd.f32 %v930, %v3585
          %3587 = vmatmul.f32.gmra.mxu0 %v970
          %v3588 = vpop.f32.mrf.mxu0
          %v3589 = vadd.f32 %v935, %v3588
          %3590 = vmatmul.f32.gmra.mxu0 %v973
          %v3591 = vpop.f32.mrf.mxu0
          %v3592 = vadd.f32 %v940, %v3591
          %3593 = vmatmul.f32.gmra.mxu0 %v976
          %v3594 = vpop.f32.mrf.mxu0
          %v3595 = vadd.f32 %v945, %v3594
          %3596 = vmatmul.f32.gmra.mxu0 %v979
          %v3597 = vpop.f32.mrf.mxu0
          %v3598 = vadd.f32 %v950, %v3597
          %3599 = vmatmul.f32.gmra.mxu0 %v982
          %v3600 = vpop.f32.mrf.mxu0
          %v3601 = vadd.f32 %v955, %v3600
          %3602 = vmatmul.f32.gmra.mxu0 %v985
          %v3603 = vpop.f32.mrf.mxu0
          %v3604 = vadd.f32 %v960, %v3603
          %3605 = vdwg.mxu0
          %3614 = vrot.lane.b32.xlu0 %v3583, 127
          %v3615 = vpop.permute.xlu0 %3614
          %3616 = vrot.lane.b32.xlu0 %v3586, 127
          %v3617 = vpop.permute.xlu0 %3616
          %3618 = vrot.lane.b32.xlu0 %v3589, 127
          %v3619 = vpop.permute.xlu0 %3618
          %3620 = vrot.lane.b32.xlu0 %v3592, 127
          %v3621 = vpop.permute.xlu0 %3620
          %3622 = vrot.lane.b32.xlu0 %v3595, 127
          %v3623 = vpop.permute.xlu0 %3622
          %3624 = vrot.lane.b32.xlu0 %v3598, 127
          %v3625 = vpop.permute.xlu0 %3624
          %3626 = vrot.lane.b32.xlu0 %v3601, 127
          %v3627 = vpop.permute.xlu0 %3626
          %3628 = vrot.lane.b32.xlu0 %v3604, 127
          %v3629 = vpop.permute.xlu0 %3628
          %3638 = vrot.lane.b32.xlu0 %v3583, 126
          %v3639 = vpop.permute.xlu0 %3638
          %3640 = vrot.lane.b32.xlu0 %v3586, 126
          %v3641 = vpop.permute.xlu0 %3640
          %3642 = vrot.lane.b32.xlu0 %v3589, 126
          %v3643 = vpop.permute.xlu0 %3642
          %3644 = vrot.lane.b32.xlu0 %v3592, 126
          %v3645 = vpop.permute.xlu0 %3644
          %3646 = vrot.lane.b32.xlu0 %v3595, 126
          %v3647 = vpop.permute.xlu0 %3646
          %3648 = vrot.lane.b32.xlu0 %v3598, 126
          %v3649 = vpop.permute.xlu0 %3648
          %3650 = vrot.lane.b32.xlu0 %v3601, 126
          %v3651 = vpop.permute.xlu0 %3650
          %3652 = vrot.lane.b32.xlu0 %v3604, 126
          %v3653 = vpop.permute.xlu0 %3652
          %3662 = vmatpush.msra.mxu0 %v3629
          %3663 = vmatpush.msra.mxu0 %v3627
          %3664 = vmatpush.msra.mxu0 %v3625
          %3665 = vmatpush.msra.mxu0 %v3623
          %3666 = vmatpush.msra.mxu0 %v3621
          %3667 = vmatpush.msra.mxu0 %v3619
          %3668 = vmatpush.msra.mxu0 %v3617
          %3669 = vmatpush.msra.mxu0 %v3615
          %3670 = vmatpush.msra.mxu0 %v3604
          %3671 = vmatpush.msra.mxu0 %v3601
          %3672 = vmatpush.msra.mxu0 %v3598
          %3673 = vmatpush.msra.mxu0 %v3595
          %3674 = vmatpush.msra.mxu0 %v3592
          %3675 = vmatpush.msra.mxu0 %v3589
          %3676 = vmatpush.msra.mxu0 %v3586
          %3677 = vmatpush.msra.mxu0 %v3583
          %3678 = vmatmul.f32.gmra.mxu0 %v714
          %v3679 = vpop.f32.mrf.mxu0
          %v3680 = vadd.f32 %v1087, %v3679
          %3681 = vmatmul.f32.gmra.mxu0 %v716
          %v3682 = vpop.f32.mrf.mxu0
          %v3683 = vadd.f32 %v1092, %v3682
          %3684 = vmatmul.f32.gmra.mxu0 %v718
          %v3685 = vpop.f32.mrf.mxu0
          %v3686 = vadd.f32 %v1097, %v3685
          %3687 = vmatmul.f32.gmra.mxu0 %v720
          %v3688 = vpop.f32.mrf.mxu0
          %v3689 = vadd.f32 %v1102, %v3688
          %3690 = vmatmul.f32.gmra.mxu0 %v722
          %v3691 = vpop.f32.mrf.mxu0
          %v3692 = vadd.f32 %v1107, %v3691
          %3693 = vmatmul.f32.gmra.mxu0 %v724
          %v3694 = vpop.f32.mrf.mxu0
          %v3695 = vadd.f32 %v1112, %v3694
          %3696 = vmatmul.f32.gmra.mxu0 %v726
          %v3697 = vpop.f32.mrf.mxu0
          %v3698 = vadd.f32 %v1117, %v3697
          %3699 = vmatmul.f32.gmra.mxu0 %v728
          %v3700 = vpop.f32.mrf.mxu0
          %v3701 = vadd.f32 %v1122, %v3700
          %3702 = vmatmul.f32.gmra.mxu0 %v730
          %v3703 = vpop.f32.mrf.mxu0
          %v3704 = vadd.f32 %v1127, %v3703
          %3705 = vmatmul.f32.gmra.mxu0 %v732
          %v3706 = vpop.f32.mrf.mxu0
          %v3707 = vadd.f32 %v1132, %v3706
          %3708 = vmatmul.f32.gmra.mxu0 %v734
          %v3709 = vpop.f32.mrf.mxu0
          %v3710 = vadd.f32 %v1137, %v3709
          %3711 = vmatmul.f32.gmra.mxu0 %v736
          %v3712 = vpop.f32.mrf.mxu0
          %v3713 = vadd.f32 %v1142, %v3712
          %3714 = vmatmul.f32.gmra.mxu0 %v738
          %v3715 = vpop.f32.mrf.mxu0
          %v3716 = vadd.f32 %v1147, %v3715
          %3717 = vmatmul.f32.gmra.mxu0 %v740
          %v3718 = vpop.f32.mrf.mxu0
          %v3719 = vadd.f32 %v1152, %v3718
          %3720 = vmatmul.f32.gmra.mxu0 %v742
          %v3721 = vpop.f32.mrf.mxu0
          %v3722 = vadd.f32 %v1157, %v3721
          %3723 = vmatmul.f32.gmra.mxu0 %v744
          %v3724 = vpop.f32.mrf.mxu0
          %v3725 = vadd.f32 %v1162, %v3724
          %3726 = vdwg.mxu0
          %3727 = vmatpush.msra.mxu0 0.0
          %3728 = vmatpush.msra.mxu0 0.0
          %3729 = vmatpush.msra.mxu0 0.0
          %3730 = vmatpush.msra.mxu0 0.0
          %3731 = vmatpush.msra.mxu0 0.0
          %3732 = vmatpush.msra.mxu0 0.0
          %3733 = vmatpush.msra.mxu0 0.0
          %3734 = vmatpush.msra.mxu0 0.0
          %3735 = vmatpush.msra.mxu0 %v3653
          %3736 = vmatpush.msra.mxu0 %v3651
          %3737 = vmatpush.msra.mxu0 %v3649
          %3738 = vmatpush.msra.mxu0 %v3647
          %3739 = vmatpush.msra.mxu0 %v3645
          %3740 = vmatpush.msra.mxu0 %v3643
          %3741 = vmatpush.msra.mxu0 %v3641
          %3742 = vmatpush.msra.mxu0 %v3639
          %3743 = vmatmul.f32.gmra.mxu0 %v1166
          %v3744 = vpop.f32.mrf.mxu0
          %v3745 = vadd.f32 %v3680, %v3744
          %3746 = vmatmul.f32.gmra.mxu0 %v1169
          %v3747 = vpop.f32.mrf.mxu0
          %v3748 = vadd.f32 %v3683, %v3747
          %3749 = vmatmul.f32.gmra.mxu0 %v1172
          %v3750 = vpop.f32.mrf.mxu0
          %v3751 = vadd.f32 %v3686, %v3750
          %3752 = vmatmul.f32.gmra.mxu0 %v1175
          %v3753 = vpop.f32.mrf.mxu0
          %v3754 = vadd.f32 %v3689, %v3753
          %3755 = vmatmul.f32.gmra.mxu0 %v1178
          %v3756 = vpop.f32.mrf.mxu0
          %v3757 = vadd.f32 %v3692, %v3756
          %3758 = vmatmul.f32.gmra.mxu0 %v1181
          %v3759 = vpop.f32.mrf.mxu0
          %v3760 = vadd.f32 %v3695, %v3759
          %3761 = vmatmul.f32.gmra.mxu0 %v1184
          %v3762 = vpop.f32.mrf.mxu0
          %v3763 = vadd.f32 %v3698, %v3762
          %3764 = vmatmul.f32.gmra.mxu0 %v1187
          %v3765 = vpop.f32.mrf.mxu0
          %v3766 = vadd.f32 %v3701, %v3765
          %3767 = vmatmul.f32.gmra.mxu0 %v1190
          %v3768 = vpop.f32.mrf.mxu0
          %v3769 = vadd.f32 %v3704, %v3768
          %3770 = vmatmul.f32.gmra.mxu0 %v1193
          %v3771 = vpop.f32.mrf.mxu0
          %v3772 = vadd.f32 %v3707, %v3771
          %3773 = vmatmul.f32.gmra.mxu0 %v1196
          %v3774 = vpop.f32.mrf.mxu0
          %v3775 = vadd.f32 %v3710, %v3774
          %3776 = vmatmul.f32.gmra.mxu0 %v1199
          %v3777 = vpop.f32.mrf.mxu0
          %v3778 = vadd.f32 %v3713, %v3777
          %3779 = vmatmul.f32.gmra.mxu0 %v1202
          %v3780 = vpop.f32.mrf.mxu0
          %v3781 = vadd.f32 %v3716, %v3780
          %3782 = vmatmul.f32.gmra.mxu0 %v1205
          %v3783 = vpop.f32.mrf.mxu0
          %v3784 = vadd.f32 %v3719, %v3783
          %3785 = vmatmul.f32.gmra.mxu0 %v1208
          %v3786 = vpop.f32.mrf.mxu0
          %v3787 = vadd.f32 %v3722, %v3786
          %3788 = vmatmul.f32.gmra.mxu0 %v1211
          %v3789 = vpop.f32.mrf.mxu0
          %v3790 = vadd.f32 %v3725, %v3789
          %3791 = vdwg.mxu0
          %3808 = vrot.lane.b32.xlu0 %v3745, 127
          %v3809 = vpop.permute.xlu0 %3808
          %3810 = vrot.lane.b32.xlu0 %v3748, 127
          %v3811 = vpop.permute.xlu0 %3810
          %3812 = vrot.lane.b32.xlu0 %v3751, 127
          %v3813 = vpop.permute.xlu0 %3812
          %3814 = vrot.lane.b32.xlu0 %v3754, 127
          %v3815 = vpop.permute.xlu0 %3814
          %3816 = vrot.lane.b32.xlu0 %v3757, 127
          %v3817 = vpop.permute.xlu0 %3816
          %3818 = vrot.lane.b32.xlu0 %v3760, 127
          %v3819 = vpop.permute.xlu0 %3818
          %3820 = vrot.lane.b32.xlu0 %v3763, 127
          %v3821 = vpop.permute.xlu0 %3820
          %3822 = vrot.lane.b32.xlu0 %v3766, 127
          %v3823 = vpop.permute.xlu0 %3822
          %3824 = vrot.lane.b32.xlu0 %v3769, 127
          %v3825 = vpop.permute.xlu0 %3824
          %3826 = vrot.lane.b32.xlu0 %v3772, 127
          %v3827 = vpop.permute.xlu0 %3826
          %3828 = vrot.lane.b32.xlu0 %v3775, 127
          %v3829 = vpop.permute.xlu0 %3828
          %3830 = vrot.lane.b32.xlu0 %v3778, 127
          %v3831 = vpop.permute.xlu0 %3830
          %3832 = vrot.lane.b32.xlu0 %v3781, 127
          %v3833 = vpop.permute.xlu0 %3832
          %3834 = vrot.lane.b32.xlu0 %v3784, 127
          %v3835 = vpop.permute.xlu0 %3834
          %3836 = vrot.lane.b32.xlu0 %v3787, 127
          %v3837 = vpop.permute.xlu0 %3836
          %3838 = vrot.lane.b32.xlu0 %v3790, 127
          %v3839 = vpop.permute.xlu0 %3838
          %v3856 = vmax.f32 %v3745, %v3809
          %v3857 = vmax.f32 %v3748, %v3811
          %v3858 = vmax.f32 %v3751, %v3813
          %v3859 = vmax.f32 %v3754, %v3815
          %v3860 = vmax.f32 %v3757, %v3817
          %v3861 = vmax.f32 %v3760, %v3819
          %v3862 = vmax.f32 %v3763, %v3821
          %v3863 = vmax.f32 %v3766, %v3823
          %v3864 = vmax.f32 %v3769, %v3825
          %v3865 = vmax.f32 %v3772, %v3827
          %v3866 = vmax.f32 %v3775, %v3829
          %v3867 = vmax.f32 %v3778, %v3831
          %v3868 = vmax.f32 %v3781, %v3833
          %v3869 = vmax.f32 %v3784, %v3835
          %v3870 = vmax.f32 %v3787, %v3837
          %v3871 = vmax.f32 %v3790, %v3839
          %3872 = vrot.lane.b32.xlu0 %v3745, 126
          %v3873 = vpop.permute.xlu0 %3872
          %3874 = vrot.lane.b32.xlu0 %v3748, 126
          %v3875 = vpop.permute.xlu0 %3874
          %3876 = vrot.lane.b32.xlu0 %v3751, 126
          %v3877 = vpop.permute.xlu0 %3876
          %3878 = vrot.lane.b32.xlu0 %v3754, 126
          %v3879 = vpop.permute.xlu0 %3878
          %3880 = vrot.lane.b32.xlu0 %v3757, 126
          %v3881 = vpop.permute.xlu0 %3880
          %3882 = vrot.lane.b32.xlu0 %v3760, 126
          %v3883 = vpop.permute.xlu0 %3882
          %3884 = vrot.lane.b32.xlu0 %v3763, 126
          %v3885 = vpop.permute.xlu0 %3884
          %3886 = vrot.lane.b32.xlu0 %v3766, 126
          %v3887 = vpop.permute.xlu0 %3886
          %3888 = vrot.lane.b32.xlu0 %v3769, 126
          %v3889 = vpop.permute.xlu0 %3888
          %3890 = vrot.lane.b32.xlu0 %v3772, 126
          %v3891 = vpop.permute.xlu0 %3890
          %3892 = vrot.lane.b32.xlu0 %v3775, 126
          %v3893 = vpop.permute.xlu0 %3892
          %3894 = vrot.lane.b32.xlu0 %v3778, 126
          %v3895 = vpop.permute.xlu0 %3894
          %3896 = vrot.lane.b32.xlu0 %v3781, 126
          %v3897 = vpop.permute.xlu0 %3896
          %3898 = vrot.lane.b32.xlu0 %v3784, 126
          %v3899 = vpop.permute.xlu0 %3898
          %3900 = vrot.lane.b32.xlu0 %v3787, 126
          %v3901 = vpop.permute.xlu0 %3900
          %3902 = vrot.lane.b32.xlu0 %v3790, 126
          %v3903 = vpop.permute.xlu0 %3902
          %v3920 = vmax.f32 %v3856, %v3873
          %v3921 = vmax.f32 %v3857, %v3875
          %v3922 = vmax.f32 %v3858, %v3877
          %v3923 = vmax.f32 %v3859, %v3879
          %v3924 = vmax.f32 %v3860, %v3881
          %v3925 = vmax.f32 %v3861, %v3883
          %v3926 = vmax.f32 %v3862, %v3885
          %v3927 = vmax.f32 %v3863, %v3887
          %v3928 = vmax.f32 %v3864, %v3889
          %v3929 = vmax.f32 %v3865, %v3891
          %v3930 = vmax.f32 %v3866, %v3893
          %v3931 = vmax.f32 %v3867, %v3895
          %v3932 = vmax.f32 %v3868, %v3897
          %v3933 = vmax.f32 %v3869, %v3899
          %v3934 = vmax.f32 %v3870, %v3901
          %v3935 = vmax.f32 %v3871, %v3903
          %v3937 = vsel %vm1487, %v3920, 0
          %v3940 = vsel %vm1487, %v3921, 0
          %v3943 = vsel %vm1487, %v3922, 0
          %v3946 = vsel %vm1487, %v3923, 0
          %v3949 = vsel %vm1487, %v3924, 0
          %v3952 = vsel %vm1487, %v3925, 0
          %v3955 = vsel %vm1487, %v3926, 0
          %v3958 = vsel %vm1487, %v3927, 0
          %v3961 = vsel %vm1487, %v3928, 0
          %v3964 = vsel %vm1487, %v3929, 0
          %v3967 = vsel %vm1487, %v3930, 0
          %v3970 = vsel %vm1487, %v3931, 0
          %v3973 = vsel %vm1487, %v3932, 0
          %v3976 = vsel %vm1487, %v3933, 0
          %v3979 = vsel %vm1487, %v3934, 0
          %v3982 = vsel %vm1487, %v3935, 0
          %3984 = vmatpush.msra.mxu0 0.0
          %3985 = vmatpush.msra.mxu0 0.0
          %3986 = vmatpush.msra.mxu0 0.0
          %3987 = vmatpush.msra.mxu0 %v689
          %3988 = vmatpush.msra.mxu0 %v688
          %3989 = vmatpush.msra.mxu0 %v687
          %3990 = vmatpush.msra.mxu0 %v686
          %3991 = vmatpush.msra.mxu0 %v685
          %3992 = vmatpush.msra.mxu0 %v684
          %3993 = vmatpush.msra.mxu0 %v683
          %3994 = vmatpush.msra.mxu0 %v682
          %3995 = vmatpush.msra.mxu0 %v681
          %3996 = vmatpush.msra.mxu0 %v680
          %3997 = vmatpush.msra.mxu0 %v679
          %3998 = vmatpush.msra.mxu0 %v678
          %3999 = vmatpush.msra.mxu0 %v677
          %4000 = vmatmul.f32.gmra.mxu0 %v3937
          %v4001 = vpop.f32.mrf.mxu0
          %v4002 = vadd.f32 0.0, %v4001
          %4003 = vmatmul.f32.gmra.mxu0 %v3940
          %v4004 = vpop.f32.mrf.mxu0
          %v4005 = vadd.f32 0.0, %v4004
          %4006 = vmatmul.f32.gmra.mxu0 %v3943
          %v4007 = vpop.f32.mrf.mxu0
          %v4008 = vadd.f32 0.0, %v4007
          %4009 = vmatmul.f32.gmra.mxu0 %v3946
          %v4010 = vpop.f32.mrf.mxu0
          %v4011 = vadd.f32 0.0, %v4010
          %4012 = vmatmul.f32.gmra.mxu0 %v3949
          %v4013 = vpop.f32.mrf.mxu0
          %v4014 = vadd.f32 0.0, %v4013
          %4015 = vmatmul.f32.gmra.mxu0 %v3952
          %v4016 = vpop.f32.mrf.mxu0
          %v4017 = vadd.f32 0.0, %v4016
          %4018 = vmatmul.f32.gmra.mxu0 %v3955
          %v4019 = vpop.f32.mrf.mxu0
          %v4020 = vadd.f32 0.0, %v4019
          %4021 = vmatmul.f32.gmra.mxu0 %v3958
          %v4022 = vpop.f32.mrf.mxu0
          %v4023 = vadd.f32 0.0, %v4022
          %4024 = vmatmul.f32.gmra.mxu0 %v3961
          %v4025 = vpop.f32.mrf.mxu0
          %v4026 = vadd.f32 0.0, %v4025
          %4027 = vmatmul.f32.gmra.mxu0 %v3964
          %v4028 = vpop.f32.mrf.mxu0
          %v4029 = vadd.f32 0.0, %v4028
          %4030 = vmatmul.f32.gmra.mxu0 %v3967
          %v4031 = vpop.f32.mrf.mxu0
          %v4032 = vadd.f32 0.0, %v4031
          %4033 = vmatmul.f32.gmra.mxu0 %v3970
          %v4034 = vpop.f32.mrf.mxu0
          %v4035 = vadd.f32 0.0, %v4034
          %4036 = vmatmul.f32.gmra.mxu0 %v3973
          %v4037 = vpop.f32.mrf.mxu0
          %v4038 = vadd.f32 0.0, %v4037
          %4039 = vmatmul.f32.gmra.mxu0 %v3976
          %v4040 = vpop.f32.mrf.mxu0
          %v4041 = vadd.f32 0.0, %v4040
          %4042 = vmatmul.f32.gmra.mxu0 %v3979
          %v4043 = vpop.f32.mrf.mxu0
          %v4044 = vadd.f32 0.0, %v4043
          %4045 = vmatmul.f32.gmra.mxu0 %v3982
          %v4046 = vpop.f32.mrf.mxu0
          %v4047 = vadd.f32 0.0, %v4046
          %4048 = vdwg.mxu0
          %4049 = vxpose.xlu0.b32.start [1/16] %v4002, 128
          %4050 = vxpose.xlu0.b32.cont [2/16] %v4005, 128
          %4051 = vxpose.xlu0.b32.cont [3/16] %v4008, 128
          %4052 = vxpose.xlu0.b32.cont [4/16] %v4011, 128
          %4053 = vxpose.xlu0.b32.cont [5/16] %v4014, 128
          %4054 = vxpose.xlu0.b32.cont [6/16] %v4017, 128
          %4055 = vxpose.xlu0.b32.cont [7/16] %v4020, 128
          %4056 = vxpose.xlu0.b32.cont [8/16] %v4023, 128
          %4057 = vxpose.xlu0.b32.cont [9/16] %v4026, 128
          %4058 = vxpose.xlu0.b32.cont [10/16] %v4029, 128
          %4059 = vxpose.xlu0.b32.cont [11/16] %v4032, 128
          %4060 = vxpose.xlu0.b32.cont [12/16] %v4035, 128
          %4061 = vxpose.xlu0.b32.cont [13/16] %v4038, 128
          %4062 = vxpose.xlu0.b32.cont [14/16] %v4041, 128
          %4063 = vxpose.xlu0.b32.cont [15/16] %v4044, 128
          %4064 = vxpose.xlu0.b32.end [16/16] %v4047, 128
          %v4065 = vpop.trf.xlu0
          %v4066 = vpop.trf.xlu0
          %v4067 = vpop.trf.xlu0
          %v4068 = vpop.trf.xlu0
          %v4069 = vpop.trf.xlu0
          %v4070 = vpop.trf.xlu0
          %v4071 = vpop.trf.xlu0
          %v4072 = vpop.trf.xlu0
          %v4073 = vpop.trf.xlu0
          %v4074 = vpop.trf.xlu0
          %v4075 = vpop.trf.xlu0
          %v4076 = vpop.trf.xlu0
          %v4077 = vpop.trf.xlu0
          %v4078 = vpop.trf.xlu0
          %v4079 = vpop.trf.xlu0
          %v4080 = vpop.trf.xlu0
          %4081 = vst [vmem:[#allocation2 + $0xd0] sm:$0xff] %v4065
          %4082 = vst [vmem:[#allocation2 + $0xd8] sm:$0xff] %v4066
          %4083 = vst [vmem:[#allocation2 + $0xe0] sm:$0xff] %v4067
          %4084 = vst [vmem:[#allocation2 + $0xe8] sm:$0xff] %v4068
          %4085 = vst [vmem:[#allocation2 + $0xf0] sm:$0xff] %v4069
          %4086 = vst [vmem:[#allocation2 + $0xf8] sm:$0xff] %v4070
          %4087 = vst [vmem:[#allocation2 + $0x100] sm:$0xf] %v4071
          %s4088 = scalar_lea.vmem [#allocation4], 5
          %v4089 = vld [vmem:[%s4088] sm:$0x1]
          %v4091 = vperm.slane %v4089, 0
          %v4093 = vmul.f32 %v766, %v4091
          %v4094 = vmul.f32 %v771, %v4091
          %v4095 = vmul.f32 %v776, %v4091
          %v4096 = vmul.f32 %v781, %v4091
          %v4097 = vmul.f32 %v792, %v4091
          %v4098 = vmul.f32 %v796, %v4091
          %v4099 = vmul.f32 %v800, %v4091
          %v4100 = vmul.f32 %v804, %v4091
          %4105 = vrot.lane.b32.xlu0 %v4097, 127
          %v4106 = vpop.permute.xlu0 %4105
          %4107 = vrot.lane.b32.xlu0 %v4098, 127
          %v4108 = vpop.permute.xlu0 %4107
          %4109 = vrot.lane.b32.xlu0 %v4099, 127
          %v4110 = vpop.permute.xlu0 %4109
          %4111 = vrot.lane.b32.xlu0 %v4100, 127
          %v4112 = vpop.permute.xlu0 %4111
          %v4117 = vadd.f32 %v4093, %v4106
          %v4118 = vadd.f32 %v4094, %v4108
          %v4119 = vadd.f32 %v4095, %v4110
          %v4120 = vadd.f32 %v4096, %v4112
          %v4121 = vmul.f32 %v832, %v4091
          %v4122 = vmul.f32 %v836, %v4091
          %v4123 = vmul.f32 %v840, %v4091
          %v4124 = vmul.f32 %v844, %v4091
          %4129 = vrot.lane.b32.xlu0 %v4121, 126
          %v4130 = vpop.permute.xlu0 %4129
          %4131 = vrot.lane.b32.xlu0 %v4122, 126
          %v4132 = vpop.permute.xlu0 %4131
          %4133 = vrot.lane.b32.xlu0 %v4123, 126
          %v4134 = vpop.permute.xlu0 %4133
          %4135 = vrot.lane.b32.xlu0 %v4124, 126
          %v4136 = vpop.permute.xlu0 %4135
          %v4141 = vadd.f32 %v4117, %v4130
          %v4142 = vadd.f32 %v4118, %v4132
          %v4143 = vadd.f32 %v4119, %v4134
          %v4144 = vadd.f32 %v4120, %v4136
          %v4145 = vadd.f32 %v4141, %v873
          %v4146 = vadd.f32 %v4142, %v878
          %v4147 = vadd.f32 %v4143, %v883
          %v4148 = vadd.f32 %v4144, %v888
          %4153 = vrot.lane.b32.xlu0 %v4145, 127
          %v4154 = vpop.permute.xlu0 %4153
          %4155 = vrot.lane.b32.xlu0 %v4146, 127
          %v4156 = vpop.permute.xlu0 %4155
          %4157 = vrot.lane.b32.xlu0 %v4147, 127
          %v4158 = vpop.permute.xlu0 %4157
          %4159 = vrot.lane.b32.xlu0 %v4148, 127
          %v4160 = vpop.permute.xlu0 %4159
          %4165 = vrot.lane.b32.xlu0 %v4145, 126
          %v4166 = vpop.permute.xlu0 %4165
          %4167 = vrot.lane.b32.xlu0 %v4146, 126
          %v4168 = vpop.permute.xlu0 %4167
          %4169 = vrot.lane.b32.xlu0 %v4147, 126
          %v4170 = vpop.permute.xlu0 %4169
          %4171 = vrot.lane.b32.xlu0 %v4148, 126
          %v4172 = vpop.permute.xlu0 %4171
          %4177 = vmatpush.msra.mxu0 0.0
          %4178 = vmatpush.msra.mxu0 0.0
          %4179 = vmatpush.msra.mxu0 0.0
          %4180 = vmatpush.msra.mxu0 0.0
          %4181 = vmatpush.msra.mxu0 %v4172
          %4182 = vmatpush.msra.mxu0 %v4170
          %4183 = vmatpush.msra.mxu0 %v4168
          %4184 = vmatpush.msra.mxu0 %v4166
          %4185 = vmatpush.msra.mxu0 %v4160
          %4186 = vmatpush.msra.mxu0 %v4158
          %4187 = vmatpush.msra.mxu0 %v4156
          %4188 = vmatpush.msra.mxu0 %v4154
          %4189 = vmatpush.msra.mxu0 %v4148
          %4190 = vmatpush.msra.mxu0 %v4147
          %4191 = vmatpush.msra.mxu0 %v4146
          %4192 = vmatpush.msra.mxu0 %v4145
          %4193 = vmatmul.f32.gmra.mxu0 %v964
          %v4194 = vpop.f32.mrf.mxu0
          %v4195 = vadd.f32 %v925, %v4194
          %4196 = vmatmul.f32.gmra.mxu0 %v967
          %v4197 = vpop.f32.mrf.mxu0
          %v4198 = vadd.f32 %v930, %v4197
          %4199 = vmatmul.f32.gmra.mxu0 %v970
          %v4200 = vpop.f32.mrf.mxu0
          %v4201 = vadd.f32 %v935, %v4200
          %4202 = vmatmul.f32.gmra.mxu0 %v973
          %v4203 = vpop.f32.mrf.mxu0
          %v4204 = vadd.f32 %v940, %v4203
          %4205 = vmatmul.f32.gmra.mxu0 %v976
          %v4206 = vpop.f32.mrf.mxu0
          %v4207 = vadd.f32 %v945, %v4206
          %4208 = vmatmul.f32.gmra.mxu0 %v979
          %v4209 = vpop.f32.mrf.mxu0
          %v4210 = vadd.f32 %v950, %v4209
          %4211 = vmatmul.f32.gmra.mxu0 %v982
          %v4212 = vpop.f32.mrf.mxu0
          %v4213 = vadd.f32 %v955, %v4212
          %4214 = vmatmul.f32.gmra.mxu0 %v985
          %v4215 = vpop.f32.mrf.mxu0
          %v4216 = vadd.f32 %v960, %v4215
          %4217 = vdwg.mxu0
          %4226 = vrot.lane.b32.xlu0 %v4195, 127
          %v4227 = vpop.permute.xlu0 %4226
          %4228 = vrot.lane.b32.xlu0 %v4198, 127
          %v4229 = vpop.permute.xlu0 %4228
          %4230 = vrot.lane.b32.xlu0 %v4201, 127
          %v4231 = vpop.permute.xlu0 %4230
          %4232 = vrot.lane.b32.xlu0 %v4204, 127
          %v4233 = vpop.permute.xlu0 %4232
          %4234 = vrot.lane.b32.xlu0 %v4207, 127
          %v4235 = vpop.permute.xlu0 %4234
          %4236 = vrot.lane.b32.xlu0 %v4210, 127
          %v4237 = vpop.permute.xlu0 %4236
          %4238 = vrot.lane.b32.xlu0 %v4213, 127
          %v4239 = vpop.permute.xlu0 %4238
          %4240 = vrot.lane.b32.xlu0 %v4216, 127
          %v4241 = vpop.permute.xlu0 %4240
          %4250 = vrot.lane.b32.xlu0 %v4195, 126
          %v4251 = vpop.permute.xlu0 %4250
          %4252 = vrot.lane.b32.xlu0 %v4198, 126
          %v4253 = vpop.permute.xlu0 %4252
          %4254 = vrot.lane.b32.xlu0 %v4201, 126
          %v4255 = vpop.permute.xlu0 %4254
          %4256 = vrot.lane.b32.xlu0 %v4204, 126
          %v4257 = vpop.permute.xlu0 %4256
          %4258 = vrot.lane.b32.xlu0 %v4207, 126
          %v4259 = vpop.permute.xlu0 %4258
          %4260 = vrot.lane.b32.xlu0 %v4210, 126
          %v4261 = vpop.permute.xlu0 %4260
          %4262 = vrot.lane.b32.xlu0 %v4213, 126
          %v4263 = vpop.permute.xlu0 %4262
          %4264 = vrot.lane.b32.xlu0 %v4216, 126
          %v4265 = vpop.permute.xlu0 %4264
          %4274 = vmatpush.msra.mxu0 %v4241
          %4275 = vmatpush.msra.mxu0 %v4239
          %4276 = vmatpush.msra.mxu0 %v4237
          %4277 = vmatpush.msra.mxu0 %v4235
          %4278 = vmatpush.msra.mxu0 %v4233
          %4279 = vmatpush.msra.mxu0 %v4231
          %4280 = vmatpush.msra.mxu0 %v4229
          %4281 = vmatpush.msra.mxu0 %v4227
          %4282 = vmatpush.msra.mxu0 %v4216
          %4283 = vmatpush.msra.mxu0 %v4213
          %4284 = vmatpush.msra.mxu0 %v4210
          %4285 = vmatpush.msra.mxu0 %v4207
          %4286 = vmatpush.msra.mxu0 %v4204
          %4287 = vmatpush.msra.mxu0 %v4201
          %4288 = vmatpush.msra.mxu0 %v4198
          %4289 = vmatpush.msra.mxu0 %v4195
          %4290 = vmatmul.f32.gmra.mxu0 %v714
          %v4291 = vpop.f32.mrf.mxu0
          %v4292 = vadd.f32 %v1087, %v4291
          %4293 = vmatmul.f32.gmra.mxu0 %v716
          %v4294 = vpop.f32.mrf.mxu0
          %v4295 = vadd.f32 %v1092, %v4294
          %4296 = vmatmul.f32.gmra.mxu0 %v718
          %v4297 = vpop.f32.mrf.mxu0
          %v4298 = vadd.f32 %v1097, %v4297
          %4299 = vmatmul.f32.gmra.mxu0 %v720
          %v4300 = vpop.f32.mrf.mxu0
          %v4301 = vadd.f32 %v1102, %v4300
          %4302 = vmatmul.f32.gmra.mxu0 %v722
          %v4303 = vpop.f32.mrf.mxu0
          %v4304 = vadd.f32 %v1107, %v4303
          %4305 = vmatmul.f32.gmra.mxu0 %v724
          %v4306 = vpop.f32.mrf.mxu0
          %v4307 = vadd.f32 %v1112, %v4306
          %4308 = vmatmul.f32.gmra.mxu0 %v726
          %v4309 = vpop.f32.mrf.mxu0
          %v4310 = vadd.f32 %v1117, %v4309
          %4311 = vmatmul.f32.gmra.mxu0 %v728
          %v4312 = vpop.f32.mrf.mxu0
          %v4313 = vadd.f32 %v1122, %v4312
          %4314 = vmatmul.f32.gmra.mxu0 %v730
          %v4315 = vpop.f32.mrf.mxu0
          %v4316 = vadd.f32 %v1127, %v4315
          %4317 = vmatmul.f32.gmra.mxu0 %v732
          %v4318 = vpop.f32.mrf.mxu0
          %v4319 = vadd.f32 %v1132, %v4318
          %4320 = vmatmul.f32.gmra.mxu0 %v734
          %v4321 = vpop.f32.mrf.mxu0
          %v4322 = vadd.f32 %v1137, %v4321
          %4323 = vmatmul.f32.gmra.mxu0 %v736
          %v4324 = vpop.f32.mrf.mxu0
          %v4325 = vadd.f32 %v1142, %v4324
          %4326 = vmatmul.f32.gmra.mxu0 %v738
          %v4327 = vpop.f32.mrf.mxu0
          %v4328 = vadd.f32 %v1147, %v4327
          %4329 = vmatmul.f32.gmra.mxu0 %v740
          %v4330 = vpop.f32.mrf.mxu0
          %v4331 = vadd.f32 %v1152, %v4330
          %4332 = vmatmul.f32.gmra.mxu0 %v742
          %v4333 = vpop.f32.mrf.mxu0
          %v4334 = vadd.f32 %v1157, %v4333
          %4335 = vmatmul.f32.gmra.mxu0 %v744
          %v4336 = vpop.f32.mrf.mxu0
          %v4337 = vadd.f32 %v1162, %v4336
          %4338 = vdwg.mxu0
          %4339 = vmatpush.msra.mxu0 0.0
          %4340 = vmatpush.msra.mxu0 0.0
          %4341 = vmatpush.msra.mxu0 0.0
          %4342 = vmatpush.msra.mxu0 0.0
          %4343 = vmatpush.msra.mxu0 0.0
          %4344 = vmatpush.msra.mxu0 0.0
          %4345 = vmatpush.msra.mxu0 0.0
          %4346 = vmatpush.msra.mxu0 0.0
          %4347 = vmatpush.msra.mxu0 %v4265
          %4348 = vmatpush.msra.mxu0 %v4263
          %4349 = vmatpush.msra.mxu0 %v4261
          %4350 = vmatpush.msra.mxu0 %v4259
          %4351 = vmatpush.msra.mxu0 %v4257
          %4352 = vmatpush.msra.mxu0 %v4255
          %4353 = vmatpush.msra.mxu0 %v4253
          %4354 = vmatpush.msra.mxu0 %v4251
          %4355 = vmatmul.f32.gmra.mxu0 %v1166
          %v4356 = vpop.f32.mrf.mxu0
          %v4357 = vadd.f32 %v4292, %v4356
          %4358 = vmatmul.f32.gmra.mxu0 %v1169
          %v4359 = vpop.f32.mrf.mxu0
          %v4360 = vadd.f32 %v4295, %v4359
          %4361 = vmatmul.f32.gmra.mxu0 %v1172
          %v4362 = vpop.f32.mrf.mxu0
          %v4363 = vadd.f32 %v4298, %v4362
          %4364 = vmatmul.f32.gmra.mxu0 %v1175
          %v4365 = vpop.f32.mrf.mxu0
          %v4366 = vadd.f32 %v4301, %v4365
          %4367 = vmatmul.f32.gmra.mxu0 %v1178
          %v4368 = vpop.f32.mrf.mxu0
          %v4369 = vadd.f32 %v4304, %v4368
          %4370 = vmatmul.f32.gmra.mxu0 %v1181
          %v4371 = vpop.f32.mrf.mxu0
          %v4372 = vadd.f32 %v4307, %v4371
          %4373 = vmatmul.f32.gmra.mxu0 %v1184
          %v4374 = vpop.f32.mrf.mxu0
          %v4375 = vadd.f32 %v4310, %v4374
          %4376 = vmatmul.f32.gmra.mxu0 %v1187
          %v4377 = vpop.f32.mrf.mxu0
          %v4378 = vadd.f32 %v4313, %v4377
          %4379 = vmatmul.f32.gmra.mxu0 %v1190
          %v4380 = vpop.f32.mrf.mxu0
          %v4381 = vadd.f32 %v4316, %v4380
          %4382 = vmatmul.f32.gmra.mxu0 %v1193
          %v4383 = vpop.f32.mrf.mxu0
          %v4384 = vadd.f32 %v4319, %v4383
          %4385 = vmatmul.f32.gmra.mxu0 %v1196
          %v4386 = vpop.f32.mrf.mxu0
          %v4387 = vadd.f32 %v4322, %v4386
          %4388 = vmatmul.f32.gmra.mxu0 %v1199
          %v4389 = vpop.f32.mrf.mxu0
          %v4390 = vadd.f32 %v4325, %v4389
          %4391 = vmatmul.f32.gmra.mxu0 %v1202
          %v4392 = vpop.f32.mrf.mxu0
          %v4393 = vadd.f32 %v4328, %v4392
          %4394 = vmatmul.f32.gmra.mxu0 %v1205
          %v4395 = vpop.f32.mrf.mxu0
          %v4396 = vadd.f32 %v4331, %v4395
          %4397 = vmatmul.f32.gmra.mxu0 %v1208
          %v4398 = vpop.f32.mrf.mxu0
          %v4399 = vadd.f32 %v4334, %v4398
          %4400 = vmatmul.f32.gmra.mxu0 %v1211
          %v4401 = vpop.f32.mrf.mxu0
          %v4402 = vadd.f32 %v4337, %v4401
          %4403 = vdwg.mxu0
          %4420 = vrot.lane.b32.xlu0 %v4357, 127
          %v4421 = vpop.permute.xlu0 %4420
          %4422 = vrot.lane.b32.xlu0 %v4360, 127
          %v4423 = vpop.permute.xlu0 %4422
          %4424 = vrot.lane.b32.xlu0 %v4363, 127
          %v4425 = vpop.permute.xlu0 %4424
          %4426 = vrot.lane.b32.xlu0 %v4366, 127
          %v4427 = vpop.permute.xlu0 %4426
          %4428 = vrot.lane.b32.xlu0 %v4369, 127
          %v4429 = vpop.permute.xlu0 %4428
          %4430 = vrot.lane.b32.xlu0 %v4372, 127
          %v4431 = vpop.permute.xlu0 %4430
          %4432 = vrot.lane.b32.xlu0 %v4375, 127
          %v4433 = vpop.permute.xlu0 %4432
          %4434 = vrot.lane.b32.xlu0 %v4378, 127
          %v4435 = vpop.permute.xlu0 %4434
          %4436 = vrot.lane.b32.xlu0 %v4381, 127
          %v4437 = vpop.permute.xlu0 %4436
          %4438 = vrot.lane.b32.xlu0 %v4384, 127
          %v4439 = vpop.permute.xlu0 %4438
          %4440 = vrot.lane.b32.xlu0 %v4387, 127
          %v4441 = vpop.permute.xlu0 %4440
          %4442 = vrot.lane.b32.xlu0 %v4390, 127
          %v4443 = vpop.permute.xlu0 %4442
          %4444 = vrot.lane.b32.xlu0 %v4393, 127
          %v4445 = vpop.permute.xlu0 %4444
          %4446 = vrot.lane.b32.xlu0 %v4396, 127
          %v4447 = vpop.permute.xlu0 %4446
          %4448 = vrot.lane.b32.xlu0 %v4399, 127
          %v4449 = vpop.permute.xlu0 %4448
          %4450 = vrot.lane.b32.xlu0 %v4402, 127
          %v4451 = vpop.permute.xlu0 %4450
          %v4468 = vmax.f32 %v4357, %v4421
          %v4469 = vmax.f32 %v4360, %v4423
          %v4470 = vmax.f32 %v4363, %v4425
          %v4471 = vmax.f32 %v4366, %v4427
          %v4472 = vmax.f32 %v4369, %v4429
          %v4473 = vmax.f32 %v4372, %v4431
          %v4474 = vmax.f32 %v4375, %v4433
          %v4475 = vmax.f32 %v4378, %v4435
          %v4476 = vmax.f32 %v4381, %v4437
          %v4477 = vmax.f32 %v4384, %v4439
          %v4478 = vmax.f32 %v4387, %v4441
          %v4479 = vmax.f32 %v4390, %v4443
          %v4480 = vmax.f32 %v4393, %v4445
          %v4481 = vmax.f32 %v4396, %v4447
          %v4482 = vmax.f32 %v4399, %v4449
          %v4483 = vmax.f32 %v4402, %v4451
          %4484 = vrot.lane.b32.xlu0 %v4357, 126
          %v4485 = vpop.permute.xlu0 %4484
          %4486 = vrot.lane.b32.xlu0 %v4360, 126
          %v4487 = vpop.permute.xlu0 %4486
          %4488 = vrot.lane.b32.xlu0 %v4363, 126
          %v4489 = vpop.permute.xlu0 %4488
          %4490 = vrot.lane.b32.xlu0 %v4366, 126
          %v4491 = vpop.permute.xlu0 %4490
          %4492 = vrot.lane.b32.xlu0 %v4369, 126
          %v4493 = vpop.permute.xlu0 %4492
          %4494 = vrot.lane.b32.xlu0 %v4372, 126
          %v4495 = vpop.permute.xlu0 %4494
          %4496 = vrot.lane.b32.xlu0 %v4375, 126
          %v4497 = vpop.permute.xlu0 %4496
          %4498 = vrot.lane.b32.xlu0 %v4378, 126
          %v4499 = vpop.permute.xlu0 %4498
          %4500 = vrot.lane.b32.xlu0 %v4381, 126
          %v4501 = vpop.permute.xlu0 %4500
          %4502 = vrot.lane.b32.xlu0 %v4384, 126
          %v4503 = vpop.permute.xlu0 %4502
          %4504 = vrot.lane.b32.xlu0 %v4387, 126
          %v4505 = vpop.permute.xlu0 %4504
          %4506 = vrot.lane.b32.xlu0 %v4390, 126
          %v4507 = vpop.permute.xlu0 %4506
          %4508 = vrot.lane.b32.xlu0 %v4393, 126
          %v4509 = vpop.permute.xlu0 %4508
          %4510 = vrot.lane.b32.xlu0 %v4396, 126
          %v4511 = vpop.permute.xlu0 %4510
          %4512 = vrot.lane.b32.xlu0 %v4399, 126
          %v4513 = vpop.permute.xlu0 %4512
          %4514 = vrot.lane.b32.xlu0 %v4402, 126
          %v4515 = vpop.permute.xlu0 %4514
          %v4532 = vmax.f32 %v4468, %v4485
          %v4533 = vmax.f32 %v4469, %v4487
          %v4534 = vmax.f32 %v4470, %v4489
          %v4535 = vmax.f32 %v4471, %v4491
          %v4536 = vmax.f32 %v4472, %v4493
          %v4537 = vmax.f32 %v4473, %v4495
          %v4538 = vmax.f32 %v4474, %v4497
          %v4539 = vmax.f32 %v4475, %v4499
          %v4540 = vmax.f32 %v4476, %v4501
          %v4541 = vmax.f32 %v4477, %v4503
          %v4542 = vmax.f32 %v4478, %v4505
          %v4543 = vmax.f32 %v4479, %v4507
          %v4544 = vmax.f32 %v4480, %v4509
          %v4545 = vmax.f32 %v4481, %v4511
          %v4546 = vmax.f32 %v4482, %v4513
          %v4547 = vmax.f32 %v4483, %v4515
          %v4549 = vsel %vm1487, %v4532, 0
          %v4552 = vsel %vm1487, %v4533, 0
          %v4555 = vsel %vm1487, %v4534, 0
          %v4558 = vsel %vm1487, %v4535, 0
          %v4561 = vsel %vm1487, %v4536, 0
          %v4564 = vsel %vm1487, %v4537, 0
          %v4567 = vsel %vm1487, %v4538, 0
          %v4570 = vsel %vm1487, %v4539, 0
          %v4573 = vsel %vm1487, %v4540, 0
          %v4576 = vsel %vm1487, %v4541, 0
          %v4579 = vsel %vm1487, %v4542, 0
          %v4582 = vsel %vm1487, %v4543, 0
          %v4585 = vsel %vm1487, %v4544, 0
          %v4588 = vsel %vm1487, %v4545, 0
          %v4591 = vsel %vm1487, %v4546, 0
          %v4594 = vsel %vm1487, %v4547, 0
          %4596 = vmatpush.msra.mxu0 0.0
          %4597 = vmatpush.msra.mxu0 0.0
          %4598 = vmatpush.msra.mxu0 0.0
          %4599 = vmatpush.msra.mxu0 %v689
          %4600 = vmatpush.msra.mxu0 %v688
          %4601 = vmatpush.msra.mxu0 %v687
          %4602 = vmatpush.msra.mxu0 %v686
          %4603 = vmatpush.msra.mxu0 %v685
          %4604 = vmatpush.msra.mxu0 %v684
          %4605 = vmatpush.msra.mxu0 %v683
          %4606 = vmatpush.msra.mxu0 %v682
          %4607 = vmatpush.msra.mxu0 %v681
          %4608 = vmatpush.msra.mxu0 %v680
          %4609 = vmatpush.msra.mxu0 %v679
          %4610 = vmatpush.msra.mxu0 %v678
          %4611 = vmatpush.msra.mxu0 %v677
          %4612 = vmatmul.f32.gmra.mxu0 %v4549
          %v4613 = vpop.f32.mrf.mxu0
          %v4614 = vadd.f32 0.0, %v4613
          %4615 = vmatmul.f32.gmra.mxu0 %v4552
          %v4616 = vpop.f32.mrf.mxu0
          %v4617 = vadd.f32 0.0, %v4616
          %4618 = vmatmul.f32.gmra.mxu0 %v4555
          %v4619 = vpop.f32.mrf.mxu0
          %v4620 = vadd.f32 0.0, %v4619
          %4621 = vmatmul.f32.gmra.mxu0 %v4558
          %v4622 = vpop.f32.mrf.mxu0
          %v4623 = vadd.f32 0.0, %v4622
          %4624 = vmatmul.f32.gmra.mxu0 %v4561
          %v4625 = vpop.f32.mrf.mxu0
          %v4626 = vadd.f32 0.0, %v4625
          %4627 = vmatmul.f32.gmra.mxu0 %v4564
          %v4628 = vpop.f32.mrf.mxu0
          %v4629 = vadd.f32 0.0, %v4628
          %4630 = vmatmul.f32.gmra.mxu0 %v4567
          %v4631 = vpop.f32.mrf.mxu0
          %v4632 = vadd.f32 0.0, %v4631
          %4633 = vmatmul.f32.gmra.mxu0 %v4570
          %v4634 = vpop.f32.mrf.mxu0
          %v4635 = vadd.f32 0.0, %v4634
          %4636 = vmatmul.f32.gmra.mxu0 %v4573
          %v4637 = vpop.f32.mrf.mxu0
          %v4638 = vadd.f32 0.0, %v4637
          %4639 = vmatmul.f32.gmra.mxu0 %v4576
          %v4640 = vpop.f32.mrf.mxu0
          %v4641 = vadd.f32 0.0, %v4640
          %4642 = vmatmul.f32.gmra.mxu0 %v4579
          %v4643 = vpop.f32.mrf.mxu0
          %v4644 = vadd.f32 0.0, %v4643
          %4645 = vmatmul.f32.gmra.mxu0 %v4582
          %v4646 = vpop.f32.mrf.mxu0
          %v4647 = vadd.f32 0.0, %v4646
          %4648 = vmatmul.f32.gmra.mxu0 %v4585
          %v4649 = vpop.f32.mrf.mxu0
          %v4650 = vadd.f32 0.0, %v4649
          %4651 = vmatmul.f32.gmra.mxu0 %v4588
          %v4652 = vpop.f32.mrf.mxu0
          %v4653 = vadd.f32 0.0, %v4652
          %4654 = vmatmul.f32.gmra.mxu0 %v4591
          %v4655 = vpop.f32.mrf.mxu0
          %v4656 = vadd.f32 0.0, %v4655
          %4657 = vmatmul.f32.gmra.mxu0 %v4594
          %v4658 = vpop.f32.mrf.mxu0
          %v4659 = vadd.f32 0.0, %v4658
          %4660 = vdwg.mxu0
          %4661 = vxpose.xlu0.b32.start [1/16] %v4614, 128
          %4662 = vxpose.xlu0.b32.cont [2/16] %v4617, 128
          %4663 = vxpose.xlu0.b32.cont [3/16] %v4620, 128
          %4664 = vxpose.xlu0.b32.cont [4/16] %v4623, 128
          %4665 = vxpose.xlu0.b32.cont [5/16] %v4626, 128
          %4666 = vxpose.xlu0.b32.cont [6/16] %v4629, 128
          %4667 = vxpose.xlu0.b32.cont [7/16] %v4632, 128
          %4668 = vxpose.xlu0.b32.cont [8/16] %v4635, 128
          %4669 = vxpose.xlu0.b32.cont [9/16] %v4638, 128
          %4670 = vxpose.xlu0.b32.cont [10/16] %v4641, 128
          %4671 = vxpose.xlu0.b32.cont [11/16] %v4644, 128
          %4672 = vxpose.xlu0.b32.cont [12/16] %v4647, 128
          %4673 = vxpose.xlu0.b32.cont [13/16] %v4650, 128
          %4674 = vxpose.xlu0.b32.cont [14/16] %v4653, 128
          %4675 = vxpose.xlu0.b32.cont [15/16] %v4656, 128
          %4676 = vxpose.xlu0.b32.end [16/16] %v4659, 128
          %v4677 = vpop.trf.xlu0
          %v4678 = vpop.trf.xlu0
          %v4679 = vpop.trf.xlu0
          %v4680 = vpop.trf.xlu0
          %v4681 = vpop.trf.xlu0
          %v4682 = vpop.trf.xlu0
          %v4683 = vpop.trf.xlu0
          %v4684 = vpop.trf.xlu0
          %v4685 = vpop.trf.xlu0
          %v4686 = vpop.trf.xlu0
          %v4687 = vpop.trf.xlu0
          %v4688 = vpop.trf.xlu0
          %v4689 = vpop.trf.xlu0
          %v4690 = vpop.trf.xlu0
          %v4691 = vpop.trf.xlu0
          %v4692 = vpop.trf.xlu0
          %4693 = vst [vmem:[#allocation2 + $0x104] sm:$0xff] %v4677
          %4694 = vst [vmem:[#allocation2 + $0x10c] sm:$0xff] %v4678
          %4695 = vst [vmem:[#allocation2 + $0x114] sm:$0xff] %v4679
          %4696 = vst [vmem:[#allocation2 + $0x11c] sm:$0xff] %v4680
          %4697 = vst [vmem:[#allocation2 + $0x124] sm:$0xff] %v4681
          %4698 = vst [vmem:[#allocation2 + $0x12c] sm:$0xff] %v4682
          %4699 = vst [vmem:[#allocation2 + $0x134] sm:$0xf] %v4683
          %s4700 = scalar_lea.vmem [#allocation4], 6
          %v4701 = vld [vmem:[%s4700] sm:$0x1]
          %v4703 = vperm.slane %v4701, 0
          %v4705 = vmul.f32 %v766, %v4703
          %v4706 = vmul.f32 %v771, %v4703
          %v4707 = vmul.f32 %v776, %v4703
          %v4708 = vmul.f32 %v781, %v4703
          %v4709 = vmul.f32 %v792, %v4703
          %v4710 = vmul.f32 %v796, %v4703
          %v4711 = vmul.f32 %v800, %v4703
          %v4712 = vmul.f32 %v804, %v4703
          %4717 = vrot.lane.b32.xlu0 %v4709, 127
          %v4718 = vpop.permute.xlu0 %4717
          %4719 = vrot.lane.b32.xlu0 %v4710, 127
          %v4720 = vpop.permute.xlu0 %4719
          %4721 = vrot.lane.b32.xlu0 %v4711, 127
          %v4722 = vpop.permute.xlu0 %4721
          %4723 = vrot.lane.b32.xlu0 %v4712, 127
          %v4724 = vpop.permute.xlu0 %4723
          %v4729 = vadd.f32 %v4705, %v4718
          %v4730 = vadd.f32 %v4706, %v4720
          %v4731 = vadd.f32 %v4707, %v4722
          %v4732 = vadd.f32 %v4708, %v4724
          %v4733 = vmul.f32 %v832, %v4703
          %v4734 = vmul.f32 %v836, %v4703
          %v4735 = vmul.f32 %v840, %v4703
          %v4736 = vmul.f32 %v844, %v4703
          %4741 = vrot.lane.b32.xlu0 %v4733, 126
          %v4742 = vpop.permute.xlu0 %4741
          %4743 = vrot.lane.b32.xlu0 %v4734, 126
          %v4744 = vpop.permute.xlu0 %4743
          %4745 = vrot.lane.b32.xlu0 %v4735, 126
          %v4746 = vpop.permute.xlu0 %4745
          %4747 = vrot.lane.b32.xlu0 %v4736, 126
          %v4748 = vpop.permute.xlu0 %4747
          %v4753 = vadd.f32 %v4729, %v4742
          %v4754 = vadd.f32 %v4730, %v4744
          %v4755 = vadd.f32 %v4731, %v4746
          %v4756 = vadd.f32 %v4732, %v4748
          %v4757 = vadd.f32 %v4753, %v873
          %v4758 = vadd.f32 %v4754, %v878
          %v4759 = vadd.f32 %v4755, %v883
          %v4760 = vadd.f32 %v4756, %v888
          %4765 = vrot.lane.b32.xlu0 %v4757, 127
          %v4766 = vpop.permute.xlu0 %4765
          %4767 = vrot.lane.b32.xlu0 %v4758, 127
          %v4768 = vpop.permute.xlu0 %4767
          %4769 = vrot.lane.b32.xlu0 %v4759, 127
          %v4770 = vpop.permute.xlu0 %4769
          %4771 = vrot.lane.b32.xlu0 %v4760, 127
          %v4772 = vpop.permute.xlu0 %4771
          %4777 = vrot.lane.b32.xlu0 %v4757, 126
          %v4778 = vpop.permute.xlu0 %4777
          %4779 = vrot.lane.b32.xlu0 %v4758, 126
          %v4780 = vpop.permute.xlu0 %4779
          %4781 = vrot.lane.b32.xlu0 %v4759, 126
          %v4782 = vpop.permute.xlu0 %4781
          %4783 = vrot.lane.b32.xlu0 %v4760, 126
          %v4784 = vpop.permute.xlu0 %4783
          %4789 = vmatpush.msra.mxu0 0.0
          %4790 = vmatpush.msra.mxu0 0.0
          %4791 = vmatpush.msra.mxu0 0.0
          %4792 = vmatpush.msra.mxu0 0.0
          %4793 = vmatpush.msra.mxu0 %v4784
          %4794 = vmatpush.msra.mxu0 %v4782
          %4795 = vmatpush.msra.mxu0 %v4780
          %4796 = vmatpush.msra.mxu0 %v4778
          %4797 = vmatpush.msra.mxu0 %v4772
          %4798 = vmatpush.msra.mxu0 %v4770
          %4799 = vmatpush.msra.mxu0 %v4768
          %4800 = vmatpush.msra.mxu0 %v4766
          %4801 = vmatpush.msra.mxu0 %v4760
          %4802 = vmatpush.msra.mxu0 %v4759
          %4803 = vmatpush.msra.mxu0 %v4758
          %4804 = vmatpush.msra.mxu0 %v4757
          %4805 = vmatmul.f32.gmra.mxu0 %v964
          %v4806 = vpop.f32.mrf.mxu0
          %v4807 = vadd.f32 %v925, %v4806
          %4808 = vmatmul.f32.gmra.mxu0 %v967
          %v4809 = vpop.f32.mrf.mxu0
          %v4810 = vadd.f32 %v930, %v4809
          %4811 = vmatmul.f32.gmra.mxu0 %v970
          %v4812 = vpop.f32.mrf.mxu0
          %v4813 = vadd.f32 %v935, %v4812
          %4814 = vmatmul.f32.gmra.mxu0 %v973
          %v4815 = vpop.f32.mrf.mxu0
          %v4816 = vadd.f32 %v940, %v4815
          %4817 = vmatmul.f32.gmra.mxu0 %v976
          %v4818 = vpop.f32.mrf.mxu0
          %v4819 = vadd.f32 %v945, %v4818
          %4820 = vmatmul.f32.gmra.mxu0 %v979
          %v4821 = vpop.f32.mrf.mxu0
          %v4822 = vadd.f32 %v950, %v4821
          %4823 = vmatmul.f32.gmra.mxu0 %v982
          %v4824 = vpop.f32.mrf.mxu0
          %v4825 = vadd.f32 %v955, %v4824
          %4826 = vmatmul.f32.gmra.mxu0 %v985
          %v4827 = vpop.f32.mrf.mxu0
          %v4828 = vadd.f32 %v960, %v4827
          %4829 = vdwg.mxu0
          %4838 = vrot.lane.b32.xlu0 %v4807, 127
          %v4839 = vpop.permute.xlu0 %4838
          %4840 = vrot.lane.b32.xlu0 %v4810, 127
          %v4841 = vpop.permute.xlu0 %4840
          %4842 = vrot.lane.b32.xlu0 %v4813, 127
          %v4843 = vpop.permute.xlu0 %4842
          %4844 = vrot.lane.b32.xlu0 %v4816, 127
          %v4845 = vpop.permute.xlu0 %4844
          %4846 = vrot.lane.b32.xlu0 %v4819, 127
          %v4847 = vpop.permute.xlu0 %4846
          %4848 = vrot.lane.b32.xlu0 %v4822, 127
          %v4849 = vpop.permute.xlu0 %4848
          %4850 = vrot.lane.b32.xlu0 %v4825, 127
          %v4851 = vpop.permute.xlu0 %4850
          %4852 = vrot.lane.b32.xlu0 %v4828, 127
          %v4853 = vpop.permute.xlu0 %4852
          %4862 = vrot.lane.b32.xlu0 %v4807, 126
          %v4863 = vpop.permute.xlu0 %4862
          %4864 = vrot.lane.b32.xlu0 %v4810, 126
          %v4865 = vpop.permute.xlu0 %4864
          %4866 = vrot.lane.b32.xlu0 %v4813, 126
          %v4867 = vpop.permute.xlu0 %4866
          %4868 = vrot.lane.b32.xlu0 %v4816, 126
          %v4869 = vpop.permute.xlu0 %4868
          %4870 = vrot.lane.b32.xlu0 %v4819, 126
          %v4871 = vpop.permute.xlu0 %4870
          %4872 = vrot.lane.b32.xlu0 %v4822, 126
          %v4873 = vpop.permute.xlu0 %4872
          %4874 = vrot.lane.b32.xlu0 %v4825, 126
          %v4875 = vpop.permute.xlu0 %4874
          %4876 = vrot.lane.b32.xlu0 %v4828, 126
          %v4877 = vpop.permute.xlu0 %4876
          %4886 = vmatpush.msra.mxu0 %v4853
          %4887 = vmatpush.msra.mxu0 %v4851
          %4888 = vmatpush.msra.mxu0 %v4849
          %4889 = vmatpush.msra.mxu0 %v4847
          %4890 = vmatpush.msra.mxu0 %v4845
          %4891 = vmatpush.msra.mxu0 %v4843
          %4892 = vmatpush.msra.mxu0 %v4841
          %4893 = vmatpush.msra.mxu0 %v4839
          %4894 = vmatpush.msra.mxu0 %v4828
          %4895 = vmatpush.msra.mxu0 %v4825
          %4896 = vmatpush.msra.mxu0 %v4822
          %4897 = vmatpush.msra.mxu0 %v4819
          %4898 = vmatpush.msra.mxu0 %v4816
          %4899 = vmatpush.msra.mxu0 %v4813
          %4900 = vmatpush.msra.mxu0 %v4810
          %4901 = vmatpush.msra.mxu0 %v4807
          %4902 = vmatmul.f32.gmra.mxu0 %v714
          %v4903 = vpop.f32.mrf.mxu0
          %v4904 = vadd.f32 %v1087, %v4903
          %4905 = vmatmul.f32.gmra.mxu0 %v716
          %v4906 = vpop.f32.mrf.mxu0
          %v4907 = vadd.f32 %v1092, %v4906
          %4908 = vmatmul.f32.gmra.mxu0 %v718
          %v4909 = vpop.f32.mrf.mxu0
          %v4910 = vadd.f32 %v1097, %v4909
          %4911 = vmatmul.f32.gmra.mxu0 %v720
          %v4912 = vpop.f32.mrf.mxu0
          %v4913 = vadd.f32 %v1102, %v4912
          %4914 = vmatmul.f32.gmra.mxu0 %v722
          %v4915 = vpop.f32.mrf.mxu0
          %v4916 = vadd.f32 %v1107, %v4915
          %4917 = vmatmul.f32.gmra.mxu0 %v724
          %v4918 = vpop.f32.mrf.mxu0
          %v4919 = vadd.f32 %v1112, %v4918
          %4920 = vmatmul.f32.gmra.mxu0 %v726
          %v4921 = vpop.f32.mrf.mxu0
          %v4922 = vadd.f32 %v1117, %v4921
          %4923 = vmatmul.f32.gmra.mxu0 %v728
          %v4924 = vpop.f32.mrf.mxu0
          %v4925 = vadd.f32 %v1122, %v4924
          %4926 = vmatmul.f32.gmra.mxu0 %v730
          %v4927 = vpop.f32.mrf.mxu0
          %v4928 = vadd.f32 %v1127, %v4927
          %4929 = vmatmul.f32.gmra.mxu0 %v732
          %v4930 = vpop.f32.mrf.mxu0
          %v4931 = vadd.f32 %v1132, %v4930
          %4932 = vmatmul.f32.gmra.mxu0 %v734
          %v4933 = vpop.f32.mrf.mxu0
          %v4934 = vadd.f32 %v1137, %v4933
          %4935 = vmatmul.f32.gmra.mxu0 %v736
          %v4936 = vpop.f32.mrf.mxu0
          %v4937 = vadd.f32 %v1142, %v4936
          %4938 = vmatmul.f32.gmra.mxu0 %v738
          %v4939 = vpop.f32.mrf.mxu0
          %v4940 = vadd.f32 %v1147, %v4939
          %4941 = vmatmul.f32.gmra.mxu0 %v740
          %v4942 = vpop.f32.mrf.mxu0
          %v4943 = vadd.f32 %v1152, %v4942
          %4944 = vmatmul.f32.gmra.mxu0 %v742
          %v4945 = vpop.f32.mrf.mxu0
          %v4946 = vadd.f32 %v1157, %v4945
          %4947 = vmatmul.f32.gmra.mxu0 %v744
          %v4948 = vpop.f32.mrf.mxu0
          %v4949 = vadd.f32 %v1162, %v4948
          %4950 = vdwg.mxu0
          %4951 = vmatpush.msra.mxu0 0.0
          %4952 = vmatpush.msra.mxu0 0.0
          %4953 = vmatpush.msra.mxu0 0.0
          %4954 = vmatpush.msra.mxu0 0.0
          %4955 = vmatpush.msra.mxu0 0.0
          %4956 = vmatpush.msra.mxu0 0.0
          %4957 = vmatpush.msra.mxu0 0.0
          %4958 = vmatpush.msra.mxu0 0.0
          %4959 = vmatpush.msra.mxu0 %v4877
          %4960 = vmatpush.msra.mxu0 %v4875
          %4961 = vmatpush.msra.mxu0 %v4873
          %4962 = vmatpush.msra.mxu0 %v4871
          %4963 = vmatpush.msra.mxu0 %v4869
          %4964 = vmatpush.msra.mxu0 %v4867
          %4965 = vmatpush.msra.mxu0 %v4865
          %4966 = vmatpush.msra.mxu0 %v4863
          %4967 = vmatmul.f32.gmra.mxu0 %v1166
          %v4968 = vpop.f32.mrf.mxu0
          %v4969 = vadd.f32 %v4904, %v4968
          %4970 = vmatmul.f32.gmra.mxu0 %v1169
          %v4971 = vpop.f32.mrf.mxu0
          %v4972 = vadd.f32 %v4907, %v4971
          %4973 = vmatmul.f32.gmra.mxu0 %v1172
          %v4974 = vpop.f32.mrf.mxu0
          %v4975 = vadd.f32 %v4910, %v4974
          %4976 = vmatmul.f32.gmra.mxu0 %v1175
          %v4977 = vpop.f32.mrf.mxu0
          %v4978 = vadd.f32 %v4913, %v4977
          %4979 = vmatmul.f32.gmra.mxu0 %v1178
          %v4980 = vpop.f32.mrf.mxu0
          %v4981 = vadd.f32 %v4916, %v4980
          %4982 = vmatmul.f32.gmra.mxu0 %v1181
          %v4983 = vpop.f32.mrf.mxu0
          %v4984 = vadd.f32 %v4919, %v4983
          %4985 = vmatmul.f32.gmra.mxu0 %v1184
          %v4986 = vpop.f32.mrf.mxu0
          %v4987 = vadd.f32 %v4922, %v4986
          %4988 = vmatmul.f32.gmra.mxu0 %v1187
          %v4989 = vpop.f32.mrf.mxu0
          %v4990 = vadd.f32 %v4925, %v4989
          %4991 = vmatmul.f32.gmra.mxu0 %v1190
          %v4992 = vpop.f32.mrf.mxu0
          %v4993 = vadd.f32 %v4928, %v4992
          %4994 = vmatmul.f32.gmra.mxu0 %v1193
          %v4995 = vpop.f32.mrf.mxu0
          %v4996 = vadd.f32 %v4931, %v4995
          %4997 = vmatmul.f32.gmra.mxu0 %v1196
          %v4998 = vpop.f32.mrf.mxu0
          %v4999 = vadd.f32 %v4934, %v4998
          %5000 = vmatmul.f32.gmra.mxu0 %v1199
          %v5001 = vpop.f32.mrf.mxu0
          %v5002 = vadd.f32 %v4937, %v5001
          %5003 = vmatmul.f32.gmra.mxu0 %v1202
          %v5004 = vpop.f32.mrf.mxu0
          %v5005 = vadd.f32 %v4940, %v5004
          %5006 = vmatmul.f32.gmra.mxu0 %v1205
          %v5007 = vpop.f32.mrf.mxu0
          %v5008 = vadd.f32 %v4943, %v5007
          %5009 = vmatmul.f32.gmra.mxu0 %v1208
          %v5010 = vpop.f32.mrf.mxu0
          %v5011 = vadd.f32 %v4946, %v5010
          %5012 = vmatmul.f32.gmra.mxu0 %v1211
          %v5013 = vpop.f32.mrf.mxu0
          %v5014 = vadd.f32 %v4949, %v5013
          %5015 = vdwg.mxu0
          %5032 = vrot.lane.b32.xlu0 %v4969, 127
          %v5033 = vpop.permute.xlu0 %5032
          %5034 = vrot.lane.b32.xlu0 %v4972, 127
          %v5035 = vpop.permute.xlu0 %5034
          %5036 = vrot.lane.b32.xlu0 %v4975, 127
          %v5037 = vpop.permute.xlu0 %5036
          %5038 = vrot.lane.b32.xlu0 %v4978, 127
          %v5039 = vpop.permute.xlu0 %5038
          %5040 = vrot.lane.b32.xlu0 %v4981, 127
          %v5041 = vpop.permute.xlu0 %5040
          %5042 = vrot.lane.b32.xlu0 %v4984, 127
          %v5043 = vpop.permute.xlu0 %5042
          %5044 = vrot.lane.b32.xlu0 %v4987, 127
          %v5045 = vpop.permute.xlu0 %5044
          %5046 = vrot.lane.b32.xlu0 %v4990, 127
          %v5047 = vpop.permute.xlu0 %5046
          %5048 = vrot.lane.b32.xlu0 %v4993, 127
          %v5049 = vpop.permute.xlu0 %5048
          %5050 = vrot.lane.b32.xlu0 %v4996, 127
          %v5051 = vpop.permute.xlu0 %5050
          %5052 = vrot.lane.b32.xlu0 %v4999, 127
          %v5053 = vpop.permute.xlu0 %5052
          %5054 = vrot.lane.b32.xlu0 %v5002, 127
          %v5055 = vpop.permute.xlu0 %5054
          %5056 = vrot.lane.b32.xlu0 %v5005, 127
          %v5057 = vpop.permute.xlu0 %5056
          %5058 = vrot.lane.b32.xlu0 %v5008, 127
          %v5059 = vpop.permute.xlu0 %5058
          %5060 = vrot.lane.b32.xlu0 %v5011, 127
          %v5061 = vpop.permute.xlu0 %5060
          %5062 = vrot.lane.b32.xlu0 %v5014, 127
          %v5063 = vpop.permute.xlu0 %5062
          %v5080 = vmax.f32 %v4969, %v5033
          %v5081 = vmax.f32 %v4972, %v5035
          %v5082 = vmax.f32 %v4975, %v5037
          %v5083 = vmax.f32 %v4978, %v5039
          %v5084 = vmax.f32 %v4981, %v5041
          %v5085 = vmax.f32 %v4984, %v5043
          %v5086 = vmax.f32 %v4987, %v5045
          %v5087 = vmax.f32 %v4990, %v5047
          %v5088 = vmax.f32 %v4993, %v5049
          %v5089 = vmax.f32 %v4996, %v5051
          %v5090 = vmax.f32 %v4999, %v5053
          %v5091 = vmax.f32 %v5002, %v5055
          %v5092 = vmax.f32 %v5005, %v5057
          %v5093 = vmax.f32 %v5008, %v5059
          %v5094 = vmax.f32 %v5011, %v5061
          %v5095 = vmax.f32 %v5014, %v5063
          %5096 = vrot.lane.b32.xlu0 %v4969, 126
          %v5097 = vpop.permute.xlu0 %5096
          %5098 = vrot.lane.b32.xlu0 %v4972, 126
          %v5099 = vpop.permute.xlu0 %5098
          %5100 = vrot.lane.b32.xlu0 %v4975, 126
          %v5101 = vpop.permute.xlu0 %5100
          %5102 = vrot.lane.b32.xlu0 %v4978, 126
          %v5103 = vpop.permute.xlu0 %5102
          %5104 = vrot.lane.b32.xlu0 %v4981, 126
          %v5105 = vpop.permute.xlu0 %5104
          %5106 = vrot.lane.b32.xlu0 %v4984, 126
          %v5107 = vpop.permute.xlu0 %5106
          %5108 = vrot.lane.b32.xlu0 %v4987, 126
          %v5109 = vpop.permute.xlu0 %5108
          %5110 = vrot.lane.b32.xlu0 %v4990, 126
          %v5111 = vpop.permute.xlu0 %5110
          %5112 = vrot.lane.b32.xlu0 %v4993, 126
          %v5113 = vpop.permute.xlu0 %5112
          %5114 = vrot.lane.b32.xlu0 %v4996, 126
          %v5115 = vpop.permute.xlu0 %5114
          %5116 = vrot.lane.b32.xlu0 %v4999, 126
          %v5117 = vpop.permute.xlu0 %5116
          %5118 = vrot.lane.b32.xlu0 %v5002, 126
          %v5119 = vpop.permute.xlu0 %5118
          %5120 = vrot.lane.b32.xlu0 %v5005, 126
          %v5121 = vpop.permute.xlu0 %5120
          %5122 = vrot.lane.b32.xlu0 %v5008, 126
          %v5123 = vpop.permute.xlu0 %5122
          %5124 = vrot.lane.b32.xlu0 %v5011, 126
          %v5125 = vpop.permute.xlu0 %5124
          %5126 = vrot.lane.b32.xlu0 %v5014, 126
          %v5127 = vpop.permute.xlu0 %5126
          %v5144 = vmax.f32 %v5080, %v5097
          %v5145 = vmax.f32 %v5081, %v5099
          %v5146 = vmax.f32 %v5082, %v5101
          %v5147 = vmax.f32 %v5083, %v5103
          %v5148 = vmax.f32 %v5084, %v5105
          %v5149 = vmax.f32 %v5085, %v5107
          %v5150 = vmax.f32 %v5086, %v5109
          %v5151 = vmax.f32 %v5087, %v5111
          %v5152 = vmax.f32 %v5088, %v5113
          %v5153 = vmax.f32 %v5089, %v5115
          %v5154 = vmax.f32 %v5090, %v5117
          %v5155 = vmax.f32 %v5091, %v5119
          %v5156 = vmax.f32 %v5092, %v5121
          %v5157 = vmax.f32 %v5093, %v5123
          %v5158 = vmax.f32 %v5094, %v5125
          %v5159 = vmax.f32 %v5095, %v5127
          %v5161 = vsel %vm1487, %v5144, 0
          %v5164 = vsel %vm1487, %v5145, 0
          %v5167 = vsel %vm1487, %v5146, 0
          %v5170 = vsel %vm1487, %v5147, 0
          %v5173 = vsel %vm1487, %v5148, 0
          %v5176 = vsel %vm1487, %v5149, 0
          %v5179 = vsel %vm1487, %v5150, 0
          %v5182 = vsel %vm1487, %v5151, 0
          %v5185 = vsel %vm1487, %v5152, 0
          %v5188 = vsel %vm1487, %v5153, 0
          %v5191 = vsel %vm1487, %v5154, 0
          %v5194 = vsel %vm1487, %v5155, 0
          %v5197 = vsel %vm1487, %v5156, 0
          %v5200 = vsel %vm1487, %v5157, 0
          %v5203 = vsel %vm1487, %v5158, 0
          %v5206 = vsel %vm1487, %v5159, 0
          %5208 = vmatpush.msra.mxu0 0.0
          %5209 = vmatpush.msra.mxu0 0.0
          %5210 = vmatpush.msra.mxu0 0.0
          %5211 = vmatpush.msra.mxu0 %v689
          %5212 = vmatpush.msra.mxu0 %v688
          %5213 = vmatpush.msra.mxu0 %v687
          %5214 = vmatpush.msra.mxu0 %v686
          %5215 = vmatpush.msra.mxu0 %v685
          %5216 = vmatpush.msra.mxu0 %v684
          %5217 = vmatpush.msra.mxu0 %v683
          %5218 = vmatpush.msra.mxu0 %v682
          %5219 = vmatpush.msra.mxu0 %v681
          %5220 = vmatpush.msra.mxu0 %v680
          %5221 = vmatpush.msra.mxu0 %v679
          %5222 = vmatpush.msra.mxu0 %v678
          %5223 = vmatpush.msra.mxu0 %v677
          %5224 = vmatmul.f32.gmra.mxu0 %v5161
          %v5225 = vpop.f32.mrf.mxu0
          %v5226 = vadd.f32 0.0, %v5225
          %5227 = vmatmul.f32.gmra.mxu0 %v5164
          %v5228 = vpop.f32.mrf.mxu0
          %v5229 = vadd.f32 0.0, %v5228
          %5230 = vmatmul.f32.gmra.mxu0 %v5167
          %v5231 = vpop.f32.mrf.mxu0
          %v5232 = vadd.f32 0.0, %v5231
          %5233 = vmatmul.f32.gmra.mxu0 %v5170
          %v5234 = vpop.f32.mrf.mxu0
          %v5235 = vadd.f32 0.0, %v5234
          %5236 = vmatmul.f32.gmra.mxu0 %v5173
          %v5237 = vpop.f32.mrf.mxu0
          %v5238 = vadd.f32 0.0, %v5237
          %5239 = vmatmul.f32.gmra.mxu0 %v5176
          %v5240 = vpop.f32.mrf.mxu0
          %v5241 = vadd.f32 0.0, %v5240
          %5242 = vmatmul.f32.gmra.mxu0 %v5179
          %v5243 = vpop.f32.mrf.mxu0
          %v5244 = vadd.f32 0.0, %v5243
          %5245 = vmatmul.f32.gmra.mxu0 %v5182
          %v5246 = vpop.f32.mrf.mxu0
          %v5247 = vadd.f32 0.0, %v5246
          %5248 = vmatmul.f32.gmra.mxu0 %v5185
          %v5249 = vpop.f32.mrf.mxu0
          %v5250 = vadd.f32 0.0, %v5249
          %5251 = vmatmul.f32.gmra.mxu0 %v5188
          %v5252 = vpop.f32.mrf.mxu0
          %v5253 = vadd.f32 0.0, %v5252
          %5254 = vmatmul.f32.gmra.mxu0 %v5191
          %v5255 = vpop.f32.mrf.mxu0
          %v5256 = vadd.f32 0.0, %v5255
          %5257 = vmatmul.f32.gmra.mxu0 %v5194
          %v5258 = vpop.f32.mrf.mxu0
          %v5259 = vadd.f32 0.0, %v5258
          %5260 = vmatmul.f32.gmra.mxu0 %v5197
          %v5261 = vpop.f32.mrf.mxu0
          %v5262 = vadd.f32 0.0, %v5261
          %5263 = vmatmul.f32.gmra.mxu0 %v5200
          %v5264 = vpop.f32.mrf.mxu0
          %v5265 = vadd.f32 0.0, %v5264
          %5266 = vmatmul.f32.gmra.mxu0 %v5203
          %v5267 = vpop.f32.mrf.mxu0
          %v5268 = vadd.f32 0.0, %v5267
          %5269 = vmatmul.f32.gmra.mxu0 %v5206
          %v5270 = vpop.f32.mrf.mxu0
          %v5271 = vadd.f32 0.0, %v5270
          %5272 = vdwg.mxu0
          %5273 = vxpose.xlu0.b32.start [1/16] %v5226, 128
          %5274 = vxpose.xlu0.b32.cont [2/16] %v5229, 128
          %5275 = vxpose.xlu0.b32.cont [3/16] %v5232, 128
          %5276 = vxpose.xlu0.b32.cont [4/16] %v5235, 128
          %5277 = vxpose.xlu0.b32.cont [5/16] %v5238, 128
          %5278 = vxpose.xlu0.b32.cont [6/16] %v5241, 128
          %5279 = vxpose.xlu0.b32.cont [7/16] %v5244, 128
          %5280 = vxpose.xlu0.b32.cont [8/16] %v5247, 128
          %5281 = vxpose.xlu0.b32.cont [9/16] %v5250, 128
          %5282 = vxpose.xlu0.b32.cont [10/16] %v5253, 128
          %5283 = vxpose.xlu0.b32.cont [11/16] %v5256, 128
          %5284 = vxpose.xlu0.b32.cont [12/16] %v5259, 128
          %5285 = vxpose.xlu0.b32.cont [13/16] %v5262, 128
          %5286 = vxpose.xlu0.b32.cont [14/16] %v5265, 128
          %5287 = vxpose.xlu0.b32.cont [15/16] %v5268, 128
          %5288 = vxpose.xlu0.b32.end [16/16] %v5271, 128
          %v5289 = vpop.trf.xlu0
          %v5290 = vpop.trf.xlu0
          %v5291 = vpop.trf.xlu0
          %v5292 = vpop.trf.xlu0
          %v5293 = vpop.trf.xlu0
          %v5294 = vpop.trf.xlu0
          %v5295 = vpop.trf.xlu0
          %v5296 = vpop.trf.xlu0
          %v5297 = vpop.trf.xlu0
          %v5298 = vpop.trf.xlu0
          %v5299 = vpop.trf.xlu0
          %v5300 = vpop.trf.xlu0
          %v5301 = vpop.trf.xlu0
          %v5302 = vpop.trf.xlu0
          %v5303 = vpop.trf.xlu0
          %v5304 = vpop.trf.xlu0
          %5305 = vst [vmem:[#allocation2 + $0x138] sm:$0xff] %v5289
          %5306 = vst [vmem:[#allocation2 + $0x140] sm:$0xff] %v5290
          %5307 = vst [vmem:[#allocation2 + $0x148] sm:$0xff] %v5291
          %5308 = vst [vmem:[#allocation2 + $0x150] sm:$0xff] %v5292
          %5309 = vst [vmem:[#allocation2 + $0x158] sm:$0xff] %v5293
          %5310 = vst [vmem:[#allocation2 + $0x160] sm:$0xff] %v5294
          %5311 = vst [vmem:[#allocation2 + $0x168] sm:$0xf] %v5295
          %s5312 = scalar_lea.vmem [#allocation4], 7
          %v5313 = vld [vmem:[%s5312] sm:$0x1]
          %v5315 = vperm.slane %v5313, 0
          %v5317 = vmul.f32 %v766, %v5315
          %v5318 = vmul.f32 %v771, %v5315
          %v5319 = vmul.f32 %v776, %v5315
          %v5320 = vmul.f32 %v781, %v5315
          %v5321 = vmul.f32 %v792, %v5315
          %v5322 = vmul.f32 %v796, %v5315
          %v5323 = vmul.f32 %v800, %v5315
          %v5324 = vmul.f32 %v804, %v5315
          %5329 = vrot.lane.b32.xlu0 %v5321, 127
          %v5330 = vpop.permute.xlu0 %5329
          %5331 = vrot.lane.b32.xlu0 %v5322, 127
          %v5332 = vpop.permute.xlu0 %5331
          %5333 = vrot.lane.b32.xlu0 %v5323, 127
          %v5334 = vpop.permute.xlu0 %5333
          %5335 = vrot.lane.b32.xlu0 %v5324, 127
          %v5336 = vpop.permute.xlu0 %5335
          %v5341 = vadd.f32 %v5317, %v5330
          %v5342 = vadd.f32 %v5318, %v5332
          %v5343 = vadd.f32 %v5319, %v5334
          %v5344 = vadd.f32 %v5320, %v5336
          %v5345 = vmul.f32 %v832, %v5315
          %v5346 = vmul.f32 %v836, %v5315
          %v5347 = vmul.f32 %v840, %v5315
          %v5348 = vmul.f32 %v844, %v5315
          %5353 = vrot.lane.b32.xlu0 %v5345, 126
          %v5354 = vpop.permute.xlu0 %5353
          %5355 = vrot.lane.b32.xlu0 %v5346, 126
          %v5356 = vpop.permute.xlu0 %5355
          %5357 = vrot.lane.b32.xlu0 %v5347, 126
          %v5358 = vpop.permute.xlu0 %5357
          %5359 = vrot.lane.b32.xlu0 %v5348, 126
          %v5360 = vpop.permute.xlu0 %5359
          %v5365 = vadd.f32 %v5341, %v5354
          %v5366 = vadd.f32 %v5342, %v5356
          %v5367 = vadd.f32 %v5343, %v5358
          %v5368 = vadd.f32 %v5344, %v5360
          %v5369 = vadd.f32 %v5365, %v873
          %v5370 = vadd.f32 %v5366, %v878
          %v5371 = vadd.f32 %v5367, %v883
          %v5372 = vadd.f32 %v5368, %v888
          %5377 = vrot.lane.b32.xlu0 %v5369, 127
          %v5378 = vpop.permute.xlu0 %5377
          %5379 = vrot.lane.b32.xlu0 %v5370, 127
          %v5380 = vpop.permute.xlu0 %5379
          %5381 = vrot.lane.b32.xlu0 %v5371, 127
          %v5382 = vpop.permute.xlu0 %5381
          %5383 = vrot.lane.b32.xlu0 %v5372, 127
          %v5384 = vpop.permute.xlu0 %5383
          %5389 = vrot.lane.b32.xlu0 %v5369, 126
          %v5390 = vpop.permute.xlu0 %5389
          %5391 = vrot.lane.b32.xlu0 %v5370, 126
          %v5392 = vpop.permute.xlu0 %5391
          %5393 = vrot.lane.b32.xlu0 %v5371, 126
          %v5394 = vpop.permute.xlu0 %5393
          %5395 = vrot.lane.b32.xlu0 %v5372, 126
          %v5396 = vpop.permute.xlu0 %5395
          %5401 = vmatpush.msra.mxu0 0.0
          %5402 = vmatpush.msra.mxu0 0.0
          %5403 = vmatpush.msra.mxu0 0.0
          %5404 = vmatpush.msra.mxu0 0.0
          %5405 = vmatpush.msra.mxu0 %v5396
          %5406 = vmatpush.msra.mxu0 %v5394
          %5407 = vmatpush.msra.mxu0 %v5392
          %5408 = vmatpush.msra.mxu0 %v5390
          %5409 = vmatpush.msra.mxu0 %v5384
          %5410 = vmatpush.msra.mxu0 %v5382
          %5411 = vmatpush.msra.mxu0 %v5380
          %5412 = vmatpush.msra.mxu0 %v5378
          %5413 = vmatpush.msra.mxu0 %v5372
          %5414 = vmatpush.msra.mxu0 %v5371
          %5415 = vmatpush.msra.mxu0 %v5370
          %5416 = vmatpush.msra.mxu0 %v5369
          %5417 = vmatmul.f32.gmra.mxu0 %v964
          %v5418 = vpop.f32.mrf.mxu0
          %v5419 = vadd.f32 %v925, %v5418
          %5420 = vmatmul.f32.gmra.mxu0 %v967
          %v5421 = vpop.f32.mrf.mxu0
          %v5422 = vadd.f32 %v930, %v5421
          %5423 = vmatmul.f32.gmra.mxu0 %v970
          %v5424 = vpop.f32.mrf.mxu0
          %v5425 = vadd.f32 %v935, %v5424
          %5426 = vmatmul.f32.gmra.mxu0 %v973
          %v5427 = vpop.f32.mrf.mxu0
          %v5428 = vadd.f32 %v940, %v5427
          %5429 = vmatmul.f32.gmra.mxu0 %v976
          %v5430 = vpop.f32.mrf.mxu0
          %v5431 = vadd.f32 %v945, %v5430
          %5432 = vmatmul.f32.gmra.mxu0 %v979
          %v5433 = vpop.f32.mrf.mxu0
          %v5434 = vadd.f32 %v950, %v5433
          %5435 = vmatmul.f32.gmra.mxu0 %v982
          %v5436 = vpop.f32.mrf.mxu0
          %v5437 = vadd.f32 %v955, %v5436
          %5438 = vmatmul.f32.gmra.mxu0 %v985
          %v5439 = vpop.f32.mrf.mxu0
          %v5440 = vadd.f32 %v960, %v5439
          %5441 = vdwg.mxu0
          %5450 = vrot.lane.b32.xlu0 %v5419, 127
          %v5451 = vpop.permute.xlu0 %5450
          %5452 = vrot.lane.b32.xlu0 %v5422, 127
          %v5453 = vpop.permute.xlu0 %5452
          %5454 = vrot.lane.b32.xlu0 %v5425, 127
          %v5455 = vpop.permute.xlu0 %5454
          %5456 = vrot.lane.b32.xlu0 %v5428, 127
          %v5457 = vpop.permute.xlu0 %5456
          %5458 = vrot.lane.b32.xlu0 %v5431, 127
          %v5459 = vpop.permute.xlu0 %5458
          %5460 = vrot.lane.b32.xlu0 %v5434, 127
          %v5461 = vpop.permute.xlu0 %5460
          %5462 = vrot.lane.b32.xlu0 %v5437, 127
          %v5463 = vpop.permute.xlu0 %5462
          %5464 = vrot.lane.b32.xlu0 %v5440, 127
          %v5465 = vpop.permute.xlu0 %5464
          %5474 = vrot.lane.b32.xlu0 %v5419, 126
          %v5475 = vpop.permute.xlu0 %5474
          %5476 = vrot.lane.b32.xlu0 %v5422, 126
          %v5477 = vpop.permute.xlu0 %5476
          %5478 = vrot.lane.b32.xlu0 %v5425, 126
          %v5479 = vpop.permute.xlu0 %5478
          %5480 = vrot.lane.b32.xlu0 %v5428, 126
          %v5481 = vpop.permute.xlu0 %5480
          %5482 = vrot.lane.b32.xlu0 %v5431, 126
          %v5483 = vpop.permute.xlu0 %5482
          %5484 = vrot.lane.b32.xlu0 %v5434, 126
          %v5485 = vpop.permute.xlu0 %5484
          %5486 = vrot.lane.b32.xlu0 %v5437, 126
          %v5487 = vpop.permute.xlu0 %5486
          %5488 = vrot.lane.b32.xlu0 %v5440, 126
          %v5489 = vpop.permute.xlu0 %5488
          %5498 = vmatpush.msra.mxu0 %v5465
          %5499 = vmatpush.msra.mxu0 %v5463
          %5500 = vmatpush.msra.mxu0 %v5461
          %5501 = vmatpush.msra.mxu0 %v5459
          %5502 = vmatpush.msra.mxu0 %v5457
          %5503 = vmatpush.msra.mxu0 %v5455
          %5504 = vmatpush.msra.mxu0 %v5453
          %5505 = vmatpush.msra.mxu0 %v5451
          %5506 = vmatpush.msra.mxu0 %v5440
          %5507 = vmatpush.msra.mxu0 %v5437
          %5508 = vmatpush.msra.mxu0 %v5434
          %5509 = vmatpush.msra.mxu0 %v5431
          %5510 = vmatpush.msra.mxu0 %v5428
          %5511 = vmatpush.msra.mxu0 %v5425
          %5512 = vmatpush.msra.mxu0 %v5422
          %5513 = vmatpush.msra.mxu0 %v5419
          %5514 = vmatmul.f32.gmra.mxu0 %v714
          %v5515 = vpop.f32.mrf.mxu0
          %v5516 = vadd.f32 %v1087, %v5515
          %5517 = vmatmul.f32.gmra.mxu0 %v716
          %v5518 = vpop.f32.mrf.mxu0
          %v5519 = vadd.f32 %v1092, %v5518
          %5520 = vmatmul.f32.gmra.mxu0 %v718
          %v5521 = vpop.f32.mrf.mxu0
          %v5522 = vadd.f32 %v1097, %v5521
          %5523 = vmatmul.f32.gmra.mxu0 %v720
          %v5524 = vpop.f32.mrf.mxu0
          %v5525 = vadd.f32 %v1102, %v5524
          %5526 = vmatmul.f32.gmra.mxu0 %v722
          %v5527 = vpop.f32.mrf.mxu0
          %v5528 = vadd.f32 %v1107, %v5527
          %5529 = vmatmul.f32.gmra.mxu0 %v724
          %v5530 = vpop.f32.mrf.mxu0
          %v5531 = vadd.f32 %v1112, %v5530
          %5532 = vmatmul.f32.gmra.mxu0 %v726
          %v5533 = vpop.f32.mrf.mxu0
          %v5534 = vadd.f32 %v1117, %v5533
          %5535 = vmatmul.f32.gmra.mxu0 %v728
          %v5536 = vpop.f32.mrf.mxu0
          %v5537 = vadd.f32 %v1122, %v5536
          %5538 = vmatmul.f32.gmra.mxu0 %v730
          %v5539 = vpop.f32.mrf.mxu0
          %v5540 = vadd.f32 %v1127, %v5539
          %5541 = vmatmul.f32.gmra.mxu0 %v732
          %v5542 = vpop.f32.mrf.mxu0
          %v5543 = vadd.f32 %v1132, %v5542
          %5544 = vmatmul.f32.gmra.mxu0 %v734
          %v5545 = vpop.f32.mrf.mxu0
          %v5546 = vadd.f32 %v1137, %v5545
          %5547 = vmatmul.f32.gmra.mxu0 %v736
          %v5548 = vpop.f32.mrf.mxu0
          %v5549 = vadd.f32 %v1142, %v5548
          %5550 = vmatmul.f32.gmra.mxu0 %v738
          %v5551 = vpop.f32.mrf.mxu0
          %v5552 = vadd.f32 %v1147, %v5551
          %5553 = vmatmul.f32.gmra.mxu0 %v740
          %v5554 = vpop.f32.mrf.mxu0
          %v5555 = vadd.f32 %v1152, %v5554
          %5556 = vmatmul.f32.gmra.mxu0 %v742
          %v5557 = vpop.f32.mrf.mxu0
          %v5558 = vadd.f32 %v1157, %v5557
          %5559 = vmatmul.f32.gmra.mxu0 %v744
          %v5560 = vpop.f32.mrf.mxu0
          %v5561 = vadd.f32 %v1162, %v5560
          %5562 = vdwg.mxu0
          %5563 = vmatpush.msra.mxu0 0.0
          %5564 = vmatpush.msra.mxu0 0.0
          %5565 = vmatpush.msra.mxu0 0.0
          %5566 = vmatpush.msra.mxu0 0.0
          %5567 = vmatpush.msra.mxu0 0.0
          %5568 = vmatpush.msra.mxu0 0.0
          %5569 = vmatpush.msra.mxu0 0.0
          %5570 = vmatpush.msra.mxu0 0.0
          %5571 = vmatpush.msra.mxu0 %v5489
          %5572 = vmatpush.msra.mxu0 %v5487
          %5573 = vmatpush.msra.mxu0 %v5485
          %5574 = vmatpush.msra.mxu0 %v5483
          %5575 = vmatpush.msra.mxu0 %v5481
          %5576 = vmatpush.msra.mxu0 %v5479
          %5577 = vmatpush.msra.mxu0 %v5477
          %5578 = vmatpush.msra.mxu0 %v5475
          %5579 = vmatmul.f32.gmra.mxu0 %v1166
          %v5580 = vpop.f32.mrf.mxu0
          %v5581 = vadd.f32 %v5516, %v5580
          %5582 = vmatmul.f32.gmra.mxu0 %v1169
          %v5583 = vpop.f32.mrf.mxu0
          %v5584 = vadd.f32 %v5519, %v5583
          %5585 = vmatmul.f32.gmra.mxu0 %v1172
          %v5586 = vpop.f32.mrf.mxu0
          %v5587 = vadd.f32 %v5522, %v5586
          %5588 = vmatmul.f32.gmra.mxu0 %v1175
          %v5589 = vpop.f32.mrf.mxu0
          %v5590 = vadd.f32 %v5525, %v5589
          %5591 = vmatmul.f32.gmra.mxu0 %v1178
          %v5592 = vpop.f32.mrf.mxu0
          %v5593 = vadd.f32 %v5528, %v5592
          %5594 = vmatmul.f32.gmra.mxu0 %v1181
          %v5595 = vpop.f32.mrf.mxu0
          %v5596 = vadd.f32 %v5531, %v5595
          %5597 = vmatmul.f32.gmra.mxu0 %v1184
          %v5598 = vpop.f32.mrf.mxu0
          %v5599 = vadd.f32 %v5534, %v5598
          %5600 = vmatmul.f32.gmra.mxu0 %v1187
          %v5601 = vpop.f32.mrf.mxu0
          %v5602 = vadd.f32 %v5537, %v5601
          %5603 = vmatmul.f32.gmra.mxu0 %v1190
          %v5604 = vpop.f32.mrf.mxu0
          %v5605 = vadd.f32 %v5540, %v5604
          %5606 = vmatmul.f32.gmra.mxu0 %v1193
          %v5607 = vpop.f32.mrf.mxu0
          %v5608 = vadd.f32 %v5543, %v5607
          %5609 = vmatmul.f32.gmra.mxu0 %v1196
          %v5610 = vpop.f32.mrf.mxu0
          %v5611 = vadd.f32 %v5546, %v5610
          %5612 = vmatmul.f32.gmra.mxu0 %v1199
          %v5613 = vpop.f32.mrf.mxu0
          %v5614 = vadd.f32 %v5549, %v5613
          %5615 = vmatmul.f32.gmra.mxu0 %v1202
          %v5616 = vpop.f32.mrf.mxu0
          %v5617 = vadd.f32 %v5552, %v5616
          %5618 = vmatmul.f32.gmra.mxu0 %v1205
          %v5619 = vpop.f32.mrf.mxu0
          %v5620 = vadd.f32 %v5555, %v5619
          %5621 = vmatmul.f32.gmra.mxu0 %v1208
          %v5622 = vpop.f32.mrf.mxu0
          %v5623 = vadd.f32 %v5558, %v5622
          %5624 = vmatmul.f32.gmra.mxu0 %v1211
          %v5625 = vpop.f32.mrf.mxu0
          %v5626 = vadd.f32 %v5561, %v5625
          %5627 = vdwg.mxu0
          %5644 = vrot.lane.b32.xlu0 %v5581, 127
          %v5645 = vpop.permute.xlu0 %5644
          %5646 = vrot.lane.b32.xlu0 %v5584, 127
          %v5647 = vpop.permute.xlu0 %5646
          %5648 = vrot.lane.b32.xlu0 %v5587, 127
          %v5649 = vpop.permute.xlu0 %5648
          %5650 = vrot.lane.b32.xlu0 %v5590, 127
          %v5651 = vpop.permute.xlu0 %5650
          %5652 = vrot.lane.b32.xlu0 %v5593, 127
          %v5653 = vpop.permute.xlu0 %5652
          %5654 = vrot.lane.b32.xlu0 %v5596, 127
          %v5655 = vpop.permute.xlu0 %5654
          %5656 = vrot.lane.b32.xlu0 %v5599, 127
          %v5657 = vpop.permute.xlu0 %5656
          %5658 = vrot.lane.b32.xlu0 %v5602, 127
          %v5659 = vpop.permute.xlu0 %5658
          %5660 = vrot.lane.b32.xlu0 %v5605, 127
          %v5661 = vpop.permute.xlu0 %5660
          %5662 = vrot.lane.b32.xlu0 %v5608, 127
          %v5663 = vpop.permute.xlu0 %5662
          %5664 = vrot.lane.b32.xlu0 %v5611, 127
          %v5665 = vpop.permute.xlu0 %5664
          %5666 = vrot.lane.b32.xlu0 %v5614, 127
          %v5667 = vpop.permute.xlu0 %5666
          %5668 = vrot.lane.b32.xlu0 %v5617, 127
          %v5669 = vpop.permute.xlu0 %5668
          %5670 = vrot.lane.b32.xlu0 %v5620, 127
          %v5671 = vpop.permute.xlu0 %5670
          %5672 = vrot.lane.b32.xlu0 %v5623, 127
          %v5673 = vpop.permute.xlu0 %5672
          %5674 = vrot.lane.b32.xlu0 %v5626, 127
          %v5675 = vpop.permute.xlu0 %5674
          %v5692 = vmax.f32 %v5581, %v5645
          %v5693 = vmax.f32 %v5584, %v5647
          %v5694 = vmax.f32 %v5587, %v5649
          %v5695 = vmax.f32 %v5590, %v5651
          %v5696 = vmax.f32 %v5593, %v5653
          %v5697 = vmax.f32 %v5596, %v5655
          %v5698 = vmax.f32 %v5599, %v5657
          %v5699 = vmax.f32 %v5602, %v5659
          %v5700 = vmax.f32 %v5605, %v5661
          %v5701 = vmax.f32 %v5608, %v5663
          %v5702 = vmax.f32 %v5611, %v5665
          %v5703 = vmax.f32 %v5614, %v5667
          %v5704 = vmax.f32 %v5617, %v5669
          %v5705 = vmax.f32 %v5620, %v5671
          %v5706 = vmax.f32 %v5623, %v5673
          %v5707 = vmax.f32 %v5626, %v5675
          %5708 = vrot.lane.b32.xlu0 %v5581, 126
          %v5709 = vpop.permute.xlu0 %5708
          %5710 = vrot.lane.b32.xlu0 %v5584, 126
          %v5711 = vpop.permute.xlu0 %5710
          %5712 = vrot.lane.b32.xlu0 %v5587, 126
          %v5713 = vpop.permute.xlu0 %5712
          %5714 = vrot.lane.b32.xlu0 %v5590, 126
          %v5715 = vpop.permute.xlu0 %5714
          %5716 = vrot.lane.b32.xlu0 %v5593, 126
          %v5717 = vpop.permute.xlu0 %5716
          %5718 = vrot.lane.b32.xlu0 %v5596, 126
          %v5719 = vpop.permute.xlu0 %5718
          %5720 = vrot.lane.b32.xlu0 %v5599, 126
          %v5721 = vpop.permute.xlu0 %5720
          %5722 = vrot.lane.b32.xlu0 %v5602, 126
          %v5723 = vpop.permute.xlu0 %5722
          %5724 = vrot.lane.b32.xlu0 %v5605, 126
          %v5725 = vpop.permute.xlu0 %5724
          %5726 = vrot.lane.b32.xlu0 %v5608, 126
          %v5727 = vpop.permute.xlu0 %5726
          %5728 = vrot.lane.b32.xlu0 %v5611, 126
          %v5729 = vpop.permute.xlu0 %5728
          %5730 = vrot.lane.b32.xlu0 %v5614, 126
          %v5731 = vpop.permute.xlu0 %5730
          %5732 = vrot.lane.b32.xlu0 %v5617, 126
          %v5733 = vpop.permute.xlu0 %5732
          %5734 = vrot.lane.b32.xlu0 %v5620, 126
          %v5735 = vpop.permute.xlu0 %5734
          %5736 = vrot.lane.b32.xlu0 %v5623, 126
          %v5737 = vpop.permute.xlu0 %5736
          %5738 = vrot.lane.b32.xlu0 %v5626, 126
          %v5739 = vpop.permute.xlu0 %5738
          %v5756 = vmax.f32 %v5692, %v5709
          %v5757 = vmax.f32 %v5693, %v5711
          %v5758 = vmax.f32 %v5694, %v5713
          %v5759 = vmax.f32 %v5695, %v5715
          %v5760 = vmax.f32 %v5696, %v5717
          %v5761 = vmax.f32 %v5697, %v5719
          %v5762 = vmax.f32 %v5698, %v5721
          %v5763 = vmax.f32 %v5699, %v5723
          %v5764 = vmax.f32 %v5700, %v5725
          %v5765 = vmax.f32 %v5701, %v5727
          %v5766 = vmax.f32 %v5702, %v5729
          %v5767 = vmax.f32 %v5703, %v5731
          %v5768 = vmax.f32 %v5704, %v5733
          %v5769 = vmax.f32 %v5705, %v5735
          %v5770 = vmax.f32 %v5706, %v5737
          %v5771 = vmax.f32 %v5707, %v5739
          %v5773 = vsel %vm1487, %v5756, 0
          %v5776 = vsel %vm1487, %v5757, 0
          %v5779 = vsel %vm1487, %v5758, 0
          %v5782 = vsel %vm1487, %v5759, 0
          %v5785 = vsel %vm1487, %v5760, 0
          %v5788 = vsel %vm1487, %v5761, 0
          %v5791 = vsel %vm1487, %v5762, 0
          %v5794 = vsel %vm1487, %v5763, 0
          %v5797 = vsel %vm1487, %v5764, 0
          %v5800 = vsel %vm1487, %v5765, 0
          %v5803 = vsel %vm1487, %v5766, 0
          %v5806 = vsel %vm1487, %v5767, 0
          %v5809 = vsel %vm1487, %v5768, 0
          %v5812 = vsel %vm1487, %v5769, 0
          %v5815 = vsel %vm1487, %v5770, 0
          %v5818 = vsel %vm1487, %v5771, 0
          %5820 = vmatpush.msra.mxu0 0.0
          %5821 = vmatpush.msra.mxu0 0.0
          %5822 = vmatpush.msra.mxu0 0.0
          %5823 = vmatpush.msra.mxu0 %v689
          %5824 = vmatpush.msra.mxu0 %v688
          %5825 = vmatpush.msra.mxu0 %v687
          %5826 = vmatpush.msra.mxu0 %v686
          %5827 = vmatpush.msra.mxu0 %v685
          %5828 = vmatpush.msra.mxu0 %v684
          %5829 = vmatpush.msra.mxu0 %v683
          %5830 = vmatpush.msra.mxu0 %v682
          %5831 = vmatpush.msra.mxu0 %v681
          %5832 = vmatpush.msra.mxu0 %v680
          %5833 = vmatpush.msra.mxu0 %v679
          %5834 = vmatpush.msra.mxu0 %v678
          %5835 = vmatpush.msra.mxu0 %v677
          %5836 = vmatmul.f32.gmra.mxu0 %v5773
          %v5837 = vpop.f32.mrf.mxu0
          %v5838 = vadd.f32 0.0, %v5837
          %5839 = vmatmul.f32.gmra.mxu0 %v5776
          %v5840 = vpop.f32.mrf.mxu0
          %v5841 = vadd.f32 0.0, %v5840
          %5842 = vmatmul.f32.gmra.mxu0 %v5779
          %v5843 = vpop.f32.mrf.mxu0
          %v5844 = vadd.f32 0.0, %v5843
          %5845 = vmatmul.f32.gmra.mxu0 %v5782
          %v5846 = vpop.f32.mrf.mxu0
          %v5847 = vadd.f32 0.0, %v5846
          %5848 = vmatmul.f32.gmra.mxu0 %v5785
          %v5849 = vpop.f32.mrf.mxu0
          %v5850 = vadd.f32 0.0, %v5849
          %5851 = vmatmul.f32.gmra.mxu0 %v5788
          %v5852 = vpop.f32.mrf.mxu0
          %v5853 = vadd.f32 0.0, %v5852
          %5854 = vmatmul.f32.gmra.mxu0 %v5791
          %v5855 = vpop.f32.mrf.mxu0
          %v5856 = vadd.f32 0.0, %v5855
          %5857 = vmatmul.f32.gmra.mxu0 %v5794
          %v5858 = vpop.f32.mrf.mxu0
          %v5859 = vadd.f32 0.0, %v5858
          %5860 = vmatmul.f32.gmra.mxu0 %v5797
          %v5861 = vpop.f32.mrf.mxu0
          %v5862 = vadd.f32 0.0, %v5861
          %5863 = vmatmul.f32.gmra.mxu0 %v5800
          %v5864 = vpop.f32.mrf.mxu0
          %v5865 = vadd.f32 0.0, %v5864
          %5866 = vmatmul.f32.gmra.mxu0 %v5803
          %v5867 = vpop.f32.mrf.mxu0
          %v5868 = vadd.f32 0.0, %v5867
          %5869 = vmatmul.f32.gmra.mxu0 %v5806
          %v5870 = vpop.f32.mrf.mxu0
          %v5871 = vadd.f32 0.0, %v5870
          %5872 = vmatmul.f32.gmra.mxu0 %v5809
          %v5873 = vpop.f32.mrf.mxu0
          %v5874 = vadd.f32 0.0, %v5873
          %5875 = vmatmul.f32.gmra.mxu0 %v5812
          %v5876 = vpop.f32.mrf.mxu0
          %v5877 = vadd.f32 0.0, %v5876
          %5878 = vmatmul.f32.gmra.mxu0 %v5815
          %v5879 = vpop.f32.mrf.mxu0
          %v5880 = vadd.f32 0.0, %v5879
          %5881 = vmatmul.f32.gmra.mxu0 %v5818
          %v5882 = vpop.f32.mrf.mxu0
          %v5883 = vadd.f32 0.0, %v5882
          %5884 = vdwg.mxu0
          %5885 = vxpose.xlu0.b32.start [1/16] %v5838, 128
          %5886 = vxpose.xlu0.b32.cont [2/16] %v5841, 128
          %5887 = vxpose.xlu0.b32.cont [3/16] %v5844, 128
          %5888 = vxpose.xlu0.b32.cont [4/16] %v5847, 128
          %5889 = vxpose.xlu0.b32.cont [5/16] %v5850, 128
          %5890 = vxpose.xlu0.b32.cont [6/16] %v5853, 128
          %5891 = vxpose.xlu0.b32.cont [7/16] %v5856, 128
          %5892 = vxpose.xlu0.b32.cont [8/16] %v5859, 128
          %5893 = vxpose.xlu0.b32.cont [9/16] %v5862, 128
          %5894 = vxpose.xlu0.b32.cont [10/16] %v5865, 128
          %5895 = vxpose.xlu0.b32.cont [11/16] %v5868, 128
          %5896 = vxpose.xlu0.b32.cont [12/16] %v5871, 128
          %5897 = vxpose.xlu0.b32.cont [13/16] %v5874, 128
          %5898 = vxpose.xlu0.b32.cont [14/16] %v5877, 128
          %5899 = vxpose.xlu0.b32.cont [15/16] %v5880, 128
          %5900 = vxpose.xlu0.b32.end [16/16] %v5883, 128
          %v5901 = vpop.trf.xlu0
          %v5902 = vpop.trf.xlu0
          %v5903 = vpop.trf.xlu0
          %v5904 = vpop.trf.xlu0
          %v5905 = vpop.trf.xlu0
          %v5906 = vpop.trf.xlu0
          %v5907 = vpop.trf.xlu0
          %v5908 = vpop.trf.xlu0
          %v5909 = vpop.trf.xlu0
          %v5910 = vpop.trf.xlu0
          %v5911 = vpop.trf.xlu0
          %v5912 = vpop.trf.xlu0
          %v5913 = vpop.trf.xlu0
          %v5914 = vpop.trf.xlu0
          %v5915 = vpop.trf.xlu0
          %v5916 = vpop.trf.xlu0
          %5917 = vst [vmem:[#allocation2 + $0x16c] sm:$0xff] %v5901
          %5918 = vst [vmem:[#allocation2 + $0x174] sm:$0xff] %v5902
          %5919 = vst [vmem:[#allocation2 + $0x17c] sm:$0xff] %v5903
          %5920 = vst [vmem:[#allocation2 + $0x184] sm:$0xff] %v5904
          %5921 = vst [vmem:[#allocation2 + $0x18c] sm:$0xff] %v5905
          %5922 = vst [vmem:[#allocation2 + $0x194] sm:$0xff] %v5906
          %5923 = vst [vmem:[#allocation2 + $0x19c] sm:$0xf] %v5907
        $region120: #{pdcnn_forward.1} parent=79 // pred_fallthru
          _
        %v5924 = vld [vmem:[#allocation3] sm:$0xff]
        %v5925 = vld [vmem:[#allocation3 + $0x8] sm:$0xff]
        %v5926 = vld [vmem:[#allocation3 + $0x10] sm:$0xff]
        %v5927 = vld [vmem:[#allocation3 + $0x18] sm:$0xff]
        %s5928 = smul.u32 %s31, 13
        %s5929 = scalar_lea.vmem [#allocation2], %s5928
        %v5930 = vld [vmem:[%s5929] ss:$52 sm:$0xff]
        %v5931 = vld [vmem:[%s552] sm:$0xff]
        %v5932 = vld [vmem:[%s552 + $0x8] sm:$0xff]
        %v5933 = vld [vmem:[%s552 + $0x10] sm:$0xff]
        %v5934 = vld [vmem:[%s552 + $0x18] sm:$0xff]
        %v5935 = vld [vmem:[%s552 + $0x20] sm:$0xff]
        %v5936 = vld [vmem:[%s552 + $0x28] sm:$0xff]
        %v5937 = vld [vmem:[%s552 + $0x30] sm:$0xff]
        %v5938 = vld [vmem:[%s552 + $0x38] sm:$0xff]
        %v5939 = vld [vmem:[%s552 + $0x40] sm:$0xff]
        %v5940 = vld [vmem:[%s552 + $0x48] sm:$0xff]
        %v5941 = vld [vmem:[%s552 + $0x50] sm:$0xff]
        %v5942 = vld [vmem:[%s552 + $0x58] sm:$0xff]
        %v5943 = vld [vmem:[%s552 + $0x60] sm:$0xff]
        %v5944 = vld [vmem:[%s552 + $0x68] sm:$0xff]
        %v5945 = vld [vmem:[%s552 + $0x70] sm:$0xff]
        %v5946 = vld [vmem:[%s552 + $0x78] sm:$0xff]
        %v5947 = vld [vmem:[%s552 + $0x80] sm:$0xff]
        %v5948 = vld [vmem:[%s552 + $0x88] sm:$0xff]
        %v5949 = vld [vmem:[%s552 + $0x90] sm:$0xff]
        %v5950 = vld [vmem:[%s552 + $0x98] sm:$0xff]
        %v5951 = vld [vmem:[%s552 + $0xa0] sm:$0xff]
        %v5952 = vld [vmem:[%s552 + $0xa8] sm:$0xff]
        %v5953 = vld [vmem:[%s552 + $0xb0] sm:$0xff]
        %v5954 = vld [vmem:[%s552 + $0xb8] sm:$0xff]
        %v5955 = vld [vmem:[%s552 + $0xc0] sm:$0xff]
        %v5956 = vld [vmem:[%s552 + $0xc8] sm:$0xff]
        %v5957 = vld [vmem:[%s552 + $0xd0] sm:$0xff]
        %v5958 = vld [vmem:[%s552 + $0xd8] sm:$0xff]
        %v5959 = vld [vmem:[%s552 + $0xe0] sm:$0xff]
        %v5960 = vld [vmem:[%s552 + $0xe8] sm:$0xff]
        %v5961 = vld [vmem:[%s552 + $0xf0] sm:$0xff]
        %v5962 = vld [vmem:[%s552 + $0xf8] sm:$0xff]
        %v5963 = vld [vmem:[%s552 + $0x100] sm:$0xff]
        %v5964 = vld [vmem:[%s552 + $0x108] sm:$0xff]
        %v5965 = vld [vmem:[%s552 + $0x110] sm:$0xff]
        %v5966 = vld [vmem:[%s552 + $0x118] sm:$0xff]
        %v5967 = vld [vmem:[%s552 + $0x120] sm:$0xff]
        %v5968 = vld [vmem:[%s552 + $0x128] sm:$0xff]
        %v5969 = vld [vmem:[%s552 + $0x130] sm:$0xff]
        %v5970 = vld [vmem:[%s552 + $0x138] sm:$0xff]
        %v5971 = vld [vmem:[%s552 + $0x140] sm:$0xff]
        %v5972 = vld [vmem:[%s552 + $0x148] sm:$0xff]
        %v5973 = vld [vmem:[%s552 + $0x150] sm:$0xff]
        %v5974 = vld [vmem:[%s552 + $0x158] sm:$0xff]
        %v5975 = vld [vmem:[%s552 + $0x160] sm:$0xff]
        %v5976 = vld [vmem:[%s552 + $0x168] sm:$0xff]
        %v5977 = vld [vmem:[%s552 + $0x170] sm:$0xff]
        %v5978 = vld [vmem:[%s552 + $0x178] sm:$0xff]
        %v5979 = vld [vmem:[%s552 + $0x180] sm:$0xff]
        %v5980 = vld [vmem:[%s552 + $0x188] sm:$0xff]
        %v5981 = vld [vmem:[%s552 + $0x190] sm:$0xff]
        %v5982 = vld [vmem:[%s552 + $0x198] sm:$0xff]
        %v5983 = vld [vmem:[%s552 + $0x1a0] sm:$0xff]
        %v5984 = vld [vmem:[%s552 + $0x1a8] sm:$0xff]
        %v5985 = vld [vmem:[%s552 + $0x1b0] sm:$0xff]
        %v5986 = vld [vmem:[%s552 + $0x1b8] sm:$0xff]
        %v5987 = vld [vmem:[%s552 + $0x1c0] sm:$0xff]
        %v5988 = vld [vmem:[%s552 + $0x1c8] sm:$0xff]
        %v5989 = vld [vmem:[%s552 + $0x1d0] sm:$0xff]
        %v5990 = vld [vmem:[%s552 + $0x1d8] sm:$0xff]
        %v5991 = vld [vmem:[%s552 + $0x1e0] sm:$0xff]
        %v5992 = vld [vmem:[%s552 + $0x1e8] sm:$0xff]
        %v5993 = vld [vmem:[%s552 + $0x1f0] sm:$0xff]
        %v5994 = vld [vmem:[%s552 + $0x1f8] sm:$0xff]
        %5995 = vmatpush.msra.mxu0 %v5991
        %5996 = vmatpush.msra.mxu0 %v5987
        %5997 = vmatpush.msra.mxu0 %v5983
        %5998 = vmatpush.msra.mxu0 %v5979
        %5999 = vmatpush.msra.mxu0 %v5975
        %6000 = vmatpush.msra.mxu0 %v5971
        %6001 = vmatpush.msra.mxu0 %v5967
        %6002 = vmatpush.msra.mxu0 %v5963
        %6003 = vmatpush.msra.mxu0 %v5959
        %6004 = vmatpush.msra.mxu0 %v5955
        %6005 = vmatpush.msra.mxu0 %v5951
        %6006 = vmatpush.msra.mxu0 %v5947
        %6007 = vmatpush.msra.mxu0 %v5943
        %6008 = vmatpush.msra.mxu0 %v5939
        %6009 = vmatpush.msra.mxu0 %v5935
        %6010 = vmatpush.msra.mxu0 %v5931
        %6011 = vmatmul.f32.gmra.mxu0 %v5930
        %v6012 = vpop.f32.mrf.mxu0
        %v6013 = vadd.f32 0.0, %v6012
        %6014 = vdwg.mxu0
        %6015 = vmatpush.msra.mxu0 %v5992
        %6016 = vmatpush.msra.mxu0 %v5988
        %6017 = vmatpush.msra.mxu0 %v5984
        %6018 = vmatpush.msra.mxu0 %v5980
        %6019 = vmatpush.msra.mxu0 %v5976
        %6020 = vmatpush.msra.mxu0 %v5972
        %6021 = vmatpush.msra.mxu0 %v5968
        %6022 = vmatpush.msra.mxu0 %v5964
        %6023 = vmatpush.msra.mxu0 %v5960
        %6024 = vmatpush.msra.mxu0 %v5956
        %6025 = vmatpush.msra.mxu0 %v5952
        %6026 = vmatpush.msra.mxu0 %v5948
        %6027 = vmatpush.msra.mxu0 %v5944
        %6028 = vmatpush.msra.mxu0 %v5940
        %6029 = vmatpush.msra.mxu0 %v5936
        %6030 = vmatpush.msra.mxu0 %v5932
        %6031 = vmatmul.f32.gmra.mxu0 %v5930
        %v6032 = vpop.f32.mrf.mxu0
        %v6033 = vadd.f32 0.0, %v6032
        %6034 = vdwg.mxu0
        %6035 = vmatpush.msra.mxu0 %v5993
        %6036 = vmatpush.msra.mxu0 %v5989
        %6037 = vmatpush.msra.mxu0 %v5985
        %6038 = vmatpush.msra.mxu0 %v5981
        %6039 = vmatpush.msra.mxu0 %v5977
        %6040 = vmatpush.msra.mxu0 %v5973
        %6041 = vmatpush.msra.mxu0 %v5969
        %6042 = vmatpush.msra.mxu0 %v5965
        %6043 = vmatpush.msra.mxu0 %v5961
        %6044 = vmatpush.msra.mxu0 %v5957
        %6045 = vmatpush.msra.mxu0 %v5953
        %6046 = vmatpush.msra.mxu0 %v5949
        %6047 = vmatpush.msra.mxu0 %v5945
        %6048 = vmatpush.msra.mxu0 %v5941
        %6049 = vmatpush.msra.mxu0 %v5937
        %6050 = vmatpush.msra.mxu0 %v5933
        %6051 = vmatmul.f32.gmra.mxu0 %v5930
        %v6052 = vpop.f32.mrf.mxu0
        %v6053 = vadd.f32 0.0, %v6052
        %6054 = vdwg.mxu0
        %6055 = vmatpush.msra.mxu0 %v5994
        %6056 = vmatpush.msra.mxu0 %v5990
        %6057 = vmatpush.msra.mxu0 %v5986
        %6058 = vmatpush.msra.mxu0 %v5982
        %6059 = vmatpush.msra.mxu0 %v5978
        %6060 = vmatpush.msra.mxu0 %v5974
        %6061 = vmatpush.msra.mxu0 %v5970
        %6062 = vmatpush.msra.mxu0 %v5966
        %6063 = vmatpush.msra.mxu0 %v5962
        %6064 = vmatpush.msra.mxu0 %v5958
        %6065 = vmatpush.msra.mxu0 %v5954
        %6066 = vmatpush.msra.mxu0 %v5950
        %6067 = vmatpush.msra.mxu0 %v5946
        %6068 = vmatpush.msra.mxu0 %v5942
        %6069 = vmatpush.msra.mxu0 %v5938
        %6070 = vmatpush.msra.mxu0 %v5934
        %6071 = vmatmul.f32.gmra.mxu0 %v5930
        %v6072 = vpop.f32.mrf.mxu0
        %v6073 = vadd.f32 0.0, %v6072
        %6074 = vdwg.mxu0
        %v6075 = vadd.f32 %v5924, %v6013
        %v6076 = vadd.f32 %v5925, %v6033
        %v6077 = vadd.f32 %v5926, %v6053
        %v6078 = vadd.f32 %v5927, %v6073
        %s6079 = sadd.s32 %s5928, 1
        %s6080 = scalar_lea.vmem [#allocation2], %s6079
        %v6081 = vld [vmem:[%s6080] ss:$52 sm:$0xff]
        %s6082 = scalar_lea.vmem %s552, 512 [#allocation8]
        %v6083 = vld [vmem:[%s6082] sm:$0xff]
        %v6084 = vld [vmem:[%s6082 + $0x8] sm:$0xff]
        %v6085 = vld [vmem:[%s6082 + $0x10] sm:$0xff]
        %v6086 = vld [vmem:[%s6082 + $0x18] sm:$0xff]
        %v6087 = vld [vmem:[%s6082 + $0x20] sm:$0xff]
        %v6088 = vld [vmem:[%s6082 + $0x28] sm:$0xff]
        %v6089 = vld [vmem:[%s6082 + $0x30] sm:$0xff]
        %v6090 = vld [vmem:[%s6082 + $0x38] sm:$0xff]
        %v6091 = vld [vmem:[%s6082 + $0x40] sm:$0xff]
        %v6092 = vld [vmem:[%s6082 + $0x48] sm:$0xff]
        %v6093 = vld [vmem:[%s6082 + $0x50] sm:$0xff]
        %v6094 = vld [vmem:[%s6082 + $0x58] sm:$0xff]
        %v6095 = vld [vmem:[%s6082 + $0x60] sm:$0xff]
        %v6096 = vld [vmem:[%s6082 + $0x68] sm:$0xff]
        %v6097 = vld [vmem:[%s6082 + $0x70] sm:$0xff]
        %v6098 = vld [vmem:[%s6082 + $0x78] sm:$0xff]
        %v6099 = vld [vmem:[%s6082 + $0x80] sm:$0xff]
        %v6100 = vld [vmem:[%s6082 + $0x88] sm:$0xff]
        %v6101 = vld [vmem:[%s6082 + $0x90] sm:$0xff]
        %v6102 = vld [vmem:[%s6082 + $0x98] sm:$0xff]
        %v6103 = vld [vmem:[%s6082 + $0xa0] sm:$0xff]
        %v6104 = vld [vmem:[%s6082 + $0xa8] sm:$0xff]
        %v6105 = vld [vmem:[%s6082 + $0xb0] sm:$0xff]
        %v6106 = vld [vmem:[%s6082 + $0xb8] sm:$0xff]
        %v6107 = vld [vmem:[%s6082 + $0xc0] sm:$0xff]
        %v6108 = vld [vmem:[%s6082 + $0xc8] sm:$0xff]
        %v6109 = vld [vmem:[%s6082 + $0xd0] sm:$0xff]
        %v6110 = vld [vmem:[%s6082 + $0xd8] sm:$0xff]
        %v6111 = vld [vmem:[%s6082 + $0xe0] sm:$0xff]
        %v6112 = vld [vmem:[%s6082 + $0xe8] sm:$0xff]
        %v6113 = vld [vmem:[%s6082 + $0xf0] sm:$0xff]
        %v6114 = vld [vmem:[%s6082 + $0xf8] sm:$0xff]
        %v6115 = vld [vmem:[%s6082 + $0x100] sm:$0xff]
        %v6116 = vld [vmem:[%s6082 + $0x108] sm:$0xff]
        %v6117 = vld [vmem:[%s6082 + $0x110] sm:$0xff]
        %v6118 = vld [vmem:[%s6082 + $0x118] sm:$0xff]
        %v6119 = vld [vmem:[%s6082 + $0x120] sm:$0xff]
        %v6120 = vld [vmem:[%s6082 + $0x128] sm:$0xff]
        %v6121 = vld [vmem:[%s6082 + $0x130] sm:$0xff]
        %v6122 = vld [vmem:[%s6082 + $0x138] sm:$0xff]
        %v6123 = vld [vmem:[%s6082 + $0x140] sm:$0xff]
        %v6124 = vld [vmem:[%s6082 + $0x148] sm:$0xff]
        %v6125 = vld [vmem:[%s6082 + $0x150] sm:$0xff]
        %v6126 = vld [vmem:[%s6082 + $0x158] sm:$0xff]
        %v6127 = vld [vmem:[%s6082 + $0x160] sm:$0xff]
        %v6128 = vld [vmem:[%s6082 + $0x168] sm:$0xff]
        %v6129 = vld [vmem:[%s6082 + $0x170] sm:$0xff]
        %v6130 = vld [vmem:[%s6082 + $0x178] sm:$0xff]
        %v6131 = vld [vmem:[%s6082 + $0x180] sm:$0xff]
        %v6132 = vld [vmem:[%s6082 + $0x188] sm:$0xff]
        %v6133 = vld [vmem:[%s6082 + $0x190] sm:$0xff]
        %v6134 = vld [vmem:[%s6082 + $0x198] sm:$0xff]
        %v6135 = vld [vmem:[%s6082 + $0x1a0] sm:$0xff]
        %v6136 = vld [vmem:[%s6082 + $0x1a8] sm:$0xff]
        %v6137 = vld [vmem:[%s6082 + $0x1b0] sm:$0xff]
        %v6138 = vld [vmem:[%s6082 + $0x1b8] sm:$0xff]
        %v6139 = vld [vmem:[%s6082 + $0x1c0] sm:$0xff]
        %v6140 = vld [vmem:[%s6082 + $0x1c8] sm:$0xff]
        %v6141 = vld [vmem:[%s6082 + $0x1d0] sm:$0xff]
        %v6142 = vld [vmem:[%s6082 + $0x1d8] sm:$0xff]
        %v6143 = vld [vmem:[%s6082 + $0x1e0] sm:$0xff]
        %v6144 = vld [vmem:[%s6082 + $0x1e8] sm:$0xff]
        %v6145 = vld [vmem:[%s6082 + $0x1f0] sm:$0xff]
        %v6146 = vld [vmem:[%s6082 + $0x1f8] sm:$0xff]
        %6147 = vmatpush.msra.mxu0 %v6143
        %6148 = vmatpush.msra.mxu0 %v6139
        %6149 = vmatpush.msra.mxu0 %v6135
        %6150 = vmatpush.msra.mxu0 %v6131
        %6151 = vmatpush.msra.mxu0 %v6127
        %6152 = vmatpush.msra.mxu0 %v6123
        %6153 = vmatpush.msra.mxu0 %v6119
        %6154 = vmatpush.msra.mxu0 %v6115
        %6155 = vmatpush.msra.mxu0 %v6111
        %6156 = vmatpush.msra.mxu0 %v6107
        %6157 = vmatpush.msra.mxu0 %v6103
        %6158 = vmatpush.msra.mxu0 %v6099
        %6159 = vmatpush.msra.mxu0 %v6095
        %6160 = vmatpush.msra.mxu0 %v6091
        %6161 = vmatpush.msra.mxu0 %v6087
        %6162 = vmatpush.msra.mxu0 %v6083
        %6163 = vmatmul.f32.gmra.mxu0 %v6081
        %v6164 = vpop.f32.mrf.mxu0
        %v6165 = vadd.f32 0.0, %v6164
        %6166 = vdwg.mxu0
        %6167 = vmatpush.msra.mxu0 %v6144
        %6168 = vmatpush.msra.mxu0 %v6140
        %6169 = vmatpush.msra.mxu0 %v6136
        %6170 = vmatpush.msra.mxu0 %v6132
        %6171 = vmatpush.msra.mxu0 %v6128
        %6172 = vmatpush.msra.mxu0 %v6124
        %6173 = vmatpush.msra.mxu0 %v6120
        %6174 = vmatpush.msra.mxu0 %v6116
        %6175 = vmatpush.msra.mxu0 %v6112
        %6176 = vmatpush.msra.mxu0 %v6108
        %6177 = vmatpush.msra.mxu0 %v6104
        %6178 = vmatpush.msra.mxu0 %v6100
        %6179 = vmatpush.msra.mxu0 %v6096
        %6180 = vmatpush.msra.mxu0 %v6092
        %6181 = vmatpush.msra.mxu0 %v6088
        %6182 = vmatpush.msra.mxu0 %v6084
        %6183 = vmatmul.f32.gmra.mxu0 %v6081
        %v6184 = vpop.f32.mrf.mxu0
        %v6185 = vadd.f32 0.0, %v6184
        %6186 = vdwg.mxu0
        %6187 = vmatpush.msra.mxu0 %v6145
        %6188 = vmatpush.msra.mxu0 %v6141
        %6189 = vmatpush.msra.mxu0 %v6137
        %6190 = vmatpush.msra.mxu0 %v6133
        %6191 = vmatpush.msra.mxu0 %v6129
        %6192 = vmatpush.msra.mxu0 %v6125
        %6193 = vmatpush.msra.mxu0 %v6121
        %6194 = vmatpush.msra.mxu0 %v6117
        %6195 = vmatpush.msra.mxu0 %v6113
        %6196 = vmatpush.msra.mxu0 %v6109
        %6197 = vmatpush.msra.mxu0 %v6105
        %6198 = vmatpush.msra.mxu0 %v6101
        %6199 = vmatpush.msra.mxu0 %v6097
        %6200 = vmatpush.msra.mxu0 %v6093
        %6201 = vmatpush.msra.mxu0 %v6089
        %6202 = vmatpush.msra.mxu0 %v6085
        %6203 = vmatmul.f32.gmra.mxu0 %v6081
        %v6204 = vpop.f32.mrf.mxu0
        %v6205 = vadd.f32 0.0, %v6204
        %6206 = vdwg.mxu0
        %6207 = vmatpush.msra.mxu0 %v6146
        %6208 = vmatpush.msra.mxu0 %v6142
        %6209 = vmatpush.msra.mxu0 %v6138
        %6210 = vmatpush.msra.mxu0 %v6134
        %6211 = vmatpush.msra.mxu0 %v6130
        %6212 = vmatpush.msra.mxu0 %v6126
        %6213 = vmatpush.msra.mxu0 %v6122
        %6214 = vmatpush.msra.mxu0 %v6118
        %6215 = vmatpush.msra.mxu0 %v6114
        %6216 = vmatpush.msra.mxu0 %v6110
        %6217 = vmatpush.msra.mxu0 %v6106
        %6218 = vmatpush.msra.mxu0 %v6102
        %6219 = vmatpush.msra.mxu0 %v6098
        %6220 = vmatpush.msra.mxu0 %v6094
        %6221 = vmatpush.msra.mxu0 %v6090
        %6222 = vmatpush.msra.mxu0 %v6086
        %6223 = vmatmul.f32.gmra.mxu0 %v6081
        %v6224 = vpop.f32.mrf.mxu0
        %v6225 = vadd.f32 0.0, %v6224
        %6226 = vdwg.mxu0
        %v6227 = vadd.f32 %v6075, %v6165
        %v6228 = vadd.f32 %v6076, %v6185
        %v6229 = vadd.f32 %v6077, %v6205
        %v6230 = vadd.f32 %v6078, %v6225
        %s6231 = sadd.s32 %s5928, 2
        %s6232 = scalar_lea.vmem [#allocation2], %s6231
        %v6233 = vld [vmem:[%s6232] ss:$52 sm:$0xff]
        %s6234 = scalar_lea.vmem %s552, 1024 [#allocation8]
        %v6235 = vld [vmem:[%s6234] sm:$0xff]
        %v6236 = vld [vmem:[%s6234 + $0x8] sm:$0xff]
        %v6237 = vld [vmem:[%s6234 + $0x10] sm:$0xff]
        %v6238 = vld [vmem:[%s6234 + $0x18] sm:$0xff]
        %v6239 = vld [vmem:[%s6234 + $0x20] sm:$0xff]
        %v6240 = vld [vmem:[%s6234 + $0x28] sm:$0xff]
        %v6241 = vld [vmem:[%s6234 + $0x30] sm:$0xff]
        %v6242 = vld [vmem:[%s6234 + $0x38] sm:$0xff]
        %v6243 = vld [vmem:[%s6234 + $0x40] sm:$0xff]
        %v6244 = vld [vmem:[%s6234 + $0x48] sm:$0xff]
        %v6245 = vld [vmem:[%s6234 + $0x50] sm:$0xff]
        %v6246 = vld [vmem:[%s6234 + $0x58] sm:$0xff]
        %v6247 = vld [vmem:[%s6234 + $0x60] sm:$0xff]
        %v6248 = vld [vmem:[%s6234 + $0x68] sm:$0xff]
        %v6249 = vld [vmem:[%s6234 + $0x70] sm:$0xff]
        %v6250 = vld [vmem:[%s6234 + $0x78] sm:$0xff]
        %v6251 = vld [vmem:[%s6234 + $0x80] sm:$0xff]
        %v6252 = vld [vmem:[%s6234 + $0x88] sm:$0xff]
        %v6253 = vld [vmem:[%s6234 + $0x90] sm:$0xff]
        %v6254 = vld [vmem:[%s6234 + $0x98] sm:$0xff]
        %v6255 = vld [vmem:[%s6234 + $0xa0] sm:$0xff]
        %v6256 = vld [vmem:[%s6234 + $0xa8] sm:$0xff]
        %v6257 = vld [vmem:[%s6234 + $0xb0] sm:$0xff]
        %v6258 = vld [vmem:[%s6234 + $0xb8] sm:$0xff]
        %v6259 = vld [vmem:[%s6234 + $0xc0] sm:$0xff]
        %v6260 = vld [vmem:[%s6234 + $0xc8] sm:$0xff]
        %v6261 = vld [vmem:[%s6234 + $0xd0] sm:$0xff]
        %v6262 = vld [vmem:[%s6234 + $0xd8] sm:$0xff]
        %v6263 = vld [vmem:[%s6234 + $0xe0] sm:$0xff]
        %v6264 = vld [vmem:[%s6234 + $0xe8] sm:$0xff]
        %v6265 = vld [vmem:[%s6234 + $0xf0] sm:$0xff]
        %v6266 = vld [vmem:[%s6234 + $0xf8] sm:$0xff]
        %v6267 = vld [vmem:[%s6234 + $0x100] sm:$0xff]
        %v6268 = vld [vmem:[%s6234 + $0x108] sm:$0xff]
        %v6269 = vld [vmem:[%s6234 + $0x110] sm:$0xff]
        %v6270 = vld [vmem:[%s6234 + $0x118] sm:$0xff]
        %v6271 = vld [vmem:[%s6234 + $0x120] sm:$0xff]
        %v6272 = vld [vmem:[%s6234 + $0x128] sm:$0xff]
        %v6273 = vld [vmem:[%s6234 + $0x130] sm:$0xff]
        %v6274 = vld [vmem:[%s6234 + $0x138] sm:$0xff]
        %v6275 = vld [vmem:[%s6234 + $0x140] sm:$0xff]
        %v6276 = vld [vmem:[%s6234 + $0x148] sm:$0xff]
        %v6277 = vld [vmem:[%s6234 + $0x150] sm:$0xff]
        %v6278 = vld [vmem:[%s6234 + $0x158] sm:$0xff]
        %v6279 = vld [vmem:[%s6234 + $0x160] sm:$0xff]
        %v6280 = vld [vmem:[%s6234 + $0x168] sm:$0xff]
        %v6281 = vld [vmem:[%s6234 + $0x170] sm:$0xff]
        %v6282 = vld [vmem:[%s6234 + $0x178] sm:$0xff]
        %v6283 = vld [vmem:[%s6234 + $0x180] sm:$0xff]
        %v6284 = vld [vmem:[%s6234 + $0x188] sm:$0xff]
        %v6285 = vld [vmem:[%s6234 + $0x190] sm:$0xff]
        %v6286 = vld [vmem:[%s6234 + $0x198] sm:$0xff]
        %v6287 = vld [vmem:[%s6234 + $0x1a0] sm:$0xff]
        %v6288 = vld [vmem:[%s6234 + $0x1a8] sm:$0xff]
        %v6289 = vld [vmem:[%s6234 + $0x1b0] sm:$0xff]
        %v6290 = vld [vmem:[%s6234 + $0x1b8] sm:$0xff]
        %v6291 = vld [vmem:[%s6234 + $0x1c0] sm:$0xff]
        %v6292 = vld [vmem:[%s6234 + $0x1c8] sm:$0xff]
        %v6293 = vld [vmem:[%s6234 + $0x1d0] sm:$0xff]
        %v6294 = vld [vmem:[%s6234 + $0x1d8] sm:$0xff]
        %v6295 = vld [vmem:[%s6234 + $0x1e0] sm:$0xff]
        %v6296 = vld [vmem:[%s6234 + $0x1e8] sm:$0xff]
        %v6297 = vld [vmem:[%s6234 + $0x1f0] sm:$0xff]
        %v6298 = vld [vmem:[%s6234 + $0x1f8] sm:$0xff]
        %6299 = vmatpush.msra.mxu0 %v6295
        %6300 = vmatpush.msra.mxu0 %v6291
        %6301 = vmatpush.msra.mxu0 %v6287
        %6302 = vmatpush.msra.mxu0 %v6283
        %6303 = vmatpush.msra.mxu0 %v6279
        %6304 = vmatpush.msra.mxu0 %v6275
        %6305 = vmatpush.msra.mxu0 %v6271
        %6306 = vmatpush.msra.mxu0 %v6267
        %6307 = vmatpush.msra.mxu0 %v6263
        %6308 = vmatpush.msra.mxu0 %v6259
        %6309 = vmatpush.msra.mxu0 %v6255
        %6310 = vmatpush.msra.mxu0 %v6251
        %6311 = vmatpush.msra.mxu0 %v6247
        %6312 = vmatpush.msra.mxu0 %v6243
        %6313 = vmatpush.msra.mxu0 %v6239
        %6314 = vmatpush.msra.mxu0 %v6235
        %6315 = vmatmul.f32.gmra.mxu0 %v6233
        %v6316 = vpop.f32.mrf.mxu0
        %v6317 = vadd.f32 0.0, %v6316
        %6318 = vdwg.mxu0
        %6319 = vmatpush.msra.mxu0 %v6296
        %6320 = vmatpush.msra.mxu0 %v6292
        %6321 = vmatpush.msra.mxu0 %v6288
        %6322 = vmatpush.msra.mxu0 %v6284
        %6323 = vmatpush.msra.mxu0 %v6280
        %6324 = vmatpush.msra.mxu0 %v6276
        %6325 = vmatpush.msra.mxu0 %v6272
        %6326 = vmatpush.msra.mxu0 %v6268
        %6327 = vmatpush.msra.mxu0 %v6264
        %6328 = vmatpush.msra.mxu0 %v6260
        %6329 = vmatpush.msra.mxu0 %v6256
        %6330 = vmatpush.msra.mxu0 %v6252
        %6331 = vmatpush.msra.mxu0 %v6248
        %6332 = vmatpush.msra.mxu0 %v6244
        %6333 = vmatpush.msra.mxu0 %v6240
        %6334 = vmatpush.msra.mxu0 %v6236
        %6335 = vmatmul.f32.gmra.mxu0 %v6233
        %v6336 = vpop.f32.mrf.mxu0
        %v6337 = vadd.f32 0.0, %v6336
        %6338 = vdwg.mxu0
        %6339 = vmatpush.msra.mxu0 %v6297
        %6340 = vmatpush.msra.mxu0 %v6293
        %6341 = vmatpush.msra.mxu0 %v6289
        %6342 = vmatpush.msra.mxu0 %v6285
        %6343 = vmatpush.msra.mxu0 %v6281
        %6344 = vmatpush.msra.mxu0 %v6277
        %6345 = vmatpush.msra.mxu0 %v6273
        %6346 = vmatpush.msra.mxu0 %v6269
        %6347 = vmatpush.msra.mxu0 %v6265
        %6348 = vmatpush.msra.mxu0 %v6261
        %6349 = vmatpush.msra.mxu0 %v6257
        %6350 = vmatpush.msra.mxu0 %v6253
        %6351 = vmatpush.msra.mxu0 %v6249
        %6352 = vmatpush.msra.mxu0 %v6245
        %6353 = vmatpush.msra.mxu0 %v6241
        %6354 = vmatpush.msra.mxu0 %v6237
        %6355 = vmatmul.f32.gmra.mxu0 %v6233
        %v6356 = vpop.f32.mrf.mxu0
        %v6357 = vadd.f32 0.0, %v6356
        %6358 = vdwg.mxu0
        %6359 = vmatpush.msra.mxu0 %v6298
        %6360 = vmatpush.msra.mxu0 %v6294
        %6361 = vmatpush.msra.mxu0 %v6290
        %6362 = vmatpush.msra.mxu0 %v6286
        %6363 = vmatpush.msra.mxu0 %v6282
        %6364 = vmatpush.msra.mxu0 %v6278
        %6365 = vmatpush.msra.mxu0 %v6274
        %6366 = vmatpush.msra.mxu0 %v6270
        %6367 = vmatpush.msra.mxu0 %v6266
        %6368 = vmatpush.msra.mxu0 %v6262
        %6369 = vmatpush.msra.mxu0 %v6258
        %6370 = vmatpush.msra.mxu0 %v6254
        %6371 = vmatpush.msra.mxu0 %v6250
        %6372 = vmatpush.msra.mxu0 %v6246
        %6373 = vmatpush.msra.mxu0 %v6242
        %6374 = vmatpush.msra.mxu0 %v6238
        %6375 = vmatmul.f32.gmra.mxu0 %v6233
        %v6376 = vpop.f32.mrf.mxu0
        %v6377 = vadd.f32 0.0, %v6376
        %6378 = vdwg.mxu0
        %v6379 = vadd.f32 %v6227, %v6317
        %v6380 = vadd.f32 %v6228, %v6337
        %v6381 = vadd.f32 %v6229, %v6357
        %v6382 = vadd.f32 %v6230, %v6377
        %s6383 = sadd.s32 %s5928, 3
        %s6384 = scalar_lea.vmem [#allocation2], %s6383
        %v6385 = vld [vmem:[%s6384] ss:$52 sm:$0xff]
        %s6386 = scalar_lea.vmem %s552, 1536 [#allocation8]
        %v6387 = vld [vmem:[%s6386] sm:$0xff]
        %v6388 = vld [vmem:[%s6386 + $0x8] sm:$0xff]
        %v6389 = vld [vmem:[%s6386 + $0x10] sm:$0xff]
        %v6390 = vld [vmem:[%s6386 + $0x18] sm:$0xff]
        %v6391 = vld [vmem:[%s6386 + $0x20] sm:$0xff]
        %v6392 = vld [vmem:[%s6386 + $0x28] sm:$0xff]
        %v6393 = vld [vmem:[%s6386 + $0x30] sm:$0xff]
        %v6394 = vld [vmem:[%s6386 + $0x38] sm:$0xff]
        %v6395 = vld [vmem:[%s6386 + $0x40] sm:$0xff]
        %v6396 = vld [vmem:[%s6386 + $0x48] sm:$0xff]
        %v6397 = vld [vmem:[%s6386 + $0x50] sm:$0xff]
        %v6398 = vld [vmem:[%s6386 + $0x58] sm:$0xff]
        %v6399 = vld [vmem:[%s6386 + $0x60] sm:$0xff]
        %v6400 = vld [vmem:[%s6386 + $0x68] sm:$0xff]
        %v6401 = vld [vmem:[%s6386 + $0x70] sm:$0xff]
        %v6402 = vld [vmem:[%s6386 + $0x78] sm:$0xff]
        %v6403 = vld [vmem:[%s6386 + $0x80] sm:$0xff]
        %v6404 = vld [vmem:[%s6386 + $0x88] sm:$0xff]
        %v6405 = vld [vmem:[%s6386 + $0x90] sm:$0xff]
        %v6406 = vld [vmem:[%s6386 + $0x98] sm:$0xff]
        %v6407 = vld [vmem:[%s6386 + $0xa0] sm:$0xff]
        %v6408 = vld [vmem:[%s6386 + $0xa8] sm:$0xff]
        %v6409 = vld [vmem:[%s6386 + $0xb0] sm:$0xff]
        %v6410 = vld [vmem:[%s6386 + $0xb8] sm:$0xff]
        %v6411 = vld [vmem:[%s6386 + $0xc0] sm:$0xff]
        %v6412 = vld [vmem:[%s6386 + $0xc8] sm:$0xff]
        %v6413 = vld [vmem:[%s6386 + $0xd0] sm:$0xff]
        %v6414 = vld [vmem:[%s6386 + $0xd8] sm:$0xff]
        %v6415 = vld [vmem:[%s6386 + $0xe0] sm:$0xff]
        %v6416 = vld [vmem:[%s6386 + $0xe8] sm:$0xff]
        %v6417 = vld [vmem:[%s6386 + $0xf0] sm:$0xff]
        %v6418 = vld [vmem:[%s6386 + $0xf8] sm:$0xff]
        %v6419 = vld [vmem:[%s6386 + $0x100] sm:$0xff]
        %v6420 = vld [vmem:[%s6386 + $0x108] sm:$0xff]
        %v6421 = vld [vmem:[%s6386 + $0x110] sm:$0xff]
        %v6422 = vld [vmem:[%s6386 + $0x118] sm:$0xff]
        %v6423 = vld [vmem:[%s6386 + $0x120] sm:$0xff]
        %v6424 = vld [vmem:[%s6386 + $0x128] sm:$0xff]
        %v6425 = vld [vmem:[%s6386 + $0x130] sm:$0xff]
        %v6426 = vld [vmem:[%s6386 + $0x138] sm:$0xff]
        %v6427 = vld [vmem:[%s6386 + $0x140] sm:$0xff]
        %v6428 = vld [vmem:[%s6386 + $0x148] sm:$0xff]
        %v6429 = vld [vmem:[%s6386 + $0x150] sm:$0xff]
        %v6430 = vld [vmem:[%s6386 + $0x158] sm:$0xff]
        %v6431 = vld [vmem:[%s6386 + $0x160] sm:$0xff]
        %v6432 = vld [vmem:[%s6386 + $0x168] sm:$0xff]
        %v6433 = vld [vmem:[%s6386 + $0x170] sm:$0xff]
        %v6434 = vld [vmem:[%s6386 + $0x178] sm:$0xff]
        %v6435 = vld [vmem:[%s6386 + $0x180] sm:$0xff]
        %v6436 = vld [vmem:[%s6386 + $0x188] sm:$0xff]
        %v6437 = vld [vmem:[%s6386 + $0x190] sm:$0xff]
        %v6438 = vld [vmem:[%s6386 + $0x198] sm:$0xff]
        %v6439 = vld [vmem:[%s6386 + $0x1a0] sm:$0xff]
        %v6440 = vld [vmem:[%s6386 + $0x1a8] sm:$0xff]
        %v6441 = vld [vmem:[%s6386 + $0x1b0] sm:$0xff]
        %v6442 = vld [vmem:[%s6386 + $0x1b8] sm:$0xff]
        %v6443 = vld [vmem:[%s6386 + $0x1c0] sm:$0xff]
        %v6444 = vld [vmem:[%s6386 + $0x1c8] sm:$0xff]
        %v6445 = vld [vmem:[%s6386 + $0x1d0] sm:$0xff]
        %v6446 = vld [vmem:[%s6386 + $0x1d8] sm:$0xff]
        %v6447 = vld [vmem:[%s6386 + $0x1e0] sm:$0xff]
        %v6448 = vld [vmem:[%s6386 + $0x1e8] sm:$0xff]
        %v6449 = vld [vmem:[%s6386 + $0x1f0] sm:$0xff]
        %v6450 = vld [vmem:[%s6386 + $0x1f8] sm:$0xff]
        %6451 = vmatpush.msra.mxu0 %v6447
        %6452 = vmatpush.msra.mxu0 %v6443
        %6453 = vmatpush.msra.mxu0 %v6439
        %6454 = vmatpush.msra.mxu0 %v6435
        %6455 = vmatpush.msra.mxu0 %v6431
        %6456 = vmatpush.msra.mxu0 %v6427
        %6457 = vmatpush.msra.mxu0 %v6423
        %6458 = vmatpush.msra.mxu0 %v6419
        %6459 = vmatpush.msra.mxu0 %v6415
        %6460 = vmatpush.msra.mxu0 %v6411
        %6461 = vmatpush.msra.mxu0 %v6407
        %6462 = vmatpush.msra.mxu0 %v6403
        %6463 = vmatpush.msra.mxu0 %v6399
        %6464 = vmatpush.msra.mxu0 %v6395
        %6465 = vmatpush.msra.mxu0 %v6391
        %6466 = vmatpush.msra.mxu0 %v6387
        %6467 = vmatmul.f32.gmra.mxu0 %v6385
        %v6468 = vpop.f32.mrf.mxu0
        %v6469 = vadd.f32 0.0, %v6468
        %6470 = vdwg.mxu0
        %6471 = vmatpush.msra.mxu0 %v6448
        %6472 = vmatpush.msra.mxu0 %v6444
        %6473 = vmatpush.msra.mxu0 %v6440
        %6474 = vmatpush.msra.mxu0 %v6436
        %6475 = vmatpush.msra.mxu0 %v6432
        %6476 = vmatpush.msra.mxu0 %v6428
        %6477 = vmatpush.msra.mxu0 %v6424
        %6478 = vmatpush.msra.mxu0 %v6420
        %6479 = vmatpush.msra.mxu0 %v6416
        %6480 = vmatpush.msra.mxu0 %v6412
        %6481 = vmatpush.msra.mxu0 %v6408
        %6482 = vmatpush.msra.mxu0 %v6404
        %6483 = vmatpush.msra.mxu0 %v6400
        %6484 = vmatpush.msra.mxu0 %v6396
        %6485 = vmatpush.msra.mxu0 %v6392
        %6486 = vmatpush.msra.mxu0 %v6388
        %6487 = vmatmul.f32.gmra.mxu0 %v6385
        %v6488 = vpop.f32.mrf.mxu0
        %v6489 = vadd.f32 0.0, %v6488
        %6490 = vdwg.mxu0
        %6491 = vmatpush.msra.mxu0 %v6449
        %6492 = vmatpush.msra.mxu0 %v6445
        %6493 = vmatpush.msra.mxu0 %v6441
        %6494 = vmatpush.msra.mxu0 %v6437
        %6495 = vmatpush.msra.mxu0 %v6433
        %6496 = vmatpush.msra.mxu0 %v6429
        %6497 = vmatpush.msra.mxu0 %v6425
        %6498 = vmatpush.msra.mxu0 %v6421
        %6499 = vmatpush.msra.mxu0 %v6417
        %6500 = vmatpush.msra.mxu0 %v6413
        %6501 = vmatpush.msra.mxu0 %v6409
        %6502 = vmatpush.msra.mxu0 %v6405
        %6503 = vmatpush.msra.mxu0 %v6401
        %6504 = vmatpush.msra.mxu0 %v6397
        %6505 = vmatpush.msra.mxu0 %v6393
        %6506 = vmatpush.msra.mxu0 %v6389
        %6507 = vmatmul.f32.gmra.mxu0 %v6385
        %v6508 = vpop.f32.mrf.mxu0
        %v6509 = vadd.f32 0.0, %v6508
        %6510 = vdwg.mxu0
        %6511 = vmatpush.msra.mxu0 %v6450
        %6512 = vmatpush.msra.mxu0 %v6446
        %6513 = vmatpush.msra.mxu0 %v6442
        %6514 = vmatpush.msra.mxu0 %v6438
        %6515 = vmatpush.msra.mxu0 %v6434
        %6516 = vmatpush.msra.mxu0 %v6430
        %6517 = vmatpush.msra.mxu0 %v6426
        %6518 = vmatpush.msra.mxu0 %v6422
        %6519 = vmatpush.msra.mxu0 %v6418
        %6520 = vmatpush.msra.mxu0 %v6414
        %6521 = vmatpush.msra.mxu0 %v6410
        %6522 = vmatpush.msra.mxu0 %v6406
        %6523 = vmatpush.msra.mxu0 %v6402
        %6524 = vmatpush.msra.mxu0 %v6398
        %6525 = vmatpush.msra.mxu0 %v6394
        %6526 = vmatpush.msra.mxu0 %v6390
        %6527 = vmatmul.f32.gmra.mxu0 %v6385
        %v6528 = vpop.f32.mrf.mxu0
        %v6529 = vadd.f32 0.0, %v6528
        %6530 = vdwg.mxu0
        %v6531 = vadd.f32 %v6379, %v6469
        %v6532 = vadd.f32 %v6380, %v6489
        %v6533 = vadd.f32 %v6381, %v6509
        %v6534 = vadd.f32 %v6382, %v6529
        %s6535 = sadd.s32 %s5928, 4
        %s6536 = scalar_lea.vmem [#allocation2], %s6535
        %v6537 = vld [vmem:[%s6536] ss:$52 sm:$0xff]
        %s6538 = scalar_lea.vmem %s552, 2048 [#allocation8]
        %v6539 = vld [vmem:[%s6538] sm:$0xff]
        %v6540 = vld [vmem:[%s6538 + $0x8] sm:$0xff]
        %v6541 = vld [vmem:[%s6538 + $0x10] sm:$0xff]
        %v6542 = vld [vmem:[%s6538 + $0x18] sm:$0xff]
        %v6543 = vld [vmem:[%s6538 + $0x20] sm:$0xff]
        %v6544 = vld [vmem:[%s6538 + $0x28] sm:$0xff]
        %v6545 = vld [vmem:[%s6538 + $0x30] sm:$0xff]
        %v6546 = vld [vmem:[%s6538 + $0x38] sm:$0xff]
        %v6547 = vld [vmem:[%s6538 + $0x40] sm:$0xff]
        %v6548 = vld [vmem:[%s6538 + $0x48] sm:$0xff]
        %v6549 = vld [vmem:[%s6538 + $0x50] sm:$0xff]
        %v6550 = vld [vmem:[%s6538 + $0x58] sm:$0xff]
        %v6551 = vld [vmem:[%s6538 + $0x60] sm:$0xff]
        %v6552 = vld [vmem:[%s6538 + $0x68] sm:$0xff]
        %v6553 = vld [vmem:[%s6538 + $0x70] sm:$0xff]
        %v6554 = vld [vmem:[%s6538 + $0x78] sm:$0xff]
        %v6555 = vld [vmem:[%s6538 + $0x80] sm:$0xff]
        %v6556 = vld [vmem:[%s6538 + $0x88] sm:$0xff]
        %v6557 = vld [vmem:[%s6538 + $0x90] sm:$0xff]
        %v6558 = vld [vmem:[%s6538 + $0x98] sm:$0xff]
        %v6559 = vld [vmem:[%s6538 + $0xa0] sm:$0xff]
        %v6560 = vld [vmem:[%s6538 + $0xa8] sm:$0xff]
        %v6561 = vld [vmem:[%s6538 + $0xb0] sm:$0xff]
        %v6562 = vld [vmem:[%s6538 + $0xb8] sm:$0xff]
        %v6563 = vld [vmem:[%s6538 + $0xc0] sm:$0xff]
        %v6564 = vld [vmem:[%s6538 + $0xc8] sm:$0xff]
        %v6565 = vld [vmem:[%s6538 + $0xd0] sm:$0xff]
        %v6566 = vld [vmem:[%s6538 + $0xd8] sm:$0xff]
        %v6567 = vld [vmem:[%s6538 + $0xe0] sm:$0xff]
        %v6568 = vld [vmem:[%s6538 + $0xe8] sm:$0xff]
        %v6569 = vld [vmem:[%s6538 + $0xf0] sm:$0xff]
        %v6570 = vld [vmem:[%s6538 + $0xf8] sm:$0xff]
        %v6571 = vld [vmem:[%s6538 + $0x100] sm:$0xff]
        %v6572 = vld [vmem:[%s6538 + $0x108] sm:$0xff]
        %v6573 = vld [vmem:[%s6538 + $0x110] sm:$0xff]
        %v6574 = vld [vmem:[%s6538 + $0x118] sm:$0xff]
        %v6575 = vld [vmem:[%s6538 + $0x120] sm:$0xff]
        %v6576 = vld [vmem:[%s6538 + $0x128] sm:$0xff]
        %v6577 = vld [vmem:[%s6538 + $0x130] sm:$0xff]
        %v6578 = vld [vmem:[%s6538 + $0x138] sm:$0xff]
        %v6579 = vld [vmem:[%s6538 + $0x140] sm:$0xff]
        %v6580 = vld [vmem:[%s6538 + $0x148] sm:$0xff]
        %v6581 = vld [vmem:[%s6538 + $0x150] sm:$0xff]
        %v6582 = vld [vmem:[%s6538 + $0x158] sm:$0xff]
        %v6583 = vld [vmem:[%s6538 + $0x160] sm:$0xff]
        %v6584 = vld [vmem:[%s6538 + $0x168] sm:$0xff]
        %v6585 = vld [vmem:[%s6538 + $0x170] sm:$0xff]
        %v6586 = vld [vmem:[%s6538 + $0x178] sm:$0xff]
        %v6587 = vld [vmem:[%s6538 + $0x180] sm:$0xff]
        %v6588 = vld [vmem:[%s6538 + $0x188] sm:$0xff]
        %v6589 = vld [vmem:[%s6538 + $0x190] sm:$0xff]
        %v6590 = vld [vmem:[%s6538 + $0x198] sm:$0xff]
        %v6591 = vld [vmem:[%s6538 + $0x1a0] sm:$0xff]
        %v6592 = vld [vmem:[%s6538 + $0x1a8] sm:$0xff]
        %v6593 = vld [vmem:[%s6538 + $0x1b0] sm:$0xff]
        %v6594 = vld [vmem:[%s6538 + $0x1b8] sm:$0xff]
        %v6595 = vld [vmem:[%s6538 + $0x1c0] sm:$0xff]
        %v6596 = vld [vmem:[%s6538 + $0x1c8] sm:$0xff]
        %v6597 = vld [vmem:[%s6538 + $0x1d0] sm:$0xff]
        %v6598 = vld [vmem:[%s6538 + $0x1d8] sm:$0xff]
        %v6599 = vld [vmem:[%s6538 + $0x1e0] sm:$0xff]
        %v6600 = vld [vmem:[%s6538 + $0x1e8] sm:$0xff]
        %v6601 = vld [vmem:[%s6538 + $0x1f0] sm:$0xff]
        %v6602 = vld [vmem:[%s6538 + $0x1f8] sm:$0xff]
        %6603 = vmatpush.msra.mxu0 %v6599
        %6604 = vmatpush.msra.mxu0 %v6595
        %6605 = vmatpush.msra.mxu0 %v6591
        %6606 = vmatpush.msra.mxu0 %v6587
        %6607 = vmatpush.msra.mxu0 %v6583
        %6608 = vmatpush.msra.mxu0 %v6579
        %6609 = vmatpush.msra.mxu0 %v6575
        %6610 = vmatpush.msra.mxu0 %v6571
        %6611 = vmatpush.msra.mxu0 %v6567
        %6612 = vmatpush.msra.mxu0 %v6563
        %6613 = vmatpush.msra.mxu0 %v6559
        %6614 = vmatpush.msra.mxu0 %v6555
        %6615 = vmatpush.msra.mxu0 %v6551
        %6616 = vmatpush.msra.mxu0 %v6547
        %6617 = vmatpush.msra.mxu0 %v6543
        %6618 = vmatpush.msra.mxu0 %v6539
        %6619 = vmatmul.f32.gmra.mxu0 %v6537
        %v6620 = vpop.f32.mrf.mxu0
        %v6621 = vadd.f32 0.0, %v6620
        %6622 = vdwg.mxu0
        %6623 = vmatpush.msra.mxu0 %v6600
        %6624 = vmatpush.msra.mxu0 %v6596
        %6625 = vmatpush.msra.mxu0 %v6592
        %6626 = vmatpush.msra.mxu0 %v6588
        %6627 = vmatpush.msra.mxu0 %v6584
        %6628 = vmatpush.msra.mxu0 %v6580
        %6629 = vmatpush.msra.mxu0 %v6576
        %6630 = vmatpush.msra.mxu0 %v6572
        %6631 = vmatpush.msra.mxu0 %v6568
        %6632 = vmatpush.msra.mxu0 %v6564
        %6633 = vmatpush.msra.mxu0 %v6560
        %6634 = vmatpush.msra.mxu0 %v6556
        %6635 = vmatpush.msra.mxu0 %v6552
        %6636 = vmatpush.msra.mxu0 %v6548
        %6637 = vmatpush.msra.mxu0 %v6544
        %6638 = vmatpush.msra.mxu0 %v6540
        %6639 = vmatmul.f32.gmra.mxu0 %v6537
        %v6640 = vpop.f32.mrf.mxu0
        %v6641 = vadd.f32 0.0, %v6640
        %6642 = vdwg.mxu0
        %6643 = vmatpush.msra.mxu0 %v6601
        %6644 = vmatpush.msra.mxu0 %v6597
        %6645 = vmatpush.msra.mxu0 %v6593
        %6646 = vmatpush.msra.mxu0 %v6589
        %6647 = vmatpush.msra.mxu0 %v6585
        %6648 = vmatpush.msra.mxu0 %v6581
        %6649 = vmatpush.msra.mxu0 %v6577
        %6650 = vmatpush.msra.mxu0 %v6573
        %6651 = vmatpush.msra.mxu0 %v6569
        %6652 = vmatpush.msra.mxu0 %v6565
        %6653 = vmatpush.msra.mxu0 %v6561
        %6654 = vmatpush.msra.mxu0 %v6557
        %6655 = vmatpush.msra.mxu0 %v6553
        %6656 = vmatpush.msra.mxu0 %v6549
        %6657 = vmatpush.msra.mxu0 %v6545
        %6658 = vmatpush.msra.mxu0 %v6541
        %6659 = vmatmul.f32.gmra.mxu0 %v6537
        %v6660 = vpop.f32.mrf.mxu0
        %v6661 = vadd.f32 0.0, %v6660
        %6662 = vdwg.mxu0
        %6663 = vmatpush.msra.mxu0 %v6602
        %6664 = vmatpush.msra.mxu0 %v6598
        %6665 = vmatpush.msra.mxu0 %v6594
        %6666 = vmatpush.msra.mxu0 %v6590
        %6667 = vmatpush.msra.mxu0 %v6586
        %6668 = vmatpush.msra.mxu0 %v6582
        %6669 = vmatpush.msra.mxu0 %v6578
        %6670 = vmatpush.msra.mxu0 %v6574
        %6671 = vmatpush.msra.mxu0 %v6570
        %6672 = vmatpush.msra.mxu0 %v6566
        %6673 = vmatpush.msra.mxu0 %v6562
        %6674 = vmatpush.msra.mxu0 %v6558
        %6675 = vmatpush.msra.mxu0 %v6554
        %6676 = vmatpush.msra.mxu0 %v6550
        %6677 = vmatpush.msra.mxu0 %v6546
        %6678 = vmatpush.msra.mxu0 %v6542
        %6679 = vmatmul.f32.gmra.mxu0 %v6537
        %v6680 = vpop.f32.mrf.mxu0
        %v6681 = vadd.f32 0.0, %v6680
        %6682 = vdwg.mxu0
        %v6683 = vadd.f32 %v6531, %v6621
        %v6684 = vadd.f32 %v6532, %v6641
        %v6685 = vadd.f32 %v6533, %v6661
        %v6686 = vadd.f32 %v6534, %v6681
        %s6687 = sadd.s32 %s5928, 5
        %s6688 = scalar_lea.vmem [#allocation2], %s6687
        %v6689 = vld [vmem:[%s6688] ss:$52 sm:$0xff]
        %s6690 = scalar_lea.vmem %s552, 2560 [#allocation8]
        %v6691 = vld [vmem:[%s6690] sm:$0xff]
        %v6692 = vld [vmem:[%s6690 + $0x8] sm:$0xff]
        %v6693 = vld [vmem:[%s6690 + $0x10] sm:$0xff]
        %v6694 = vld [vmem:[%s6690 + $0x18] sm:$0xff]
        %v6695 = vld [vmem:[%s6690 + $0x20] sm:$0xff]
        %v6696 = vld [vmem:[%s6690 + $0x28] sm:$0xff]
        %v6697 = vld [vmem:[%s6690 + $0x30] sm:$0xff]
        %v6698 = vld [vmem:[%s6690 + $0x38] sm:$0xff]
        %v6699 = vld [vmem:[%s6690 + $0x40] sm:$0xff]
        %v6700 = vld [vmem:[%s6690 + $0x48] sm:$0xff]
        %v6701 = vld [vmem:[%s6690 + $0x50] sm:$0xff]
        %v6702 = vld [vmem:[%s6690 + $0x58] sm:$0xff]
        %v6703 = vld [vmem:[%s6690 + $0x60] sm:$0xff]
        %v6704 = vld [vmem:[%s6690 + $0x68] sm:$0xff]
        %v6705 = vld [vmem:[%s6690 + $0x70] sm:$0xff]
        %v6706 = vld [vmem:[%s6690 + $0x78] sm:$0xff]
        %v6707 = vld [vmem:[%s6690 + $0x80] sm:$0xff]
        %v6708 = vld [vmem:[%s6690 + $0x88] sm:$0xff]
        %v6709 = vld [vmem:[%s6690 + $0x90] sm:$0xff]
        %v6710 = vld [vmem:[%s6690 + $0x98] sm:$0xff]
        %v6711 = vld [vmem:[%s6690 + $0xa0] sm:$0xff]
        %v6712 = vld [vmem:[%s6690 + $0xa8] sm:$0xff]
        %v6713 = vld [vmem:[%s6690 + $0xb0] sm:$0xff]
        %v6714 = vld [vmem:[%s6690 + $0xb8] sm:$0xff]
        %v6715 = vld [vmem:[%s6690 + $0xc0] sm:$0xff]
        %v6716 = vld [vmem:[%s6690 + $0xc8] sm:$0xff]
        %v6717 = vld [vmem:[%s6690 + $0xd0] sm:$0xff]
        %v6718 = vld [vmem:[%s6690 + $0xd8] sm:$0xff]
        %v6719 = vld [vmem:[%s6690 + $0xe0] sm:$0xff]
        %v6720 = vld [vmem:[%s6690 + $0xe8] sm:$0xff]
        %v6721 = vld [vmem:[%s6690 + $0xf0] sm:$0xff]
        %v6722 = vld [vmem:[%s6690 + $0xf8] sm:$0xff]
        %v6723 = vld [vmem:[%s6690 + $0x100] sm:$0xff]
        %v6724 = vld [vmem:[%s6690 + $0x108] sm:$0xff]
        %v6725 = vld [vmem:[%s6690 + $0x110] sm:$0xff]
        %v6726 = vld [vmem:[%s6690 + $0x118] sm:$0xff]
        %v6727 = vld [vmem:[%s6690 + $0x120] sm:$0xff]
        %v6728 = vld [vmem:[%s6690 + $0x128] sm:$0xff]
        %v6729 = vld [vmem:[%s6690 + $0x130] sm:$0xff]
        %v6730 = vld [vmem:[%s6690 + $0x138] sm:$0xff]
        %v6731 = vld [vmem:[%s6690 + $0x140] sm:$0xff]
        %v6732 = vld [vmem:[%s6690 + $0x148] sm:$0xff]
        %v6733 = vld [vmem:[%s6690 + $0x150] sm:$0xff]
        %v6734 = vld [vmem:[%s6690 + $0x158] sm:$0xff]
        %v6735 = vld [vmem:[%s6690 + $0x160] sm:$0xff]
        %v6736 = vld [vmem:[%s6690 + $0x168] sm:$0xff]
        %v6737 = vld [vmem:[%s6690 + $0x170] sm:$0xff]
        %v6738 = vld [vmem:[%s6690 + $0x178] sm:$0xff]
        %v6739 = vld [vmem:[%s6690 + $0x180] sm:$0xff]
        %v6740 = vld [vmem:[%s6690 + $0x188] sm:$0xff]
        %v6741 = vld [vmem:[%s6690 + $0x190] sm:$0xff]
        %v6742 = vld [vmem:[%s6690 + $0x198] sm:$0xff]
        %v6743 = vld [vmem:[%s6690 + $0x1a0] sm:$0xff]
        %v6744 = vld [vmem:[%s6690 + $0x1a8] sm:$0xff]
        %v6745 = vld [vmem:[%s6690 + $0x1b0] sm:$0xff]
        %v6746 = vld [vmem:[%s6690 + $0x1b8] sm:$0xff]
        %v6747 = vld [vmem:[%s6690 + $0x1c0] sm:$0xff]
        %v6748 = vld [vmem:[%s6690 + $0x1c8] sm:$0xff]
        %v6749 = vld [vmem:[%s6690 + $0x1d0] sm:$0xff]
        %v6750 = vld [vmem:[%s6690 + $0x1d8] sm:$0xff]
        %v6751 = vld [vmem:[%s6690 + $0x1e0] sm:$0xff]
        %v6752 = vld [vmem:[%s6690 + $0x1e8] sm:$0xff]
        %v6753 = vld [vmem:[%s6690 + $0x1f0] sm:$0xff]
        %v6754 = vld [vmem:[%s6690 + $0x1f8] sm:$0xff]
        %6755 = vmatpush.msra.mxu0 %v6751
        %6756 = vmatpush.msra.mxu0 %v6747
        %6757 = vmatpush.msra.mxu0 %v6743
        %6758 = vmatpush.msra.mxu0 %v6739
        %6759 = vmatpush.msra.mxu0 %v6735
        %6760 = vmatpush.msra.mxu0 %v6731
        %6761 = vmatpush.msra.mxu0 %v6727
        %6762 = vmatpush.msra.mxu0 %v6723
        %6763 = vmatpush.msra.mxu0 %v6719
        %6764 = vmatpush.msra.mxu0 %v6715
        %6765 = vmatpush.msra.mxu0 %v6711
        %6766 = vmatpush.msra.mxu0 %v6707
        %6767 = vmatpush.msra.mxu0 %v6703
        %6768 = vmatpush.msra.mxu0 %v6699
        %6769 = vmatpush.msra.mxu0 %v6695
        %6770 = vmatpush.msra.mxu0 %v6691
        %6771 = vmatmul.f32.gmra.mxu0 %v6689
        %v6772 = vpop.f32.mrf.mxu0
        %v6773 = vadd.f32 0.0, %v6772
        %6774 = vdwg.mxu0
        %6775 = vmatpush.msra.mxu0 %v6752
        %6776 = vmatpush.msra.mxu0 %v6748
        %6777 = vmatpush.msra.mxu0 %v6744
        %6778 = vmatpush.msra.mxu0 %v6740
        %6779 = vmatpush.msra.mxu0 %v6736
        %6780 = vmatpush.msra.mxu0 %v6732
        %6781 = vmatpush.msra.mxu0 %v6728
        %6782 = vmatpush.msra.mxu0 %v6724
        %6783 = vmatpush.msra.mxu0 %v6720
        %6784 = vmatpush.msra.mxu0 %v6716
        %6785 = vmatpush.msra.mxu0 %v6712
        %6786 = vmatpush.msra.mxu0 %v6708
        %6787 = vmatpush.msra.mxu0 %v6704
        %6788 = vmatpush.msra.mxu0 %v6700
        %6789 = vmatpush.msra.mxu0 %v6696
        %6790 = vmatpush.msra.mxu0 %v6692
        %6791 = vmatmul.f32.gmra.mxu0 %v6689
        %v6792 = vpop.f32.mrf.mxu0
        %v6793 = vadd.f32 0.0, %v6792
        %6794 = vdwg.mxu0
        %6795 = vmatpush.msra.mxu0 %v6753
        %6796 = vmatpush.msra.mxu0 %v6749
        %6797 = vmatpush.msra.mxu0 %v6745
        %6798 = vmatpush.msra.mxu0 %v6741
        %6799 = vmatpush.msra.mxu0 %v6737
        %6800 = vmatpush.msra.mxu0 %v6733
        %6801 = vmatpush.msra.mxu0 %v6729
        %6802 = vmatpush.msra.mxu0 %v6725
        %6803 = vmatpush.msra.mxu0 %v6721
        %6804 = vmatpush.msra.mxu0 %v6717
        %6805 = vmatpush.msra.mxu0 %v6713
        %6806 = vmatpush.msra.mxu0 %v6709
        %6807 = vmatpush.msra.mxu0 %v6705
        %6808 = vmatpush.msra.mxu0 %v6701
        %6809 = vmatpush.msra.mxu0 %v6697
        %6810 = vmatpush.msra.mxu0 %v6693
        %6811 = vmatmul.f32.gmra.mxu0 %v6689
        %v6812 = vpop.f32.mrf.mxu0
        %v6813 = vadd.f32 0.0, %v6812
        %6814 = vdwg.mxu0
        %6815 = vmatpush.msra.mxu0 %v6754
        %6816 = vmatpush.msra.mxu0 %v6750
        %6817 = vmatpush.msra.mxu0 %v6746
        %6818 = vmatpush.msra.mxu0 %v6742
        %6819 = vmatpush.msra.mxu0 %v6738
        %6820 = vmatpush.msra.mxu0 %v6734
        %6821 = vmatpush.msra.mxu0 %v6730
        %6822 = vmatpush.msra.mxu0 %v6726
        %6823 = vmatpush.msra.mxu0 %v6722
        %6824 = vmatpush.msra.mxu0 %v6718
        %6825 = vmatpush.msra.mxu0 %v6714
        %6826 = vmatpush.msra.mxu0 %v6710
        %6827 = vmatpush.msra.mxu0 %v6706
        %6828 = vmatpush.msra.mxu0 %v6702
        %6829 = vmatpush.msra.mxu0 %v6698
        %6830 = vmatpush.msra.mxu0 %v6694
        %6831 = vmatmul.f32.gmra.mxu0 %v6689
        %v6832 = vpop.f32.mrf.mxu0
        %v6833 = vadd.f32 0.0, %v6832
        %6834 = vdwg.mxu0
        %v6835 = vadd.f32 %v6683, %v6773
        %v6836 = vadd.f32 %v6684, %v6793
        %v6837 = vadd.f32 %v6685, %v6813
        %v6838 = vadd.f32 %v6686, %v6833
        %s6839 = sadd.s32 %s5928, 6
        %s6840 = scalar_lea.vmem [#allocation2], %s6839
        %v6841 = vld [vmem:[%s6840] ss:$52 sm:$0xff]
        %s6842 = scalar_lea.vmem %s552, 3072 [#allocation8]
        %v6843 = vld [vmem:[%s6842] sm:$0xff]
        %v6844 = vld [vmem:[%s6842 + $0x8] sm:$0xff]
        %v6845 = vld [vmem:[%s6842 + $0x10] sm:$0xff]
        %v6846 = vld [vmem:[%s6842 + $0x18] sm:$0xff]
        %v6847 = vld [vmem:[%s6842 + $0x20] sm:$0xff]
        %v6848 = vld [vmem:[%s6842 + $0x28] sm:$0xff]
        %v6849 = vld [vmem:[%s6842 + $0x30] sm:$0xff]
        %v6850 = vld [vmem:[%s6842 + $0x38] sm:$0xff]
        %v6851 = vld [vmem:[%s6842 + $0x40] sm:$0xff]
        %v6852 = vld [vmem:[%s6842 + $0x48] sm:$0xff]
        %v6853 = vld [vmem:[%s6842 + $0x50] sm:$0xff]
        %v6854 = vld [vmem:[%s6842 + $0x58] sm:$0xff]
        %v6855 = vld [vmem:[%s6842 + $0x60] sm:$0xff]
        %v6856 = vld [vmem:[%s6842 + $0x68] sm:$0xff]
        %v6857 = vld [vmem:[%s6842 + $0x70] sm:$0xff]
        %v6858 = vld [vmem:[%s6842 + $0x78] sm:$0xff]
        %v6859 = vld [vmem:[%s6842 + $0x80] sm:$0xff]
        %v6860 = vld [vmem:[%s6842 + $0x88] sm:$0xff]
        %v6861 = vld [vmem:[%s6842 + $0x90] sm:$0xff]
        %v6862 = vld [vmem:[%s6842 + $0x98] sm:$0xff]
        %v6863 = vld [vmem:[%s6842 + $0xa0] sm:$0xff]
        %v6864 = vld [vmem:[%s6842 + $0xa8] sm:$0xff]
        %v6865 = vld [vmem:[%s6842 + $0xb0] sm:$0xff]
        %v6866 = vld [vmem:[%s6842 + $0xb8] sm:$0xff]
        %v6867 = vld [vmem:[%s6842 + $0xc0] sm:$0xff]
        %v6868 = vld [vmem:[%s6842 + $0xc8] sm:$0xff]
        %v6869 = vld [vmem:[%s6842 + $0xd0] sm:$0xff]
        %v6870 = vld [vmem:[%s6842 + $0xd8] sm:$0xff]
        %v6871 = vld [vmem:[%s6842 + $0xe0] sm:$0xff]
        %v6872 = vld [vmem:[%s6842 + $0xe8] sm:$0xff]
        %v6873 = vld [vmem:[%s6842 + $0xf0] sm:$0xff]
        %v6874 = vld [vmem:[%s6842 + $0xf8] sm:$0xff]
        %v6875 = vld [vmem:[%s6842 + $0x100] sm:$0xff]
        %v6876 = vld [vmem:[%s6842 + $0x108] sm:$0xff]
        %v6877 = vld [vmem:[%s6842 + $0x110] sm:$0xff]
        %v6878 = vld [vmem:[%s6842 + $0x118] sm:$0xff]
        %v6879 = vld [vmem:[%s6842 + $0x120] sm:$0xff]
        %v6880 = vld [vmem:[%s6842 + $0x128] sm:$0xff]
        %v6881 = vld [vmem:[%s6842 + $0x130] sm:$0xff]
        %v6882 = vld [vmem:[%s6842 + $0x138] sm:$0xff]
        %v6883 = vld [vmem:[%s6842 + $0x140] sm:$0xff]
        %v6884 = vld [vmem:[%s6842 + $0x148] sm:$0xff]
        %v6885 = vld [vmem:[%s6842 + $0x150] sm:$0xff]
        %v6886 = vld [vmem:[%s6842 + $0x158] sm:$0xff]
        %v6887 = vld [vmem:[%s6842 + $0x160] sm:$0xff]
        %v6888 = vld [vmem:[%s6842 + $0x168] sm:$0xff]
        %v6889 = vld [vmem:[%s6842 + $0x170] sm:$0xff]
        %v6890 = vld [vmem:[%s6842 + $0x178] sm:$0xff]
        %v6891 = vld [vmem:[%s6842 + $0x180] sm:$0xff]
        %v6892 = vld [vmem:[%s6842 + $0x188] sm:$0xff]
        %v6893 = vld [vmem:[%s6842 + $0x190] sm:$0xff]
        %v6894 = vld [vmem:[%s6842 + $0x198] sm:$0xff]
        %v6895 = vld [vmem:[%s6842 + $0x1a0] sm:$0xff]
        %v6896 = vld [vmem:[%s6842 + $0x1a8] sm:$0xff]
        %v6897 = vld [vmem:[%s6842 + $0x1b0] sm:$0xff]
        %v6898 = vld [vmem:[%s6842 + $0x1b8] sm:$0xff]
        %v6899 = vld [vmem:[%s6842 + $0x1c0] sm:$0xff]
        %v6900 = vld [vmem:[%s6842 + $0x1c8] sm:$0xff]
        %v6901 = vld [vmem:[%s6842 + $0x1d0] sm:$0xff]
        %v6902 = vld [vmem:[%s6842 + $0x1d8] sm:$0xff]
        %v6903 = vld [vmem:[%s6842 + $0x1e0] sm:$0xff]
        %v6904 = vld [vmem:[%s6842 + $0x1e8] sm:$0xff]
        %v6905 = vld [vmem:[%s6842 + $0x1f0] sm:$0xff]
        %v6906 = vld [vmem:[%s6842 + $0x1f8] sm:$0xff]
        %6907 = vmatpush.msra.mxu0 %v6903
        %6908 = vmatpush.msra.mxu0 %v6899
        %6909 = vmatpush.msra.mxu0 %v6895
        %6910 = vmatpush.msra.mxu0 %v6891
        %6911 = vmatpush.msra.mxu0 %v6887
        %6912 = vmatpush.msra.mxu0 %v6883
        %6913 = vmatpush.msra.mxu0 %v6879
        %6914 = vmatpush.msra.mxu0 %v6875
        %6915 = vmatpush.msra.mxu0 %v6871
        %6916 = vmatpush.msra.mxu0 %v6867
        %6917 = vmatpush.msra.mxu0 %v6863
        %6918 = vmatpush.msra.mxu0 %v6859
        %6919 = vmatpush.msra.mxu0 %v6855
        %6920 = vmatpush.msra.mxu0 %v6851
        %6921 = vmatpush.msra.mxu0 %v6847
        %6922 = vmatpush.msra.mxu0 %v6843
        %6923 = vmatmul.f32.gmra.mxu0 %v6841
        %v6924 = vpop.f32.mrf.mxu0
        %v6925 = vadd.f32 0.0, %v6924
        %6926 = vdwg.mxu0
        %6927 = vmatpush.msra.mxu0 %v6904
        %6928 = vmatpush.msra.mxu0 %v6900
        %6929 = vmatpush.msra.mxu0 %v6896
        %6930 = vmatpush.msra.mxu0 %v6892
        %6931 = vmatpush.msra.mxu0 %v6888
        %6932 = vmatpush.msra.mxu0 %v6884
        %6933 = vmatpush.msra.mxu0 %v6880
        %6934 = vmatpush.msra.mxu0 %v6876
        %6935 = vmatpush.msra.mxu0 %v6872
        %6936 = vmatpush.msra.mxu0 %v6868
        %6937 = vmatpush.msra.mxu0 %v6864
        %6938 = vmatpush.msra.mxu0 %v6860
        %6939 = vmatpush.msra.mxu0 %v6856
        %6940 = vmatpush.msra.mxu0 %v6852
        %6941 = vmatpush.msra.mxu0 %v6848
        %6942 = vmatpush.msra.mxu0 %v6844
        %6943 = vmatmul.f32.gmra.mxu0 %v6841
        %v6944 = vpop.f32.mrf.mxu0
        %v6945 = vadd.f32 0.0, %v6944
        %6946 = vdwg.mxu0
        %6947 = vmatpush.msra.mxu0 %v6905
        %6948 = vmatpush.msra.mxu0 %v6901
        %6949 = vmatpush.msra.mxu0 %v6897
        %6950 = vmatpush.msra.mxu0 %v6893
        %6951 = vmatpush.msra.mxu0 %v6889
        %6952 = vmatpush.msra.mxu0 %v6885
        %6953 = vmatpush.msra.mxu0 %v6881
        %6954 = vmatpush.msra.mxu0 %v6877
        %6955 = vmatpush.msra.mxu0 %v6873
        %6956 = vmatpush.msra.mxu0 %v6869
        %6957 = vmatpush.msra.mxu0 %v6865
        %6958 = vmatpush.msra.mxu0 %v6861
        %6959 = vmatpush.msra.mxu0 %v6857
        %6960 = vmatpush.msra.mxu0 %v6853
        %6961 = vmatpush.msra.mxu0 %v6849
        %6962 = vmatpush.msra.mxu0 %v6845
        %6963 = vmatmul.f32.gmra.mxu0 %v6841
        %v6964 = vpop.f32.mrf.mxu0
        %v6965 = vadd.f32 0.0, %v6964
        %6966 = vdwg.mxu0
        %6967 = vmatpush.msra.mxu0 %v6906
        %6968 = vmatpush.msra.mxu0 %v6902
        %6969 = vmatpush.msra.mxu0 %v6898
        %6970 = vmatpush.msra.mxu0 %v6894
        %6971 = vmatpush.msra.mxu0 %v6890
        %6972 = vmatpush.msra.mxu0 %v6886
        %6973 = vmatpush.msra.mxu0 %v6882
        %6974 = vmatpush.msra.mxu0 %v6878
        %6975 = vmatpush.msra.mxu0 %v6874
        %6976 = vmatpush.msra.mxu0 %v6870
        %6977 = vmatpush.msra.mxu0 %v6866
        %6978 = vmatpush.msra.mxu0 %v6862
        %6979 = vmatpush.msra.mxu0 %v6858
        %6980 = vmatpush.msra.mxu0 %v6854
        %6981 = vmatpush.msra.mxu0 %v6850
        %6982 = vmatpush.msra.mxu0 %v6846
        %6983 = vmatmul.f32.gmra.mxu0 %v6841
        %v6984 = vpop.f32.mrf.mxu0
        %v6985 = vadd.f32 0.0, %v6984
        %6986 = vdwg.mxu0
        %v6987 = vadd.f32 %v6835, %v6925
        %v6988 = vadd.f32 %v6836, %v6945
        %v6989 = vadd.f32 %v6837, %v6965
        %v6990 = vadd.f32 %v6838, %v6985
        %s6991 = sadd.s32 %s5928, 7
        %s6992 = scalar_lea.vmem [#allocation2], %s6991
        %v6993 = vld [vmem:[%s6992] ss:$52 sm:$0xff]
        %s6994 = scalar_lea.vmem %s552, 3584 [#allocation8]
        %v6995 = vld [vmem:[%s6994] sm:$0xff]
        %v6996 = vld [vmem:[%s6994 + $0x8] sm:$0xff]
        %v6997 = vld [vmem:[%s6994 + $0x10] sm:$0xff]
        %v6998 = vld [vmem:[%s6994 + $0x18] sm:$0xff]
        %v6999 = vld [vmem:[%s6994 + $0x20] sm:$0xff]
        %v7000 = vld [vmem:[%s6994 + $0x28] sm:$0xff]
        %v7001 = vld [vmem:[%s6994 + $0x30] sm:$0xff]
        %v7002 = vld [vmem:[%s6994 + $0x38] sm:$0xff]
        %v7003 = vld [vmem:[%s6994 + $0x40] sm:$0xff]
        %v7004 = vld [vmem:[%s6994 + $0x48] sm:$0xff]
        %v7005 = vld [vmem:[%s6994 + $0x50] sm:$0xff]
        %v7006 = vld [vmem:[%s6994 + $0x58] sm:$0xff]
        %v7007 = vld [vmem:[%s6994 + $0x60] sm:$0xff]
        %v7008 = vld [vmem:[%s6994 + $0x68] sm:$0xff]
        %v7009 = vld [vmem:[%s6994 + $0x70] sm:$0xff]
        %v7010 = vld [vmem:[%s6994 + $0x78] sm:$0xff]
        %v7011 = vld [vmem:[%s6994 + $0x80] sm:$0xff]
        %v7012 = vld [vmem:[%s6994 + $0x88] sm:$0xff]
        %v7013 = vld [vmem:[%s6994 + $0x90] sm:$0xff]
        %v7014 = vld [vmem:[%s6994 + $0x98] sm:$0xff]
        %v7015 = vld [vmem:[%s6994 + $0xa0] sm:$0xff]
        %v7016 = vld [vmem:[%s6994 + $0xa8] sm:$0xff]
        %v7017 = vld [vmem:[%s6994 + $0xb0] sm:$0xff]
        %v7018 = vld [vmem:[%s6994 + $0xb8] sm:$0xff]
        %v7019 = vld [vmem:[%s6994 + $0xc0] sm:$0xff]
        %v7020 = vld [vmem:[%s6994 + $0xc8] sm:$0xff]
        %v7021 = vld [vmem:[%s6994 + $0xd0] sm:$0xff]
        %v7022 = vld [vmem:[%s6994 + $0xd8] sm:$0xff]
        %v7023 = vld [vmem:[%s6994 + $0xe0] sm:$0xff]
        %v7024 = vld [vmem:[%s6994 + $0xe8] sm:$0xff]
        %v7025 = vld [vmem:[%s6994 + $0xf0] sm:$0xff]
        %v7026 = vld [vmem:[%s6994 + $0xf8] sm:$0xff]
        %v7027 = vld [vmem:[%s6994 + $0x100] sm:$0xff]
        %v7028 = vld [vmem:[%s6994 + $0x108] sm:$0xff]
        %v7029 = vld [vmem:[%s6994 + $0x110] sm:$0xff]
        %v7030 = vld [vmem:[%s6994 + $0x118] sm:$0xff]
        %v7031 = vld [vmem:[%s6994 + $0x120] sm:$0xff]
        %v7032 = vld [vmem:[%s6994 + $0x128] sm:$0xff]
        %v7033 = vld [vmem:[%s6994 + $0x130] sm:$0xff]
        %v7034 = vld [vmem:[%s6994 + $0x138] sm:$0xff]
        %v7035 = vld [vmem:[%s6994 + $0x140] sm:$0xff]
        %v7036 = vld [vmem:[%s6994 + $0x148] sm:$0xff]
        %v7037 = vld [vmem:[%s6994 + $0x150] sm:$0xff]
        %v7038 = vld [vmem:[%s6994 + $0x158] sm:$0xff]
        %v7039 = vld [vmem:[%s6994 + $0x160] sm:$0xff]
        %v7040 = vld [vmem:[%s6994 + $0x168] sm:$0xff]
        %v7041 = vld [vmem:[%s6994 + $0x170] sm:$0xff]
        %v7042 = vld [vmem:[%s6994 + $0x178] sm:$0xff]
        %v7043 = vld [vmem:[%s6994 + $0x180] sm:$0xff]
        %v7044 = vld [vmem:[%s6994 + $0x188] sm:$0xff]
        %v7045 = vld [vmem:[%s6994 + $0x190] sm:$0xff]
        %v7046 = vld [vmem:[%s6994 + $0x198] sm:$0xff]
        %v7047 = vld [vmem:[%s6994 + $0x1a0] sm:$0xff]
        %v7048 = vld [vmem:[%s6994 + $0x1a8] sm:$0xff]
        %v7049 = vld [vmem:[%s6994 + $0x1b0] sm:$0xff]
        %v7050 = vld [vmem:[%s6994 + $0x1b8] sm:$0xff]
        %v7051 = vld [vmem:[%s6994 + $0x1c0] sm:$0xff]
        %v7052 = vld [vmem:[%s6994 + $0x1c8] sm:$0xff]
        %v7053 = vld [vmem:[%s6994 + $0x1d0] sm:$0xff]
        %v7054 = vld [vmem:[%s6994 + $0x1d8] sm:$0xff]
        %v7055 = vld [vmem:[%s6994 + $0x1e0] sm:$0xff]
        %v7056 = vld [vmem:[%s6994 + $0x1e8] sm:$0xff]
        %v7057 = vld [vmem:[%s6994 + $0x1f0] sm:$0xff]
        %v7058 = vld [vmem:[%s6994 + $0x1f8] sm:$0xff]
        %7059 = vmatpush.msra.mxu0 %v7055
        %7060 = vmatpush.msra.mxu0 %v7051
        %7061 = vmatpush.msra.mxu0 %v7047
        %7062 = vmatpush.msra.mxu0 %v7043
        %7063 = vmatpush.msra.mxu0 %v7039
        %7064 = vmatpush.msra.mxu0 %v7035
        %7065 = vmatpush.msra.mxu0 %v7031
        %7066 = vmatpush.msra.mxu0 %v7027
        %7067 = vmatpush.msra.mxu0 %v7023
        %7068 = vmatpush.msra.mxu0 %v7019
        %7069 = vmatpush.msra.mxu0 %v7015
        %7070 = vmatpush.msra.mxu0 %v7011
        %7071 = vmatpush.msra.mxu0 %v7007
        %7072 = vmatpush.msra.mxu0 %v7003
        %7073 = vmatpush.msra.mxu0 %v6999
        %7074 = vmatpush.msra.mxu0 %v6995
        %7075 = vmatmul.f32.gmra.mxu0 %v6993
        %v7076 = vpop.f32.mrf.mxu0
        %v7077 = vadd.f32 0.0, %v7076
        %7078 = vdwg.mxu0
        %7079 = vmatpush.msra.mxu0 %v7056
        %7080 = vmatpush.msra.mxu0 %v7052
        %7081 = vmatpush.msra.mxu0 %v7048
        %7082 = vmatpush.msra.mxu0 %v7044
        %7083 = vmatpush.msra.mxu0 %v7040
        %7084 = vmatpush.msra.mxu0 %v7036
        %7085 = vmatpush.msra.mxu0 %v7032
        %7086 = vmatpush.msra.mxu0 %v7028
        %7087 = vmatpush.msra.mxu0 %v7024
        %7088 = vmatpush.msra.mxu0 %v7020
        %7089 = vmatpush.msra.mxu0 %v7016
        %7090 = vmatpush.msra.mxu0 %v7012
        %7091 = vmatpush.msra.mxu0 %v7008
        %7092 = vmatpush.msra.mxu0 %v7004
        %7093 = vmatpush.msra.mxu0 %v7000
        %7094 = vmatpush.msra.mxu0 %v6996
        %7095 = vmatmul.f32.gmra.mxu0 %v6993
        %v7096 = vpop.f32.mrf.mxu0
        %v7097 = vadd.f32 0.0, %v7096
        %7098 = vdwg.mxu0
        %7099 = vmatpush.msra.mxu0 %v7057
        %7100 = vmatpush.msra.mxu0 %v7053
        %7101 = vmatpush.msra.mxu0 %v7049
        %7102 = vmatpush.msra.mxu0 %v7045
        %7103 = vmatpush.msra.mxu0 %v7041
        %7104 = vmatpush.msra.mxu0 %v7037
        %7105 = vmatpush.msra.mxu0 %v7033
        %7106 = vmatpush.msra.mxu0 %v7029
        %7107 = vmatpush.msra.mxu0 %v7025
        %7108 = vmatpush.msra.mxu0 %v7021
        %7109 = vmatpush.msra.mxu0 %v7017
        %7110 = vmatpush.msra.mxu0 %v7013
        %7111 = vmatpush.msra.mxu0 %v7009
        %7112 = vmatpush.msra.mxu0 %v7005
        %7113 = vmatpush.msra.mxu0 %v7001
        %7114 = vmatpush.msra.mxu0 %v6997
        %7115 = vmatmul.f32.gmra.mxu0 %v6993
        %v7116 = vpop.f32.mrf.mxu0
        %v7117 = vadd.f32 0.0, %v7116
        %7118 = vdwg.mxu0
        %7119 = vmatpush.msra.mxu0 %v7058
        %7120 = vmatpush.msra.mxu0 %v7054
        %7121 = vmatpush.msra.mxu0 %v7050
        %7122 = vmatpush.msra.mxu0 %v7046
        %7123 = vmatpush.msra.mxu0 %v7042
        %7124 = vmatpush.msra.mxu0 %v7038
        %7125 = vmatpush.msra.mxu0 %v7034
        %7126 = vmatpush.msra.mxu0 %v7030
        %7127 = vmatpush.msra.mxu0 %v7026
        %7128 = vmatpush.msra.mxu0 %v7022
        %7129 = vmatpush.msra.mxu0 %v7018
        %7130 = vmatpush.msra.mxu0 %v7014
        %7131 = vmatpush.msra.mxu0 %v7010
        %7132 = vmatpush.msra.mxu0 %v7006
        %7133 = vmatpush.msra.mxu0 %v7002
        %7134 = vmatpush.msra.mxu0 %v6998
        %7135 = vmatmul.f32.gmra.mxu0 %v6993
        %v7136 = vpop.f32.mrf.mxu0
        %v7137 = vadd.f32 0.0, %v7136
        %7138 = vdwg.mxu0
        %v7139 = vadd.f32 %v6987, %v7077
        %v7140 = vadd.f32 %v6988, %v7097
        %v7141 = vadd.f32 %v6989, %v7117
        %v7142 = vadd.f32 %v6990, %v7137
        %s7143 = sadd.s32 %s5928, 8
        %s7144 = scalar_lea.vmem [#allocation2], %s7143
        %v7145 = vld [vmem:[%s7144] ss:$52 sm:$0xff]
        %s7146 = scalar_lea.vmem %s552, 4096 [#allocation8]
        %v7147 = vld [vmem:[%s7146] sm:$0xff]
        %v7148 = vld [vmem:[%s7146 + $0x8] sm:$0xff]
        %v7149 = vld [vmem:[%s7146 + $0x10] sm:$0xff]
        %v7150 = vld [vmem:[%s7146 + $0x18] sm:$0xff]
        %v7151 = vld [vmem:[%s7146 + $0x20] sm:$0xff]
        %v7152 = vld [vmem:[%s7146 + $0x28] sm:$0xff]
        %v7153 = vld [vmem:[%s7146 + $0x30] sm:$0xff]
        %v7154 = vld [vmem:[%s7146 + $0x38] sm:$0xff]
        %v7155 = vld [vmem:[%s7146 + $0x40] sm:$0xff]
        %v7156 = vld [vmem:[%s7146 + $0x48] sm:$0xff]
        %v7157 = vld [vmem:[%s7146 + $0x50] sm:$0xff]
        %v7158 = vld [vmem:[%s7146 + $0x58] sm:$0xff]
        %v7159 = vld [vmem:[%s7146 + $0x60] sm:$0xff]
        %v7160 = vld [vmem:[%s7146 + $0x68] sm:$0xff]
        %v7161 = vld [vmem:[%s7146 + $0x70] sm:$0xff]
        %v7162 = vld [vmem:[%s7146 + $0x78] sm:$0xff]
        %v7163 = vld [vmem:[%s7146 + $0x80] sm:$0xff]
        %v7164 = vld [vmem:[%s7146 + $0x88] sm:$0xff]
        %v7165 = vld [vmem:[%s7146 + $0x90] sm:$0xff]
        %v7166 = vld [vmem:[%s7146 + $0x98] sm:$0xff]
        %v7167 = vld [vmem:[%s7146 + $0xa0] sm:$0xff]
        %v7168 = vld [vmem:[%s7146 + $0xa8] sm:$0xff]
        %v7169 = vld [vmem:[%s7146 + $0xb0] sm:$0xff]
        %v7170 = vld [vmem:[%s7146 + $0xb8] sm:$0xff]
        %v7171 = vld [vmem:[%s7146 + $0xc0] sm:$0xff]
        %v7172 = vld [vmem:[%s7146 + $0xc8] sm:$0xff]
        %v7173 = vld [vmem:[%s7146 + $0xd0] sm:$0xff]
        %v7174 = vld [vmem:[%s7146 + $0xd8] sm:$0xff]
        %v7175 = vld [vmem:[%s7146 + $0xe0] sm:$0xff]
        %v7176 = vld [vmem:[%s7146 + $0xe8] sm:$0xff]
        %v7177 = vld [vmem:[%s7146 + $0xf0] sm:$0xff]
        %v7178 = vld [vmem:[%s7146 + $0xf8] sm:$0xff]
        %v7179 = vld [vmem:[%s7146 + $0x100] sm:$0xff]
        %v7180 = vld [vmem:[%s7146 + $0x108] sm:$0xff]
        %v7181 = vld [vmem:[%s7146 + $0x110] sm:$0xff]
        %v7182 = vld [vmem:[%s7146 + $0x118] sm:$0xff]
        %v7183 = vld [vmem:[%s7146 + $0x120] sm:$0xff]
        %v7184 = vld [vmem:[%s7146 + $0x128] sm:$0xff]
        %v7185 = vld [vmem:[%s7146 + $0x130] sm:$0xff]
        %v7186 = vld [vmem:[%s7146 + $0x138] sm:$0xff]
        %v7187 = vld [vmem:[%s7146 + $0x140] sm:$0xff]
        %v7188 = vld [vmem:[%s7146 + $0x148] sm:$0xff]
        %v7189 = vld [vmem:[%s7146 + $0x150] sm:$0xff]
        %v7190 = vld [vmem:[%s7146 + $0x158] sm:$0xff]
        %v7191 = vld [vmem:[%s7146 + $0x160] sm:$0xff]
        %v7192 = vld [vmem:[%s7146 + $0x168] sm:$0xff]
        %v7193 = vld [vmem:[%s7146 + $0x170] sm:$0xff]
        %v7194 = vld [vmem:[%s7146 + $0x178] sm:$0xff]
        %v7195 = vld [vmem:[%s7146 + $0x180] sm:$0xff]
        %v7196 = vld [vmem:[%s7146 + $0x188] sm:$0xff]
        %v7197 = vld [vmem:[%s7146 + $0x190] sm:$0xff]
        %v7198 = vld [vmem:[%s7146 + $0x198] sm:$0xff]
        %v7199 = vld [vmem:[%s7146 + $0x1a0] sm:$0xff]
        %v7200 = vld [vmem:[%s7146 + $0x1a8] sm:$0xff]
        %v7201 = vld [vmem:[%s7146 + $0x1b0] sm:$0xff]
        %v7202 = vld [vmem:[%s7146 + $0x1b8] sm:$0xff]
        %v7203 = vld [vmem:[%s7146 + $0x1c0] sm:$0xff]
        %v7204 = vld [vmem:[%s7146 + $0x1c8] sm:$0xff]
        %v7205 = vld [vmem:[%s7146 + $0x1d0] sm:$0xff]
        %v7206 = vld [vmem:[%s7146 + $0x1d8] sm:$0xff]
        %v7207 = vld [vmem:[%s7146 + $0x1e0] sm:$0xff]
        %v7208 = vld [vmem:[%s7146 + $0x1e8] sm:$0xff]
        %v7209 = vld [vmem:[%s7146 + $0x1f0] sm:$0xff]
        %v7210 = vld [vmem:[%s7146 + $0x1f8] sm:$0xff]
        %7211 = vmatpush.msra.mxu0 %v7207
        %7212 = vmatpush.msra.mxu0 %v7203
        %7213 = vmatpush.msra.mxu0 %v7199
        %7214 = vmatpush.msra.mxu0 %v7195
        %7215 = vmatpush.msra.mxu0 %v7191
        %7216 = vmatpush.msra.mxu0 %v7187
        %7217 = vmatpush.msra.mxu0 %v7183
        %7218 = vmatpush.msra.mxu0 %v7179
        %7219 = vmatpush.msra.mxu0 %v7175
        %7220 = vmatpush.msra.mxu0 %v7171
        %7221 = vmatpush.msra.mxu0 %v7167
        %7222 = vmatpush.msra.mxu0 %v7163
        %7223 = vmatpush.msra.mxu0 %v7159
        %7224 = vmatpush.msra.mxu0 %v7155
        %7225 = vmatpush.msra.mxu0 %v7151
        %7226 = vmatpush.msra.mxu0 %v7147
        %7227 = vmatmul.f32.gmra.mxu0 %v7145
        %v7228 = vpop.f32.mrf.mxu0
        %v7229 = vadd.f32 0.0, %v7228
        %7230 = vdwg.mxu0
        %7231 = vmatpush.msra.mxu0 %v7208
        %7232 = vmatpush.msra.mxu0 %v7204
        %7233 = vmatpush.msra.mxu0 %v7200
        %7234 = vmatpush.msra.mxu0 %v7196
        %7235 = vmatpush.msra.mxu0 %v7192
        %7236 = vmatpush.msra.mxu0 %v7188
        %7237 = vmatpush.msra.mxu0 %v7184
        %7238 = vmatpush.msra.mxu0 %v7180
        %7239 = vmatpush.msra.mxu0 %v7176
        %7240 = vmatpush.msra.mxu0 %v7172
        %7241 = vmatpush.msra.mxu0 %v7168
        %7242 = vmatpush.msra.mxu0 %v7164
        %7243 = vmatpush.msra.mxu0 %v7160
        %7244 = vmatpush.msra.mxu0 %v7156
        %7245 = vmatpush.msra.mxu0 %v7152
        %7246 = vmatpush.msra.mxu0 %v7148
        %7247 = vmatmul.f32.gmra.mxu0 %v7145
        %v7248 = vpop.f32.mrf.mxu0
        %v7249 = vadd.f32 0.0, %v7248
        %7250 = vdwg.mxu0
        %7251 = vmatpush.msra.mxu0 %v7209
        %7252 = vmatpush.msra.mxu0 %v7205
        %7253 = vmatpush.msra.mxu0 %v7201
        %7254 = vmatpush.msra.mxu0 %v7197
        %7255 = vmatpush.msra.mxu0 %v7193
        %7256 = vmatpush.msra.mxu0 %v7189
        %7257 = vmatpush.msra.mxu0 %v7185
        %7258 = vmatpush.msra.mxu0 %v7181
        %7259 = vmatpush.msra.mxu0 %v7177
        %7260 = vmatpush.msra.mxu0 %v7173
        %7261 = vmatpush.msra.mxu0 %v7169
        %7262 = vmatpush.msra.mxu0 %v7165
        %7263 = vmatpush.msra.mxu0 %v7161
        %7264 = vmatpush.msra.mxu0 %v7157
        %7265 = vmatpush.msra.mxu0 %v7153
        %7266 = vmatpush.msra.mxu0 %v7149
        %7267 = vmatmul.f32.gmra.mxu0 %v7145
        %v7268 = vpop.f32.mrf.mxu0
        %v7269 = vadd.f32 0.0, %v7268
        %7270 = vdwg.mxu0
        %7271 = vmatpush.msra.mxu0 %v7210
        %7272 = vmatpush.msra.mxu0 %v7206
        %7273 = vmatpush.msra.mxu0 %v7202
        %7274 = vmatpush.msra.mxu0 %v7198
        %7275 = vmatpush.msra.mxu0 %v7194
        %7276 = vmatpush.msra.mxu0 %v7190
        %7277 = vmatpush.msra.mxu0 %v7186
        %7278 = vmatpush.msra.mxu0 %v7182
        %7279 = vmatpush.msra.mxu0 %v7178
        %7280 = vmatpush.msra.mxu0 %v7174
        %7281 = vmatpush.msra.mxu0 %v7170
        %7282 = vmatpush.msra.mxu0 %v7166
        %7283 = vmatpush.msra.mxu0 %v7162
        %7284 = vmatpush.msra.mxu0 %v7158
        %7285 = vmatpush.msra.mxu0 %v7154
        %7286 = vmatpush.msra.mxu0 %v7150
        %7287 = vmatmul.f32.gmra.mxu0 %v7145
        %v7288 = vpop.f32.mrf.mxu0
        %v7289 = vadd.f32 0.0, %v7288
        %7290 = vdwg.mxu0
        %v7291 = vadd.f32 %v7139, %v7229
        %v7292 = vadd.f32 %v7140, %v7249
        %v7293 = vadd.f32 %v7141, %v7269
        %v7294 = vadd.f32 %v7142, %v7289
        %s7295 = sadd.s32 %s5928, 9
        %s7296 = scalar_lea.vmem [#allocation2], %s7295
        %v7297 = vld [vmem:[%s7296] ss:$52 sm:$0xff]
        %s7298 = scalar_lea.vmem %s552, 4608 [#allocation8]
        %v7299 = vld [vmem:[%s7298] sm:$0xff]
        %v7300 = vld [vmem:[%s7298 + $0x8] sm:$0xff]
        %v7301 = vld [vmem:[%s7298 + $0x10] sm:$0xff]
        %v7302 = vld [vmem:[%s7298 + $0x18] sm:$0xff]
        %v7303 = vld [vmem:[%s7298 + $0x20] sm:$0xff]
        %v7304 = vld [vmem:[%s7298 + $0x28] sm:$0xff]
        %v7305 = vld [vmem:[%s7298 + $0x30] sm:$0xff]
        %v7306 = vld [vmem:[%s7298 + $0x38] sm:$0xff]
        %v7307 = vld [vmem:[%s7298 + $0x40] sm:$0xff]
        %v7308 = vld [vmem:[%s7298 + $0x48] sm:$0xff]
        %v7309 = vld [vmem:[%s7298 + $0x50] sm:$0xff]
        %v7310 = vld [vmem:[%s7298 + $0x58] sm:$0xff]
        %v7311 = vld [vmem:[%s7298 + $0x60] sm:$0xff]
        %v7312 = vld [vmem:[%s7298 + $0x68] sm:$0xff]
        %v7313 = vld [vmem:[%s7298 + $0x70] sm:$0xff]
        %v7314 = vld [vmem:[%s7298 + $0x78] sm:$0xff]
        %v7315 = vld [vmem:[%s7298 + $0x80] sm:$0xff]
        %v7316 = vld [vmem:[%s7298 + $0x88] sm:$0xff]
        %v7317 = vld [vmem:[%s7298 + $0x90] sm:$0xff]
        %v7318 = vld [vmem:[%s7298 + $0x98] sm:$0xff]
        %v7319 = vld [vmem:[%s7298 + $0xa0] sm:$0xff]
        %v7320 = vld [vmem:[%s7298 + $0xa8] sm:$0xff]
        %v7321 = vld [vmem:[%s7298 + $0xb0] sm:$0xff]
        %v7322 = vld [vmem:[%s7298 + $0xb8] sm:$0xff]
        %v7323 = vld [vmem:[%s7298 + $0xc0] sm:$0xff]
        %v7324 = vld [vmem:[%s7298 + $0xc8] sm:$0xff]
        %v7325 = vld [vmem:[%s7298 + $0xd0] sm:$0xff]
        %v7326 = vld [vmem:[%s7298 + $0xd8] sm:$0xff]
        %v7327 = vld [vmem:[%s7298 + $0xe0] sm:$0xff]
        %v7328 = vld [vmem:[%s7298 + $0xe8] sm:$0xff]
        %v7329 = vld [vmem:[%s7298 + $0xf0] sm:$0xff]
        %v7330 = vld [vmem:[%s7298 + $0xf8] sm:$0xff]
        %v7331 = vld [vmem:[%s7298 + $0x100] sm:$0xff]
        %v7332 = vld [vmem:[%s7298 + $0x108] sm:$0xff]
        %v7333 = vld [vmem:[%s7298 + $0x110] sm:$0xff]
        %v7334 = vld [vmem:[%s7298 + $0x118] sm:$0xff]
        %v7335 = vld [vmem:[%s7298 + $0x120] sm:$0xff]
        %v7336 = vld [vmem:[%s7298 + $0x128] sm:$0xff]
        %v7337 = vld [vmem:[%s7298 + $0x130] sm:$0xff]
        %v7338 = vld [vmem:[%s7298 + $0x138] sm:$0xff]
        %v7339 = vld [vmem:[%s7298 + $0x140] sm:$0xff]
        %v7340 = vld [vmem:[%s7298 + $0x148] sm:$0xff]
        %v7341 = vld [vmem:[%s7298 + $0x150] sm:$0xff]
        %v7342 = vld [vmem:[%s7298 + $0x158] sm:$0xff]
        %v7343 = vld [vmem:[%s7298 + $0x160] sm:$0xff]
        %v7344 = vld [vmem:[%s7298 + $0x168] sm:$0xff]
        %v7345 = vld [vmem:[%s7298 + $0x170] sm:$0xff]
        %v7346 = vld [vmem:[%s7298 + $0x178] sm:$0xff]
        %v7347 = vld [vmem:[%s7298 + $0x180] sm:$0xff]
        %v7348 = vld [vmem:[%s7298 + $0x188] sm:$0xff]
        %v7349 = vld [vmem:[%s7298 + $0x190] sm:$0xff]
        %v7350 = vld [vmem:[%s7298 + $0x198] sm:$0xff]
        %v7351 = vld [vmem:[%s7298 + $0x1a0] sm:$0xff]
        %v7352 = vld [vmem:[%s7298 + $0x1a8] sm:$0xff]
        %v7353 = vld [vmem:[%s7298 + $0x1b0] sm:$0xff]
        %v7354 = vld [vmem:[%s7298 + $0x1b8] sm:$0xff]
        %v7355 = vld [vmem:[%s7298 + $0x1c0] sm:$0xff]
        %v7356 = vld [vmem:[%s7298 + $0x1c8] sm:$0xff]
        %v7357 = vld [vmem:[%s7298 + $0x1d0] sm:$0xff]
        %v7358 = vld [vmem:[%s7298 + $0x1d8] sm:$0xff]
        %v7359 = vld [vmem:[%s7298 + $0x1e0] sm:$0xff]
        %v7360 = vld [vmem:[%s7298 + $0x1e8] sm:$0xff]
        %v7361 = vld [vmem:[%s7298 + $0x1f0] sm:$0xff]
        %v7362 = vld [vmem:[%s7298 + $0x1f8] sm:$0xff]
        %7363 = vmatpush.msra.mxu0 %v7359
        %7364 = vmatpush.msra.mxu0 %v7355
        %7365 = vmatpush.msra.mxu0 %v7351
        %7366 = vmatpush.msra.mxu0 %v7347
        %7367 = vmatpush.msra.mxu0 %v7343
        %7368 = vmatpush.msra.mxu0 %v7339
        %7369 = vmatpush.msra.mxu0 %v7335
        %7370 = vmatpush.msra.mxu0 %v7331
        %7371 = vmatpush.msra.mxu0 %v7327
        %7372 = vmatpush.msra.mxu0 %v7323
        %7373 = vmatpush.msra.mxu0 %v7319
        %7374 = vmatpush.msra.mxu0 %v7315
        %7375 = vmatpush.msra.mxu0 %v7311
        %7376 = vmatpush.msra.mxu0 %v7307
        %7377 = vmatpush.msra.mxu0 %v7303
        %7378 = vmatpush.msra.mxu0 %v7299
        %7379 = vmatmul.f32.gmra.mxu0 %v7297
        %v7380 = vpop.f32.mrf.mxu0
        %v7381 = vadd.f32 0.0, %v7380
        %7382 = vdwg.mxu0
        %7383 = vmatpush.msra.mxu0 %v7360
        %7384 = vmatpush.msra.mxu0 %v7356
        %7385 = vmatpush.msra.mxu0 %v7352
        %7386 = vmatpush.msra.mxu0 %v7348
        %7387 = vmatpush.msra.mxu0 %v7344
        %7388 = vmatpush.msra.mxu0 %v7340
        %7389 = vmatpush.msra.mxu0 %v7336
        %7390 = vmatpush.msra.mxu0 %v7332
        %7391 = vmatpush.msra.mxu0 %v7328
        %7392 = vmatpush.msra.mxu0 %v7324
        %7393 = vmatpush.msra.mxu0 %v7320
        %7394 = vmatpush.msra.mxu0 %v7316
        %7395 = vmatpush.msra.mxu0 %v7312
        %7396 = vmatpush.msra.mxu0 %v7308
        %7397 = vmatpush.msra.mxu0 %v7304
        %7398 = vmatpush.msra.mxu0 %v7300
        %7399 = vmatmul.f32.gmra.mxu0 %v7297
        %v7400 = vpop.f32.mrf.mxu0
        %v7401 = vadd.f32 0.0, %v7400
        %7402 = vdwg.mxu0
        %7403 = vmatpush.msra.mxu0 %v7361
        %7404 = vmatpush.msra.mxu0 %v7357
        %7405 = vmatpush.msra.mxu0 %v7353
        %7406 = vmatpush.msra.mxu0 %v7349
        %7407 = vmatpush.msra.mxu0 %v7345
        %7408 = vmatpush.msra.mxu0 %v7341
        %7409 = vmatpush.msra.mxu0 %v7337
        %7410 = vmatpush.msra.mxu0 %v7333
        %7411 = vmatpush.msra.mxu0 %v7329
        %7412 = vmatpush.msra.mxu0 %v7325
        %7413 = vmatpush.msra.mxu0 %v7321
        %7414 = vmatpush.msra.mxu0 %v7317
        %7415 = vmatpush.msra.mxu0 %v7313
        %7416 = vmatpush.msra.mxu0 %v7309
        %7417 = vmatpush.msra.mxu0 %v7305
        %7418 = vmatpush.msra.mxu0 %v7301
        %7419 = vmatmul.f32.gmra.mxu0 %v7297
        %v7420 = vpop.f32.mrf.mxu0
        %v7421 = vadd.f32 0.0, %v7420
        %7422 = vdwg.mxu0
        %7423 = vmatpush.msra.mxu0 %v7362
        %7424 = vmatpush.msra.mxu0 %v7358
        %7425 = vmatpush.msra.mxu0 %v7354
        %7426 = vmatpush.msra.mxu0 %v7350
        %7427 = vmatpush.msra.mxu0 %v7346
        %7428 = vmatpush.msra.mxu0 %v7342
        %7429 = vmatpush.msra.mxu0 %v7338
        %7430 = vmatpush.msra.mxu0 %v7334
        %7431 = vmatpush.msra.mxu0 %v7330
        %7432 = vmatpush.msra.mxu0 %v7326
        %7433 = vmatpush.msra.mxu0 %v7322
        %7434 = vmatpush.msra.mxu0 %v7318
        %7435 = vmatpush.msra.mxu0 %v7314
        %7436 = vmatpush.msra.mxu0 %v7310
        %7437 = vmatpush.msra.mxu0 %v7306
        %7438 = vmatpush.msra.mxu0 %v7302
        %7439 = vmatmul.f32.gmra.mxu0 %v7297
        %v7440 = vpop.f32.mrf.mxu0
        %v7441 = vadd.f32 0.0, %v7440
        %7442 = vdwg.mxu0
        %v7443 = vadd.f32 %v7291, %v7381
        %v7444 = vadd.f32 %v7292, %v7401
        %v7445 = vadd.f32 %v7293, %v7421
        %v7446 = vadd.f32 %v7294, %v7441
        %s7447 = sadd.s32 %s5928, 10
        %s7448 = scalar_lea.vmem [#allocation2], %s7447
        %v7449 = vld [vmem:[%s7448] ss:$52 sm:$0xff]
        %s7450 = scalar_lea.vmem %s552, 5120 [#allocation8]
        %v7451 = vld [vmem:[%s7450] sm:$0xff]
        %v7452 = vld [vmem:[%s7450 + $0x8] sm:$0xff]
        %v7453 = vld [vmem:[%s7450 + $0x10] sm:$0xff]
        %v7454 = vld [vmem:[%s7450 + $0x18] sm:$0xff]
        %v7455 = vld [vmem:[%s7450 + $0x20] sm:$0xff]
        %v7456 = vld [vmem:[%s7450 + $0x28] sm:$0xff]
        %v7457 = vld [vmem:[%s7450 + $0x30] sm:$0xff]
        %v7458 = vld [vmem:[%s7450 + $0x38] sm:$0xff]
        %v7459 = vld [vmem:[%s7450 + $0x40] sm:$0xff]
        %v7460 = vld [vmem:[%s7450 + $0x48] sm:$0xff]
        %v7461 = vld [vmem:[%s7450 + $0x50] sm:$0xff]
        %v7462 = vld [vmem:[%s7450 + $0x58] sm:$0xff]
        %v7463 = vld [vmem:[%s7450 + $0x60] sm:$0xff]
        %v7464 = vld [vmem:[%s7450 + $0x68] sm:$0xff]
        %v7465 = vld [vmem:[%s7450 + $0x70] sm:$0xff]
        %v7466 = vld [vmem:[%s7450 + $0x78] sm:$0xff]
        %v7467 = vld [vmem:[%s7450 + $0x80] sm:$0xff]
        %v7468 = vld [vmem:[%s7450 + $0x88] sm:$0xff]
        %v7469 = vld [vmem:[%s7450 + $0x90] sm:$0xff]
        %v7470 = vld [vmem:[%s7450 + $0x98] sm:$0xff]
        %v7471 = vld [vmem:[%s7450 + $0xa0] sm:$0xff]
        %v7472 = vld [vmem:[%s7450 + $0xa8] sm:$0xff]
        %v7473 = vld [vmem:[%s7450 + $0xb0] sm:$0xff]
        %v7474 = vld [vmem:[%s7450 + $0xb8] sm:$0xff]
        %v7475 = vld [vmem:[%s7450 + $0xc0] sm:$0xff]
        %v7476 = vld [vmem:[%s7450 + $0xc8] sm:$0xff]
        %v7477 = vld [vmem:[%s7450 + $0xd0] sm:$0xff]
        %v7478 = vld [vmem:[%s7450 + $0xd8] sm:$0xff]
        %v7479 = vld [vmem:[%s7450 + $0xe0] sm:$0xff]
        %v7480 = vld [vmem:[%s7450 + $0xe8] sm:$0xff]
        %v7481 = vld [vmem:[%s7450 + $0xf0] sm:$0xff]
        %v7482 = vld [vmem:[%s7450 + $0xf8] sm:$0xff]
        %v7483 = vld [vmem:[%s7450 + $0x100] sm:$0xff]
        %v7484 = vld [vmem:[%s7450 + $0x108] sm:$0xff]
        %v7485 = vld [vmem:[%s7450 + $0x110] sm:$0xff]
        %v7486 = vld [vmem:[%s7450 + $0x118] sm:$0xff]
        %v7487 = vld [vmem:[%s7450 + $0x120] sm:$0xff]
        %v7488 = vld [vmem:[%s7450 + $0x128] sm:$0xff]
        %v7489 = vld [vmem:[%s7450 + $0x130] sm:$0xff]
        %v7490 = vld [vmem:[%s7450 + $0x138] sm:$0xff]
        %v7491 = vld [vmem:[%s7450 + $0x140] sm:$0xff]
        %v7492 = vld [vmem:[%s7450 + $0x148] sm:$0xff]
        %v7493 = vld [vmem:[%s7450 + $0x150] sm:$0xff]
        %v7494 = vld [vmem:[%s7450 + $0x158] sm:$0xff]
        %v7495 = vld [vmem:[%s7450 + $0x160] sm:$0xff]
        %v7496 = vld [vmem:[%s7450 + $0x168] sm:$0xff]
        %v7497 = vld [vmem:[%s7450 + $0x170] sm:$0xff]
        %v7498 = vld [vmem:[%s7450 + $0x178] sm:$0xff]
        %v7499 = vld [vmem:[%s7450 + $0x180] sm:$0xff]
        %v7500 = vld [vmem:[%s7450 + $0x188] sm:$0xff]
        %v7501 = vld [vmem:[%s7450 + $0x190] sm:$0xff]
        %v7502 = vld [vmem:[%s7450 + $0x198] sm:$0xff]
        %v7503 = vld [vmem:[%s7450 + $0x1a0] sm:$0xff]
        %v7504 = vld [vmem:[%s7450 + $0x1a8] sm:$0xff]
        %v7505 = vld [vmem:[%s7450 + $0x1b0] sm:$0xff]
        %v7506 = vld [vmem:[%s7450 + $0x1b8] sm:$0xff]
        %v7507 = vld [vmem:[%s7450 + $0x1c0] sm:$0xff]
        %v7508 = vld [vmem:[%s7450 + $0x1c8] sm:$0xff]
        %v7509 = vld [vmem:[%s7450 + $0x1d0] sm:$0xff]
        %v7510 = vld [vmem:[%s7450 + $0x1d8] sm:$0xff]
        %v7511 = vld [vmem:[%s7450 + $0x1e0] sm:$0xff]
        %v7512 = vld [vmem:[%s7450 + $0x1e8] sm:$0xff]
        %v7513 = vld [vmem:[%s7450 + $0x1f0] sm:$0xff]
        %v7514 = vld [vmem:[%s7450 + $0x1f8] sm:$0xff]
        %7515 = vmatpush.msra.mxu0 %v7511
        %7516 = vmatpush.msra.mxu0 %v7507
        %7517 = vmatpush.msra.mxu0 %v7503
        %7518 = vmatpush.msra.mxu0 %v7499
        %7519 = vmatpush.msra.mxu0 %v7495
        %7520 = vmatpush.msra.mxu0 %v7491
        %7521 = vmatpush.msra.mxu0 %v7487
        %7522 = vmatpush.msra.mxu0 %v7483
        %7523 = vmatpush.msra.mxu0 %v7479
        %7524 = vmatpush.msra.mxu0 %v7475
        %7525 = vmatpush.msra.mxu0 %v7471
        %7526 = vmatpush.msra.mxu0 %v7467
        %7527 = vmatpush.msra.mxu0 %v7463
        %7528 = vmatpush.msra.mxu0 %v7459
        %7529 = vmatpush.msra.mxu0 %v7455
        %7530 = vmatpush.msra.mxu0 %v7451
        %7531 = vmatmul.f32.gmra.mxu0 %v7449
        %v7532 = vpop.f32.mrf.mxu0
        %v7533 = vadd.f32 0.0, %v7532
        %7534 = vdwg.mxu0
        %7535 = vmatpush.msra.mxu0 %v7512
        %7536 = vmatpush.msra.mxu0 %v7508
        %7537 = vmatpush.msra.mxu0 %v7504
        %7538 = vmatpush.msra.mxu0 %v7500
        %7539 = vmatpush.msra.mxu0 %v7496
        %7540 = vmatpush.msra.mxu0 %v7492
        %7541 = vmatpush.msra.mxu0 %v7488
        %7542 = vmatpush.msra.mxu0 %v7484
        %7543 = vmatpush.msra.mxu0 %v7480
        %7544 = vmatpush.msra.mxu0 %v7476
        %7545 = vmatpush.msra.mxu0 %v7472
        %7546 = vmatpush.msra.mxu0 %v7468
        %7547 = vmatpush.msra.mxu0 %v7464
        %7548 = vmatpush.msra.mxu0 %v7460
        %7549 = vmatpush.msra.mxu0 %v7456
        %7550 = vmatpush.msra.mxu0 %v7452
        %7551 = vmatmul.f32.gmra.mxu0 %v7449
        %v7552 = vpop.f32.mrf.mxu0
        %v7553 = vadd.f32 0.0, %v7552
        %7554 = vdwg.mxu0
        %7555 = vmatpush.msra.mxu0 %v7513
        %7556 = vmatpush.msra.mxu0 %v7509
        %7557 = vmatpush.msra.mxu0 %v7505
        %7558 = vmatpush.msra.mxu0 %v7501
        %7559 = vmatpush.msra.mxu0 %v7497
        %7560 = vmatpush.msra.mxu0 %v7493
        %7561 = vmatpush.msra.mxu0 %v7489
        %7562 = vmatpush.msra.mxu0 %v7485
        %7563 = vmatpush.msra.mxu0 %v7481
        %7564 = vmatpush.msra.mxu0 %v7477
        %7565 = vmatpush.msra.mxu0 %v7473
        %7566 = vmatpush.msra.mxu0 %v7469
        %7567 = vmatpush.msra.mxu0 %v7465
        %7568 = vmatpush.msra.mxu0 %v7461
        %7569 = vmatpush.msra.mxu0 %v7457
        %7570 = vmatpush.msra.mxu0 %v7453
        %7571 = vmatmul.f32.gmra.mxu0 %v7449
        %v7572 = vpop.f32.mrf.mxu0
        %v7573 = vadd.f32 0.0, %v7572
        %7574 = vdwg.mxu0
        %7575 = vmatpush.msra.mxu0 %v7514
        %7576 = vmatpush.msra.mxu0 %v7510
        %7577 = vmatpush.msra.mxu0 %v7506
        %7578 = vmatpush.msra.mxu0 %v7502
        %7579 = vmatpush.msra.mxu0 %v7498
        %7580 = vmatpush.msra.mxu0 %v7494
        %7581 = vmatpush.msra.mxu0 %v7490
        %7582 = vmatpush.msra.mxu0 %v7486
        %7583 = vmatpush.msra.mxu0 %v7482
        %7584 = vmatpush.msra.mxu0 %v7478
        %7585 = vmatpush.msra.mxu0 %v7474
        %7586 = vmatpush.msra.mxu0 %v7470
        %7587 = vmatpush.msra.mxu0 %v7466
        %7588 = vmatpush.msra.mxu0 %v7462
        %7589 = vmatpush.msra.mxu0 %v7458
        %7590 = vmatpush.msra.mxu0 %v7454
        %7591 = vmatmul.f32.gmra.mxu0 %v7449
        %v7592 = vpop.f32.mrf.mxu0
        %v7593 = vadd.f32 0.0, %v7592
        %7594 = vdwg.mxu0
        %v7595 = vadd.f32 %v7443, %v7533
        %v7596 = vadd.f32 %v7444, %v7553
        %v7597 = vadd.f32 %v7445, %v7573
        %v7598 = vadd.f32 %v7446, %v7593
        %s7599 = sadd.s32 %s5928, 11
        %s7600 = scalar_lea.vmem [#allocation2], %s7599
        %v7601 = vld [vmem:[%s7600] ss:$52 sm:$0xff]
        %s7602 = scalar_lea.vmem %s552, 5632 [#allocation8]
        %v7603 = vld [vmem:[%s7602] sm:$0xff]
        %v7604 = vld [vmem:[%s7602 + $0x8] sm:$0xff]
        %v7605 = vld [vmem:[%s7602 + $0x10] sm:$0xff]
        %v7606 = vld [vmem:[%s7602 + $0x18] sm:$0xff]
        %v7607 = vld [vmem:[%s7602 + $0x20] sm:$0xff]
        %v7608 = vld [vmem:[%s7602 + $0x28] sm:$0xff]
        %v7609 = vld [vmem:[%s7602 + $0x30] sm:$0xff]
        %v7610 = vld [vmem:[%s7602 + $0x38] sm:$0xff]
        %v7611 = vld [vmem:[%s7602 + $0x40] sm:$0xff]
        %v7612 = vld [vmem:[%s7602 + $0x48] sm:$0xff]
        %v7613 = vld [vmem:[%s7602 + $0x50] sm:$0xff]
        %v7614 = vld [vmem:[%s7602 + $0x58] sm:$0xff]
        %v7615 = vld [vmem:[%s7602 + $0x60] sm:$0xff]
        %v7616 = vld [vmem:[%s7602 + $0x68] sm:$0xff]
        %v7617 = vld [vmem:[%s7602 + $0x70] sm:$0xff]
        %v7618 = vld [vmem:[%s7602 + $0x78] sm:$0xff]
        %v7619 = vld [vmem:[%s7602 + $0x80] sm:$0xff]
        %v7620 = vld [vmem:[%s7602 + $0x88] sm:$0xff]
        %v7621 = vld [vmem:[%s7602 + $0x90] sm:$0xff]
        %v7622 = vld [vmem:[%s7602 + $0x98] sm:$0xff]
        %v7623 = vld [vmem:[%s7602 + $0xa0] sm:$0xff]
        %v7624 = vld [vmem:[%s7602 + $0xa8] sm:$0xff]
        %v7625 = vld [vmem:[%s7602 + $0xb0] sm:$0xff]
        %v7626 = vld [vmem:[%s7602 + $0xb8] sm:$0xff]
        %v7627 = vld [vmem:[%s7602 + $0xc0] sm:$0xff]
        %v7628 = vld [vmem:[%s7602 + $0xc8] sm:$0xff]
        %v7629 = vld [vmem:[%s7602 + $0xd0] sm:$0xff]
        %v7630 = vld [vmem:[%s7602 + $0xd8] sm:$0xff]
        %v7631 = vld [vmem:[%s7602 + $0xe0] sm:$0xff]
        %v7632 = vld [vmem:[%s7602 + $0xe8] sm:$0xff]
        %v7633 = vld [vmem:[%s7602 + $0xf0] sm:$0xff]
        %v7634 = vld [vmem:[%s7602 + $0xf8] sm:$0xff]
        %v7635 = vld [vmem:[%s7602 + $0x100] sm:$0xff]
        %v7636 = vld [vmem:[%s7602 + $0x108] sm:$0xff]
        %v7637 = vld [vmem:[%s7602 + $0x110] sm:$0xff]
        %v7638 = vld [vmem:[%s7602 + $0x118] sm:$0xff]
        %v7639 = vld [vmem:[%s7602 + $0x120] sm:$0xff]
        %v7640 = vld [vmem:[%s7602 + $0x128] sm:$0xff]
        %v7641 = vld [vmem:[%s7602 + $0x130] sm:$0xff]
        %v7642 = vld [vmem:[%s7602 + $0x138] sm:$0xff]
        %v7643 = vld [vmem:[%s7602 + $0x140] sm:$0xff]
        %v7644 = vld [vmem:[%s7602 + $0x148] sm:$0xff]
        %v7645 = vld [vmem:[%s7602 + $0x150] sm:$0xff]
        %v7646 = vld [vmem:[%s7602 + $0x158] sm:$0xff]
        %v7647 = vld [vmem:[%s7602 + $0x160] sm:$0xff]
        %v7648 = vld [vmem:[%s7602 + $0x168] sm:$0xff]
        %v7649 = vld [vmem:[%s7602 + $0x170] sm:$0xff]
        %v7650 = vld [vmem:[%s7602 + $0x178] sm:$0xff]
        %v7651 = vld [vmem:[%s7602 + $0x180] sm:$0xff]
        %v7652 = vld [vmem:[%s7602 + $0x188] sm:$0xff]
        %v7653 = vld [vmem:[%s7602 + $0x190] sm:$0xff]
        %v7654 = vld [vmem:[%s7602 + $0x198] sm:$0xff]
        %v7655 = vld [vmem:[%s7602 + $0x1a0] sm:$0xff]
        %v7656 = vld [vmem:[%s7602 + $0x1a8] sm:$0xff]
        %v7657 = vld [vmem:[%s7602 + $0x1b0] sm:$0xff]
        %v7658 = vld [vmem:[%s7602 + $0x1b8] sm:$0xff]
        %v7659 = vld [vmem:[%s7602 + $0x1c0] sm:$0xff]
        %v7660 = vld [vmem:[%s7602 + $0x1c8] sm:$0xff]
        %v7661 = vld [vmem:[%s7602 + $0x1d0] sm:$0xff]
        %v7662 = vld [vmem:[%s7602 + $0x1d8] sm:$0xff]
        %v7663 = vld [vmem:[%s7602 + $0x1e0] sm:$0xff]
        %v7664 = vld [vmem:[%s7602 + $0x1e8] sm:$0xff]
        %v7665 = vld [vmem:[%s7602 + $0x1f0] sm:$0xff]
        %v7666 = vld [vmem:[%s7602 + $0x1f8] sm:$0xff]
        %7667 = vmatpush.msra.mxu0 %v7663
        %7668 = vmatpush.msra.mxu0 %v7659
        %7669 = vmatpush.msra.mxu0 %v7655
        %7670 = vmatpush.msra.mxu0 %v7651
        %7671 = vmatpush.msra.mxu0 %v7647
        %7672 = vmatpush.msra.mxu0 %v7643
        %7673 = vmatpush.msra.mxu0 %v7639
        %7674 = vmatpush.msra.mxu0 %v7635
        %7675 = vmatpush.msra.mxu0 %v7631
        %7676 = vmatpush.msra.mxu0 %v7627
        %7677 = vmatpush.msra.mxu0 %v7623
        %7678 = vmatpush.msra.mxu0 %v7619
        %7679 = vmatpush.msra.mxu0 %v7615
        %7680 = vmatpush.msra.mxu0 %v7611
        %7681 = vmatpush.msra.mxu0 %v7607
        %7682 = vmatpush.msra.mxu0 %v7603
        %7683 = vmatmul.f32.gmra.mxu0 %v7601
        %v7684 = vpop.f32.mrf.mxu0
        %v7685 = vadd.f32 0.0, %v7684
        %7686 = vdwg.mxu0
        %7687 = vmatpush.msra.mxu0 %v7664
        %7688 = vmatpush.msra.mxu0 %v7660
        %7689 = vmatpush.msra.mxu0 %v7656
        %7690 = vmatpush.msra.mxu0 %v7652
        %7691 = vmatpush.msra.mxu0 %v7648
        %7692 = vmatpush.msra.mxu0 %v7644
        %7693 = vmatpush.msra.mxu0 %v7640
        %7694 = vmatpush.msra.mxu0 %v7636
        %7695 = vmatpush.msra.mxu0 %v7632
        %7696 = vmatpush.msra.mxu0 %v7628
        %7697 = vmatpush.msra.mxu0 %v7624
        %7698 = vmatpush.msra.mxu0 %v7620
        %7699 = vmatpush.msra.mxu0 %v7616
        %7700 = vmatpush.msra.mxu0 %v7612
        %7701 = vmatpush.msra.mxu0 %v7608
        %7702 = vmatpush.msra.mxu0 %v7604
        %7703 = vmatmul.f32.gmra.mxu0 %v7601
        %v7704 = vpop.f32.mrf.mxu0
        %v7705 = vadd.f32 0.0, %v7704
        %7706 = vdwg.mxu0
        %7707 = vmatpush.msra.mxu0 %v7665
        %7708 = vmatpush.msra.mxu0 %v7661
        %7709 = vmatpush.msra.mxu0 %v7657
        %7710 = vmatpush.msra.mxu0 %v7653
        %7711 = vmatpush.msra.mxu0 %v7649
        %7712 = vmatpush.msra.mxu0 %v7645
        %7713 = vmatpush.msra.mxu0 %v7641
        %7714 = vmatpush.msra.mxu0 %v7637
        %7715 = vmatpush.msra.mxu0 %v7633
        %7716 = vmatpush.msra.mxu0 %v7629
        %7717 = vmatpush.msra.mxu0 %v7625
        %7718 = vmatpush.msra.mxu0 %v7621
        %7719 = vmatpush.msra.mxu0 %v7617
        %7720 = vmatpush.msra.mxu0 %v7613
        %7721 = vmatpush.msra.mxu0 %v7609
        %7722 = vmatpush.msra.mxu0 %v7605
        %7723 = vmatmul.f32.gmra.mxu0 %v7601
        %v7724 = vpop.f32.mrf.mxu0
        %v7725 = vadd.f32 0.0, %v7724
        %7726 = vdwg.mxu0
        %7727 = vmatpush.msra.mxu0 %v7666
        %7728 = vmatpush.msra.mxu0 %v7662
        %7729 = vmatpush.msra.mxu0 %v7658
        %7730 = vmatpush.msra.mxu0 %v7654
        %7731 = vmatpush.msra.mxu0 %v7650
        %7732 = vmatpush.msra.mxu0 %v7646
        %7733 = vmatpush.msra.mxu0 %v7642
        %7734 = vmatpush.msra.mxu0 %v7638
        %7735 = vmatpush.msra.mxu0 %v7634
        %7736 = vmatpush.msra.mxu0 %v7630
        %7737 = vmatpush.msra.mxu0 %v7626
        %7738 = vmatpush.msra.mxu0 %v7622
        %7739 = vmatpush.msra.mxu0 %v7618
        %7740 = vmatpush.msra.mxu0 %v7614
        %7741 = vmatpush.msra.mxu0 %v7610
        %7742 = vmatpush.msra.mxu0 %v7606
        %7743 = vmatmul.f32.gmra.mxu0 %v7601
        %v7744 = vpop.f32.mrf.mxu0
        %v7745 = vadd.f32 0.0, %v7744
        %7746 = vdwg.mxu0
        %v7747 = vadd.f32 %v7595, %v7685
        %v7748 = vadd.f32 %v7596, %v7705
        %v7749 = vadd.f32 %v7597, %v7725
        %v7750 = vadd.f32 %v7598, %v7745
        %s7751 = sadd.s32 %s5928, 12
        %s7752 = scalar_lea.vmem [#allocation2], %s7751
        %v7753 = vld [vmem:[%s7752] ss:$52 sm:$0xff]
        %s7754 = scalar_lea.vmem %s552, 6144 [#allocation8]
        %v7755 = vld [vmem:[%s7754] sm:$0xff]
        %v7756 = vld [vmem:[%s7754 + $0x8] sm:$0xff]
        %v7757 = vld [vmem:[%s7754 + $0x10] sm:$0xff]
        %v7758 = vld [vmem:[%s7754 + $0x18] sm:$0xff]
        %v7759 = vld [vmem:[%s7754 + $0x20] sm:$0xff]
        %v7760 = vld [vmem:[%s7754 + $0x28] sm:$0xff]
        %v7761 = vld [vmem:[%s7754 + $0x30] sm:$0xff]
        %v7762 = vld [vmem:[%s7754 + $0x38] sm:$0xff]
        %v7763 = vld [vmem:[%s7754 + $0x40] sm:$0xff]
        %v7764 = vld [vmem:[%s7754 + $0x48] sm:$0xff]
        %v7765 = vld [vmem:[%s7754 + $0x50] sm:$0xff]
        %v7766 = vld [vmem:[%s7754 + $0x58] sm:$0xff]
        %v7767 = vld [vmem:[%s7754 + $0x60] sm:$0xff]
        %v7768 = vld [vmem:[%s7754 + $0x68] sm:$0xff]
        %v7769 = vld [vmem:[%s7754 + $0x70] sm:$0xff]
        %v7770 = vld [vmem:[%s7754 + $0x78] sm:$0xff]
        %v7771 = vld [vmem:[%s7754 + $0x80] sm:$0xff]
        %v7772 = vld [vmem:[%s7754 + $0x88] sm:$0xff]
        %v7773 = vld [vmem:[%s7754 + $0x90] sm:$0xff]
        %v7774 = vld [vmem:[%s7754 + $0x98] sm:$0xff]
        %v7775 = vld [vmem:[%s7754 + $0xa0] sm:$0xff]
        %v7776 = vld [vmem:[%s7754 + $0xa8] sm:$0xff]
        %v7777 = vld [vmem:[%s7754 + $0xb0] sm:$0xff]
        %v7778 = vld [vmem:[%s7754 + $0xb8] sm:$0xff]
        %v7779 = vld [vmem:[%s7754 + $0xc0] sm:$0xff]
        %v7780 = vld [vmem:[%s7754 + $0xc8] sm:$0xff]
        %v7781 = vld [vmem:[%s7754 + $0xd0] sm:$0xff]
        %v7782 = vld [vmem:[%s7754 + $0xd8] sm:$0xff]
        %v7783 = vld [vmem:[%s7754 + $0xe0] sm:$0xff]
        %v7784 = vld [vmem:[%s7754 + $0xe8] sm:$0xff]
        %v7785 = vld [vmem:[%s7754 + $0xf0] sm:$0xff]
        %v7786 = vld [vmem:[%s7754 + $0xf8] sm:$0xff]
        %v7787 = vld [vmem:[%s7754 + $0x100] sm:$0xff]
        %v7788 = vld [vmem:[%s7754 + $0x108] sm:$0xff]
        %v7789 = vld [vmem:[%s7754 + $0x110] sm:$0xff]
        %v7790 = vld [vmem:[%s7754 + $0x118] sm:$0xff]
        %v7791 = vld [vmem:[%s7754 + $0x120] sm:$0xff]
        %v7792 = vld [vmem:[%s7754 + $0x128] sm:$0xff]
        %v7793 = vld [vmem:[%s7754 + $0x130] sm:$0xff]
        %v7794 = vld [vmem:[%s7754 + $0x138] sm:$0xff]
        %v7795 = vld [vmem:[%s7754 + $0x140] sm:$0xff]
        %v7796 = vld [vmem:[%s7754 + $0x148] sm:$0xff]
        %v7797 = vld [vmem:[%s7754 + $0x150] sm:$0xff]
        %v7798 = vld [vmem:[%s7754 + $0x158] sm:$0xff]
        %v7799 = vld [vmem:[%s7754 + $0x160] sm:$0xff]
        %v7800 = vld [vmem:[%s7754 + $0x168] sm:$0xff]
        %v7801 = vld [vmem:[%s7754 + $0x170] sm:$0xff]
        %v7802 = vld [vmem:[%s7754 + $0x178] sm:$0xff]
        %v7803 = vld [vmem:[%s7754 + $0x180] sm:$0xff]
        %v7804 = vld [vmem:[%s7754 + $0x188] sm:$0xff]
        %v7805 = vld [vmem:[%s7754 + $0x190] sm:$0xff]
        %v7806 = vld [vmem:[%s7754 + $0x198] sm:$0xff]
        %v7807 = vld [vmem:[%s7754 + $0x1a0] sm:$0xff]
        %v7808 = vld [vmem:[%s7754 + $0x1a8] sm:$0xff]
        %v7809 = vld [vmem:[%s7754 + $0x1b0] sm:$0xff]
        %v7810 = vld [vmem:[%s7754 + $0x1b8] sm:$0xff]
        %v7811 = vld [vmem:[%s7754 + $0x1c0] sm:$0xff]
        %v7812 = vld [vmem:[%s7754 + $0x1c8] sm:$0xff]
        %v7813 = vld [vmem:[%s7754 + $0x1d0] sm:$0xff]
        %v7814 = vld [vmem:[%s7754 + $0x1d8] sm:$0xff]
        %v7815 = vld [vmem:[%s7754 + $0x1e0] sm:$0xff]
        %v7816 = vld [vmem:[%s7754 + $0x1e8] sm:$0xff]
        %v7817 = vld [vmem:[%s7754 + $0x1f0] sm:$0xff]
        %v7818 = vld [vmem:[%s7754 + $0x1f8] sm:$0xff]
        %7819 = vmatpush.msra.mxu0 %v7815
        %7820 = vmatpush.msra.mxu0 %v7811
        %7821 = vmatpush.msra.mxu0 %v7807
        %7822 = vmatpush.msra.mxu0 %v7803
        %7823 = vmatpush.msra.mxu0 %v7799
        %7824 = vmatpush.msra.mxu0 %v7795
        %7825 = vmatpush.msra.mxu0 %v7791
        %7826 = vmatpush.msra.mxu0 %v7787
        %7827 = vmatpush.msra.mxu0 %v7783
        %7828 = vmatpush.msra.mxu0 %v7779
        %7829 = vmatpush.msra.mxu0 %v7775
        %7830 = vmatpush.msra.mxu0 %v7771
        %7831 = vmatpush.msra.mxu0 %v7767
        %7832 = vmatpush.msra.mxu0 %v7763
        %7833 = vmatpush.msra.mxu0 %v7759
        %7834 = vmatpush.msra.mxu0 %v7755
        %7835 = vmatmul.f32.gmra.mxu0 %v7753
        %v7836 = vpop.f32.mrf.mxu0
        %v7837 = vadd.f32 0.0, %v7836
        %7838 = vdwg.mxu0
        %7839 = vmatpush.msra.mxu0 %v7816
        %7840 = vmatpush.msra.mxu0 %v7812
        %7841 = vmatpush.msra.mxu0 %v7808
        %7842 = vmatpush.msra.mxu0 %v7804
        %7843 = vmatpush.msra.mxu0 %v7800
        %7844 = vmatpush.msra.mxu0 %v7796
        %7845 = vmatpush.msra.mxu0 %v7792
        %7846 = vmatpush.msra.mxu0 %v7788
        %7847 = vmatpush.msra.mxu0 %v7784
        %7848 = vmatpush.msra.mxu0 %v7780
        %7849 = vmatpush.msra.mxu0 %v7776
        %7850 = vmatpush.msra.mxu0 %v7772
        %7851 = vmatpush.msra.mxu0 %v7768
        %7852 = vmatpush.msra.mxu0 %v7764
        %7853 = vmatpush.msra.mxu0 %v7760
        %7854 = vmatpush.msra.mxu0 %v7756
        %7855 = vmatmul.f32.gmra.mxu0 %v7753
        %v7856 = vpop.f32.mrf.mxu0
        %v7857 = vadd.f32 0.0, %v7856
        %7858 = vdwg.mxu0
        %7859 = vmatpush.msra.mxu0 %v7817
        %7860 = vmatpush.msra.mxu0 %v7813
        %7861 = vmatpush.msra.mxu0 %v7809
        %7862 = vmatpush.msra.mxu0 %v7805
        %7863 = vmatpush.msra.mxu0 %v7801
        %7864 = vmatpush.msra.mxu0 %v7797
        %7865 = vmatpush.msra.mxu0 %v7793
        %7866 = vmatpush.msra.mxu0 %v7789
        %7867 = vmatpush.msra.mxu0 %v7785
        %7868 = vmatpush.msra.mxu0 %v7781
        %7869 = vmatpush.msra.mxu0 %v7777
        %7870 = vmatpush.msra.mxu0 %v7773
        %7871 = vmatpush.msra.mxu0 %v7769
        %7872 = vmatpush.msra.mxu0 %v7765
        %7873 = vmatpush.msra.mxu0 %v7761
        %7874 = vmatpush.msra.mxu0 %v7757
        %7875 = vmatmul.f32.gmra.mxu0 %v7753
        %v7876 = vpop.f32.mrf.mxu0
        %v7877 = vadd.f32 0.0, %v7876
        %7878 = vdwg.mxu0
        %7879 = vmatpush.msra.mxu0 %v7818
        %7880 = vmatpush.msra.mxu0 %v7814
        %7881 = vmatpush.msra.mxu0 %v7810
        %7882 = vmatpush.msra.mxu0 %v7806
        %7883 = vmatpush.msra.mxu0 %v7802
        %7884 = vmatpush.msra.mxu0 %v7798
        %7885 = vmatpush.msra.mxu0 %v7794
        %7886 = vmatpush.msra.mxu0 %v7790
        %7887 = vmatpush.msra.mxu0 %v7786
        %7888 = vmatpush.msra.mxu0 %v7782
        %7889 = vmatpush.msra.mxu0 %v7778
        %7890 = vmatpush.msra.mxu0 %v7774
        %7891 = vmatpush.msra.mxu0 %v7770
        %7892 = vmatpush.msra.mxu0 %v7766
        %7893 = vmatpush.msra.mxu0 %v7762
        %7894 = vmatpush.msra.mxu0 %v7758
        %7895 = vmatmul.f32.gmra.mxu0 %v7753
        %v7896 = vpop.f32.mrf.mxu0
        %v7897 = vadd.f32 0.0, %v7896
        %7898 = vdwg.mxu0
        %v7899 = vadd.f32 %v7747, %v7837
        %v7900 = vadd.f32 %v7748, %v7857
        %v7901 = vadd.f32 %v7749, %v7877
        %v7902 = vadd.f32 %v7750, %v7897
        %7903 = vst [vmem:[#allocation3] sm:$0xff] %v7899
        %7904 = vst [vmem:[#allocation3 + $0x8] sm:$0xff] %v7900
        %7905 = vst [vmem:[#allocation3 + $0x10] sm:$0xff] %v7901
        %7906 = vst [vmem:[#allocation3 + $0x18] sm:$0xff] %v7902
        %p7907 = scmp.eq.s32.totalorder %s31, 3
        // Predicated region
        $region121: #{pdcnn_forward.1} parent=79 // pred_check
          %p7908 = pneg %p7907
        $region122: #{pdcnn_forward.1} parent=79 // pred_check_branch
          %7910 = sbr.rel (%p7908) target = $region124
        $region123: #{pdcnn_forward.1} parent=79 // pred_region
          %v7911 = vld [vmem:[#allocation3] sm:$0xff]
          %v7912 = vld [vmem:[#allocation3 + $0x8] sm:$0xff]
          %v7913 = vld [vmem:[#allocation3 + $0x10] sm:$0xff]
          %v7914 = vld [vmem:[#allocation3 + $0x18] sm:$0xff]
          %v7915 = vld [vmem:[#allocation9] sm:$0xf]
          %v7917 = vperm.slane %v7915, 0
          %v7918 = vperm.slane %v7915, 1
          %v7919 = vperm.slane %v7915, 2
          %v7920 = vperm.slane %v7915, 3
          %v7925 = vadd.f32 %v7911, %v7917
          %v7926 = vadd.f32 %v7912, %v7918
          %v7927 = vadd.f32 %v7913, %v7919
          %v7928 = vadd.f32 %v7914, %v7920
          %v7929 = vld [vmem:[#allocation10] sm:$0xff]
          %v7930 = vld [vmem:[#allocation10 + $0x8] sm:$0xff]
          %v7931 = vld [vmem:[#allocation10 + $0x10] sm:$0xff]
          %v7932 = vld [vmem:[#allocation10 + $0x18] sm:$0xff]
          %v7933 = vld [vmem:[#allocation10 + $0x20] sm:$0xff]
          %v7934 = vld [vmem:[#allocation10 + $0x28] sm:$0xff]
          %v7935 = vld [vmem:[#allocation10 + $0x30] sm:$0xff]
          %v7936 = vld [vmem:[#allocation10 + $0x38] sm:$0xff]
          %v7937 = vld [vmem:[#allocation10 + $0x40] sm:$0xff]
          %v7938 = vld [vmem:[#allocation10 + $0x48] sm:$0xff]
          %v7939 = vld [vmem:[#allocation10 + $0x50] sm:$0xff]
          %v7940 = vld [vmem:[#allocation10 + $0x58] sm:$0xff]
          %v7941 = vld [vmem:[#allocation10 + $0x60] sm:$0xff]
          %v7942 = vld [vmem:[#allocation10 + $0x68] sm:$0xff]
          %v7943 = vld [vmem:[#allocation10 + $0x70] sm:$0xff]
          %v7944 = vld [vmem:[#allocation10 + $0x78] sm:$0xff]
          %v7945 = vld [vmem:[#allocation10 + $0x80] sm:$0xff]
          %v7946 = vld [vmem:[#allocation10 + $0x88] sm:$0xff]
          %v7947 = vld [vmem:[#allocation10 + $0x90] sm:$0xff]
          %v7948 = vld [vmem:[#allocation10 + $0x98] sm:$0xff]
          %v7949 = vld [vmem:[#allocation10 + $0xa0] sm:$0xff]
          %v7950 = vld [vmem:[#allocation10 + $0xa8] sm:$0xff]
          %v7951 = vld [vmem:[#allocation10 + $0xb0] sm:$0xff]
          %v7952 = vld [vmem:[#allocation10 + $0xb8] sm:$0xff]
          %v7953 = vld [vmem:[#allocation10 + $0xc0] sm:$0xff]
          %v7954 = vld [vmem:[#allocation10 + $0xc8] sm:$0xff]
          %v7955 = vld [vmem:[#allocation10 + $0xd0] sm:$0xff]
          %v7956 = vld [vmem:[#allocation10 + $0xd8] sm:$0xff]
          %v7957 = vld [vmem:[#allocation10 + $0xe0] sm:$0xff]
          %v7958 = vld [vmem:[#allocation10 + $0xe8] sm:$0xff]
          %v7959 = vld [vmem:[#allocation10 + $0xf0] sm:$0xff]
          %v7960 = vld [vmem:[#allocation10 + $0xf8] sm:$0xff]
          %v7961 = vld [vmem:[#allocation10 + $0x100] sm:$0xff]
          %v7962 = vld [vmem:[#allocation10 + $0x108] sm:$0xff]
          %v7963 = vld [vmem:[#allocation10 + $0x110] sm:$0xff]
          %v7964 = vld [vmem:[#allocation10 + $0x118] sm:$0xff]
          %v7965 = vld [vmem:[#allocation10 + $0x120] sm:$0xff]
          %v7966 = vld [vmem:[#allocation10 + $0x128] sm:$0xff]
          %v7967 = vld [vmem:[#allocation10 + $0x130] sm:$0xff]
          %v7968 = vld [vmem:[#allocation10 + $0x138] sm:$0xff]
          %v7969 = vld [vmem:[#allocation10 + $0x140] sm:$0xff]
          %v7970 = vld [vmem:[#allocation10 + $0x148] sm:$0xff]
          %v7971 = vld [vmem:[#allocation10 + $0x150] sm:$0xff]
          %v7972 = vld [vmem:[#allocation10 + $0x158] sm:$0xff]
          %v7973 = vld [vmem:[#allocation10 + $0x160] sm:$0xff]
          %v7974 = vld [vmem:[#allocation10 + $0x168] sm:$0xff]
          %v7975 = vld [vmem:[#allocation10 + $0x170] sm:$0xff]
          %v7976 = vld [vmem:[#allocation10 + $0x178] sm:$0xff]
          %v7977 = vld [vmem:[#allocation10 + $0x180] sm:$0xff]
          %v7978 = vld [vmem:[#allocation10 + $0x188] sm:$0xff]
          %v7979 = vld [vmem:[#allocation10 + $0x190] sm:$0xff]
          %v7980 = vld [vmem:[#allocation10 + $0x198] sm:$0xff]
          %v7981 = vld [vmem:[#allocation10 + $0x1a0] sm:$0xff]
          %v7982 = vld [vmem:[#allocation10 + $0x1a8] sm:$0xff]
          %v7983 = vld [vmem:[#allocation10 + $0x1b0] sm:$0xff]
          %v7984 = vld [vmem:[#allocation10 + $0x1b8] sm:$0xff]
          %v7985 = vld [vmem:[#allocation10 + $0x1c0] sm:$0xff]
          %v7986 = vld [vmem:[#allocation10 + $0x1c8] sm:$0xff]
          %v7987 = vld [vmem:[#allocation10 + $0x1d0] sm:$0xff]
          %v7988 = vld [vmem:[#allocation10 + $0x1d8] sm:$0xff]
          %v7989 = vld [vmem:[#allocation10 + $0x1e0] sm:$0xff]
          %v7990 = vld [vmem:[#allocation10 + $0x1e8] sm:$0xff]
          %v7991 = vld [vmem:[#allocation10 + $0x1f0] sm:$0xff]
          %v7992 = vld [vmem:[#allocation10 + $0x1f8] sm:$0xff]
          %v7993 = vld [vmem:[#allocation10 + $0x200] sm:$0xff]
          %v7994 = vld [vmem:[#allocation10 + $0x208] sm:$0xff]
          %v7995 = vld [vmem:[#allocation10 + $0x210] sm:$0xff]
          %v7996 = vld [vmem:[#allocation10 + $0x218] sm:$0xff]
          %v7997 = vld [vmem:[#allocation10 + $0x220] sm:$0xff]
          %v7998 = vld [vmem:[#allocation10 + $0x228] sm:$0xff]
          %v7999 = vld [vmem:[#allocation10 + $0x230] sm:$0xff]
          %v8000 = vld [vmem:[#allocation10 + $0x238] sm:$0xff]
          %v8001 = vld [vmem:[#allocation10 + $0x240] sm:$0xff]
          %v8002 = vld [vmem:[#allocation10 + $0x248] sm:$0xff]
          %v8003 = vld [vmem:[#allocation10 + $0x250] sm:$0xff]
          %v8004 = vld [vmem:[#allocation10 + $0x258] sm:$0xff]
          %v8005 = vld [vmem:[#allocation10 + $0x260] sm:$0xff]
          %v8006 = vld [vmem:[#allocation10 + $0x268] sm:$0xff]
          %v8007 = vld [vmem:[#allocation10 + $0x270] sm:$0xff]
          %v8008 = vld [vmem:[#allocation10 + $0x278] sm:$0xff]
          %v8009 = vld [vmem:[#allocation10 + $0x280] sm:$0xff]
          %v8010 = vld [vmem:[#allocation10 + $0x288] sm:$0xff]
          %v8011 = vld [vmem:[#allocation10 + $0x290] sm:$0xff]
          %v8012 = vld [vmem:[#allocation10 + $0x298] sm:$0xff]
          %v8013 = vld [vmem:[#allocation10 + $0x2a0] sm:$0xff]
          %v8014 = vld [vmem:[#allocation10 + $0x2a8] sm:$0xff]
          %v8015 = vld [vmem:[#allocation10 + $0x2b0] sm:$0xff]
          %v8016 = vld [vmem:[#allocation10 + $0x2b8] sm:$0xff]
          %v8017 = vld [vmem:[#allocation10 + $0x2c0] sm:$0xff]
          %v8018 = vld [vmem:[#allocation10 + $0x2c8] sm:$0xff]
          %v8019 = vld [vmem:[#allocation10 + $0x2d0] sm:$0xff]
          %v8020 = vld [vmem:[#allocation10 + $0x2d8] sm:$0xff]
          %v8021 = vld [vmem:[#allocation10 + $0x2e0] sm:$0xff]
          %v8022 = vld [vmem:[#allocation10 + $0x2e8] sm:$0xff]
          %v8023 = vld [vmem:[#allocation10 + $0x2f0] sm:$0xff]
          %v8024 = vld [vmem:[#allocation10 + $0x2f8] sm:$0xff]
          %v8025 = vld [vmem:[#allocation10 + $0x300] sm:$0xff]
          %v8026 = vld [vmem:[#allocation10 + $0x308] sm:$0xff]
          %v8027 = vld [vmem:[#allocation10 + $0x310] sm:$0xff]
          %v8028 = vld [vmem:[#allocation10 + $0x318] sm:$0xff]
          %v8029 = vld [vmem:[#allocation10 + $0x320] sm:$0xff]
          %v8030 = vld [vmem:[#allocation10 + $0x328] sm:$0xff]
          %v8031 = vld [vmem:[#allocation10 + $0x330] sm:$0xff]
          %v8032 = vld [vmem:[#allocation10 + $0x338] sm:$0xff]
          %v8033 = vld [vmem:[#allocation10 + $0x340] sm:$0xff]
          %v8034 = vld [vmem:[#allocation10 + $0x348] sm:$0xff]
          %v8035 = vld [vmem:[#allocation10 + $0x350] sm:$0xff]
          %v8036 = vld [vmem:[#allocation10 + $0x358] sm:$0xff]
          %v8037 = vld [vmem:[#allocation10 + $0x360] sm:$0xff]
          %v8038 = vld [vmem:[#allocation10 + $0x368] sm:$0xff]
          %v8039 = vld [vmem:[#allocation10 + $0x370] sm:$0xff]
          %v8040 = vld [vmem:[#allocation10 + $0x378] sm:$0xff]
          %v8041 = vld [vmem:[#allocation10 + $0x380] sm:$0xff]
          %v8042 = vld [vmem:[#allocation10 + $0x388] sm:$0xff]
          %v8043 = vld [vmem:[#allocation10 + $0x390] sm:$0xff]
          %v8044 = vld [vmem:[#allocation10 + $0x398] sm:$0xff]
          %v8045 = vld [vmem:[#allocation10 + $0x3a0] sm:$0xff]
          %v8046 = vld [vmem:[#allocation10 + $0x3a8] sm:$0xff]
          %v8047 = vld [vmem:[#allocation10 + $0x3b0] sm:$0xff]
          %v8048 = vld [vmem:[#allocation10 + $0x3b8] sm:$0xff]
          %v8049 = vld [vmem:[#allocation10 + $0x3c0] sm:$0xff]
          %v8050 = vld [vmem:[#allocation10 + $0x3c8] sm:$0xff]
          %v8051 = vld [vmem:[#allocation10 + $0x3d0] sm:$0xff]
          %v8052 = vld [vmem:[#allocation10 + $0x3d8] sm:$0xff]
          %v8053 = vld [vmem:[#allocation10 + $0x3e0] sm:$0xff]
          %v8054 = vld [vmem:[#allocation10 + $0x3e8] sm:$0xff]
          %v8055 = vld [vmem:[#allocation10 + $0x3f0] sm:$0xff]
          %v8056 = vld [vmem:[#allocation10 + $0x3f8] sm:$0xff]
          %v8057 = vld [vmem:[#allocation12] sm:$0x3]
          %v8059 = vperm.slane %v8057, 0
          %v8060 = vperm.slane %v8057, 1
          %8063 = vmatpush.msra.mxu0 %v7959
          %8064 = vmatpush.msra.mxu0 %v7957
          %8065 = vmatpush.msra.mxu0 %v7955
          %8066 = vmatpush.msra.mxu0 %v7953
          %8067 = vmatpush.msra.mxu0 %v7951
          %8068 = vmatpush.msra.mxu0 %v7949
          %8069 = vmatpush.msra.mxu0 %v7947
          %8070 = vmatpush.msra.mxu0 %v7945
          %8071 = vmatpush.msra.mxu0 %v7943
          %8072 = vmatpush.msra.mxu0 %v7941
          %8073 = vmatpush.msra.mxu0 %v7939
          %8074 = vmatpush.msra.mxu0 %v7937
          %8075 = vmatpush.msra.mxu0 %v7935
          %8076 = vmatpush.msra.mxu0 %v7933
          %8077 = vmatpush.msra.mxu0 %v7931
          %8078 = vmatpush.msra.mxu0 %v7929
          %8079 = vmatmul.f32.gmra.mxu0 %v7925
          %v8080 = vpop.f32.mrf.mxu0
          %v8081 = vadd.f32 %v8059, %v8080
          %8082 = vdwg.mxu0
          %8083 = vmatpush.msra.mxu0 %v7991
          %8084 = vmatpush.msra.mxu0 %v7989
          %8085 = vmatpush.msra.mxu0 %v7987
          %8086 = vmatpush.msra.mxu0 %v7985
          %8087 = vmatpush.msra.mxu0 %v7983
          %8088 = vmatpush.msra.mxu0 %v7981
          %8089 = vmatpush.msra.mxu0 %v7979
          %8090 = vmatpush.msra.mxu0 %v7977
          %8091 = vmatpush.msra.mxu0 %v7975
          %8092 = vmatpush.msra.mxu0 %v7973
          %8093 = vmatpush.msra.mxu0 %v7971
          %8094 = vmatpush.msra.mxu0 %v7969
          %8095 = vmatpush.msra.mxu0 %v7967
          %8096 = vmatpush.msra.mxu0 %v7965
          %8097 = vmatpush.msra.mxu0 %v7963
          %8098 = vmatpush.msra.mxu0 %v7961
          %8099 = vmatmul.f32.gmra.mxu0 %v7926
          %v8100 = vpop.f32.mrf.mxu0
          %v8101 = vadd.f32 %v8081, %v8100
          %8102 = vdwg.mxu0
          %8103 = vmatpush.msra.mxu0 %v8023
          %8104 = vmatpush.msra.mxu0 %v8021
          %8105 = vmatpush.msra.mxu0 %v8019
          %8106 = vmatpush.msra.mxu0 %v8017
          %8107 = vmatpush.msra.mxu0 %v8015
          %8108 = vmatpush.msra.mxu0 %v8013
          %8109 = vmatpush.msra.mxu0 %v8011
          %8110 = vmatpush.msra.mxu0 %v8009
          %8111 = vmatpush.msra.mxu0 %v8007
          %8112 = vmatpush.msra.mxu0 %v8005
          %8113 = vmatpush.msra.mxu0 %v8003
          %8114 = vmatpush.msra.mxu0 %v8001
          %8115 = vmatpush.msra.mxu0 %v7999
          %8116 = vmatpush.msra.mxu0 %v7997
          %8117 = vmatpush.msra.mxu0 %v7995
          %8118 = vmatpush.msra.mxu0 %v7993
          %8119 = vmatmul.f32.gmra.mxu0 %v7927
          %v8120 = vpop.f32.mrf.mxu0
          %v8121 = vadd.f32 %v8101, %v8120
          %8122 = vdwg.mxu0
          %8123 = vmatpush.msra.mxu0 %v8055
          %8124 = vmatpush.msra.mxu0 %v8053
          %8125 = vmatpush.msra.mxu0 %v8051
          %8126 = vmatpush.msra.mxu0 %v8049
          %8127 = vmatpush.msra.mxu0 %v8047
          %8128 = vmatpush.msra.mxu0 %v8045
          %8129 = vmatpush.msra.mxu0 %v8043
          %8130 = vmatpush.msra.mxu0 %v8041
          %8131 = vmatpush.msra.mxu0 %v8039
          %8132 = vmatpush.msra.mxu0 %v8037
          %8133 = vmatpush.msra.mxu0 %v8035
          %8134 = vmatpush.msra.mxu0 %v8033
          %8135 = vmatpush.msra.mxu0 %v8031
          %8136 = vmatpush.msra.mxu0 %v8029
          %8137 = vmatpush.msra.mxu0 %v8027
          %8138 = vmatpush.msra.mxu0 %v8025
          %8139 = vmatmul.f32.gmra.mxu0 %v7928
          %v8140 = vpop.f32.mrf.mxu0
          %v8141 = vadd.f32 %v8121, %v8140
          %8142 = vdwg.mxu0
          %8143 = vmatpush.msra.mxu0 %v7960
          %8144 = vmatpush.msra.mxu0 %v7958
          %8145 = vmatpush.msra.mxu0 %v7956
          %8146 = vmatpush.msra.mxu0 %v7954
          %8147 = vmatpush.msra.mxu0 %v7952
          %8148 = vmatpush.msra.mxu0 %v7950
          %8149 = vmatpush.msra.mxu0 %v7948
          %8150 = vmatpush.msra.mxu0 %v7946
          %8151 = vmatpush.msra.mxu0 %v7944
          %8152 = vmatpush.msra.mxu0 %v7942
          %8153 = vmatpush.msra.mxu0 %v7940
          %8154 = vmatpush.msra.mxu0 %v7938
          %8155 = vmatpush.msra.mxu0 %v7936
          %8156 = vmatpush.msra.mxu0 %v7934
          %8157 = vmatpush.msra.mxu0 %v7932
          %8158 = vmatpush.msra.mxu0 %v7930
          %8159 = vmatmul.f32.gmra.mxu0 %v7925
          %v8160 = vpop.f32.mrf.mxu0
          %v8161 = vadd.f32 %v8060, %v8160
          %8162 = vdwg.mxu0
          %8163 = vmatpush.msra.mxu0 %v7992
          %8164 = vmatpush.msra.mxu0 %v7990
          %8165 = vmatpush.msra.mxu0 %v7988
          %8166 = vmatpush.msra.mxu0 %v7986
          %8167 = vmatpush.msra.mxu0 %v7984
          %8168 = vmatpush.msra.mxu0 %v7982
          %8169 = vmatpush.msra.mxu0 %v7980
          %8170 = vmatpush.msra.mxu0 %v7978
          %8171 = vmatpush.msra.mxu0 %v7976
          %8172 = vmatpush.msra.mxu0 %v7974
          %8173 = vmatpush.msra.mxu0 %v7972
          %8174 = vmatpush.msra.mxu0 %v7970
          %8175 = vmatpush.msra.mxu0 %v7968
          %8176 = vmatpush.msra.mxu0 %v7966
          %8177 = vmatpush.msra.mxu0 %v7964
          %8178 = vmatpush.msra.mxu0 %v7962
          %8179 = vmatmul.f32.gmra.mxu0 %v7926
          %v8180 = vpop.f32.mrf.mxu0
          %v8181 = vadd.f32 %v8161, %v8180
          %8182 = vdwg.mxu0
          %8183 = vmatpush.msra.mxu0 %v8024
          %8184 = vmatpush.msra.mxu0 %v8022
          %8185 = vmatpush.msra.mxu0 %v8020
          %8186 = vmatpush.msra.mxu0 %v8018
          %8187 = vmatpush.msra.mxu0 %v8016
          %8188 = vmatpush.msra.mxu0 %v8014
          %8189 = vmatpush.msra.mxu0 %v8012
          %8190 = vmatpush.msra.mxu0 %v8010
          %8191 = vmatpush.msra.mxu0 %v8008
          %8192 = vmatpush.msra.mxu0 %v8006
          %8193 = vmatpush.msra.mxu0 %v8004
          %8194 = vmatpush.msra.mxu0 %v8002
          %8195 = vmatpush.msra.mxu0 %v8000
          %8196 = vmatpush.msra.mxu0 %v7998
          %8197 = vmatpush.msra.mxu0 %v7996
          %8198 = vmatpush.msra.mxu0 %v7994
          %8199 = vmatmul.f32.gmra.mxu0 %v7927
          %v8200 = vpop.f32.mrf.mxu0
          %v8201 = vadd.f32 %v8181, %v8200
          %8202 = vdwg.mxu0
          %8203 = vmatpush.msra.mxu0 %v8056
          %8204 = vmatpush.msra.mxu0 %v8054
          %8205 = vmatpush.msra.mxu0 %v8052
          %8206 = vmatpush.msra.mxu0 %v8050
          %8207 = vmatpush.msra.mxu0 %v8048
          %8208 = vmatpush.msra.mxu0 %v8046
          %8209 = vmatpush.msra.mxu0 %v8044
          %8210 = vmatpush.msra.mxu0 %v8042
          %8211 = vmatpush.msra.mxu0 %v8040
          %8212 = vmatpush.msra.mxu0 %v8038
          %8213 = vmatpush.msra.mxu0 %v8036
          %8214 = vmatpush.msra.mxu0 %v8034
          %8215 = vmatpush.msra.mxu0 %v8032
          %8216 = vmatpush.msra.mxu0 %v8030
          %8217 = vmatpush.msra.mxu0 %v8028
          %8218 = vmatpush.msra.mxu0 %v8026
          %8219 = vmatmul.f32.gmra.mxu0 %v7928
          %v8220 = vpop.f32.mrf.mxu0
          %v8221 = vadd.f32 %v8201, %v8220
          %8222 = vdwg.mxu0
          %v8223 = vld [vmem:[#allocation13] sm:$0xff]
          %v8224 = vld [vmem:[#allocation13 + $0x8] sm:$0xff]
          %v8225 = vld [vmem:[#allocation13 + $0x10] sm:$0xff]
          %v8226 = vld [vmem:[#allocation13 + $0x18] sm:$0xff]
          %v8227 = vld [vmem:[#allocation13 + $0x20] sm:$0xff]
          %v8228 = vld [vmem:[#allocation13 + $0x28] sm:$0xff]
          %v8229 = vld [vmem:[#allocation13 + $0x30] sm:$0xff]
          %v8230 = vld [vmem:[#allocation13 + $0x38] sm:$0xff]
          %v8231 = vld [vmem:[#allocation13 + $0x40] sm:$0xff]
          %v8232 = vld [vmem:[#allocation13 + $0x48] sm:$0xff]
          %v8233 = vld [vmem:[#allocation13 + $0x50] sm:$0xff]
          %v8234 = vld [vmem:[#allocation13 + $0x58] sm:$0xff]
          %v8235 = vld [vmem:[#allocation13 + $0x60] sm:$0xff]
          %v8236 = vld [vmem:[#allocation13 + $0x68] sm:$0xff]
          %v8237 = vld [vmem:[#allocation13 + $0x70] sm:$0xff]
          %v8238 = vld [vmem:[#allocation13 + $0x78] sm:$0xff]
          %v8239 = vld [vmem:[#allocation13 + $0x80] sm:$0xff]
          %v8240 = vld [vmem:[#allocation13 + $0x88] sm:$0xff]
          %v8241 = vld [vmem:[#allocation13 + $0x90] sm:$0xff]
          %v8242 = vld [vmem:[#allocation13 + $0x98] sm:$0xff]
          %v8243 = vld [vmem:[#allocation13 + $0xa0] sm:$0xff]
          %v8244 = vld [vmem:[#allocation13 + $0xa8] sm:$0xff]
          %v8245 = vld [vmem:[#allocation13 + $0xb0] sm:$0xff]
          %v8246 = vld [vmem:[#allocation13 + $0xb8] sm:$0xff]
          %v8247 = vld [vmem:[#allocation13 + $0xc0] sm:$0xff]
          %v8248 = vld [vmem:[#allocation13 + $0xc8] sm:$0xff]
          %v8249 = vld [vmem:[#allocation13 + $0xd0] sm:$0xff]
          %v8250 = vld [vmem:[#allocation13 + $0xd8] sm:$0xff]
          %v8251 = vld [vmem:[#allocation13 + $0xe0] sm:$0xff]
          %v8252 = vld [vmem:[#allocation13 + $0xe8] sm:$0xff]
          %v8253 = vld [vmem:[#allocation13 + $0xf0] sm:$0xff]
          %v8254 = vld [vmem:[#allocation13 + $0xf8] sm:$0xff]
          %v8255 = vld [vmem:[#allocation15] sm:$0x1]
          %v8257 = vperm.slane %v8255, 0
          %8259 = vmatpush.msra.mxu0 %v8238
          %8260 = vmatpush.msra.mxu0 %v8237
          %8261 = vmatpush.msra.mxu0 %v8236
          %8262 = vmatpush.msra.mxu0 %v8235
          %8263 = vmatpush.msra.mxu0 %v8234
          %8264 = vmatpush.msra.mxu0 %v8233
          %8265 = vmatpush.msra.mxu0 %v8232
          %8266 = vmatpush.msra.mxu0 %v8231
          %8267 = vmatpush.msra.mxu0 %v8230
          %8268 = vmatpush.msra.mxu0 %v8229
          %8269 = vmatpush.msra.mxu0 %v8228
          %8270 = vmatpush.msra.mxu0 %v8227
          %8271 = vmatpush.msra.mxu0 %v8226
          %8272 = vmatpush.msra.mxu0 %v8225
          %8273 = vmatpush.msra.mxu0 %v8224
          %8274 = vmatpush.msra.mxu0 %v8223
          %8275 = vmatmul.f32.gmra.mxu0 %v8141
          %v8276 = vpop.f32.mrf.mxu0
          %v8277 = vadd.f32 %v8257, %v8276
          %8278 = vdwg.mxu0
          %8279 = vmatpush.msra.mxu0 %v8254
          %8280 = vmatpush.msra.mxu0 %v8253
          %8281 = vmatpush.msra.mxu0 %v8252
          %8282 = vmatpush.msra.mxu0 %v8251
          %8283 = vmatpush.msra.mxu0 %v8250
          %8284 = vmatpush.msra.mxu0 %v8249
          %8285 = vmatpush.msra.mxu0 %v8248
          %8286 = vmatpush.msra.mxu0 %v8247
          %8287 = vmatpush.msra.mxu0 %v8246
          %8288 = vmatpush.msra.mxu0 %v8245
          %8289 = vmatpush.msra.mxu0 %v8244
          %8290 = vmatpush.msra.mxu0 %v8243
          %8291 = vmatpush.msra.mxu0 %v8242
          %8292 = vmatpush.msra.mxu0 %v8241
          %8293 = vmatpush.msra.mxu0 %v8240
          %8294 = vmatpush.msra.mxu0 %v8239
          %8295 = vmatmul.f32.gmra.mxu0 %v8221
          %v8296 = vpop.f32.mrf.mxu0
          %v8297 = vadd.f32 %v8277, %v8296
          %8298 = vdwg.mxu0
          %v8299 = vld [vmem:[%s13] sm:$0xff]
          %v8300 = vld [vmem:[%s13 + $0x8] sm:$0xff]
          %v8301 = vld [vmem:[%s13 + $0x10] sm:$0xff]
          %v8302 = vld [vmem:[%s13 + $0x18] sm:$0xff]
          %v8303 = vld [vmem:[%s13 + $0x20] sm:$0xff]
          %v8304 = vld [vmem:[%s13 + $0x28] sm:$0xff]
          %v8305 = vld [vmem:[%s13 + $0x30] sm:$0xff]
          %v8306 = vld [vmem:[%s13 + $0x38] sm:$0xff]
          %v8307 = vld [vmem:[%s13 + $0x40] sm:$0xff]
          %v8308 = vld [vmem:[%s13 + $0x48] sm:$0xff]
          %v8309 = vld [vmem:[%s13 + $0x50] sm:$0xff]
          %v8310 = vld [vmem:[%s13 + $0x58] sm:$0xff]
          %v8311 = vld [vmem:[%s13 + $0x60] sm:$0xff]
          %v8312 = vld [vmem:[%s13 + $0x68] sm:$0xff]
          %v8313 = vld [vmem:[%s13 + $0x70] sm:$0xff]
          %v8314 = vld [vmem:[%s13 + $0x78] sm:$0xff]
          %v8315 = vld [vmem:[#allocation16] sm:$0x1]
          %v8317 = vperm.slane %v8315, 0
          %8319 = vmatpush.msra.mxu0 %v8314
          %8320 = vmatpush.msra.mxu0 %v8313
          %8321 = vmatpush.msra.mxu0 %v8312
          %8322 = vmatpush.msra.mxu0 %v8311
          %8323 = vmatpush.msra.mxu0 %v8310
          %8324 = vmatpush.msra.mxu0 %v8309
          %8325 = vmatpush.msra.mxu0 %v8308
          %8326 = vmatpush.msra.mxu0 %v8307
          %8327 = vmatpush.msra.mxu0 %v8306
          %8328 = vmatpush.msra.mxu0 %v8305
          %8329 = vmatpush.msra.mxu0 %v8304
          %8330 = vmatpush.msra.mxu0 %v8303
          %8331 = vmatpush.msra.mxu0 %v8302
          %8332 = vmatpush.msra.mxu0 %v8301
          %8333 = vmatpush.msra.mxu0 %v8300
          %8334 = vmatpush.msra.mxu0 %v8299
          %8335 = vmatmul.f32.gmra.mxu0 %v8297
          %v8336 = vpop.f32.mrf.mxu0
          %v8337 = vadd.f32 %v8317, %v8336
          %8338 = vdwg.mxu0
          %vm8339 = vcmask 15360
          %8340 = vst.msk [vmem:[%s15] sm:$0xff] %vm8339, %v8337
        $region124: #{pdcnn_forward.1} parent=79 // pred_fallthru
          _
        // Predicated region
        $region125: #{pdcnn_forward.1} parent=79 // pred_check
          %p8341 = pneg %p364
        $region126: #{pdcnn_forward.1} parent=79 // pred_check_branch
          %8343 = sbr.rel (%p8341) target = $region128
        $region127: #{pdcnn_forward.1} parent=79 // pred_region
          _
        $region128: #{pdcnn_forward.1} parent=79 // pred_fallthru
          _
        // Predicated region
        $region129: #{pdcnn_forward.1} parent=79 // pred_check
          %p8344 = pneg %p364
        $region130: #{pdcnn_forward.1} parent=79 // pred_check_branch
          %8346 = sbr.rel (%p8344) target = $region132
        $region131: #{pdcnn_forward.1} parent=79 // pred_region
          _
        $region132: #{pdcnn_forward.1} parent=79 // pred_fallthru
          _
      $region80: #{pdcnn_forward.1} parent=5 // pred_fallthru
        _
      %p8347 = scmp.le.s32.totalorder 2, %s26
      // Predicated region
      $region133: #{pdcnn_forward.1} parent=5 // pred_check
        %p8348 = pneg %p8347
      $region134: #{pdcnn_forward.1} parent=5 // pred_check_branch
        %8350 = sbr.rel (%p8348) target = $region136
      $region135: #{pdcnn_forward.1} parent=5 // pred_region
        %s8351 = ssub.s32 %s26, 2
      $region136: #{pdcnn_forward.1} parent=5 // pred_fallthru
        _
    $region6: #{pdcnn_forward.1} parent=1 // loop_footer
      %s30 = sadd.s32 1, %s26
    $region7: #{pdcnn_forward.1} parent=1 // loop_footer_branch
      %25 = sbr.rel target = $region3
    $region8: #{pdcnn_forward.1} parent=1 // loop_exit
      _
    %8352 = vsyncpa [#allocation5], 1
    %s8353 = scalar_lea.sflag [#allocation5], 1
    %8354 = vsyncpa %s8353, 1
    %8355 = vsyncpa [#allocation7], 1
    %8356 = vsyncpa [#allocation11], 1
    %8357 = vsyncpa [#allocation14], 1
    %8358 = vsyncpa [#allocation17], 1

</llo_original>
